<compile_context>
chip_gen: v7x
topology: tpu7x:2x2x1
jax: 0.10.0
libtpu: 0.0.40
codegen_flags: <defaults>
</compile_context>

<pallas_src>
import functools

import jax
import jax.numpy as jnp
from jax import lax
from jax.experimental import pallas as pl
from jax.experimental.pallas import tpu as pltpu


# ----------------------------------------------------------------------------
# Kernel: one grid step == Bb batch elements; everything stays in VMEM.
#
# Folded column layout (see fold_cross_attention_params):
#   px = x2d @ W_x : [ q1' (2d) | xl (d) | k1 (d) | v1 (d) ]            (rows, 5d)
#   py = y2d @ W_y : [ q2' (2d) | k2' (2d) | yl (d) | k2 (d) | v2 (d) ] (rows, 7d)
# Softmax scale is pre-folded into the k1 / k2 / k2' columns.
# ----------------------------------------------------------------------------
def _cross_attention_kernel(x_ref, y_ref, wx_ref, wy_ref,
                            wp1_ref, bp1_ref, wp2_ref, bp2_ref, out_ref,
                            *, dim, num_heads, block_batch, seq, compute_dtype):
    H = num_heads
    hd = dim // H
    hd2 = 2 * hd
    n = seq
    cd = compute_dtype

    def mm(a, b):
        # (M, K) @ (K, N); optional bf16 operands, always f32 accumulation.
        return jnp.dot(a.astype(cd), b.astype(cd),
                       preferred_element_type=jnp.float32)

    def mm_nt(a, b):
        # (M, D) x (N, D) -> (M, N); contract trailing dims (no transpose copy).
        return lax.dot_general(a.astype(cd), b.astype(cd),
                               (((1,), (1,)), ((), ())),
                               preferred_element_type=jnp.float32)

    def softmax(s):
        m = jnp.max(s, axis=-1, keepdims=True)
        e = jnp.exp(s - m)
        # EUP approximate reciprocal (~1e-4 rel. err); fine for this module.
        return e * pl.reciprocal(jnp.sum(e, axis=-1, keepdims=True), approx=True)

    wp1 = wp1_ref[...]            # (2*dim, dim)
    wp2 = wp2_ref[...]            # (dim,   dim)
    bp1 = bp1_ref[...]            # (1, dim)
    bp2 = bp2_ref[...]            # (1, dim)

    # One lane-dense matmul per stream yields every folded projection at once.
    px = mm(x_ref[...], wx_ref[...])      # (Bb*n, 5*dim)
    py = mm(y_ref[...], wy_ref[...])      # (Bb*n, 7*dim)

    for b in range(block_batch):          # static unroll; attention is per batch elem
        r0 = b * n
        q1p = px[r0:r0 + n, 0:2 * dim]              # 128-aligned, 2*dim-wide slice
        xl  = px[r0:r0 + n, 2 * dim:3 * dim]
        k1  = px[r0:r0 + n, 3 * dim:4 * dim]        # scale pre-folded
        v1  = px[r0:r0 + n, 4 * dim:5 * dim]
        q2p = py[r0:r0 + n, 0:2 * dim]              # 128-aligned
        k2p = py[r0:r0 + n, 2 * dim:4 * dim]        # 128-aligned, scale pre-folded
        yl  = py[r0:r0 + n, 4 * dim:5 * dim]
        k2  = py[r0:r0 + n, 5 * dim:6 * dim]        # raw k2, scale pre-folded
        v2  = py[r0:r0 + n, 6 * dim:7 * dim]

        # Residual + proj bias (the only biases in the module); accumulate the
        # per-head projected attention outputs directly on top (no head concat).
        x1 = xl + bp1
        y1 = yl + bp2

        for h in range(H):                # static unroll over heads
            c2, c1 = h * hd2, h * hd
            # ---- branch 1: k_new=[k1_h|k2_h], v_new=[v1_h|v2_h] never built;
            #      the contractions are split instead (identical FLOPs, no XLU
            #      lane-relayout copies).
            s1 = mm_nt(q1p[:, c2:c2 + hd], k1[:, c1:c1 + hd]) \
               + mm_nt(q1p[:, c2 + hd:c2 + hd2], k2[:, c1:c1 + hd])
            p1 = softmax(s1)                                        # (n, n)
            x1 = x1 + mm(mm(p1, v1[:, c1:c1 + hd]), wp1[c2:c2 + hd, :]) \
                    + mm(mm(p1, v2[:, c1:c1 + hd]), wp1[c2 + hd:c2 + hd2, :])

            # ---- branch 2: q2'_h and k2'_h are contiguous 2hd slices; single
            #      contraction, no concat ever needed.
            p2 = softmax(mm_nt(q2p[:, c2:c2 + hd2], k2p[:, c2:c2 + hd2]))
            y1 = y1 + mm(mm(p2, v2[:, c1:c1 + hd]), wp2[c1:c1 + hd, :])

        # cro = concat([x1, y1], -1) + rearrange(q1', 'b h t d -> b t (h d)')
        # One lane-concat + one dense (n, 2*dim) store per batch element.
        out_ref[r0:r0 + n, :] = (jnp.concatenate([x1, y1], axis=-1) + q1p
                                 ).astype(out_ref.dtype)


# ----------------------------------------------------------------------------
# One-time host-side weight folding / stacking.
# ----------------------------------------------------------------------------
def fold_cross_attention_params(params, num_heads, *, compute_dtype=jnp.float32):
    dim = params["W_qkv1"].shape[0]
    H = num_heads
    hd = dim // H
    scale = hd ** (-0.5)

    def blockdiag(w):  # (hd, m) -> (H*hd, H*m) block-diagonal over heads
        return jnp.einsum("ij,ab->iajb", jnp.eye(H, dtype=w.dtype), w
                          ).reshape(H * w.shape[0], H * w.shape[1])

    Wl1, Wl2 = params["W_l1"], params["W_l2"]
    Wqkv1, Wqkv2 = params["W_qkv1"], params["W_qkv2"]

    Wq1 = Wqkv1[:, 0:dim] @ blockdiag(params["W_q1"])          # (dim, 2*dim)
    Wk1 = Wqkv1[:, dim:2 * dim] * scale                        # branch-1 keys (x)
    Wv1 = Wqkv1[:, 2 * dim:3 * dim]

    Wq2    = Wqkv2[:, 0:dim] @ blockdiag(params["W_q2"])       # (dim, 2*dim)
    Wk2raw = Wqkv2[:, dim:2 * dim]
    Wk2e   = (Wk2raw @ blockdiag(params["W_k2"])) * scale      # branch-2 keys
    Wk2r   = Wk2raw * scale                                    # branch-1 keys (y)
    Wv2    = Wqkv2[:, 2 * dim:3 * dim]

    # Softmax scale is folded into the KEY columns only; the q1' columns stay
    # unscaled because q1' is reused as the final residual.
    # Column order puts the 2*dim-wide (128-lane-aligned) segments first.
    W_x = jnp.concatenate([Wl1 @ Wq1, Wl1, Wl1 @ Wk1, Wl1 @ Wv1], axis=1)   # (C1, 5*dim)
    W_y = jnp.concatenate([Wl2 @ Wq2, Wl2 @ Wk2e, Wl2, Wl2 @ Wk2r, Wl2 @ Wv2],
                          axis=1)                                           # (C2, 7*dim)

    wd = compute_dtype        # pre-cast weights host-side (bf16 path: halves DMA)
    return {
        "dim": dim,
        "compute_dtype": compute_dtype,
        "W_x": W_x.astype(wd),
        "W_y": W_y.astype(wd),
        "W_proj1": params["W_proj1"].astype(wd),
        "b_proj1": params["b_proj1"].reshape(1, -1).astype(jnp.float32),
        "W_proj2": params["W_proj2"].astype(wd),
        "b_proj2": params["b_proj2"].reshape(1, -1).astype(jnp.float32),
    }


# ----------------------------------------------------------------------------
# Wrapper: single fused pallas_call over grid=(B // Bb,).
# ----------------------------------------------------------------------------
def _choose_block_batch(B, N, target_rows=128):
    bb = max(1, min(B, target_rows // max(N, 1)))
    while B % bb:                    # must divide the batch
        bb -= 1
    while bb > 1 and B // bb < 2:    # keep grid length >= 2 (v7x megacore)
        bb -= 1
        while B % bb:
            bb -= 1
    if (bb * N) % 8 != 0 and bb != B:  # honor (8,128) sublane constraint
        bb = B
    return max(bb, 1)


def cross_attention_forward(folded, x, y, *, num_heads, block_batch=None):
    B, Nx, C1 = x.shape
    By, Ny, C2 = y.shape
    assert B == By and Nx == Ny, "module assumes matching batch / token counts"
    dim = folded["dim"]
    N = Nx

    Bb = block_batch if block_batch is not None else _choose_block_batch(B, N)
    assert B % Bb == 0
    rows = Bb * N

    # Host-side flatten of (B, N) -> rows is a free metadata reshape; the kernel
    # then sees plain 2-D row blocks (no in-kernel batch reshapes).
    x2d = x.reshape(B * N, C1)
    y2d = y.reshape(B * N, C2)

    kernel = functools.partial(
        _cross_attention_kernel, dim=dim, num_heads=num_heads,
        block_batch=Bb, seq=N, compute_dtype=folded["compute_dtype"])

    def wspec(arr):
        # Full-array weight block, constant index map.
        # TODO(synk): single-buffer these constant blocks (pl.Buffered(1)) once
        # weight sizes make the extra VMEM copy matter (v7x 64 MiB budget).
        return pl.BlockSpec(arr.shape, lambda i: (0, 0))

    out2d = pl.pallas_call(
        kernel,
        grid=(B // Bb,),
        in_specs=[
            pl.BlockSpec((rows, C1), lambda i: (i, 0)),
            pl.BlockSpec((rows, C2), lambda i: (i, 0)),
            wspec(folded["W_x"]),
            wspec(folded["W_y"]),
            wspec(folded["W_proj1"]),
            wspec(folded["b_proj1"]),
            wspec(folded["W_proj2"]),
            wspec(folded["b_proj2"]),
        ],
        out_specs=pl.BlockSpec((rows, 2 * dim), lambda i: (i, 0)),
        out_shape=jax.ShapeDtypeStruct((B * N, 2 * dim), x.dtype),
        compiler_params=pltpu.CompilerParams(
            dimension_semantics=("parallel",),
            vmem_limit_bytes=32 * 1024 * 1024),
    )(x2d, y2d, folded["W_x"], folded["W_y"],
      folded["W_proj1"], folded["b_proj1"],
      folded["W_proj2"], folded["b_proj2"])

    return out2d.reshape(B, N, 2 * dim)


# ----------------------------------------------------------------------------
# Pure-JAX reference (mirrors the PyTorch forward in eval mode).
# ----------------------------------------------------------------------------
def cross_attention_reference(params, x, y, num_heads):
    B, Nx, _ = x.shape
    dim = params["W_qkv1"].shape[0]
    H = num_heads
    hd = dim // H
    scale = hd ** (-0.5)

    x = x @ params["W_l1"]
    y = y @ params["W_l2"]

    qkv1 = (x @ params["W_qkv1"]).reshape(B, Nx, 3, H, hd).transpose(2, 0, 3, 1, 4)
    q1, k1, v1 = qkv1[0], qkv1[1], qkv1[2]
    qkv2 = (y @ params["W_qkv2"]).reshape(B, Nx, 3, H, hd).transpose(2, 0, 3, 1, 4)
    q2, k2, v2 = qkv2[0], qkv2[1], qkv2[2]

    q1 = q1 @ params["W_q1"]
    q2 = q2 @ params["W_q2"]
    k_new = jnp.concatenate([k1, k2], axis=-1)
    v_new = jnp.concatenate([v1, v2], axis=-1)

    a1 = jax.nn.softmax(q1 @ jnp.swapaxes(k_new, -2, -1) * scale, axis=-1)
    o1 = (a1 @ v_new).transpose(0, 2, 1, 3).reshape(B, Nx, 2 * dim)
    x1 = x + (o1 @ params["W_proj1"] + params["b_proj1"])

    k2p = k2 @ params["W_k2"]
    a2 = jax.nn.softmax(q2 @ jnp.swapaxes(k2p, -2, -1) * scale, axis=-1)
    o2 = (a2 @ v2).transpose(0, 2, 1, 3).reshape(B, Nx, dim)
    y1 = y + (o2 @ params["W_proj2"] + params["b_proj2"])

    q1_re = q1.transpose(0, 2, 1, 3).reshape(B, Nx, 2 * dim)
    return jnp.concatenate([x1, y1], axis=2) + q1_re


if __name__ == "__main__":
    # Small config (dim == out_dim required: qkv1 consumes linear_1's output).
    # dim=64 -> 2*dim = 128 lanes: the output block is naturally lane-dense.
    B, N = 4, 8
    input_1, input_2 = 24, 16
    dim = out_dim = 64
    num_heads = 4
    hd = dim // num_heads

    key = jax.random.PRNGKey(0)
    ks = jax.random.split(key, 16)

    def init(k, shape, s=0.05):
        return (s * jax.random.normal(k, shape)).astype(jnp.float32)

    params = {
        "W_l1":    init(ks[0], (input_1, out_dim)),
        "W_l2":    init(ks[1], (input_2, out_dim)),
        "W_qkv1":  init(ks[2], (dim, 3 * dim)),
        "W_qkv2":  init(ks[3], (dim, 3 * dim)),
        "W_q1":    init(ks[4], (hd, 2 * hd)),
        "W_q2":    init(ks[5], (hd, 2 * hd)),
        "W_k2":    init(ks[6], (hd, 2 * hd)),
        "W_proj1": init(ks[7], (2 * dim, dim)),
        "b_proj1": init(ks[8], (dim,)),
        "W_proj2": init(ks[9], (dim, dim)),
        "b_proj2": init(ks[10], (dim,)),
    }
    x = jax.random.normal(ks[11], (B, N, input_1), dtype=jnp.float32)
    y = jax.random.normal(ks[12], (B, N, input_2), dtype=jnp.float32)

    ref = cross_attention_reference(params, x, y, num_heads)

    # f32 path (exact, v5e-friendly) — tight check vs reference.
    folded = fold_cross_attention_params(params, num_heads)
    out = cross_attention_forward(folded, x, y, num_heads=num_heads)
    out = jax.block_until_ready(out)
    assert out.shape == (B, N, 2 * dim), out.shape
    err = float(jnp.max(jnp.abs(out - ref)))
    assert err < 1e-3, f"f32 max err {err}"

    # bf16 weights + bf16 MXU operands (v6e/v7x fast path), f32 accumulation.
    folded_bf16 = fold_cross_attention_params(params, num_heads,
                                              compute_dtype=jnp.bfloat16)
    out_bf16 = cross_attention_forward(folded_bf16, x, y, num_heads=num_heads)
    out_bf16 = jax.block_until_ready(out_bf16)
    err_bf16 = float(jnp.max(jnp.abs(out_bf16 - ref)))
    assert err_bf16 < 5e-2, f"bf16 max err {err_bf16}"

    print("KERNEL_OK")
</pallas_src>

<mosaic_0001>
module attributes {stable_mosaic.version = 11 : i64} {
  func.func @_cross_attention_kernel(%arg0: i32, %arg1: memref<16x24xf32, #tpu.memory_space<vmem>>, %arg2: memref<16x16xf32, #tpu.memory_space<vmem>>, %arg3: memref<24x320xf32, #tpu.memory_space<vmem>>, %arg4: memref<16x448xf32, #tpu.memory_space<vmem>>, %arg5: memref<128x64xf32, #tpu.memory_space<vmem>>, %arg6: memref<1x64xf32, #tpu.memory_space<vmem>>, %arg7: memref<64x64xf32, #tpu.memory_space<vmem>>, %arg8: memref<1x64xf32, #tpu.memory_space<vmem>>, %arg9: memref<16x128xf32, #tpu.memory_space<vmem>>) attributes {dimension_semantics = [#tpu.dimension_semantics<parallel>], iteration_bounds = array<i64: 2>, scalar_prefetch = 0 : i64, scratch_operands = 0 : i64, tpu.core_type = #tpu.core_type<tc>, window_params = [{transform_indices = @transform_0, window_bounds = array<i64: 16, 24>}, {transform_indices = @transform_1, window_bounds = array<i64: 16, 16>}, {pipeline_mode = #tpu.pipeline_mode<synchronous>, transform_indices = @transform_2, window_bounds = array<i64: 24, 320>}, {pipeline_mode = #tpu.pipeline_mode<synchronous>, transform_indices = @transform_3, window_bounds = array<i64: 16, 448>}, {pipeline_mode = #tpu.pipeline_mode<synchronous>, transform_indices = @transform_4, window_bounds = array<i64: 128, 64>}, {pipeline_mode = #tpu.pipeline_mode<synchronous>, transform_indices = @transform_5, window_bounds = array<i64: 1, 64>}, {pipeline_mode = #tpu.pipeline_mode<synchronous>, transform_indices = @transform_6, window_bounds = array<i64: 64, 64>}, {pipeline_mode = #tpu.pipeline_mode<synchronous>, transform_indices = @transform_7, window_bounds = array<i64: 1, 64>}, {transform_indices = @transform_8, window_bounds = array<i64: 16, 128>}]} {
    %c0 = arith.constant 0 : index
    %c0_0 = arith.constant 0 : index
    %0 = vector.load %arg5[%c0, %c0_0] : memref<128x64xf32, #tpu.memory_space<vmem>>, vector<128x64xf32>
    %c0_1 = arith.constant 0 : index
    %c0_2 = arith.constant 0 : index
    %1 = vector.load %arg7[%c0_1, %c0_2] : memref<64x64xf32, #tpu.memory_space<vmem>>, vector<64x64xf32>
    %c0_3 = arith.constant 0 : index
    %c0_4 = arith.constant 0 : index
    %2 = vector.load %arg6[%c0_3, %c0_4] : memref<1x64xf32, #tpu.memory_space<vmem>>, vector<1x64xf32>
    %c0_5 = arith.constant 0 : index
    %c0_6 = arith.constant 0 : index
    %3 = vector.load %arg8[%c0_5, %c0_6] : memref<1x64xf32, #tpu.memory_space<vmem>>, vector<1x64xf32>
    %c0_7 = arith.constant 0 : index
    %c0_8 = arith.constant 0 : index
    %4 = vector.load %arg1[%c0_7, %c0_8] : memref<16x24xf32, #tpu.memory_space<vmem>>, vector<16x24xf32>
    %c0_9 = arith.constant 0 : index
    %c0_10 = arith.constant 0 : index
    %5 = vector.load %arg3[%c0_9, %c0_10] : memref<24x320xf32, #tpu.memory_space<vmem>>, vector<24x320xf32>
    %cst = arith.constant dense<0.000000e+00> : vector<16x320xf32>
    %6 = tpu.matmul %4, %5, %cst {dimension_numbers = #tpu.dot_dimension_numbers<[1], [0], [0], [1], [0, 0, 1, 1], [], []>} : vector<16x24xf32>, vector<24x320xf32>, vector<16x320xf32> -> vector<16x320xf32>
    %c0_11 = arith.constant 0 : index
    %c0_12 = arith.constant 0 : index
    %7 = vector.load %arg2[%c0_11, %c0_12] : memref<16x16xf32, #tpu.memory_space<vmem>>, vector<16x16xf32>
    %c0_13 = arith.constant 0 : index
    %c0_14 = arith.constant 0 : index
    %8 = vector.load %arg4[%c0_13, %c0_14] : memref<16x448xf32, #tpu.memory_space<vmem>>, vector<16x448xf32>
    %cst_15 = arith.constant dense<0.000000e+00> : vector<16x448xf32>
    %9 = tpu.matmul %7, %8, %cst_15 {dimension_numbers = #tpu.dot_dimension_numbers<[1], [0], [0], [1], [0, 0, 1, 1], [], []>} : vector<16x16xf32>, vector<16x448xf32>, vector<16x448xf32> -> vector<16x448xf32>
    %10 = vector.extract_strided_slice %6 {offsets = [0, 0], sizes = [8, 128], strides = [1, 1]} : vector<16x320xf32> to vector<8x128xf32>
    %11 = vector.extract_strided_slice %6 {offsets = [0, 128], sizes = [8, 64], strides = [1, 1]} : vector<16x320xf32> to vector<8x64xf32>
    %12 = vector.extract_strided_slice %6 {offsets = [0, 192], sizes = [8, 64], strides = [1, 1]} : vector<16x320xf32> to vector<8x64xf32>
    %13 = vector.extract_strided_slice %6 {offsets = [0, 256], sizes = [8, 64], strides = [1, 1]} : vector<16x320xf32> to vector<8x64xf32>
    %14 = vector.extract_strided_slice %9 {offsets = [0, 0], sizes = [8, 128], strides = [1, 1]} : vector<16x448xf32> to vector<8x128xf32>
    %15 = vector.extract_strided_slice %9 {offsets = [0, 128], sizes = [8, 128], strides = [1, 1]} : vector<16x448xf32> to vector<8x128xf32>
    %16 = vector.extract_strided_slice %9 {offsets = [0, 256], sizes = [8, 64], strides = [1, 1]} : vector<16x448xf32> to vector<8x64xf32>
    %17 = vector.extract_strided_slice %9 {offsets = [0, 320], sizes = [8, 64], strides = [1, 1]} : vector<16x448xf32> to vector<8x64xf32>
    %18 = vector.extract_strided_slice %9 {offsets = [0, 384], sizes = [8, 64], strides = [1, 1]} : vector<16x448xf32> to vector<8x64xf32>
    %19 = vector.broadcast %2 : vector<1x64xf32> to vector<8x64xf32>
    %20 = arith.addf %11, %19 : vector<8x64xf32>
    %21 = vector.broadcast %3 : vector<1x64xf32> to vector<8x64xf32>
    %22 = arith.addf %16, %21 : vector<8x64xf32>
    %23 = vector.extract_strided_slice %10 {offsets = [0, 0], sizes = [8, 16], strides = [1, 1]} : vector<8x128xf32> to vector<8x16xf32>
    %24 = vector.extract_strided_slice %12 {offsets = [0, 0], sizes = [8, 16], strides = [1, 1]} : vector<8x64xf32> to vector<8x16xf32>
    %cst_16 = arith.constant dense<0.000000e+00> : vector<8x8xf32>
    %25 = tpu.matmul %23, %24, %cst_16 {dimension_numbers = #tpu.dot_dimension_numbers<[1], [1], [0], [0], [0, 0, 1, 0], [], []>} : vector<8x16xf32>, vector<8x16xf32>, vector<8x8xf32> -> vector<8x8xf32>
    %26 = vector.extract_strided_slice %10 {offsets = [0, 16], sizes = [8, 16], strides = [1, 1]} : vector<8x128xf32> to vector<8x16xf32>
    %27 = vector.extract_strided_slice %17 {offsets = [0, 0], sizes = [8, 16], strides = [1, 1]} : vector<8x64xf32> to vector<8x16xf32>
    %cst_17 = arith.constant dense<0.000000e+00> : vector<8x8xf32>
    %28 = tpu.matmul %26, %27, %cst_17 {dimension_numbers = #tpu.dot_dimension_numbers<[1], [1], [0], [0], [0, 0, 1, 0], [], []>} : vector<8x16xf32>, vector<8x16xf32>, vector<8x8xf32> -> vector<8x8xf32>
    %29 = arith.addf %25, %28 : vector<8x8xf32>
    %cst_18 = arith.constant dense<0xFF800000> : vector<8xf32>
    %30 = vector.multi_reduction <maximumf>, %29, %cst_18 [1] : vector<8x8xf32> to vector<8xf32>
    %31 = vector.shape_cast %30 : vector<8xf32> to vector<8x1xf32>
    %32 = vector.broadcast %31 : vector<8x1xf32> to vector<8x8xf32>
    %33 = arith.subf %29, %32 : vector<8x8xf32>
    %34 = math.exp %33 : vector<8x8xf32>
    %cst_19 = arith.constant dense<0.000000e+00> : vector<8xf32>
    %35 = vector.multi_reduction <add>, %34, %cst_19 [1] : vector<8x8xf32> to vector<8xf32>
    %36 = vector.shape_cast %35 : vector<8xf32> to vector<8x1xf32>
    %37 = tpu.reciprocal %36 {approx = true} : vector<8x1xf32> -> vector<8x1xf32>
    %38 = vector.broadcast %37 : vector<8x1xf32> to vector<8x8xf32>
    %39 = arith.mulf %34, %38 : vector<8x8xf32>
    %40 = vector.extract_strided_slice %13 {offsets = [0, 0], sizes = [8, 16], strides = [1, 1]} : vector<8x64xf32> to vector<8x16xf32>
    %cst_20 = arith.constant dense<0.000000e+00> : vector<8x16xf32>
    %41 = tpu.matmul %39, %40, %cst_20 {dimension_numbers = #tpu.dot_dimension_numbers<[1], [0], [0], [1], [0, 0, 1, 1], [], []>} : vector<8x8xf32>, vector<8x16xf32>, vector<8x16xf32> -> vector<8x16xf32>
    %42 = vector.extract_strided_slice %0 {offsets = [0, 0], sizes = [16, 64], strides = [1, 1]} : vector<128x64xf32> to vector<16x64xf32>
    %cst_21 = arith.constant dense<0.000000e+00> : vector<8x64xf32>
    %43 = tpu.matmul %41, %42, %cst_21 {dimension_numbers = #tpu.dot_dimension_numbers<[1], [0], [0], [1], [0, 0, 1, 1], [], []>} : vector<8x16xf32>, vector<16x64xf32>, vector<8x64xf32> -> vector<8x64xf32>
    %44 = arith.addf %20, %43 : vector<8x64xf32>
    %45 = vector.extract_strided_slice %18 {offsets = [0, 0], sizes = [8, 16], strides = [1, 1]} : vector<8x64xf32> to vector<8x16xf32>
    %cst_22 = arith.constant dense<0.000000e+00> : vector<8x16xf32>
    %46 = tpu.matmul %39, %45, %cst_22 {dimension_numbers = #tpu.dot_dimension_numbers<[1], [0], [0], [1], [0, 0, 1, 1], [], []>} : vector<8x8xf32>, vector<8x16xf32>, vector<8x16xf32> -> vector<8x16xf32>
    %47 = vector.extract_strided_slice %0 {offsets = [16, 0], sizes = [16, 64], strides = [1, 1]} : vector<128x64xf32> to vector<16x64xf32>
    %cst_23 = arith.constant dense<0.000000e+00> : vector<8x64xf32>
    %48 = tpu.matmul %46, %47, %cst_23 {dimension_numbers = #tpu.dot_dimension_numbers<[1], [0], [0], [1], [0, 0, 1, 1], [], []>} : vector<8x16xf32>, vector<16x64xf32>, vector<8x64xf32> -> vector<8x64xf32>
    %49 = arith.addf %44, %48 : vector<8x64xf32>
    %50 = vector.extract_strided_slice %14 {offsets = [0, 0], sizes = [8, 32], strides = [1, 1]} : vector<8x128xf32> to vector<8x32xf32>
    %51 = vector.extract_strided_slice %15 {offsets = [0, 0], sizes = [8, 32], strides = [1, 1]} : vector<8x128xf32> to vector<8x32xf32>
    %cst_24 = arith.constant dense<0.000000e+00> : vector<8x8xf32>
    %52 = tpu.matmul %50, %51, %cst_24 {dimension_numbers = #tpu.dot_dimension_numbers<[1], [1], [0], [0], [0, 0, 1, 0], [], []>} : vector<8x32xf32>, vector<8x32xf32>, vector<8x8xf32> -> vector<8x8xf32>
    %cst_25 = arith.constant dense<0xFF800000> : vector<8xf32>
    %53 = vector.multi_reduction <maximumf>, %52, %cst_25 [1] : vector<8x8xf32> to vector<8xf32>
    %54 = vector.shape_cast %53 : vector<8xf32> to vector<8x1xf32>
    %55 = vector.broadcast %54 : vector<8x1xf32> to vector<8x8xf32>
    %56 = arith.subf %52, %55 : vector<8x8xf32>
    %57 = math.exp %56 : vector<8x8xf32>
    %cst_26 = arith.constant dense<0.000000e+00> : vector<8xf32>
    %58 = vector.multi_reduction <add>, %57, %cst_26 [1] : vector<8x8xf32> to vector<8xf32>
    %59 = vector.shape_cast %58 : vector<8xf32> to vector<8x1xf32>
    %60 = tpu.reciprocal %59 {approx = true} : vector<8x1xf32> -> vector<8x1xf32>
    %61 = vector.broadcast %60 : vector<8x1xf32> to vector<8x8xf32>
    %62 = arith.mulf %57, %61 : vector<8x8xf32>
    %63 = vector.extract_strided_slice %18 {offsets = [0, 0], sizes = [8, 16], strides = [1, 1]} : vector<8x64xf32> to vector<8x16xf32>
    %cst_27 = arith.constant dense<0.000000e+00> : vector<8x16xf32>
    %64 = tpu.matmul %62, %63, %cst_27 {dimension_numbers = #tpu.dot_dimension_numbers<[1], [0], [0], [1], [0, 0, 1, 1], [], []>} : vector<8x8xf32>, vector<8x16xf32>, vector<8x16xf32> -> vector<8x16xf32>
    %65 = vector.extract_strided_slice %1 {offsets = [0, 0], sizes = [16, 64], strides = [1, 1]} : vector<64x64xf32> to vector<16x64xf32>
    %cst_28 = arith.constant dense<0.000000e+00> : vector<8x64xf32>
    %66 = tpu.matmul %64, %65, %cst_28 {dimension_numbers = #tpu.dot_dimension_numbers<[1], [0], [0], [1], [0, 0, 1, 1], [], []>} : vector<8x16xf32>, vector<16x64xf32>, vector<8x64xf32> -> vector<8x64xf32>
    %67 = arith.addf %22, %66 : vector<8x64xf32>
    %68 = vector.extract_strided_slice %10 {offsets = [0, 32], sizes = [8, 16], strides = [1, 1]} : vector<8x128xf32> to vector<8x16xf32>
    %69 = vector.extract_strided_slice %12 {offsets = [0, 16], sizes = [8, 16], strides = [1, 1]} : vector<8x64xf32> to vector<8x16xf32>
    %cst_29 = arith.constant dense<0.000000e+00> : vector<8x8xf32>
    %70 = tpu.matmul %68, %69, %cst_29 {dimension_numbers = #tpu.dot_dimension_numbers<[1], [1], [0], [0], [0, 0, 1, 0], [], []>} : vector<8x16xf32>, vector<8x16xf32>, vector<8x8xf32> -> vector<8x8xf32>
    %71 = vector.extract_strided_slice %10 {offsets = [0, 48], sizes = [8, 16], strides = [1, 1]} : vector<8x128xf32> to vector<8x16xf32>
    %72 = vector.extract_strided_slice %17 {offsets = [0, 16], sizes = [8, 16], strides = [1, 1]} : vector<8x64xf32> to vector<8x16xf32>
    %cst_30 = arith.constant dense<0.000000e+00> : vector<8x8xf32>
    %73 = tpu.matmul %71, %72, %cst_30 {dimension_numbers = #tpu.dot_dimension_numbers<[1], [1], [0], [0], [0, 0, 1, 0], [], []>} : vector<8x16xf32>, vector<8x16xf32>, vector<8x8xf32> -> vector<8x8xf32>
    %74 = arith.addf %70, %73 : vector<8x8xf32>
    %cst_31 = arith.constant dense<0xFF800000> : vector<8xf32>
    %75 = vector.multi_reduction <maximumf>, %74, %cst_31 [1] : vector<8x8xf32> to vector<8xf32>
    %76 = vector.shape_cast %75 : vector<8xf32> to vector<8x1xf32>
    %77 = vector.broadcast %76 : vector<8x1xf32> to vector<8x8xf32>
    %78 = arith.subf %74, %77 : vector<8x8xf32>
    %79 = math.exp %78 : vector<8x8xf32>
    %cst_32 = arith.constant dense<0.000000e+00> : vector<8xf32>
    %80 = vector.multi_reduction <add>, %79, %cst_32 [1] : vector<8x8xf32> to vector<8xf32>
    %81 = vector.shape_cast %80 : vector<8xf32> to vector<8x1xf32>
    %82 = tpu.reciprocal %81 {approx = true} : vector<8x1xf32> -> vector<8x1xf32>
    %83 = vector.broadcast %82 : vector<8x1xf32> to vector<8x8xf32>
    %84 = arith.mulf %79, %83 : vector<8x8xf32>
    %85 = vector.extract_strided_slice %13 {offsets = [0, 16], sizes = [8, 16], strides = [1, 1]} : vector<8x64xf32> to vector<8x16xf32>
    %cst_33 = arith.constant dense<0.000000e+00> : vector<8x16xf32>
    %86 = tpu.matmul %84, %85, %cst_33 {dimension_numbers = #tpu.dot_dimension_numbers<[1], [0], [0], [1], [0, 0, 1, 1], [], []>} : vector<8x8xf32>, vector<8x16xf32>, vector<8x16xf32> -> vector<8x16xf32>
    %87 = vector.extract_strided_slice %0 {offsets = [32, 0], sizes = [16, 64], strides = [1, 1]} : vector<128x64xf32> to vector<16x64xf32>
    %cst_34 = arith.constant dense<0.000000e+00> : vector<8x64xf32>
    %88 = tpu.matmul %86, %87, %cst_34 {dimension_numbers = #tpu.dot_dimension_numbers<[1], [0], [0], [1], [0, 0, 1, 1], [], []>} : vector<8x16xf32>, vector<16x64xf32>, vector<8x64xf32> -> vector<8x64xf32>
    %89 = arith.addf %49, %88 : vector<8x64xf32>
    %90 = vector.extract_strided_slice %18 {offsets = [0, 16], sizes = [8, 16], strides = [1, 1]} : vector<8x64xf32> to vector<8x16xf32>
    %cst_35 = arith.constant dense<0.000000e+00> : vector<8x16xf32>
    %91 = tpu.matmul %84, %90, %cst_35 {dimension_numbers = #tpu.dot_dimension_numbers<[1], [0], [0], [1], [0, 0, 1, 1], [], []>} : vector<8x8xf32>, vector<8x16xf32>, vector<8x16xf32> -> vector<8x16xf32>
    %92 = vector.extract_strided_slice %0 {offsets = [48, 0], sizes = [16, 64], strides = [1, 1]} : vector<128x64xf32> to vector<16x64xf32>
    %cst_36 = arith.constant dense<0.000000e+00> : vector<8x64xf32>
    %93 = tpu.matmul %91, %92, %cst_36 {dimension_numbers = #tpu.dot_dimension_numbers<[1], [0], [0], [1], [0, 0, 1, 1], [], []>} : vector<8x16xf32>, vector<16x64xf32>, vector<8x64xf32> -> vector<8x64xf32>
    %94 = arith.addf %89, %93 : vector<8x64xf32>
    %95 = vector.extract_strided_slice %14 {offsets = [0, 32], sizes = [8, 32], strides = [1, 1]} : vector<8x128xf32> to vector<8x32xf32>
    %96 = vector.extract_strided_slice %15 {offsets = [0, 32], sizes = [8, 32], strides = [1, 1]} : vector<8x128xf32> to vector<8x32xf32>
    %cst_37 = arith.constant dense<0.000000e+00> : vector<8x8xf32>
    %97 = tpu.matmul %95, %96, %cst_37 {dimension_numbers = #tpu.dot_dimension_numbers<[1], [1], [0], [0], [0, 0, 1, 0], [], []>} : vector<8x32xf32>, vector<8x32xf32>, vector<8x8xf32> -> vector<8x8xf32>
    %cst_38 = arith.constant dense<0xFF800000> : vector<8xf32>
    %98 = vector.multi_reduction <maximumf>, %97, %cst_38 [1] : vector<8x8xf32> to vector<8xf32>
    %99 = vector.shape_cast %98 : vector<8xf32> to vector<8x1xf32>
    %100 = vector.broadcast %99 : vector<8x1xf32> to vector<8x8xf32>
    %101 = arith.subf %97, %100 : vector<8x8xf32>
    %102 = math.exp %101 : vector<8x8xf32>
    %cst_39 = arith.constant dense<0.000000e+00> : vector<8xf32>
    %103 = vector.multi_reduction <add>, %102, %cst_39 [1] : vector<8x8xf32> to vector<8xf32>
    %104 = vector.shape_cast %103 : vector<8xf32> to vector<8x1xf32>
    %105 = tpu.reciprocal %104 {approx = true} : vector<8x1xf32> -> vector<8x1xf32>
    %106 = vector.broadcast %105 : vector<8x1xf32> to vector<8x8xf32>
    %107 = arith.mulf %102, %106 : vector<8x8xf32>
    %108 = vector.extract_strided_slice %18 {offsets = [0, 16], sizes = [8, 16], strides = [1, 1]} : vector<8x64xf32> to vector<8x16xf32>
    %cst_40 = arith.constant dense<0.000000e+00> : vector<8x16xf32>
    %109 = tpu.matmul %107, %108, %cst_40 {dimension_numbers = #tpu.dot_dimension_numbers<[1], [0], [0], [1], [0, 0, 1, 1], [], []>} : vector<8x8xf32>, vector<8x16xf32>, vector<8x16xf32> -> vector<8x16xf32>
    %110 = vector.extract_strided_slice %1 {offsets = [16, 0], sizes = [16, 64], strides = [1, 1]} : vector<64x64xf32> to vector<16x64xf32>
    %cst_41 = arith.constant dense<0.000000e+00> : vector<8x64xf32>
    %111 = tpu.matmul %109, %110, %cst_41 {dimension_numbers = #tpu.dot_dimension_numbers<[1], [0], [0], [1], [0, 0, 1, 1], [], []>} : vector<8x16xf32>, vector<16x64xf32>, vector<8x64xf32> -> vector<8x64xf32>
    %112 = arith.addf %67, %111 : vector<8x64xf32>
    %113 = vector.extract_strided_slice %10 {offsets = [0, 64], sizes = [8, 16], strides = [1, 1]} : vector<8x128xf32> to vector<8x16xf32>
    %114 = vector.extract_strided_slice %12 {offsets = [0, 32], sizes = [8, 16], strides = [1, 1]} : vector<8x64xf32> to vector<8x16xf32>
    %cst_42 = arith.constant dense<0.000000e+00> : vector<8x8xf32>
    %115 = tpu.matmul %113, %114, %cst_42 {dimension_numbers = #tpu.dot_dimension_numbers<[1], [1], [0], [0], [0, 0, 1, 0], [], []>} : vector<8x16xf32>, vector<8x16xf32>, vector<8x8xf32> -> vector<8x8xf32>
    %116 = vector.extract_strided_slice %10 {offsets = [0, 80], sizes = [8, 16], strides = [1, 1]} : vector<8x128xf32> to vector<8x16xf32>
    %117 = vector.extract_strided_slice %17 {offsets = [0, 32], sizes = [8, 16], strides = [1, 1]} : vector<8x64xf32> to vector<8x16xf32>
    %cst_43 = arith.constant dense<0.000000e+00> : vector<8x8xf32>
    %118 = tpu.matmul %116, %117, %cst_43 {dimension_numbers = #tpu.dot_dimension_numbers<[1], [1], [0], [0], [0, 0, 1, 0], [], []>} : vector<8x16xf32>, vector<8x16xf32>, vector<8x8xf32> -> vector<8x8xf32>
    %119 = arith.addf %115, %118 : vector<8x8xf32>
    %cst_44 = arith.constant dense<0xFF800000> : vector<8xf32>
    %120 = vector.multi_reduction <maximumf>, %119, %cst_44 [1] : vector<8x8xf32> to vector<8xf32>
    %121 = vector.shape_cast %120 : vector<8xf32> to vector<8x1xf32>
    %122 = vector.broadcast %121 : vector<8x1xf32> to vector<8x8xf32>
    %123 = arith.subf %119, %122 : vector<8x8xf32>
    %124 = math.exp %123 : vector<8x8xf32>
    %cst_45 = arith.constant dense<0.000000e+00> : vector<8xf32>
    %125 = vector.multi_reduction <add>, %124, %cst_45 [1] : vector<8x8xf32> to vector<8xf32>
    %126 = vector.shape_cast %125 : vector<8xf32> to vector<8x1xf32>
    %127 = tpu.reciprocal %126 {approx = true} : vector<8x1xf32> -> vector<8x1xf32>
    %128 = vector.broadcast %127 : vector<8x1xf32> to vector<8x8xf32>
    %129 = arith.mulf %124, %128 : vector<8x8xf32>
    %130 = vector.extract_strided_slice %13 {offsets = [0, 32], sizes = [8, 16], strides = [1, 1]} : vector<8x64xf32> to vector<8x16xf32>
    %cst_46 = arith.constant dense<0.000000e+00> : vector<8x16xf32>
    %131 = tpu.matmul %129, %130, %cst_46 {dimension_numbers = #tpu.dot_dimension_numbers<[1], [0], [0], [1], [0, 0, 1, 1], [], []>} : vector<8x8xf32>, vector<8x16xf32>, vector<8x16xf32> -> vector<8x16xf32>
    %132 = vector.extract_strided_slice %0 {offsets = [64, 0], sizes = [16, 64], strides = [1, 1]} : vector<128x64xf32> to vector<16x64xf32>
    %cst_47 = arith.constant dense<0.000000e+00> : vector<8x64xf32>
    %133 = tpu.matmul %131, %132, %cst_47 {dimension_numbers = #tpu.dot_dimension_numbers<[1], [0], [0], [1], [0, 0, 1, 1], [], []>} : vector<8x16xf32>, vector<16x64xf32>, vector<8x64xf32> -> vector<8x64xf32>
    %134 = arith.addf %94, %133 : vector<8x64xf32>
    %135 = vector.extract_strided_slice %18 {offsets = [0, 32], sizes = [8, 16], strides = [1, 1]} : vector<8x64xf32> to vector<8x16xf32>
    %cst_48 = arith.constant dense<0.000000e+00> : vector<8x16xf32>
    %136 = tpu.matmul %129, %135, %cst_48 {dimension_numbers = #tpu.dot_dimension_numbers<[1], [0], [0], [1], [0, 0, 1, 1], [], []>} : vector<8x8xf32>, vector<8x16xf32>, vector<8x16xf32> -> vector<8x16xf32>
    %137 = vector.extract_strided_slice %0 {offsets = [80, 0], sizes = [16, 64], strides = [1, 1]} : vector<128x64xf32> to vector<16x64xf32>
    %cst_49 = arith.constant dense<0.000000e+00> : vector<8x64xf32>
    %138 = tpu.matmul %136, %137, %cst_49 {dimension_numbers = #tpu.dot_dimension_numbers<[1], [0], [0], [1], [0, 0, 1, 1], [], []>} : vector<8x16xf32>, vector<16x64xf32>, vector<8x64xf32> -> vector<8x64xf32>
    %139 = arith.addf %134, %138 : vector<8x64xf32>
    %140 = vector.extract_strided_slice %14 {offsets = [0, 64], sizes = [8, 32], strides = [1, 1]} : vector<8x128xf32> to vector<8x32xf32>
    %141 = vector.extract_strided_slice %15 {offsets = [0, 64], sizes = [8, 32], strides = [1, 1]} : vector<8x128xf32> to vector<8x32xf32>
    %cst_50 = arith.constant dense<0.000000e+00> : vector<8x8xf32>
    %142 = tpu.matmul %140, %141, %cst_50 {dimension_numbers = #tpu.dot_dimension_numbers<[1], [1], [0], [0], [0, 0, 1, 0], [], []>} : vector<8x32xf32>, vector<8x32xf32>, vector<8x8xf32> -> vector<8x8xf32>
    %cst_51 = arith.constant dense<0xFF800000> : vector<8xf32>
    %143 = vector.multi_reduction <maximumf>, %142, %cst_51 [1] : vector<8x8xf32> to vector<8xf32>
    %144 = vector.shape_cast %143 : vector<8xf32> to vector<8x1xf32>
    %145 = vector.broadcast %144 : vector<8x1xf32> to vector<8x8xf32>
    %146 = arith.subf %142, %145 : vector<8x8xf32>
    %147 = math.exp %146 : vector<8x8xf32>
    %cst_52 = arith.constant dense<0.000000e+00> : vector<8xf32>
    %148 = vector.multi_reduction <add>, %147, %cst_52 [1] : vector<8x8xf32> to vector<8xf32>
    %149 = vector.shape_cast %148 : vector<8xf32> to vector<8x1xf32>
    %150 = tpu.reciprocal %149 {approx = true} : vector<8x1xf32> -> vector<8x1xf32>
    %151 = vector.broadcast %150 : vector<8x1xf32> to vector<8x8xf32>
    %152 = arith.mulf %147, %151 : vector<8x8xf32>
    %153 = vector.extract_strided_slice %18 {offsets = [0, 32], sizes = [8, 16], strides = [1, 1]} : vector<8x64xf32> to vector<8x16xf32>
    %cst_53 = arith.constant dense<0.000000e+00> : vector<8x16xf32>
    %154 = tpu.matmul %152, %153, %cst_53 {dimension_numbers = #tpu.dot_dimension_numbers<[1], [0], [0], [1], [0, 0, 1, 1], [], []>} : vector<8x8xf32>, vector<8x16xf32>, vector<8x16xf32> -> vector<8x16xf32>
    %155 = vector.extract_strided_slice %1 {offsets = [32, 0], sizes = [16, 64], strides = [1, 1]} : vector<64x64xf32> to vector<16x64xf32>
    %cst_54 = arith.constant dense<0.000000e+00> : vector<8x64xf32>
    %156 = tpu.matmul %154, %155, %cst_54 {dimension_numbers = #tpu.dot_dimension_numbers<[1], [0], [0], [1], [0, 0, 1, 1], [], []>} : vector<8x16xf32>, vector<16x64xf32>, vector<8x64xf32> -> vector<8x64xf32>
    %157 = arith.addf %112, %156 : vector<8x64xf32>
    %158 = vector.extract_strided_slice %10 {offsets = [0, 96], sizes = [8, 16], strides = [1, 1]} : vector<8x128xf32> to vector<8x16xf32>
    %159 = vector.extract_strided_slice %12 {offsets = [0, 48], sizes = [8, 16], strides = [1, 1]} : vector<8x64xf32> to vector<8x16xf32>
    %cst_55 = arith.constant dense<0.000000e+00> : vector<8x8xf32>
    %160 = tpu.matmul %158, %159, %cst_55 {dimension_numbers = #tpu.dot_dimension_numbers<[1], [1], [0], [0], [0, 0, 1, 0], [], []>} : vector<8x16xf32>, vector<8x16xf32>, vector<8x8xf32> -> vector<8x8xf32>
    %161 = vector.extract_strided_slice %10 {offsets = [0, 112], sizes = [8, 16], strides = [1, 1]} : vector<8x128xf32> to vector<8x16xf32>
    %162 = vector.extract_strided_slice %17 {offsets = [0, 48], sizes = [8, 16], strides = [1, 1]} : vector<8x64xf32> to vector<8x16xf32>
    %cst_56 = arith.constant dense<0.000000e+00> : vector<8x8xf32>
    %163 = tpu.matmul %161, %162, %cst_56 {dimension_numbers = #tpu.dot_dimension_numbers<[1], [1], [0], [0], [0, 0, 1, 0], [], []>} : vector<8x16xf32>, vector<8x16xf32>, vector<8x8xf32> -> vector<8x8xf32>
    %164 = arith.addf %160, %163 : vector<8x8xf32>
    %cst_57 = arith.constant dense<0xFF800000> : vector<8xf32>
    %165 = vector.multi_reduction <maximumf>, %164, %cst_57 [1] : vector<8x8xf32> to vector<8xf32>
    %166 = vector.shape_cast %165 : vector<8xf32> to vector<8x1xf32>
    %167 = vector.broadcast %166 : vector<8x1xf32> to vector<8x8xf32>
    %168 = arith.subf %164, %167 : vector<8x8xf32>
    %169 = math.exp %168 : vector<8x8xf32>
    %cst_58 = arith.constant dense<0.000000e+00> : vector<8xf32>
    %170 = vector.multi_reduction <add>, %169, %cst_58 [1] : vector<8x8xf32> to vector<8xf32>
    %171 = vector.shape_cast %170 : vector<8xf32> to vector<8x1xf32>
    %172 = tpu.reciprocal %171 {approx = true} : vector<8x1xf32> -> vector<8x1xf32>
    %173 = vector.broadcast %172 : vector<8x1xf32> to vector<8x8xf32>
    %174 = arith.mulf %169, %173 : vector<8x8xf32>
    %175 = vector.extract_strided_slice %13 {offsets = [0, 48], sizes = [8, 16], strides = [1, 1]} : vector<8x64xf32> to vector<8x16xf32>
    %cst_59 = arith.constant dense<0.000000e+00> : vector<8x16xf32>
    %176 = tpu.matmul %174, %175, %cst_59 {dimension_numbers = #tpu.dot_dimension_numbers<[1], [0], [0], [1], [0, 0, 1, 1], [], []>} : vector<8x8xf32>, vector<8x16xf32>, vector<8x16xf32> -> vector<8x16xf32>
    %177 = vector.extract_strided_slice %0 {offsets = [96, 0], sizes = [16, 64], strides = [1, 1]} : vector<128x64xf32> to vector<16x64xf32>
    %cst_60 = arith.constant dense<0.000000e+00> : vector<8x64xf32>
    %178 = tpu.matmul %176, %177, %cst_60 {dimension_numbers = #tpu.dot_dimension_numbers<[1], [0], [0], [1], [0, 0, 1, 1], [], []>} : vector<8x16xf32>, vector<16x64xf32>, vector<8x64xf32> -> vector<8x64xf32>
    %179 = arith.addf %139, %178 : vector<8x64xf32>
    %180 = vector.extract_strided_slice %18 {offsets = [0, 48], sizes = [8, 16], strides = [1, 1]} : vector<8x64xf32> to vector<8x16xf32>
    %cst_61 = arith.constant dense<0.000000e+00> : vector<8x16xf32>
    %181 = tpu.matmul %174, %180, %cst_61 {dimension_numbers = #tpu.dot_dimension_numbers<[1], [0], [0], [1], [0, 0, 1, 1], [], []>} : vector<8x8xf32>, vector<8x16xf32>, vector<8x16xf32> -> vector<8x16xf32>
    %182 = vector.extract_strided_slice %0 {offsets = [112, 0], sizes = [16, 64], strides = [1, 1]} : vector<128x64xf32> to vector<16x64xf32>
    %cst_62 = arith.constant dense<0.000000e+00> : vector<8x64xf32>
    %183 = tpu.matmul %181, %182, %cst_62 {dimension_numbers = #tpu.dot_dimension_numbers<[1], [0], [0], [1], [0, 0, 1, 1], [], []>} : vector<8x16xf32>, vector<16x64xf32>, vector<8x64xf32> -> vector<8x64xf32>
    %184 = arith.addf %179, %183 : vector<8x64xf32>
    %185 = vector.extract_strided_slice %14 {offsets = [0, 96], sizes = [8, 32], strides = [1, 1]} : vector<8x128xf32> to vector<8x32xf32>
    %186 = vector.extract_strided_slice %15 {offsets = [0, 96], sizes = [8, 32], strides = [1, 1]} : vector<8x128xf32> to vector<8x32xf32>
    %cst_63 = arith.constant dense<0.000000e+00> : vector<8x8xf32>
    %187 = tpu.matmul %185, %186, %cst_63 {dimension_numbers = #tpu.dot_dimension_numbers<[1], [1], [0], [0], [0, 0, 1, 0], [], []>} : vector<8x32xf32>, vector<8x32xf32>, vector<8x8xf32> -> vector<8x8xf32>
    %cst_64 = arith.constant dense<0xFF800000> : vector<8xf32>
    %188 = vector.multi_reduction <maximumf>, %187, %cst_64 [1] : vector<8x8xf32> to vector<8xf32>
    %189 = vector.shape_cast %188 : vector<8xf32> to vector<8x1xf32>
    %190 = vector.broadcast %189 : vector<8x1xf32> to vector<8x8xf32>
    %191 = arith.subf %187, %190 : vector<8x8xf32>
    %192 = math.exp %191 : vector<8x8xf32>
    %cst_65 = arith.constant dense<0.000000e+00> : vector<8xf32>
    %193 = vector.multi_reduction <add>, %192, %cst_65 [1] : vector<8x8xf32> to vector<8xf32>
    %194 = vector.shape_cast %193 : vector<8xf32> to vector<8x1xf32>
    %195 = tpu.reciprocal %194 {approx = true} : vector<8x1xf32> -> vector<8x1xf32>
    %196 = vector.broadcast %195 : vector<8x1xf32> to vector<8x8xf32>
    %197 = arith.mulf %192, %196 : vector<8x8xf32>
    %198 = vector.extract_strided_slice %18 {offsets = [0, 48], sizes = [8, 16], strides = [1, 1]} : vector<8x64xf32> to vector<8x16xf32>
    %cst_66 = arith.constant dense<0.000000e+00> : vector<8x16xf32>
    %199 = tpu.matmul %197, %198, %cst_66 {dimension_numbers = #tpu.dot_dimension_numbers<[1], [0], [0], [1], [0, 0, 1, 1], [], []>} : vector<8x8xf32>, vector<8x16xf32>, vector<8x16xf32> -> vector<8x16xf32>
    %200 = vector.extract_strided_slice %1 {offsets = [48, 0], sizes = [16, 64], strides = [1, 1]} : vector<64x64xf32> to vector<16x64xf32>
    %cst_67 = arith.constant dense<0.000000e+00> : vector<8x64xf32>
    %201 = tpu.matmul %199, %200, %cst_67 {dimension_numbers = #tpu.dot_dimension_numbers<[1], [0], [0], [1], [0, 0, 1, 1], [], []>} : vector<8x16xf32>, vector<16x64xf32>, vector<8x64xf32> -> vector<8x64xf32>
    %202 = arith.addf %157, %201 : vector<8x64xf32>
    %203 = tpu.concatenate %184, %202 in 1 : vector<8x64xf32>, vector<8x64xf32> -> vector<8x128xf32>
    %204 = arith.addf %203, %10 : vector<8x128xf32>
    %c0_68 = arith.constant 0 : index
    %c0_69 = arith.constant 0 : index
    %205 = vector.load %arg9[%c0_68, %c0_69] : memref<16x128xf32, #tpu.memory_space<vmem>>, vector<8x128xf32>
    tpu.vector_store %arg9[%c0_68, %c0_69], %204 {strides = array<i32>} : memref<16x128xf32, #tpu.memory_space<vmem>>, vector<8x128xf32>,
    %206 = vector.extract_strided_slice %6 {offsets = [8, 0], sizes = [8, 128], strides = [1, 1]} : vector<16x320xf32> to vector<8x128xf32>
    %207 = vector.extract_strided_slice %6 {offsets = [8, 128], sizes = [8, 64], strides = [1, 1]} : vector<16x320xf32> to vector<8x64xf32>
    %208 = vector.extract_strided_slice %6 {offsets = [8, 192], sizes = [8, 64], strides = [1, 1]} : vector<16x320xf32> to vector<8x64xf32>
    %209 = vector.extract_strided_slice %6 {offsets = [8, 256], sizes = [8, 64], strides = [1, 1]} : vector<16x320xf32> to vector<8x64xf32>
    %210 = vector.extract_strided_slice %9 {offsets = [8, 0], sizes = [8, 128], strides = [1, 1]} : vector<16x448xf32> to vector<8x128xf32>
    %211 = vector.extract_strided_slice %9 {offsets = [8, 128], sizes = [8, 128], strides = [1, 1]} : vector<16x448xf32> to vector<8x128xf32>
    %212 = vector.extract_strided_slice %9 {offsets = [8, 256], sizes = [8, 64], strides = [1, 1]} : vector<16x448xf32> to vector<8x64xf32>
    %213 = vector.extract_strided_slice %9 {offsets = [8, 320], sizes = [8, 64], strides = [1, 1]} : vector<16x448xf32> to vector<8x64xf32>
    %214 = vector.extract_strided_slice %9 {offsets = [8, 384], sizes = [8, 64], strides = [1, 1]} : vector<16x448xf32> to vector<8x64xf32>
    %215 = vector.broadcast %2 : vector<1x64xf32> to vector<8x64xf32>
    %216 = arith.addf %207, %215 : vector<8x64xf32>
    %217 = vector.broadcast %3 : vector<1x64xf32> to vector<8x64xf32>
    %218 = arith.addf %212, %217 : vector<8x64xf32>
    %219 = vector.extract_strided_slice %206 {offsets = [0, 0], sizes = [8, 16], strides = [1, 1]} : vector<8x128xf32> to vector<8x16xf32>
    %220 = vector.extract_strided_slice %208 {offsets = [0, 0], sizes = [8, 16], strides = [1, 1]} : vector<8x64xf32> to vector<8x16xf32>
    %cst_70 = arith.constant dense<0.000000e+00> : vector<8x8xf32>
    %221 = tpu.matmul %219, %220, %cst_70 {dimension_numbers = #tpu.dot_dimension_numbers<[1], [1], [0], [0], [0, 0, 1, 0], [], []>} : vector<8x16xf32>, vector<8x16xf32>, vector<8x8xf32> -> vector<8x8xf32>
    %222 = vector.extract_strided_slice %206 {offsets = [0, 16], sizes = [8, 16], strides = [1, 1]} : vector<8x128xf32> to vector<8x16xf32>
    %223 = vector.extract_strided_slice %213 {offsets = [0, 0], sizes = [8, 16], strides = [1, 1]} : vector<8x64xf32> to vector<8x16xf32>
    %cst_71 = arith.constant dense<0.000000e+00> : vector<8x8xf32>
    %224 = tpu.matmul %222, %223, %cst_71 {dimension_numbers = #tpu.dot_dimension_numbers<[1], [1], [0], [0], [0, 0, 1, 0], [], []>} : vector<8x16xf32>, vector<8x16xf32>, vector<8x8xf32> -> vector<8x8xf32>
    %225 = arith.addf %221, %224 : vector<8x8xf32>
    %cst_72 = arith.constant dense<0xFF800000> : vector<8xf32>
    %226 = vector.multi_reduction <maximumf>, %225, %cst_72 [1] : vector<8x8xf32> to vector<8xf32>
    %227 = vector.shape_cast %226 : vector<8xf32> to vector<8x1xf32>
    %228 = vector.broadcast %227 : vector<8x1xf32> to vector<8x8xf32>
    %229 = arith.subf %225, %228 : vector<8x8xf32>
    %230 = math.exp %229 : vector<8x8xf32>
    %cst_73 = arith.constant dense<0.000000e+00> : vector<8xf32>
    %231 = vector.multi_reduction <add>, %230, %cst_73 [1] : vector<8x8xf32> to vector<8xf32>
    %232 = vector.shape_cast %231 : vector<8xf32> to vector<8x1xf32>
    %233 = tpu.reciprocal %232 {approx = true} : vector<8x1xf32> -> vector<8x1xf32>
    %234 = vector.broadcast %233 : vector<8x1xf32> to vector<8x8xf32>
    %235 = arith.mulf %230, %234 : vector<8x8xf32>
    %236 = vector.extract_strided_slice %209 {offsets = [0, 0], sizes = [8, 16], strides = [1, 1]} : vector<8x64xf32> to vector<8x16xf32>
    %cst_74 = arith.constant dense<0.000000e+00> : vector<8x16xf32>
    %237 = tpu.matmul %235, %236, %cst_74 {dimension_numbers = #tpu.dot_dimension_numbers<[1], [0], [0], [1], [0, 0, 1, 1], [], []>} : vector<8x8xf32>, vector<8x16xf32>, vector<8x16xf32> -> vector<8x16xf32>
    %238 = vector.extract_strided_slice %0 {offsets = [0, 0], sizes = [16, 64], strides = [1, 1]} : vector<128x64xf32> to vector<16x64xf32>
    %cst_75 = arith.constant dense<0.000000e+00> : vector<8x64xf32>
    %239 = tpu.matmul %237, %238, %cst_75 {dimension_numbers = #tpu.dot_dimension_numbers<[1], [0], [0], [1], [0, 0, 1, 1], [], []>} : vector<8x16xf32>, vector<16x64xf32>, vector<8x64xf32> -> vector<8x64xf32>
    %240 = arith.addf %216, %239 : vector<8x64xf32>
    %241 = vector.extract_strided_slice %214 {offsets = [0, 0], sizes = [8, 16], strides = [1, 1]} : vector<8x64xf32> to vector<8x16xf32>
    %cst_76 = arith.constant dense<0.000000e+00> : vector<8x16xf32>
    %242 = tpu.matmul %235, %241, %cst_76 {dimension_numbers = #tpu.dot_dimension_numbers<[1], [0], [0], [1], [0, 0, 1, 1], [], []>} : vector<8x8xf32>, vector<8x16xf32>, vector<8x16xf32> -> vector<8x16xf32>
    %243 = vector.extract_strided_slice %0 {offsets = [16, 0], sizes = [16, 64], strides = [1, 1]} : vector<128x64xf32> to vector<16x64xf32>
    %cst_77 = arith.constant dense<0.000000e+00> : vector<8x64xf32>
    %244 = tpu.matmul %242, %243, %cst_77 {dimension_numbers = #tpu.dot_dimension_numbers<[1], [0], [0], [1], [0, 0, 1, 1], [], []>} : vector<8x16xf32>, vector<16x64xf32>, vector<8x64xf32> -> vector<8x64xf32>
    %245 = arith.addf %240, %244 : vector<8x64xf32>
    %246 = vector.extract_strided_slice %210 {offsets = [0, 0], sizes = [8, 32], strides = [1, 1]} : vector<8x128xf32> to vector<8x32xf32>
    %247 = vector.extract_strided_slice %211 {offsets = [0, 0], sizes = [8, 32], strides = [1, 1]} : vector<8x128xf32> to vector<8x32xf32>
    %cst_78 = arith.constant dense<0.000000e+00> : vector<8x8xf32>
    %248 = tpu.matmul %246, %247, %cst_78 {dimension_numbers = #tpu.dot_dimension_numbers<[1], [1], [0], [0], [0, 0, 1, 0], [], []>} : vector<8x32xf32>, vector<8x32xf32>, vector<8x8xf32> -> vector<8x8xf32>
    %cst_79 = arith.constant dense<0xFF800000> : vector<8xf32>
    %249 = vector.multi_reduction <maximumf>, %248, %cst_79 [1] : vector<8x8xf32> to vector<8xf32>
    %250 = vector.shape_cast %249 : vector<8xf32> to vector<8x1xf32>
    %251 = vector.broadcast %250 : vector<8x1xf32> to vector<8x8xf32>
    %252 = arith.subf %248, %251 : vector<8x8xf32>
    %253 = math.exp %252 : vector<8x8xf32>
    %cst_80 = arith.constant dense<0.000000e+00> : vector<8xf32>
    %254 = vector.multi_reduction <add>, %253, %cst_80 [1] : vector<8x8xf32> to vector<8xf32>
    %255 = vector.shape_cast %254 : vector<8xf32> to vector<8x1xf32>
    %256 = tpu.reciprocal %255 {approx = true} : vector<8x1xf32> -> vector<8x1xf32>
    %257 = vector.broadcast %256 : vector<8x1xf32> to vector<8x8xf32>
    %258 = arith.mulf %253, %257 : vector<8x8xf32>
    %259 = vector.extract_strided_slice %214 {offsets = [0, 0], sizes = [8, 16], strides = [1, 1]} : vector<8x64xf32> to vector<8x16xf32>
    %cst_81 = arith.constant dense<0.000000e+00> : vector<8x16xf32>
    %260 = tpu.matmul %258, %259, %cst_81 {dimension_numbers = #tpu.dot_dimension_numbers<[1], [0], [0], [1], [0, 0, 1, 1], [], []>} : vector<8x8xf32>, vector<8x16xf32>, vector<8x16xf32> -> vector<8x16xf32>
    %261 = vector.extract_strided_slice %1 {offsets = [0, 0], sizes = [16, 64], strides = [1, 1]} : vector<64x64xf32> to vector<16x64xf32>
    %cst_82 = arith.constant dense<0.000000e+00> : vector<8x64xf32>
    %262 = tpu.matmul %260, %261, %cst_82 {dimension_numbers = #tpu.dot_dimension_numbers<[1], [0], [0], [1], [0, 0, 1, 1], [], []>} : vector<8x16xf32>, vector<16x64xf32>, vector<8x64xf32> -> vector<8x64xf32>
    %263 = arith.addf %218, %262 : vector<8x64xf32>
    %264 = vector.extract_strided_slice %206 {offsets = [0, 32], sizes = [8, 16], strides = [1, 1]} : vector<8x128xf32> to vector<8x16xf32>
    %265 = vector.extract_strided_slice %208 {offsets = [0, 16], sizes = [8, 16], strides = [1, 1]} : vector<8x64xf32> to vector<8x16xf32>
    %cst_83 = arith.constant dense<0.000000e+00> : vector<8x8xf32>
    %266 = tpu.matmul %264, %265, %cst_83 {dimension_numbers = #tpu.dot_dimension_numbers<[1], [1], [0], [0], [0, 0, 1, 0], [], []>} : vector<8x16xf32>, vector<8x16xf32>, vector<8x8xf32> -> vector<8x8xf32>
    %267 = vector.extract_strided_slice %206 {offsets = [0, 48], sizes = [8, 16], strides = [1, 1]} : vector<8x128xf32> to vector<8x16xf32>
    %268 = vector.extract_strided_slice %213 {offsets = [0, 16], sizes = [8, 16], strides = [1, 1]} : vector<8x64xf32> to vector<8x16xf32>
    %cst_84 = arith.constant dense<0.000000e+00> : vector<8x8xf32>
    %269 = tpu.matmul %267, %268, %cst_84 {dimension_numbers = #tpu.dot_dimension_numbers<[1], [1], [0], [0], [0, 0, 1, 0], [], []>} : vector<8x16xf32>, vector<8x16xf32>, vector<8x8xf32> -> vector<8x8xf32>
    %270 = arith.addf %266, %269 : vector<8x8xf32>
    %cst_85 = arith.constant dense<0xFF800000> : vector<8xf32>
    %271 = vector.multi_reduction <maximumf>, %270, %cst_85 [1] : vector<8x8xf32> to vector<8xf32>
    %272 = vector.shape_cast %271 : vector<8xf32> to vector<8x1xf32>
    %273 = vector.broadcast %272 : vector<8x1xf32> to vector<8x8xf32>
    %274 = arith.subf %270, %273 : vector<8x8xf32>
    %275 = math.exp %274 : vector<8x8xf32>
    %cst_86 = arith.constant dense<0.000000e+00> : vector<8xf32>
    %276 = vector.multi_reduction <add>, %275, %cst_86 [1] : vector<8x8xf32> to vector<8xf32>
    %277 = vector.shape_cast %276 : vector<8xf32> to vector<8x1xf32>
    %278 = tpu.reciprocal %277 {approx = true} : vector<8x1xf32> -> vector<8x1xf32>
    %279 = vector.broadcast %278 : vector<8x1xf32> to vector<8x8xf32>
    %280 = arith.mulf %275, %279 : vector<8x8xf32>
    %281 = vector.extract_strided_slice %209 {offsets = [0, 16], sizes = [8, 16], strides = [1, 1]} : vector<8x64xf32> to vector<8x16xf32>
    %cst_87 = arith.constant dense<0.000000e+00> : vector<8x16xf32>
    %282 = tpu.matmul %280, %281, %cst_87 {dimension_numbers = #tpu.dot_dimension_numbers<[1], [0], [0], [1], [0, 0, 1, 1], [], []>} : vector<8x8xf32>, vector<8x16xf32>, vector<8x16xf32> -> vector<8x16xf32>
    %283 = vector.extract_strided_slice %0 {offsets = [32, 0], sizes = [16, 64], strides = [1, 1]} : vector<128x64xf32> to vector<16x64xf32>
    %cst_88 = arith.constant dense<0.000000e+00> : vector<8x64xf32>
    %284 = tpu.matmul %282, %283, %cst_88 {dimension_numbers = #tpu.dot_dimension_numbers<[1], [0], [0], [1], [0, 0, 1, 1], [], []>} : vector<8x16xf32>, vector<16x64xf32>, vector<8x64xf32> -> vector<8x64xf32>
    %285 = arith.addf %245, %284 : vector<8x64xf32>
    %286 = vector.extract_strided_slice %214 {offsets = [0, 16], sizes = [8, 16], strides = [1, 1]} : vector<8x64xf32> to vector<8x16xf32>
    %cst_89 = arith.constant dense<0.000000e+00> : vector<8x16xf32>
    %287 = tpu.matmul %280, %286, %cst_89 {dimension_numbers = #tpu.dot_dimension_numbers<[1], [0], [0], [1], [0, 0, 1, 1], [], []>} : vector<8x8xf32>, vector<8x16xf32>, vector<8x16xf32> -> vector<8x16xf32>
    %288 = vector.extract_strided_slice %0 {offsets = [48, 0], sizes = [16, 64], strides = [1, 1]} : vector<128x64xf32> to vector<16x64xf32>
    %cst_90 = arith.constant dense<0.000000e+00> : vector<8x64xf32>
    %289 = tpu.matmul %287, %288, %cst_90 {dimension_numbers = #tpu.dot_dimension_numbers<[1], [0], [0], [1], [0, 0, 1, 1], [], []>} : vector<8x16xf32>, vector<16x64xf32>, vector<8x64xf32> -> vector<8x64xf32>
    %290 = arith.addf %285, %289 : vector<8x64xf32>
    %291 = vector.extract_strided_slice %210 {offsets = [0, 32], sizes = [8, 32], strides = [1, 1]} : vector<8x128xf32> to vector<8x32xf32>
    %292 = vector.extract_strided_slice %211 {offsets = [0, 32], sizes = [8, 32], strides = [1, 1]} : vector<8x128xf32> to vector<8x32xf32>
    %cst_91 = arith.constant dense<0.000000e+00> : vector<8x8xf32>
    %293 = tpu.matmul %291, %292, %cst_91 {dimension_numbers = #tpu.dot_dimension_numbers<[1], [1], [0], [0], [0, 0, 1, 0], [], []>} : vector<8x32xf32>, vector<8x32xf32>, vector<8x8xf32> -> vector<8x8xf32>
    %cst_92 = arith.constant dense<0xFF800000> : vector<8xf32>
    %294 = vector.multi_reduction <maximumf>, %293, %cst_92 [1] : vector<8x8xf32> to vector<8xf32>
    %295 = vector.shape_cast %294 : vector<8xf32> to vector<8x1xf32>
    %296 = vector.broadcast %295 : vector<8x1xf32> to vector<8x8xf32>
    %297 = arith.subf %293, %296 : vector<8x8xf32>
    %298 = math.exp %297 : vector<8x8xf32>
    %cst_93 = arith.constant dense<0.000000e+00> : vector<8xf32>
    %299 = vector.multi_reduction <add>, %298, %cst_93 [1] : vector<8x8xf32> to vector<8xf32>
    %300 = vector.shape_cast %299 : vector<8xf32> to vector<8x1xf32>
    %301 = tpu.reciprocal %300 {approx = true} : vector<8x1xf32> -> vector<8x1xf32>
    %302 = vector.broadcast %301 : vector<8x1xf32> to vector<8x8xf32>
    %303 = arith.mulf %298, %302 : vector<8x8xf32>
    %304 = vector.extract_strided_slice %214 {offsets = [0, 16], sizes = [8, 16], strides = [1, 1]} : vector<8x64xf32> to vector<8x16xf32>
    %cst_94 = arith.constant dense<0.000000e+00> : vector<8x16xf32>
    %305 = tpu.matmul %303, %304, %cst_94 {dimension_numbers = #tpu.dot_dimension_numbers<[1], [0], [0], [1], [0, 0, 1, 1], [], []>} : vector<8x8xf32>, vector<8x16xf32>, vector<8x16xf32> -> vector<8x16xf32>
    %306 = vector.extract_strided_slice %1 {offsets = [16, 0], sizes = [16, 64], strides = [1, 1]} : vector<64x64xf32> to vector<16x64xf32>
    %cst_95 = arith.constant dense<0.000000e+00> : vector<8x64xf32>
    %307 = tpu.matmul %305, %306, %cst_95 {dimension_numbers = #tpu.dot_dimension_numbers<[1], [0], [0], [1], [0, 0, 1, 1], [], []>} : vector<8x16xf32>, vector<16x64xf32>, vector<8x64xf32> -> vector<8x64xf32>
    %308 = arith.addf %263, %307 : vector<8x64xf32>
    %309 = vector.extract_strided_slice %206 {offsets = [0, 64], sizes = [8, 16], strides = [1, 1]} : vector<8x128xf32> to vector<8x16xf32>
    %310 = vector.extract_strided_slice %208 {offsets = [0, 32], sizes = [8, 16], strides = [1, 1]} : vector<8x64xf32> to vector<8x16xf32>
    %cst_96 = arith.constant dense<0.000000e+00> : vector<8x8xf32>
    %311 = tpu.matmul %309, %310, %cst_96 {dimension_numbers = #tpu.dot_dimension_numbers<[1], [1], [0], [0], [0, 0, 1, 0], [], []>} : vector<8x16xf32>, vector<8x16xf32>, vector<8x8xf32> -> vector<8x8xf32>
    %312 = vector.extract_strided_slice %206 {offsets = [0, 80], sizes = [8, 16], strides = [1, 1]} : vector<8x128xf32> to vector<8x16xf32>
    %313 = vector.extract_strided_slice %213 {offsets = [0, 32], sizes = [8, 16], strides = [1, 1]} : vector<8x64xf32> to vector<8x16xf32>
    %cst_97 = arith.constant dense<0.000000e+00> : vector<8x8xf32>
    %314 = tpu.matmul %312, %313, %cst_97 {dimension_numbers = #tpu.dot_dimension_numbers<[1], [1], [0], [0], [0, 0, 1, 0], [], []>} : vector<8x16xf32>, vector<8x16xf32>, vector<8x8xf32> -> vector<8x8xf32>
    %315 = arith.addf %311, %314 : vector<8x8xf32>
    %cst_98 = arith.constant dense<0xFF800000> : vector<8xf32>
    %316 = vector.multi_reduction <maximumf>, %315, %cst_98 [1] : vector<8x8xf32> to vector<8xf32>
    %317 = vector.shape_cast %316 : vector<8xf32> to vector<8x1xf32>
    %318 = vector.broadcast %317 : vector<8x1xf32> to vector<8x8xf32>
    %319 = arith.subf %315, %318 : vector<8x8xf32>
    %320 = math.exp %319 : vector<8x8xf32>
    %cst_99 = arith.constant dense<0.000000e+00> : vector<8xf32>
    %321 = vector.multi_reduction <add>, %320, %cst_99 [1] : vector<8x8xf32> to vector<8xf32>
    %322 = vector.shape_cast %321 : vector<8xf32> to vector<8x1xf32>
    %323 = tpu.reciprocal %322 {approx = true} : vector<8x1xf32> -> vector<8x1xf32>
    %324 = vector.broadcast %323 : vector<8x1xf32> to vector<8x8xf32>
    %325 = arith.mulf %320, %324 : vector<8x8xf32>
    %326 = vector.extract_strided_slice %209 {offsets = [0, 32], sizes = [8, 16], strides = [1, 1]} : vector<8x64xf32> to vector<8x16xf32>
    %cst_100 = arith.constant dense<0.000000e+00> : vector<8x16xf32>
    %327 = tpu.matmul %325, %326, %cst_100 {dimension_numbers = #tpu.dot_dimension_numbers<[1], [0], [0], [1], [0, 0, 1, 1], [], []>} : vector<8x8xf32>, vector<8x16xf32>, vector<8x16xf32> -> vector<8x16xf32>
    %328 = vector.extract_strided_slice %0 {offsets = [64, 0], sizes = [16, 64], strides = [1, 1]} : vector<128x64xf32> to vector<16x64xf32>
    %cst_101 = arith.constant dense<0.000000e+00> : vector<8x64xf32>
    %329 = tpu.matmul %327, %328, %cst_101 {dimension_numbers = #tpu.dot_dimension_numbers<[1], [0], [0], [1], [0, 0, 1, 1], [], []>} : vector<8x16xf32>, vector<16x64xf32>, vector<8x64xf32> -> vector<8x64xf32>
    %330 = arith.addf %290, %329 : vector<8x64xf32>
    %331 = vector.extract_strided_slice %214 {offsets = [0, 32], sizes = [8, 16], strides = [1, 1]} : vector<8x64xf32> to vector<8x16xf32>
    %cst_102 = arith.constant dense<0.000000e+00> : vector<8x16xf32>
    %332 = tpu.matmul %325, %331, %cst_102 {dimension_numbers = #tpu.dot_dimension_numbers<[1], [0], [0], [1], [0, 0, 1, 1], [], []>} : vector<8x8xf32>, vector<8x16xf32>, vector<8x16xf32> -> vector<8x16xf32>
    %333 = vector.extract_strided_slice %0 {offsets = [80, 0], sizes = [16, 64], strides = [1, 1]} : vector<128x64xf32> to vector<16x64xf32>
    %cst_103 = arith.constant dense<0.000000e+00> : vector<8x64xf32>
    %334 = tpu.matmul %332, %333, %cst_103 {dimension_numbers = #tpu.dot_dimension_numbers<[1], [0], [0], [1], [0, 0, 1, 1], [], []>} : vector<8x16xf32>, vector<16x64xf32>, vector<8x64xf32> -> vector<8x64xf32>
    %335 = arith.addf %330, %334 : vector<8x64xf32>
    %336 = vector.extract_strided_slice %210 {offsets = [0, 64], sizes = [8, 32], strides = [1, 1]} : vector<8x128xf32> to vector<8x32xf32>
    %337 = vector.extract_strided_slice %211 {offsets = [0, 64], sizes = [8, 32], strides = [1, 1]} : vector<8x128xf32> to vector<8x32xf32>
    %cst_104 = arith.constant dense<0.000000e+00> : vector<8x8xf32>
    %338 = tpu.matmul %336, %337, %cst_104 {dimension_numbers = #tpu.dot_dimension_numbers<[1], [1], [0], [0], [0, 0, 1, 0], [], []>} : vector<8x32xf32>, vector<8x32xf32>, vector<8x8xf32> -> vector<8x8xf32>
    %cst_105 = arith.constant dense<0xFF800000> : vector<8xf32>
    %339 = vector.multi_reduction <maximumf>, %338, %cst_105 [1] : vector<8x8xf32> to vector<8xf32>
    %340 = vector.shape_cast %339 : vector<8xf32> to vector<8x1xf32>
    %341 = vector.broadcast %340 : vector<8x1xf32> to vector<8x8xf32>
    %342 = arith.subf %338, %341 : vector<8x8xf32>
    %343 = math.exp %342 : vector<8x8xf32>
    %cst_106 = arith.constant dense<0.000000e+00> : vector<8xf32>
    %344 = vector.multi_reduction <add>, %343, %cst_106 [1] : vector<8x8xf32> to vector<8xf32>
    %345 = vector.shape_cast %344 : vector<8xf32> to vector<8x1xf32>
    %346 = tpu.reciprocal %345 {approx = true} : vector<8x1xf32> -> vector<8x1xf32>
    %347 = vector.broadcast %346 : vector<8x1xf32> to vector<8x8xf32>
    %348 = arith.mulf %343, %347 : vector<8x8xf32>
    %349 = vector.extract_strided_slice %214 {offsets = [0, 32], sizes = [8, 16], strides = [1, 1]} : vector<8x64xf32> to vector<8x16xf32>
    %cst_107 = arith.constant dense<0.000000e+00> : vector<8x16xf32>
    %350 = tpu.matmul %348, %349, %cst_107 {dimension_numbers = #tpu.dot_dimension_numbers<[1], [0], [0], [1], [0, 0, 1, 1], [], []>} : vector<8x8xf32>, vector<8x16xf32>, vector<8x16xf32> -> vector<8x16xf32>
    %351 = vector.extract_strided_slice %1 {offsets = [32, 0], sizes = [16, 64], strides = [1, 1]} : vector<64x64xf32> to vector<16x64xf32>
    %cst_108 = arith.constant dense<0.000000e+00> : vector<8x64xf32>
    %352 = tpu.matmul %350, %351, %cst_108 {dimension_numbers = #tpu.dot_dimension_numbers<[1], [0], [0], [1], [0, 0, 1, 1], [], []>} : vector<8x16xf32>, vector<16x64xf32>, vector<8x64xf32> -> vector<8x64xf32>
    %353 = arith.addf %308, %352 : vector<8x64xf32>
    %354 = vector.extract_strided_slice %206 {offsets = [0, 96], sizes = [8, 16], strides = [1, 1]} : vector<8x128xf32> to vector<8x16xf32>
    %355 = vector.extract_strided_slice %208 {offsets = [0, 48], sizes = [8, 16], strides = [1, 1]} : vector<8x64xf32> to vector<8x16xf32>
    %cst_109 = arith.constant dense<0.000000e+00> : vector<8x8xf32>
    %356 = tpu.matmul %354, %355, %cst_109 {dimension_numbers = #tpu.dot_dimension_numbers<[1], [1], [0], [0], [0, 0, 1, 0], [], []>} : vector<8x16xf32>, vector<8x16xf32>, vector<8x8xf32> -> vector<8x8xf32>
    %357 = vector.extract_strided_slice %206 {offsets = [0, 112], sizes = [8, 16], strides = [1, 1]} : vector<8x128xf32> to vector<8x16xf32>
    %358 = vector.extract_strided_slice %213 {offsets = [0, 48], sizes = [8, 16], strides = [1, 1]} : vector<8x64xf32> to vector<8x16xf32>
    %cst_110 = arith.constant dense<0.000000e+00> : vector<8x8xf32>
    %359 = tpu.matmul %357, %358, %cst_110 {dimension_numbers = #tpu.dot_dimension_numbers<[1], [1], [0], [0], [0, 0, 1, 0], [], []>} : vector<8x16xf32>, vector<8x16xf32>, vector<8x8xf32> -> vector<8x8xf32>
    %360 = arith.addf %356, %359 : vector<8x8xf32>
    %cst_111 = arith.constant dense<0xFF800000> : vector<8xf32>
    %361 = vector.multi_reduction <maximumf>, %360, %cst_111 [1] : vector<8x8xf32> to vector<8xf32>
    %362 = vector.shape_cast %361 : vector<8xf32> to vector<8x1xf32>
    %363 = vector.broadcast %362 : vector<8x1xf32> to vector<8x8xf32>
    %364 = arith.subf %360, %363 : vector<8x8xf32>
    %365 = math.exp %364 : vector<8x8xf32>
    %cst_112 = arith.constant dense<0.000000e+00> : vector<8xf32>
    %366 = vector.multi_reduction <add>, %365, %cst_112 [1] : vector<8x8xf32> to vector<8xf32>
    %367 = vector.shape_cast %366 : vector<8xf32> to vector<8x1xf32>
    %368 = tpu.reciprocal %367 {approx = true} : vector<8x1xf32> -> vector<8x1xf32>
    %369 = vector.broadcast %368 : vector<8x1xf32> to vector<8x8xf32>
    %370 = arith.mulf %365, %369 : vector<8x8xf32>
    %371 = vector.extract_strided_slice %209 {offsets = [0, 48], sizes = [8, 16], strides = [1, 1]} : vector<8x64xf32> to vector<8x16xf32>
    %cst_113 = arith.constant dense<0.000000e+00> : vector<8x16xf32>
    %372 = tpu.matmul %370, %371, %cst_113 {dimension_numbers = #tpu.dot_dimension_numbers<[1], [0], [0], [1], [0, 0, 1, 1], [], []>} : vector<8x8xf32>, vector<8x16xf32>, vector<8x16xf32> -> vector<8x16xf32>
    %373 = vector.extract_strided_slice %0 {offsets = [96, 0], sizes = [16, 64], strides = [1, 1]} : vector<128x64xf32> to vector<16x64xf32>
    %cst_114 = arith.constant dense<0.000000e+00> : vector<8x64xf32>
    %374 = tpu.matmul %372, %373, %cst_114 {dimension_numbers = #tpu.dot_dimension_numbers<[1], [0], [0], [1], [0, 0, 1, 1], [], []>} : vector<8x16xf32>, vector<16x64xf32>, vector<8x64xf32> -> vector<8x64xf32>
    %375 = arith.addf %335, %374 : vector<8x64xf32>
    %376 = vector.extract_strided_slice %214 {offsets = [0, 48], sizes = [8, 16], strides = [1, 1]} : vector<8x64xf32> to vector<8x16xf32>
    %cst_115 = arith.constant dense<0.000000e+00> : vector<8x16xf32>
    %377 = tpu.matmul %370, %376, %cst_115 {dimension_numbers = #tpu.dot_dimension_numbers<[1], [0], [0], [1], [0, 0, 1, 1], [], []>} : vector<8x8xf32>, vector<8x16xf32>, vector<8x16xf32> -> vector<8x16xf32>
    %378 = vector.extract_strided_slice %0 {offsets = [112, 0], sizes = [16, 64], strides = [1, 1]} : vector<128x64xf32> to vector<16x64xf32>
    %cst_116 = arith.constant dense<0.000000e+00> : vector<8x64xf32>
    %379 = tpu.matmul %377, %378, %cst_116 {dimension_numbers = #tpu.dot_dimension_numbers<[1], [0], [0], [1], [0, 0, 1, 1], [], []>} : vector<8x16xf32>, vector<16x64xf32>, vector<8x64xf32> -> vector<8x64xf32>
    %380 = arith.addf %375, %379 : vector<8x64xf32>
    %381 = vector.extract_strided_slice %210 {offsets = [0, 96], sizes = [8, 32], strides = [1, 1]} : vector<8x128xf32> to vector<8x32xf32>
    %382 = vector.extract_strided_slice %211 {offsets = [0, 96], sizes = [8, 32], strides = [1, 1]} : vector<8x128xf32> to vector<8x32xf32>
    %cst_117 = arith.constant dense<0.000000e+00> : vector<8x8xf32>
    %383 = tpu.matmul %381, %382, %cst_117 {dimension_numbers = #tpu.dot_dimension_numbers<[1], [1], [0], [0], [0, 0, 1, 0], [], []>} : vector<8x32xf32>, vector<8x32xf32>, vector<8x8xf32> -> vector<8x8xf32>
    %cst_118 = arith.constant dense<0xFF800000> : vector<8xf32>
    %384 = vector.multi_reduction <maximumf>, %383, %cst_118 [1] : vector<8x8xf32> to vector<8xf32>
    %385 = vector.shape_cast %384 : vector<8xf32> to vector<8x1xf32>
    %386 = vector.broadcast %385 : vector<8x1xf32> to vector<8x8xf32>
    %387 = arith.subf %383, %386 : vector<8x8xf32>
    %388 = math.exp %387 : vector<8x8xf32>
    %cst_119 = arith.constant dense<0.000000e+00> : vector<8xf32>
    %389 = vector.multi_reduction <add>, %388, %cst_119 [1] : vector<8x8xf32> to vector<8xf32>
    %390 = vector.shape_cast %389 : vector<8xf32> to vector<8x1xf32>
    %391 = tpu.reciprocal %390 {approx = true} : vector<8x1xf32> -> vector<8x1xf32>
    %392 = vector.broadcast %391 : vector<8x1xf32> to vector<8x8xf32>
    %393 = arith.mulf %388, %392 : vector<8x8xf32>
    %394 = vector.extract_strided_slice %214 {offsets = [0, 48], sizes = [8, 16], strides = [1, 1]} : vector<8x64xf32> to vector<8x16xf32>
    %cst_120 = arith.constant dense<0.000000e+00> : vector<8x16xf32>
    %395 = tpu.matmul %393, %394, %cst_120 {dimension_numbers = #tpu.dot_dimension_numbers<[1], [0], [0], [1], [0, 0, 1, 1], [], []>} : vector<8x8xf32>, vector<8x16xf32>, vector<8x16xf32> -> vector<8x16xf32>
    %396 = vector.extract_strided_slice %1 {offsets = [48, 0], sizes = [16, 64], strides = [1, 1]} : vector<64x64xf32> to vector<16x64xf32>
    %cst_121 = arith.constant dense<0.000000e+00> : vector<8x64xf32>
    %397 = tpu.matmul %395, %396, %cst_121 {dimension_numbers = #tpu.dot_dimension_numbers<[1], [0], [0], [1], [0, 0, 1, 1], [], []>} : vector<8x16xf32>, vector<16x64xf32>, vector<8x64xf32> -> vector<8x64xf32>
    %398 = arith.addf %353, %397 : vector<8x64xf32>
    %399 = tpu.concatenate %380, %398 in 1 : vector<8x64xf32>, vector<8x64xf32> -> vector<8x128xf32>
    %400 = arith.addf %399, %206 : vector<8x128xf32>
    %c8 = arith.constant 8 : index
    %c0_122 = arith.constant 0 : index
    %401 = vector.load %arg9[%c8, %c0_122] : memref<16x128xf32, #tpu.memory_space<vmem>>, vector<8x128xf32>
    tpu.vector_store %arg9[%c8, %c0_122], %400 {strides = array<i32>} : memref<16x128xf32, #tpu.memory_space<vmem>>, vector<8x128xf32>,
    return
  }
  func.func @transform_0(%arg0: i32) -> (i32, i32) {
    %c0_i32 = arith.constant 0 : i32
    %c0_i32_0 = arith.constant 0 : i32
    return %arg0, %c0_i32 : i32, i32
  }
  func.func @transform_1(%arg0: i32) -> (i32, i32) {
    %c0_i32 = arith.constant 0 : i32
    %c0_i32_0 = arith.constant 0 : i32
    return %arg0, %c0_i32 : i32, i32
  }
  func.func @transform_2(%arg0: i32) -> (i32, i32) {
    %c0_i32 = arith.constant 0 : i32
    %c0_i32_0 = arith.constant 0 : i32
    %c0_i32_1 = arith.constant 0 : i32
    return %c0_i32, %c0_i32_0 : i32, i32
  }
  func.func @transform_3(%arg0: i32) -> (i32, i32) {
    %c0_i32 = arith.constant 0 : i32
    %c0_i32_0 = arith.constant 0 : i32
    %c0_i32_1 = arith.constant 0 : i32
    return %c0_i32, %c0_i32_0 : i32, i32
  }
  func.func @transform_4(%arg0: i32) -> (i32, i32) {
    %c0_i32 = arith.constant 0 : i32
    %c0_i32_0 = arith.constant 0 : i32
    %c0_i32_1 = arith.constant 0 : i32
    return %c0_i32, %c0_i32_0 : i32, i32
  }
  func.func @transform_5(%arg0: i32) -> (i32, i32) {
    %c0_i32 = arith.constant 0 : i32
    %c0_i32_0 = arith.constant 0 : i32
    %c0_i32_1 = arith.constant 0 : i32
    return %c0_i32, %c0_i32_0 : i32, i32
  }
  func.func @transform_6(%arg0: i32) -> (i32, i32) {
    %c0_i32 = arith.constant 0 : i32
    %c0_i32_0 = arith.constant 0 : i32
    %c0_i32_1 = arith.constant 0 : i32
    return %c0_i32, %c0_i32_0 : i32, i32
  }
  func.func @transform_7(%arg0: i32) -> (i32, i32) {
    %c0_i32 = arith.constant 0 : i32
    %c0_i32_0 = arith.constant 0 : i32
    %c0_i32_1 = arith.constant 0 : i32
    return %c0_i32, %c0_i32_0 : i32, i32
  }
  func.func @transform_8(%arg0: i32) -> (i32, i32) {
    %c0_i32 = arith.constant 0 : i32
    %c0_i32_0 = arith.constant 0 : i32
    return %arg0, %c0_i32 : i32, i32
  }
}

</mosaic_0001>

<llo_original>
// kernel: tpu_custom_call.1
$region0: #{tpu_custom_call.1}
  #allocation0 [shape = 'u32[]', space=smem, size = 0x4, offset = 0x4, fixed_abs, tag = 'smem constant byte address 0x4 - core index']
  #allocation1 [shape = 'u32[144,128]{1,0:T(1,128)}', space=vmem, size = 0x12000, scoped, tag = 'internal scratch']
  %s0 = inlined_call_operand.vmem [shape: f32[32,24], index: 0, kind: input, shape index: {}]
  %s1 = inlined_call_operand.vmem [shape: f32[32,16], index: 1, kind: input, shape index: {}]
  %s2 = inlined_call_operand.vmem [shape: f32[24,320], index: 2, kind: input, shape index: {}]
  %s3 = inlined_call_operand.vmem [shape: f32[16,448], index: 3, kind: input, shape index: {}]
  %s4 = inlined_call_operand.vmem [shape: f32[128,64], index: 4, kind: input, shape index: {}]
  %s5 = inlined_call_operand.vmem [shape: f32[1,64], index: 5, kind: input, shape index: {}]
  %s6 = inlined_call_operand.vmem [shape: f32[64,64], index: 6, kind: input, shape index: {}]
  %s7 = inlined_call_operand.vmem [shape: f32[1,64], index: 7, kind: input, shape index: {}]
  %s8 = inlined_call_operand.hbm [shape: f32[32,128], index: 8, kind: output, shape index: {}]
  %s9 = sld [smem:[#allocation0]]
  $region65: #{tpu_custom_call.1} parent=0
    _
  %s11 = ssub.s32 1, %s9
  %s12 = scalar_select 0, %s11, %s9
  $region1: #{tpu_custom_call.1} parent=0
    #allocation2 [shape = 'u8[16384]{0}', space=vmem, size = 0x4000, scoped, tag = 'output window, operand 0']
    #allocation3 [shape = 's32[2]{0}', space=sflag, size = 0x8, scoped, tag = 'scoped memory for tpu_custom_call.1']
    %13 = vsyncpa [#allocation3], 0
    %s14 = scalar_lea.sflag [#allocation3], 1
    %15 = vsyncpa %s14, 0
    loop: start=0, step=1, limit=4
    $region2: #{tpu_custom_call.1} parent=1 // loop_pre_header
      _
    $region3: #{tpu_custom_call.1} parent=1 // loop_header
      %s17 = sphi 0, %s21
      %p18 = scmp.ge.s32.totalorder %s17, 4
      %s27 = sphi 0, %s29
      %s30 = sphi 0, %s27
      %s31 = sphi 0, %s30
      %s47 = sphi 0, %s31
      %s53 = sphi 0, %s55
      %s56 = sphi 0, %s53
      %s57 = sphi 0, %s56
      %s73 = sphi 0, %s57
      %s77 = sphi 0, %s77
      %s79 = sphi 0, %s77
      %s80 = sphi 0, %s79
      %s94 = sphi 0, %s80
      %s98 = sphi 0, %s98
      %s100 = sphi 0, %s98
      %s101 = sphi 0, %s100
      %s115 = sphi 0, %s101
      %s119 = sphi 0, %s119
      %s121 = sphi 0, %s119
      %s122 = sphi 0, %s121
      %s136 = sphi 0, %s122
      %s140 = sphi 0, %s140
      %s142 = sphi 0, %s140
      %s143 = sphi 0, %s142
      %s157 = sphi 0, %s143
      %s161 = sphi 0, %s161
      %s163 = sphi 0, %s161
      %s164 = sphi 0, %s163
      %s178 = sphi 0, %s164
      %s182 = sphi 0, %s182
      %s184 = sphi 0, %s182
      %s185 = sphi 0, %s184
      %s199 = sphi 0, %s185
      %s205 = sphi 0, %s207
      %s208 = sphi 0, %s205
      %s209 = sphi 0, %s208
      %s225 = sphi 0, %s209
    $region4: #{tpu_custom_call.1} parent=1 // loop_header_branch
      %20 = sbr.rel (%p18) target = $region8
    $region5: #{tpu_custom_call.1} parent=1 // loop_body
      %s22 = ssub.s32 %s17, 1
      %s23 = ssub.s32 %s17, 2
      %s24 = sadd.s32 %s17, 1
      %s25 = ssub.s32 %s17, %s24
      %p26 = scmp.eq.s32.totalorder %s25, 0
      %s28 = sadd.s32 %s27, 1
      %s29 = scalar_select %p26, %s27, %s28
      %p32 = pneg %p26
      %p33 = scmp.eq.s32.totalorder %s17, 1
      %p34 = por %p32, %p33
      %p35 = scmp.ne.s32.totalorder %s27, %s30
      %p36 = scmp.eq.s32.totalorder %s17, 0
      %p37 = por %p35, %p36
      %p38 = scmp.ne.s32.totalorder %s27, %s30
      %p39 = scmp.eq.s32.totalorder %s22, 1
      %p40 = por %p38, %p39
      %p41 = scmp.ne.s32.totalorder %s30, %s31
      %p42 = scmp.eq.s32.totalorder %s22, 0
      %p43 = por %p41, %p42
      %p44 = scmp.ne.s32.totalorder %s30, %s31
      %p45 = scmp.eq.s32.totalorder %s23, 1
      %p46 = por %p44, %p45
      %p48 = scmp.ne.s32.totalorder %s31, %s47
      %p49 = scmp.eq.s32.totalorder %s23, 0
      %p50 = por %p48, %p49
      %s51 = ssub.s32 %s17, %s24
      %p52 = scmp.eq.s32.totalorder %s51, 0
      %s54 = sadd.s32 %s53, 1
      %s55 = scalar_select %p52, %s53, %s54
      %p58 = pneg %p52
      %p59 = scmp.eq.s32.totalorder %s17, 1
      %p60 = por %p58, %p59
      %p61 = scmp.ne.s32.totalorder %s53, %s56
      %p62 = scmp.eq.s32.totalorder %s17, 0
      %p63 = por %p61, %p62
      %p64 = scmp.ne.s32.totalorder %s53, %s56
      %p65 = scmp.eq.s32.totalorder %s22, 1
      %p66 = por %p64, %p65
      %p67 = scmp.ne.s32.totalorder %s56, %s57
      %p68 = scmp.eq.s32.totalorder %s22, 0
      %p69 = por %p67, %p68
      %p70 = scmp.ne.s32.totalorder %s56, %s57
      %p71 = scmp.eq.s32.totalorder %s23, 1
      %p72 = por %p70, %p71
      %p74 = scmp.ne.s32.totalorder %s57, %s73
      %p75 = scmp.eq.s32.totalorder %s23, 0
      %p76 = por %p74, %p75
      %s78 = sadd.s32 %s77, 1
      %p81 = scmp.eq.s32.totalorder %s17, 1
      %p82 = scmp.ne.s32.totalorder %s77, %s79
      %p83 = scmp.eq.s32.totalorder %s17, 0
      %p84 = por %p82, %p83
      %p85 = scmp.ne.s32.totalorder %s77, %s79
      %p86 = scmp.eq.s32.totalorder %s22, 1
      %p87 = por %p85, %p86
      %p88 = scmp.ne.s32.totalorder %s79, %s80
      %p89 = scmp.eq.s32.totalorder %s22, 0
      %p90 = por %p88, %p89
      %p91 = scmp.ne.s32.totalorder %s79, %s80
      %p92 = scmp.eq.s32.totalorder %s23, 1
      %p93 = por %p91, %p92
      %p95 = scmp.ne.s32.totalorder %s80, %s94
      %p96 = scmp.eq.s32.totalorder %s23, 0
      %p97 = por %p95, %p96
      %s99 = sadd.s32 %s98, 1
      %p102 = scmp.eq.s32.totalorder %s17, 1
      %p103 = scmp.ne.s32.totalorder %s98, %s100
      %p104 = scmp.eq.s32.totalorder %s17, 0
      %p105 = por %p103, %p104
      %p106 = scmp.ne.s32.totalorder %s98, %s100
      %p107 = scmp.eq.s32.totalorder %s22, 1
      %p108 = por %p106, %p107
      %p109 = scmp.ne.s32.totalorder %s100, %s101
      %p110 = scmp.eq.s32.totalorder %s22, 0
      %p111 = por %p109, %p110
      %p112 = scmp.ne.s32.totalorder %s100, %s101
      %p113 = scmp.eq.s32.totalorder %s23, 1
      %p114 = por %p112, %p113
      %p116 = scmp.ne.s32.totalorder %s101, %s115
      %p117 = scmp.eq.s32.totalorder %s23, 0
      %p118 = por %p116, %p117
      %s120 = sadd.s32 %s119, 1
      %p123 = scmp.eq.s32.totalorder %s17, 1
      %p124 = scmp.ne.s32.totalorder %s119, %s121
      %p125 = scmp.eq.s32.totalorder %s17, 0
      %p126 = por %p124, %p125
      %p127 = scmp.ne.s32.totalorder %s119, %s121
      %p128 = scmp.eq.s32.totalorder %s22, 1
      %p129 = por %p127, %p128
      %p130 = scmp.ne.s32.totalorder %s121, %s122
      %p131 = scmp.eq.s32.totalorder %s22, 0
      %p132 = por %p130, %p131
      %p133 = scmp.ne.s32.totalorder %s121, %s122
      %p134 = scmp.eq.s32.totalorder %s23, 1
      %p135 = por %p133, %p134
      %p137 = scmp.ne.s32.totalorder %s122, %s136
      %p138 = scmp.eq.s32.totalorder %s23, 0
      %p139 = por %p137, %p138
      %s141 = sadd.s32 %s140, 1
      %p144 = scmp.eq.s32.totalorder %s17, 1
      %p145 = scmp.ne.s32.totalorder %s140, %s142
      %p146 = scmp.eq.s32.totalorder %s17, 0
      %p147 = por %p145, %p146
      %p148 = scmp.ne.s32.totalorder %s140, %s142
      %p149 = scmp.eq.s32.totalorder %s22, 1
      %p150 = por %p148, %p149
      %p151 = scmp.ne.s32.totalorder %s142, %s143
      %p152 = scmp.eq.s32.totalorder %s22, 0
      %p153 = por %p151, %p152
      %p154 = scmp.ne.s32.totalorder %s142, %s143
      %p155 = scmp.eq.s32.totalorder %s23, 1
      %p156 = por %p154, %p155
      %p158 = scmp.ne.s32.totalorder %s143, %s157
      %p159 = scmp.eq.s32.totalorder %s23, 0
      %p160 = por %p158, %p159
      %s162 = sadd.s32 %s161, 1
      %p165 = scmp.eq.s32.totalorder %s17, 1
      %p166 = scmp.ne.s32.totalorder %s161, %s163
      %p167 = scmp.eq.s32.totalorder %s17, 0
      %p168 = por %p166, %p167
      %p169 = scmp.ne.s32.totalorder %s161, %s163
      %p170 = scmp.eq.s32.totalorder %s22, 1
      %p171 = por %p169, %p170
      %p172 = scmp.ne.s32.totalorder %s163, %s164
      %p173 = scmp.eq.s32.totalorder %s22, 0
      %p174 = por %p172, %p173
      %p175 = scmp.ne.s32.totalorder %s163, %s164
      %p176 = scmp.eq.s32.totalorder %s23, 1
      %p177 = por %p175, %p176
      %p179 = scmp.ne.s32.totalorder %s164, %s178
      %p180 = scmp.eq.s32.totalorder %s23, 0
      %p181 = por %p179, %p180
      %s183 = sadd.s32 %s182, 1
      %p186 = scmp.eq.s32.totalorder %s17, 1
      %p187 = scmp.ne.s32.totalorder %s182, %s184
      %p188 = scmp.eq.s32.totalorder %s17, 0
      %p189 = por %p187, %p188
      %p190 = scmp.ne.s32.totalorder %s182, %s184
      %p191 = scmp.eq.s32.totalorder %s22, 1
      %p192 = por %p190, %p191
      %p193 = scmp.ne.s32.totalorder %s184, %s185
      %p194 = scmp.eq.s32.totalorder %s22, 0
      %p195 = por %p193, %p194
      %p196 = scmp.ne.s32.totalorder %s184, %s185
      %p197 = scmp.eq.s32.totalorder %s23, 1
      %p198 = por %p196, %p197
      %p200 = scmp.ne.s32.totalorder %s185, %s199
      %p201 = scmp.eq.s32.totalorder %s23, 0
      %p202 = por %p200, %p201
      %s203 = ssub.s32 %s17, %s24
      %p204 = scmp.eq.s32.totalorder %s203, 0
      %s206 = sadd.s32 %s205, 1
      %s207 = scalar_select %p204, %s205, %s206
      %p210 = pneg %p204
      %p211 = scmp.eq.s32.totalorder %s17, 1
      %p212 = por %p210, %p211
      %p213 = scmp.ne.s32.totalorder %s205, %s208
      %p214 = scmp.eq.s32.totalorder %s17, 0
      %p215 = por %p213, %p214
      %p216 = scmp.ne.s32.totalorder %s205, %s208
      %p217 = scmp.eq.s32.totalorder %s22, 1
      %p218 = por %p216, %p217
      %p219 = scmp.ne.s32.totalorder %s208, %s209
      %p220 = scmp.eq.s32.totalorder %s22, 0
      %p221 = por %p219, %p220
      %p222 = scmp.ne.s32.totalorder %s208, %s209
      %p223 = scmp.eq.s32.totalorder %s23, 1
      %p224 = por %p222, %p223
      %p226 = scmp.ne.s32.totalorder %s209, %s225
      %p227 = scmp.eq.s32.totalorder %s23, 0
      %p228 = por %p226, %p227
      %p229 = scmp.le.s32.totalorder 1, %s17
      %p230 = scmp.lt.s32.totalorder %s17, 3
      %p231 = pnand %p229, %p230
      %p232 = pneg %p231
      // Predicated region
      $region9: #{tpu_custom_call.1} parent=5 // pred_check
        _
      $region10: #{tpu_custom_call.1} parent=5 // pred_check_branch
        %234 = sbr.rel (%p231) target = $region12
      $region11: #{tpu_custom_call.1} parent=5 // pred_region
        %s235 = ssub.s32 %s17, 1
        // Predicated region
        $region13: #{tpu_custom_call.1} parent=11 // pred_check
          %p236 = pneg %p90
        $region14: #{tpu_custom_call.1} parent=11 // pred_check_branch
          %238 = sbr.rel (%p236) target = $region16
        $region15: #{tpu_custom_call.1} parent=11 // pred_region
          _
        $region16: #{tpu_custom_call.1} parent=11 // pred_fallthru
          _
        // Predicated region
        $region17: #{tpu_custom_call.1} parent=11 // pred_check
          %p239 = pneg %p111
        $region18: #{tpu_custom_call.1} parent=11 // pred_check_branch
          %241 = sbr.rel (%p239) target = $region20
        $region19: #{tpu_custom_call.1} parent=11 // pred_region
          _
        $region20: #{tpu_custom_call.1} parent=11 // pred_fallthru
          _
        // Predicated region
        $region21: #{tpu_custom_call.1} parent=11 // pred_check
          %p242 = pneg %p132
        $region22: #{tpu_custom_call.1} parent=11 // pred_check_branch
          %244 = sbr.rel (%p242) target = $region24
        $region23: #{tpu_custom_call.1} parent=11 // pred_region
          _
        $region24: #{tpu_custom_call.1} parent=11 // pred_fallthru
          _
        // Predicated region
        $region25: #{tpu_custom_call.1} parent=11 // pred_check
          %p245 = pneg %p153
        $region26: #{tpu_custom_call.1} parent=11 // pred_check_branch
          %247 = sbr.rel (%p245) target = $region28
        $region27: #{tpu_custom_call.1} parent=11 // pred_region
          _
        $region28: #{tpu_custom_call.1} parent=11 // pred_fallthru
          _
        // Predicated region
        $region29: #{tpu_custom_call.1} parent=11 // pred_check
          %p248 = pneg %p174
        $region30: #{tpu_custom_call.1} parent=11 // pred_check_branch
          %250 = sbr.rel (%p248) target = $region32
        $region31: #{tpu_custom_call.1} parent=11 // pred_region
          _
        $region32: #{tpu_custom_call.1} parent=11 // pred_fallthru
          _
        // Predicated region
        $region33: #{tpu_custom_call.1} parent=11 // pred_check
          %p251 = pneg %p195
        $region34: #{tpu_custom_call.1} parent=11 // pred_check_branch
          %253 = sbr.rel (%p251) target = $region36
        $region35: #{tpu_custom_call.1} parent=11 // pred_region
          _
        $region36: #{tpu_custom_call.1} parent=11 // pred_fallthru
          _
      $region12: #{tpu_custom_call.1} parent=5 // pred_fallthru
        _
      %p254 = scmp.lt.s32.totalorder %s17, 2
      // Predicated region
      $region37: #{tpu_custom_call.1} parent=5 // pred_check
        %p255 = pneg %p254
      $region38: #{tpu_custom_call.1} parent=5 // pred_check_branch
        %257 = sbr.rel (%p255) target = $region40
      $region39: #{tpu_custom_call.1} parent=5 // pred_region
        // Predicated region
        $region41: #{tpu_custom_call.1} parent=39 // pred_check
          %p258 = pneg %p37
        $region42: #{tpu_custom_call.1} parent=39 // pred_check_branch
          %260 = sbr.rel (%p258) target = $region44
        $region43: #{tpu_custom_call.1} parent=39 // pred_region
          %s261 = smul.u32 2, %s17
          %p262 = scmp.lt.s32.totalorder %s261, 3
          %s263 = scalar_select %p262, %s261, 3
          %s264 = smul.addr %s263, 8
          %s265 = scalar_lea.vmem %s0, %s264
          %s266 = smul.u32 2, %s17
        $region44: #{tpu_custom_call.1} parent=39 // pred_fallthru
          _
        // Predicated region
        $region45: #{tpu_custom_call.1} parent=39 // pred_check
          %p267 = pneg %p63
        $region46: #{tpu_custom_call.1} parent=39 // pred_check_branch
          %269 = sbr.rel (%p267) target = $region48
        $region47: #{tpu_custom_call.1} parent=39 // pred_region
          %s270 = smul.u32 2, %s17
          %p271 = scmp.lt.s32.totalorder %s270, 3
          %s272 = scalar_select %p271, %s270, 3
          %s273 = smul.addr %s272, 8
          %s274 = scalar_lea.vmem %s1, %s273
          %s275 = smul.u32 2, %s17
        $region48: #{tpu_custom_call.1} parent=39 // pred_fallthru
          _
      $region40: #{tpu_custom_call.1} parent=5 // pred_fallthru
        _
      %p276 = scmp.le.s32.totalorder 1, %s17
      %p277 = scmp.lt.s32.totalorder %s17, 3
      %p278 = pnand %p276, %p277
      %p279 = pneg %p278
      // Predicated region
      $region49: #{tpu_custom_call.1} parent=5 // pred_check
        _
      $region50: #{tpu_custom_call.1} parent=5 // pred_check_branch
        %281 = sbr.rel (%p278) target = $region52
      $region51: #{tpu_custom_call.1} parent=5 // pred_region
        %s282 = ssub.s32 %s17, 1
        %s283 = smul.u32 2, %s22
        %p284 = scmp.lt.s32.totalorder %s283, 3
        %s285 = scalar_select %p284, %s283, 3
        %s286 = smul.addr %s285, 8
        %s287 = scalar_lea.vmem %s0, %s286
        %p288 = pneg %p43
        %p289 = pneg %p40
        %s290 = smul.u32 2, %s22
        %p291 = scmp.lt.s32.totalorder %s290, 3
        %s292 = scalar_select %p291, %s290, 3
        %s293 = smul.addr %s292, 8
        %s294 = scalar_lea.vmem %s1, %s293
        %p295 = pneg %p69
        %p296 = pneg %p66
        %p297 = pneg %p90
        %p298 = pneg %p87
        %p299 = pneg %p111
        %p300 = pneg %p108
        %p301 = pneg %p132
        %p302 = pneg %p129
        %p303 = pneg %p153
        %p304 = pneg %p150
        %p305 = pneg %p174
        %p306 = pneg %p171
        %p307 = pneg %p195
        %p308 = pneg %p192
        %p309 = pneg %p221
        %p310 = pneg %p218
        %s311 = sand.u32 %s208, 1
        %s312 = scalar_lea.sflag [#allocation3], %s311
        %s313 = sand.u32 %s208, 1
        %s314 = smul.addr %s313, 16
        %s315 = scalar_lea.vmem [#allocation2], %s314
        %s316 = smul.u32 2, %s22
        %p317 = scmp.lt.s32.totalorder %s316, 3
        %s318 = scalar_select %p317, %s316, 3
        %s319 = smul.addr %s318, 8
        %s320 = scalar_lea.vmem %s0, %s319
        %s321 = smul.u32 2, %s22
        %s322 = smul.u32 2, %s22
        %p323 = scmp.lt.s32.totalorder %s322, 3
        %s324 = scalar_select %p323, %s322, 3
        %s325 = smul.addr %s324, 8
        %s326 = scalar_lea.vmem %s1, %s325
        %s327 = smul.u32 2, %s22
        %s328 = smul.u32 2, %s22
        %v329 = vld [vmem:[%s4] sm:$0xff]
        %v330 = vld [vmem:[%s4 + $0x8] sm:$0xff]
        %v331 = vld [vmem:[%s4 + $0x10] sm:$0xff]
        %v332 = vld [vmem:[%s4 + $0x18] sm:$0xff]
        %v333 = vld [vmem:[%s4 + $0x20] sm:$0xff]
        %v334 = vld [vmem:[%s4 + $0x28] sm:$0xff]
        %v335 = vld [vmem:[%s4 + $0x30] sm:$0xff]
        %v336 = vld [vmem:[%s4 + $0x38] sm:$0xff]
        %v337 = vld [vmem:[%s4 + $0x40] sm:$0xff]
        %v338 = vld [vmem:[%s4 + $0x48] sm:$0xff]
        %v339 = vld [vmem:[%s4 + $0x50] sm:$0xff]
        %v340 = vld [vmem:[%s4 + $0x58] sm:$0xff]
        %v341 = vld [vmem:[%s4 + $0x60] sm:$0xff]
        %v342 = vld [vmem:[%s4 + $0x68] sm:$0xff]
        %v343 = vld [vmem:[%s4 + $0x70] sm:$0xff]
        %v344 = vld [vmem:[%s4 + $0x78] sm:$0xff]
        %v345 = vld [vmem:[%s6] sm:$0xff]
        %v346 = vld [vmem:[%s6 + $0x8] sm:$0xff]
        %v347 = vld [vmem:[%s6 + $0x10] sm:$0xff]
        %v348 = vld [vmem:[%s6 + $0x18] sm:$0xff]
        %v349 = vld [vmem:[%s6 + $0x20] sm:$0xff]
        %v350 = vld [vmem:[%s6 + $0x28] sm:$0xff]
        %v351 = vld [vmem:[%s6 + $0x30] sm:$0xff]
        %v352 = vld [vmem:[%s6 + $0x38] sm:$0xff]
        %v353 = vld [vmem:[%s5] sm:$0x1]
        %v354 = vld [vmem:[%s7] sm:$0x1]
        %v355 = vld [vmem:[%s320] sm:$0xff]
        %v356 = vld [vmem:[%s320 + $0x8] sm:$0xff]
        %v357 = vld [vmem:[%s2] sm:$0xff]
        %v358 = vld [vmem:[%s2 + $0x8] sm:$0xff]
        %v359 = vld [vmem:[%s2 + $0x10] sm:$0xff]
        %v360 = vld [vmem:[%s2 + $0x18] sm:$0xff]
        %v361 = vld [vmem:[%s2 + $0x20] sm:$0xff]
        %v362 = vld [vmem:[%s2 + $0x28] sm:$0xff]
        %v363 = vld [vmem:[%s2 + $0x30] sm:$0xff]
        %v364 = vld [vmem:[%s2 + $0x38] sm:$0xff]
        %v365 = vld [vmem:[%s2 + $0x40] sm:$0xff]
        %vm366 = vcmask 195584
        %v368 = vsel %vm366, %v355, 0
        %v371 = vsel %vm366, %v356, 0
        %373 = vmatprep.subr.mxu0 %v358
        %374 = vmatpush1.msra.mxu0 %v357
        %375 = vmatprep.subr.mxu0 %v361
        %376 = vmatpush1.msra.mxu0 %v360
        %377 = vmatprep.subr.mxu0 %v364
        %378 = vmatpush1.msra.mxu0 %v363
        %379 = vmatprep.subr.mxu0 0.0
        %380 = vmatpush1.msra.mxu0 0.0
        %381 = vmatprep.subr.mxu0 0.0
        %382 = vmatpush1.msra.mxu0 0.0
        %383 = vmatprep.subr.mxu0 0.0
        %384 = vmatpush1.msra.mxu0 0.0
        %385 = vmatprep.subr.mxu0 0.0
        %386 = vmatpush1.msra.mxu0 0.0
        %387 = vmatprep.subr.mxu0 0.0
        %388 = vmatpush1.msra.mxu0 0.0
        %389 = vmatprep.subr.mxu0 0.0
        %390 = vmatpush1.msra.mxu0 0.0
        %391 = vmatprep.subr.mxu0 0.0
        %392 = vmatpush1.msra.mxu0 0.0
        %393 = vmatprep.subr.mxu0 0.0
        %394 = vmatpush1.msra.mxu0 0.0
        %395 = vmatprep.subr.mxu0 0.0
        %396 = vmatpush1.msra.mxu0 0.0
        %397 = vmatprep.subr.mxu0 0.0
        %398 = vmatpush1.msra.mxu0 0.0
        %399 = vmatprep.subr.mxu0 0.0
        %400 = vmatpush1.msra.mxu0 0.0
        %401 = vmatprep.subr.mxu0 0.0
        %402 = vmatpush1.msra.mxu0 0.0
        %403 = vmatprep.subr.mxu0 0.0
        %404 = vmatpush1.msra.mxu0 0.0
        %405 = vmatprep.subr.mxu0 0.0
        %406 = vmatpush1.msra.mxu0 0.0
        %407 = vmatprep.subr.mxu0 0.0
        %408 = vmatpush1.msra.mxu0 0.0
        %409 = vmatprep.subr.mxu0 0.0
        %410 = vmatpush1.msra.mxu0 0.0
        %411 = vmatprep.subr.mxu0 0.0
        %412 = vmatpush1.msra.mxu0 0.0
        %413 = vmatprep.subr.mxu0 0.0
        %414 = vmatpush1.msra.mxu0 0.0
        %415 = vmatprep.subr.mxu0 0.0
        %416 = vmatpush1.msra.mxu0 0.0
        %417 = vmatprep.subr.mxu0 0.0
        %418 = vmatpush1.msra.mxu0 0.0
        %419 = vmatprep.subr.mxu0 0.0
        %420 = vmatpush1.msra.mxu0 0.0
        %421 = vmatprep.subr.mxu0 0.0
        %422 = vmatpush1.msra.mxu0 0.0
        %423 = vmatprep.subr.mxu0 0.0
        %424 = vmatpush1.msra.mxu0 0.0
        %425 = vmatprep.subr.mxu0 0.0
        %426 = vmatpush1.msra.mxu0 0.0
        %427 = vmatprep.subr.mxu0 0.0
        %428 = vmatpush1.msra.mxu0 0.0
        %429 = vmatprep.subr.mxu0 0.0
        %430 = vmatpush1.msra.mxu0 0.0
        %431 = vmatprep.subr.mxu0 0.0
        %432 = vmatpush1.msra.mxu0 0.0
        %433 = vmatprep.subr.mxu0 0.0
        %434 = vmatpush1.msra.mxu0 0.0
        %435 = vmatprep.subr.mxu0 0.0
        %436 = vmatpush1.msra.mxu0 0.0
        %437 = vmatprep.mubr.f32.mxu0 0.0
        %438 = vmatmul.mubr.f32.gmra.mrb[0].mxu0 %v368
        %v439 = vpop.f32.mrb[0].mxu0
        %v440 = vadd.f32 0.0, %v439
        %v441 = vpop.f32.mrb[0].mxu0
        %v442 = vadd.f32 0.0, %v441
        %443 = vmatprep.mubr.f32.mxu0 0.0
        %444 = vmatmul.mubr.f32.gmra.mrb[0].mxu0 %v371
        %v445 = vpop.f32.mrb[0].mxu0
        %v446 = vadd.f32 0.0, %v445
        %v447 = vpop.f32.mrb[0].mxu0
        %v448 = vadd.f32 0.0, %v447
        %449 = vdwg.mxu0
        %450 = vmatprep.subr.mxu0 0.0
        %451 = vmatpush1.msra.mxu0 %v359
        %452 = vmatprep.subr.mxu0 0.0
        %453 = vmatpush1.msra.mxu0 %v362
        %454 = vmatprep.subr.mxu0 0.0
        %455 = vmatpush1.msra.mxu0 %v365
        %456 = vmatprep.subr.mxu0 0.0
        %457 = vmatpush1.msra.mxu0 0.0
        %458 = vmatprep.subr.mxu0 0.0
        %459 = vmatpush1.msra.mxu0 0.0
        %460 = vmatprep.subr.mxu0 0.0
        %461 = vmatpush1.msra.mxu0 0.0
        %462 = vmatprep.subr.mxu0 0.0
        %463 = vmatpush1.msra.mxu0 0.0
        %464 = vmatprep.subr.mxu0 0.0
        %465 = vmatpush1.msra.mxu0 0.0
        %466 = vmatprep.subr.mxu0 0.0
        %467 = vmatpush1.msra.mxu0 0.0
        %468 = vmatprep.subr.mxu0 0.0
        %469 = vmatpush1.msra.mxu0 0.0
        %470 = vmatprep.subr.mxu0 0.0
        %471 = vmatpush1.msra.mxu0 0.0
        %472 = vmatprep.subr.mxu0 0.0
        %473 = vmatpush1.msra.mxu0 0.0
        %474 = vmatprep.subr.mxu0 0.0
        %475 = vmatpush1.msra.mxu0 0.0
        %476 = vmatprep.subr.mxu0 0.0
        %477 = vmatpush1.msra.mxu0 0.0
        %478 = vmatprep.subr.mxu0 0.0
        %479 = vmatpush1.msra.mxu0 0.0
        %480 = vmatprep.subr.mxu0 0.0
        %481 = vmatpush1.msra.mxu0 0.0
        %482 = vmatprep.subr.mxu0 0.0
        %483 = vmatpush1.msra.mxu0 0.0
        %484 = vmatprep.subr.mxu0 0.0
        %485 = vmatpush1.msra.mxu0 0.0
        %486 = vmatprep.subr.mxu0 0.0
        %487 = vmatpush1.msra.mxu0 0.0
        %488 = vmatprep.subr.mxu0 0.0
        %489 = vmatpush1.msra.mxu0 0.0
        %490 = vmatprep.subr.mxu0 0.0
        %491 = vmatpush1.msra.mxu0 0.0
        %492 = vmatprep.subr.mxu0 0.0
        %493 = vmatpush1.msra.mxu0 0.0
        %494 = vmatprep.subr.mxu0 0.0
        %495 = vmatpush1.msra.mxu0 0.0
        %496 = vmatprep.subr.mxu0 0.0
        %497 = vmatpush1.msra.mxu0 0.0
        %498 = vmatprep.subr.mxu0 0.0
        %499 = vmatpush1.msra.mxu0 0.0
        %500 = vmatprep.subr.mxu0 0.0
        %501 = vmatpush1.msra.mxu0 0.0
        %502 = vmatprep.subr.mxu0 0.0
        %503 = vmatpush1.msra.mxu0 0.0
        %504 = vmatprep.subr.mxu0 0.0
        %505 = vmatpush1.msra.mxu0 0.0
        %506 = vmatprep.subr.mxu0 0.0
        %507 = vmatpush1.msra.mxu0 0.0
        %508 = vmatprep.subr.mxu0 0.0
        %509 = vmatpush1.msra.mxu0 0.0
        %510 = vmatprep.subr.mxu0 0.0
        %511 = vmatpush1.msra.mxu0 0.0
        %512 = vmatprep.subr.mxu0 0.0
        %513 = vmatpush1.msra.mxu0 0.0
        %514 = vmatprep.mubr.f32.mxu0 0.0
        %515 = vmatmul.mubr.f32.gmra.mrb[0].mxu0 %v368
        %v516 = vpop.f32.mrb[0].mxu0
        %v517 = vadd.f32 0.0, %v516
        %v518 = vpop.f32.mrb[0].mxu0
        %519 = vmatprep.mubr.f32.mxu0 0.0
        %520 = vmatmul.mubr.f32.gmra.mrb[0].mxu0 %v371
        %v521 = vpop.f32.mrb[0].mxu0
        %v522 = vadd.f32 0.0, %v521
        %v523 = vpop.f32.mrb[0].mxu0
        %524 = vdwg.mxu0
        %v525 = vld [vmem:[%s326] sm:$0xff]
        %v526 = vld [vmem:[%s326 + $0x8] sm:$0xff]
        %v527 = vld [vmem:[%s3] sm:$0xff]
        %v528 = vld [vmem:[%s3 + $0x8] sm:$0xff]
        %v529 = vld [vmem:[%s3 + $0x10] sm:$0xff]
        %v530 = vld [vmem:[%s3 + $0x18] sm:$0xff]
        %v531 = vld [vmem:[%s3 + $0x20] sm:$0xff]
        %v532 = vld [vmem:[%s3 + $0x28] sm:$0xff]
        %v533 = vld [vmem:[%s3 + $0x30] sm:$0xff]
        %v534 = vld [vmem:[%s3 + $0x38] sm:$0xff]
        %vm535 = vcmask 130048
        %v537 = vsel %vm535, %v525, 0
        %v540 = vsel %vm535, %v526, 0
        %542 = vmatprep.subr.mxu0 %v528
        %543 = vmatpush1.msra.mxu0 %v527
        %544 = vmatprep.subr.mxu0 %v532
        %545 = vmatpush1.msra.mxu0 %v531
        %546 = vmatprep.subr.mxu0 0.0
        %547 = vmatpush1.msra.mxu0 0.0
        %548 = vmatprep.subr.mxu0 0.0
        %549 = vmatpush1.msra.mxu0 0.0
        %550 = vmatprep.subr.mxu0 0.0
        %551 = vmatpush1.msra.mxu0 0.0
        %552 = vmatprep.subr.mxu0 0.0
        %553 = vmatpush1.msra.mxu0 0.0
        %554 = vmatprep.subr.mxu0 0.0
        %555 = vmatpush1.msra.mxu0 0.0
        %556 = vmatprep.subr.mxu0 0.0
        %557 = vmatpush1.msra.mxu0 0.0
        %558 = vmatprep.subr.mxu0 0.0
        %559 = vmatpush1.msra.mxu0 0.0
        %560 = vmatprep.subr.mxu0 0.0
        %561 = vmatpush1.msra.mxu0 0.0
        %562 = vmatprep.subr.mxu0 0.0
        %563 = vmatpush1.msra.mxu0 0.0
        %564 = vmatprep.subr.mxu0 0.0
        %565 = vmatpush1.msra.mxu0 0.0
        %566 = vmatprep.subr.mxu0 0.0
        %567 = vmatpush1.msra.mxu0 0.0
        %568 = vmatprep.subr.mxu0 0.0
        %569 = vmatpush1.msra.mxu0 0.0
        %570 = vmatprep.subr.mxu0 0.0
        %571 = vmatpush1.msra.mxu0 0.0
        %572 = vmatprep.subr.mxu0 0.0
        %573 = vmatpush1.msra.mxu0 0.0
        %574 = vmatprep.subr.mxu0 0.0
        %575 = vmatpush1.msra.mxu0 0.0
        %576 = vmatprep.subr.mxu0 0.0
        %577 = vmatpush1.msra.mxu0 0.0
        %578 = vmatprep.subr.mxu0 0.0
        %579 = vmatpush1.msra.mxu0 0.0
        %580 = vmatprep.subr.mxu0 0.0
        %581 = vmatpush1.msra.mxu0 0.0
        %582 = vmatprep.subr.mxu0 0.0
        %583 = vmatpush1.msra.mxu0 0.0
        %584 = vmatprep.subr.mxu0 0.0
        %585 = vmatpush1.msra.mxu0 0.0
        %586 = vmatprep.subr.mxu0 0.0
        %587 = vmatpush1.msra.mxu0 0.0
        %588 = vmatprep.subr.mxu0 0.0
        %589 = vmatpush1.msra.mxu0 0.0
        %590 = vmatprep.subr.mxu0 0.0
        %591 = vmatpush1.msra.mxu0 0.0
        %592 = vmatprep.subr.mxu0 0.0
        %593 = vmatpush1.msra.mxu0 0.0
        %594 = vmatprep.subr.mxu0 0.0
        %595 = vmatpush1.msra.mxu0 0.0
        %596 = vmatprep.subr.mxu0 0.0
        %597 = vmatpush1.msra.mxu0 0.0
        %598 = vmatprep.subr.mxu0 0.0
        %599 = vmatpush1.msra.mxu0 0.0
        %600 = vmatprep.subr.mxu0 0.0
        %601 = vmatpush1.msra.mxu0 0.0
        %602 = vmatprep.subr.mxu0 0.0
        %603 = vmatpush1.msra.mxu0 0.0
        %604 = vmatprep.subr.mxu0 0.0
        %605 = vmatpush1.msra.mxu0 0.0
        %606 = vmatprep.mubr.f32.mxu0 0.0
        %607 = vmatmul.mubr.f32.gmra.mrb[0].mxu0 %v537
        %v608 = vpop.f32.mrb[0].mxu0
        %v609 = vadd.f32 0.0, %v608
        %v610 = vpop.f32.mrb[0].mxu0
        %v611 = vadd.f32 0.0, %v610
        %612 = vmatprep.mubr.f32.mxu0 0.0
        %613 = vmatmul.mubr.f32.gmra.mrb[0].mxu0 %v540
        %v614 = vpop.f32.mrb[0].mxu0
        %v615 = vadd.f32 0.0, %v614
        %v616 = vpop.f32.mrb[0].mxu0
        %v617 = vadd.f32 0.0, %v616
        %618 = vdwg.mxu0
        %619 = vmatprep.subr.mxu0 %v530
        %620 = vmatpush1.msra.mxu0 %v529
        %621 = vmatprep.subr.mxu0 %v534
        %622 = vmatpush1.msra.mxu0 %v533
        %623 = vmatprep.subr.mxu0 0.0
        %624 = vmatpush1.msra.mxu0 0.0
        %625 = vmatprep.subr.mxu0 0.0
        %626 = vmatpush1.msra.mxu0 0.0
        %627 = vmatprep.subr.mxu0 0.0
        %628 = vmatpush1.msra.mxu0 0.0
        %629 = vmatprep.subr.mxu0 0.0
        %630 = vmatpush1.msra.mxu0 0.0
        %631 = vmatprep.subr.mxu0 0.0
        %632 = vmatpush1.msra.mxu0 0.0
        %633 = vmatprep.subr.mxu0 0.0
        %634 = vmatpush1.msra.mxu0 0.0
        %635 = vmatprep.subr.mxu0 0.0
        %636 = vmatpush1.msra.mxu0 0.0
        %637 = vmatprep.subr.mxu0 0.0
        %638 = vmatpush1.msra.mxu0 0.0
        %639 = vmatprep.subr.mxu0 0.0
        %640 = vmatpush1.msra.mxu0 0.0
        %641 = vmatprep.subr.mxu0 0.0
        %642 = vmatpush1.msra.mxu0 0.0
        %643 = vmatprep.subr.mxu0 0.0
        %644 = vmatpush1.msra.mxu0 0.0
        %645 = vmatprep.subr.mxu0 0.0
        %646 = vmatpush1.msra.mxu0 0.0
        %647 = vmatprep.subr.mxu0 0.0
        %648 = vmatpush1.msra.mxu0 0.0
        %649 = vmatprep.subr.mxu0 0.0
        %650 = vmatpush1.msra.mxu0 0.0
        %651 = vmatprep.subr.mxu0 0.0
        %652 = vmatpush1.msra.mxu0 0.0
        %653 = vmatprep.subr.mxu0 0.0
        %654 = vmatpush1.msra.mxu0 0.0
        %655 = vmatprep.subr.mxu0 0.0
        %656 = vmatpush1.msra.mxu0 0.0
        %657 = vmatprep.subr.mxu0 0.0
        %658 = vmatpush1.msra.mxu0 0.0
        %659 = vmatprep.subr.mxu0 0.0
        %660 = vmatpush1.msra.mxu0 0.0
        %661 = vmatprep.subr.mxu0 0.0
        %662 = vmatpush1.msra.mxu0 0.0
        %663 = vmatprep.subr.mxu0 0.0
        %664 = vmatpush1.msra.mxu0 0.0
        %665 = vmatprep.subr.mxu0 0.0
        %666 = vmatpush1.msra.mxu0 0.0
        %667 = vmatprep.subr.mxu0 0.0
        %668 = vmatpush1.msra.mxu0 0.0
        %669 = vmatprep.subr.mxu0 0.0
        %670 = vmatpush1.msra.mxu0 0.0
        %671 = vmatprep.subr.mxu0 0.0
        %672 = vmatpush1.msra.mxu0 0.0
        %673 = vmatprep.subr.mxu0 0.0
        %674 = vmatpush1.msra.mxu0 0.0
        %675 = vmatprep.subr.mxu0 0.0
        %676 = vmatpush1.msra.mxu0 0.0
        %677 = vmatprep.subr.mxu0 0.0
        %678 = vmatpush1.msra.mxu0 0.0
        %679 = vmatprep.subr.mxu0 0.0
        %680 = vmatpush1.msra.mxu0 0.0
        %681 = vmatprep.subr.mxu0 0.0
        %682 = vmatpush1.msra.mxu0 0.0
        %683 = vmatprep.mubr.f32.mxu0 0.0
        %684 = vmatmul.mubr.f32.gmra.mrb[0].mxu0 %v537
        %v685 = vpop.f32.mrb[0].mxu0
        %v686 = vadd.f32 0.0, %v685
        %v687 = vpop.f32.mrb[0].mxu0
        %v688 = vadd.f32 0.0, %v687
        %689 = vmatprep.mubr.f32.mxu0 0.0
        %690 = vmatmul.mubr.f32.gmra.mrb[0].mxu0 %v540
        %v691 = vpop.f32.mrb[0].mxu0
        %v692 = vadd.f32 0.0, %v691
        %v693 = vpop.f32.mrb[0].mxu0
        %v694 = vadd.f32 0.0, %v693
        %695 = vdwg.mxu0
        %v697 = vlaneseq
        %v698 = vshrl.u32 %v697, 7
        %v699 = vsub.s32 0, %v698
        %v700 = vrot.slane %v353, %v699
        %v702 = vadd.f32 %v442, %v700
        %v704 = vlaneseq
        %v705 = vshrl.u32 %v704, 7
        %v706 = vsub.s32 0, %v705
        %v707 = vrot.slane %v354, %v706
        %v709 = vadd.f32 %v686, %v707
        %711 = vrot.lane.b32.xlu0 %v440, 112
        %v712 = vpop.permute.xlu0 %711
        %714 = vrot.lane.b32.xlu0 %v686, 64
        %v715 = vpop.permute.xlu0 %714
        %v716 = vsel %vm535, %v712, 0
        %v718 = vsel %vm535, %v715, 0
        %720 = vmatprep.subr.mxu0 0.0
        %721 = vmatpush1.xpose.msra.mxu0 %v718
        %722 = vmatprep.subr.mxu0 0.0
        %723 = vmatpush1.xpose.msra.mxu0 0.0
        %724 = vmatprep.subr.mxu0 0.0
        %725 = vmatpush1.xpose.msra.mxu0 0.0
        %726 = vmatprep.subr.mxu0 0.0
        %727 = vmatpush1.xpose.msra.mxu0 0.0
        %728 = vmatprep.subr.mxu0 0.0
        %729 = vmatpush1.xpose.msra.mxu0 0.0
        %730 = vmatprep.subr.mxu0 0.0
        %731 = vmatpush1.xpose.msra.mxu0 0.0
        %732 = vmatprep.subr.mxu0 0.0
        %733 = vmatpush1.xpose.msra.mxu0 0.0
        %734 = vmatprep.subr.mxu0 0.0
        %735 = vmatpush1.xpose.msra.mxu0 0.0
        %736 = vmatprep.subr.mxu0 0.0
        %737 = vmatpush1.xpose.msra.mxu0 0.0
        %738 = vmatprep.subr.mxu0 0.0
        %739 = vmatpush1.xpose.msra.mxu0 0.0
        %740 = vmatprep.subr.mxu0 0.0
        %741 = vmatpush1.xpose.msra.mxu0 0.0
        %742 = vmatprep.subr.mxu0 0.0
        %743 = vmatpush1.xpose.msra.mxu0 0.0
        %744 = vmatprep.subr.mxu0 0.0
        %745 = vmatpush1.xpose.msra.mxu0 0.0
        %746 = vmatprep.subr.mxu0 0.0
        %747 = vmatpush1.xpose.msra.mxu0 0.0
        %748 = vmatprep.subr.mxu0 0.0
        %749 = vmatpush1.xpose.msra.mxu0 0.0
        %750 = vmatprep.subr.mxu0 0.0
        %751 = vmatpush1.xpose.msra.mxu0 0.0
        %752 = vmatprep.subr.mxu0 0.0
        %753 = vmatpush1.xpose.msra.mxu0 0.0
        %754 = vmatprep.subr.mxu0 0.0
        %755 = vmatpush1.xpose.msra.mxu0 0.0
        %756 = vmatprep.subr.mxu0 0.0
        %757 = vmatpush1.xpose.msra.mxu0 0.0
        %758 = vmatprep.subr.mxu0 0.0
        %759 = vmatpush1.xpose.msra.mxu0 0.0
        %760 = vmatprep.subr.mxu0 0.0
        %761 = vmatpush1.xpose.msra.mxu0 0.0
        %762 = vmatprep.subr.mxu0 0.0
        %763 = vmatpush1.xpose.msra.mxu0 0.0
        %764 = vmatprep.subr.mxu0 0.0
        %765 = vmatpush1.xpose.msra.mxu0 0.0
        %766 = vmatprep.subr.mxu0 0.0
        %767 = vmatpush1.xpose.msra.mxu0 0.0
        %768 = vmatprep.subr.mxu0 0.0
        %769 = vmatpush1.xpose.msra.mxu0 0.0
        %770 = vmatprep.subr.mxu0 0.0
        %771 = vmatpush1.xpose.msra.mxu0 0.0
        %772 = vmatprep.subr.mxu0 0.0
        %773 = vmatpush1.xpose.msra.mxu0 0.0
        %774 = vmatprep.subr.mxu0 0.0
        %775 = vmatpush1.xpose.msra.mxu0 0.0
        %776 = vmatprep.subr.mxu0 0.0
        %777 = vmatpush1.xpose.msra.mxu0 0.0
        %778 = vmatprep.subr.mxu0 0.0
        %779 = vmatpush1.xpose.msra.mxu0 0.0
        %780 = vmatprep.subr.mxu0 0.0
        %781 = vmatpush1.xpose.msra.mxu0 0.0
        %782 = vmatprep.subr.mxu0 0.0
        %783 = vmatpush1.xpose.msra.mxu0 0.0
        %784 = vmatprep.mubr.f32.mxu0 0.0
        %785 = vmatmul.mubr.f32.gmra.mrb[0].mxu0 %v716
        %v786 = vpop.f32.mrb[0].mxu0
        %v787 = vadd.f32 0.0, %v786
        %v788 = vpop.f32.mrb[0].mxu0
        %789 = vdwg.mxu0
        %791 = vrot.lane.b32.xlu0 %v442, 64
        %v792 = vpop.permute.xlu0 %791
        %v793 = vsel %vm535, %v440, 0
        %v795 = vsel %vm535, %v792, 0
        %797 = vmatprep.subr.mxu0 0.0
        %798 = vmatpush1.xpose.msra.mxu0 %v795
        %799 = vmatprep.subr.mxu0 0.0
        %800 = vmatpush1.xpose.msra.mxu0 0.0
        %801 = vmatprep.subr.mxu0 0.0
        %802 = vmatpush1.xpose.msra.mxu0 0.0
        %803 = vmatprep.subr.mxu0 0.0
        %804 = vmatpush1.xpose.msra.mxu0 0.0
        %805 = vmatprep.subr.mxu0 0.0
        %806 = vmatpush1.xpose.msra.mxu0 0.0
        %807 = vmatprep.subr.mxu0 0.0
        %808 = vmatpush1.xpose.msra.mxu0 0.0
        %809 = vmatprep.subr.mxu0 0.0
        %810 = vmatpush1.xpose.msra.mxu0 0.0
        %811 = vmatprep.subr.mxu0 0.0
        %812 = vmatpush1.xpose.msra.mxu0 0.0
        %813 = vmatprep.subr.mxu0 0.0
        %814 = vmatpush1.xpose.msra.mxu0 0.0
        %815 = vmatprep.subr.mxu0 0.0
        %816 = vmatpush1.xpose.msra.mxu0 0.0
        %817 = vmatprep.subr.mxu0 0.0
        %818 = vmatpush1.xpose.msra.mxu0 0.0
        %819 = vmatprep.subr.mxu0 0.0
        %820 = vmatpush1.xpose.msra.mxu0 0.0
        %821 = vmatprep.subr.mxu0 0.0
        %822 = vmatpush1.xpose.msra.mxu0 0.0
        %823 = vmatprep.subr.mxu0 0.0
        %824 = vmatpush1.xpose.msra.mxu0 0.0
        %825 = vmatprep.subr.mxu0 0.0
        %826 = vmatpush1.xpose.msra.mxu0 0.0
        %827 = vmatprep.subr.mxu0 0.0
        %828 = vmatpush1.xpose.msra.mxu0 0.0
        %829 = vmatprep.subr.mxu0 0.0
        %830 = vmatpush1.xpose.msra.mxu0 0.0
        %831 = vmatprep.subr.mxu0 0.0
        %832 = vmatpush1.xpose.msra.mxu0 0.0
        %833 = vmatprep.subr.mxu0 0.0
        %834 = vmatpush1.xpose.msra.mxu0 0.0
        %835 = vmatprep.subr.mxu0 0.0
        %836 = vmatpush1.xpose.msra.mxu0 0.0
        %837 = vmatprep.subr.mxu0 0.0
        %838 = vmatpush1.xpose.msra.mxu0 0.0
        %839 = vmatprep.subr.mxu0 0.0
        %840 = vmatpush1.xpose.msra.mxu0 0.0
        %841 = vmatprep.subr.mxu0 0.0
        %842 = vmatpush1.xpose.msra.mxu0 0.0
        %843 = vmatprep.subr.mxu0 0.0
        %844 = vmatpush1.xpose.msra.mxu0 0.0
        %845 = vmatprep.subr.mxu0 0.0
        %846 = vmatpush1.xpose.msra.mxu0 0.0
        %847 = vmatprep.subr.mxu0 0.0
        %848 = vmatpush1.xpose.msra.mxu0 0.0
        %849 = vmatprep.subr.mxu0 0.0
        %850 = vmatpush1.xpose.msra.mxu0 0.0
        %851 = vmatprep.subr.mxu0 0.0
        %852 = vmatpush1.xpose.msra.mxu0 0.0
        %853 = vmatprep.subr.mxu0 0.0
        %854 = vmatpush1.xpose.msra.mxu0 0.0
        %855 = vmatprep.subr.mxu0 0.0
        %856 = vmatpush1.xpose.msra.mxu0 0.0
        %857 = vmatprep.subr.mxu0 0.0
        %858 = vmatpush1.xpose.msra.mxu0 0.0
        %859 = vmatprep.subr.mxu0 0.0
        %860 = vmatpush1.xpose.msra.mxu0 0.0
        %861 = vmatprep.mubr.f32.mxu0 0.0
        %862 = vmatmul.mubr.f32.gmra.mrb[0].mxu0 %v793
        %v863 = vpop.f32.mrb[0].mxu0
        %v864 = vadd.f32 %v787, %v863
        %v865 = vpop.f32.mrb[0].mxu0
        %866 = vdwg.mxu0
        %vm867 = vcmask 64512
        %v868 = vsel %vm867, %v864, -inf
        %869 = vmax.xlane.f32.xlu0 %v868
        %v870 = vpop.xlane.xlu0 %869
        %v871 = vsub.f32 %v864, %v870
        %v872 = vmul.f32 %v871, 1.442695
        %v873 = vpow.pop %v872
        %v874 = vsel %vm867, %v873, 0.0
        %875 = vadd.xlane.f32.xlu0 %v874
        %v876 = vpop.xlane.xlu0 %875
        %v877 = vrcp.pop %v876
        %v878 = vmul.f32 %v873, %v877
        %v880 = vsel %vm867, %v878, 0
        %882 = vmatprep.subr.mxu0 0.0
        %883 = vmatpush1.msra.mxu0 %v517
        %884 = vmatprep.subr.mxu0 0.0
        %885 = vmatpush1.msra.mxu0 0.0
        %886 = vmatprep.subr.mxu0 0.0
        %887 = vmatpush1.msra.mxu0 0.0
        %888 = vmatprep.subr.mxu0 0.0
        %889 = vmatpush1.msra.mxu0 0.0
        %890 = vmatprep.subr.mxu0 0.0
        %891 = vmatpush1.msra.mxu0 0.0
        %892 = vmatprep.subr.mxu0 0.0
        %893 = vmatpush1.msra.mxu0 0.0
        %894 = vmatprep.subr.mxu0 0.0
        %895 = vmatpush1.msra.mxu0 0.0
        %896 = vmatprep.subr.mxu0 0.0
        %897 = vmatpush1.msra.mxu0 0.0
        %898 = vmatprep.subr.mxu0 0.0
        %899 = vmatpush1.msra.mxu0 0.0
        %900 = vmatprep.subr.mxu0 0.0
        %901 = vmatpush1.msra.mxu0 0.0
        %902 = vmatprep.subr.mxu0 0.0
        %903 = vmatpush1.msra.mxu0 0.0
        %904 = vmatprep.subr.mxu0 0.0
        %905 = vmatpush1.msra.mxu0 0.0
        %906 = vmatprep.subr.mxu0 0.0
        %907 = vmatpush1.msra.mxu0 0.0
        %908 = vmatprep.subr.mxu0 0.0
        %909 = vmatpush1.msra.mxu0 0.0
        %910 = vmatprep.subr.mxu0 0.0
        %911 = vmatpush1.msra.mxu0 0.0
        %912 = vmatprep.subr.mxu0 0.0
        %913 = vmatpush1.msra.mxu0 0.0
        %914 = vmatprep.subr.mxu0 0.0
        %915 = vmatpush1.msra.mxu0 0.0
        %916 = vmatprep.subr.mxu0 0.0
        %917 = vmatpush1.msra.mxu0 0.0
        %918 = vmatprep.subr.mxu0 0.0
        %919 = vmatpush1.msra.mxu0 0.0
        %920 = vmatprep.subr.mxu0 0.0
        %921 = vmatpush1.msra.mxu0 0.0
        %922 = vmatprep.subr.mxu0 0.0
        %923 = vmatpush1.msra.mxu0 0.0
        %924 = vmatprep.subr.mxu0 0.0
        %925 = vmatpush1.msra.mxu0 0.0
        %926 = vmatprep.subr.mxu0 0.0
        %927 = vmatpush1.msra.mxu0 0.0
        %928 = vmatprep.subr.mxu0 0.0
        %929 = vmatpush1.msra.mxu0 0.0
        %930 = vmatprep.subr.mxu0 0.0
        %931 = vmatpush1.msra.mxu0 0.0
        %932 = vmatprep.subr.mxu0 0.0
        %933 = vmatpush1.msra.mxu0 0.0
        %934 = vmatprep.subr.mxu0 0.0
        %935 = vmatpush1.msra.mxu0 0.0
        %936 = vmatprep.subr.mxu0 0.0
        %937 = vmatpush1.msra.mxu0 0.0
        %938 = vmatprep.subr.mxu0 0.0
        %939 = vmatpush1.msra.mxu0 0.0
        %940 = vmatprep.subr.mxu0 0.0
        %941 = vmatpush1.msra.mxu0 0.0
        %942 = vmatprep.subr.mxu0 0.0
        %943 = vmatpush1.msra.mxu0 0.0
        %944 = vmatprep.subr.mxu0 0.0
        %945 = vmatpush1.msra.mxu0 0.0
        %946 = vmatprep.mubr.f32.mxu0 0.0
        %947 = vmatmul.mubr.f32.gmra.mrb[0].mxu0 %v880
        %v948 = vpop.f32.mrb[0].mxu0
        %v949 = vadd.f32 0.0, %v948
        %v950 = vpop.f32.mrb[0].mxu0
        %951 = vdwg.mxu0
        %v953 = vsel %vm535, %v949, 0
        %955 = vmatprep.subr.mxu0 0.0
        %956 = vmatpush1.msra.mxu0 %v329
        %957 = vmatprep.subr.mxu0 0.0
        %958 = vmatpush1.msra.mxu0 %v330
        %959 = vmatprep.subr.mxu0 0.0
        %960 = vmatpush1.msra.mxu0 0.0
        %961 = vmatprep.subr.mxu0 0.0
        %962 = vmatpush1.msra.mxu0 0.0
        %963 = vmatprep.subr.mxu0 0.0
        %964 = vmatpush1.msra.mxu0 0.0
        %965 = vmatprep.subr.mxu0 0.0
        %966 = vmatpush1.msra.mxu0 0.0
        %967 = vmatprep.subr.mxu0 0.0
        %968 = vmatpush1.msra.mxu0 0.0
        %969 = vmatprep.subr.mxu0 0.0
        %970 = vmatpush1.msra.mxu0 0.0
        %971 = vmatprep.subr.mxu0 0.0
        %972 = vmatpush1.msra.mxu0 0.0
        %973 = vmatprep.subr.mxu0 0.0
        %974 = vmatpush1.msra.mxu0 0.0
        %975 = vmatprep.subr.mxu0 0.0
        %976 = vmatpush1.msra.mxu0 0.0
        %977 = vmatprep.subr.mxu0 0.0
        %978 = vmatpush1.msra.mxu0 0.0
        %979 = vmatprep.subr.mxu0 0.0
        %980 = vmatpush1.msra.mxu0 0.0
        %981 = vmatprep.subr.mxu0 0.0
        %982 = vmatpush1.msra.mxu0 0.0
        %983 = vmatprep.subr.mxu0 0.0
        %984 = vmatpush1.msra.mxu0 0.0
        %985 = vmatprep.subr.mxu0 0.0
        %986 = vmatpush1.msra.mxu0 0.0
        %987 = vmatprep.subr.mxu0 0.0
        %988 = vmatpush1.msra.mxu0 0.0
        %989 = vmatprep.subr.mxu0 0.0
        %990 = vmatpush1.msra.mxu0 0.0
        %991 = vmatprep.subr.mxu0 0.0
        %992 = vmatpush1.msra.mxu0 0.0
        %993 = vmatprep.subr.mxu0 0.0
        %994 = vmatpush1.msra.mxu0 0.0
        %995 = vmatprep.subr.mxu0 0.0
        %996 = vmatpush1.msra.mxu0 0.0
        %997 = vmatprep.subr.mxu0 0.0
        %998 = vmatpush1.msra.mxu0 0.0
        %999 = vmatprep.subr.mxu0 0.0
        %1000 = vmatpush1.msra.mxu0 0.0
        %1001 = vmatprep.subr.mxu0 0.0
        %1002 = vmatpush1.msra.mxu0 0.0
        %1003 = vmatprep.subr.mxu0 0.0
        %1004 = vmatpush1.msra.mxu0 0.0
        %1005 = vmatprep.subr.mxu0 0.0
        %1006 = vmatpush1.msra.mxu0 0.0
        %1007 = vmatprep.subr.mxu0 0.0
        %1008 = vmatpush1.msra.mxu0 0.0
        %1009 = vmatprep.subr.mxu0 0.0
        %1010 = vmatpush1.msra.mxu0 0.0
        %1011 = vmatprep.subr.mxu0 0.0
        %1012 = vmatpush1.msra.mxu0 0.0
        %1013 = vmatprep.subr.mxu0 0.0
        %1014 = vmatpush1.msra.mxu0 0.0
        %1015 = vmatprep.subr.mxu0 0.0
        %1016 = vmatpush1.msra.mxu0 0.0
        %1017 = vmatprep.subr.mxu0 0.0
        %1018 = vmatpush1.msra.mxu0 0.0
        %1019 = vmatprep.mubr.f32.mxu0 0.0
        %1020 = vmatmul.mubr.f32.gmra.mrb[0].mxu0 %v953
        %v1021 = vpop.f32.mrb[0].mxu0
        %v1022 = vadd.f32 0.0, %v1021
        %v1023 = vpop.f32.mrb[0].mxu0
        %1024 = vdwg.mxu0
        %v1025 = vadd.f32 %v702, %v1022
        %1026 = vmatprep.subr.mxu0 0.0
        %1027 = vmatpush1.msra.mxu0 %v688
        %1028 = vmatprep.subr.mxu0 0.0
        %1029 = vmatpush1.msra.mxu0 0.0
        %1030 = vmatprep.subr.mxu0 0.0
        %1031 = vmatpush1.msra.mxu0 0.0
        %1032 = vmatprep.subr.mxu0 0.0
        %1033 = vmatpush1.msra.mxu0 0.0
        %1034 = vmatprep.subr.mxu0 0.0
        %1035 = vmatpush1.msra.mxu0 0.0
        %1036 = vmatprep.subr.mxu0 0.0
        %1037 = vmatpush1.msra.mxu0 0.0
        %1038 = vmatprep.subr.mxu0 0.0
        %1039 = vmatpush1.msra.mxu0 0.0
        %1040 = vmatprep.subr.mxu0 0.0
        %1041 = vmatpush1.msra.mxu0 0.0
        %1042 = vmatprep.subr.mxu0 0.0
        %1043 = vmatpush1.msra.mxu0 0.0
        %1044 = vmatprep.subr.mxu0 0.0
        %1045 = vmatpush1.msra.mxu0 0.0
        %1046 = vmatprep.subr.mxu0 0.0
        %1047 = vmatpush1.msra.mxu0 0.0
        %1048 = vmatprep.subr.mxu0 0.0
        %1049 = vmatpush1.msra.mxu0 0.0
        %1050 = vmatprep.subr.mxu0 0.0
        %1051 = vmatpush1.msra.mxu0 0.0
        %1052 = vmatprep.subr.mxu0 0.0
        %1053 = vmatpush1.msra.mxu0 0.0
        %1054 = vmatprep.subr.mxu0 0.0
        %1055 = vmatpush1.msra.mxu0 0.0
        %1056 = vmatprep.subr.mxu0 0.0
        %1057 = vmatpush1.msra.mxu0 0.0
        %1058 = vmatprep.subr.mxu0 0.0
        %1059 = vmatpush1.msra.mxu0 0.0
        %1060 = vmatprep.subr.mxu0 0.0
        %1061 = vmatpush1.msra.mxu0 0.0
        %1062 = vmatprep.subr.mxu0 0.0
        %1063 = vmatpush1.msra.mxu0 0.0
        %1064 = vmatprep.subr.mxu0 0.0
        %1065 = vmatpush1.msra.mxu0 0.0
        %1066 = vmatprep.subr.mxu0 0.0
        %1067 = vmatpush1.msra.mxu0 0.0
        %1068 = vmatprep.subr.mxu0 0.0
        %1069 = vmatpush1.msra.mxu0 0.0
        %1070 = vmatprep.subr.mxu0 0.0
        %1071 = vmatpush1.msra.mxu0 0.0
        %1072 = vmatprep.subr.mxu0 0.0
        %1073 = vmatpush1.msra.mxu0 0.0
        %1074 = vmatprep.subr.mxu0 0.0
        %1075 = vmatpush1.msra.mxu0 0.0
        %1076 = vmatprep.subr.mxu0 0.0
        %1077 = vmatpush1.msra.mxu0 0.0
        %1078 = vmatprep.subr.mxu0 0.0
        %1079 = vmatpush1.msra.mxu0 0.0
        %1080 = vmatprep.subr.mxu0 0.0
        %1081 = vmatpush1.msra.mxu0 0.0
        %1082 = vmatprep.subr.mxu0 0.0
        %1083 = vmatpush1.msra.mxu0 0.0
        %1084 = vmatprep.subr.mxu0 0.0
        %1085 = vmatpush1.msra.mxu0 0.0
        %1086 = vmatprep.subr.mxu0 0.0
        %1087 = vmatpush1.msra.mxu0 0.0
        %1088 = vmatprep.subr.mxu0 0.0
        %1089 = vmatpush1.msra.mxu0 0.0
        %1090 = vmatprep.mubr.f32.mxu0 0.0
        %1091 = vmatmul.mubr.f32.gmra.mrb[0].mxu0 %v880
        %v1092 = vpop.f32.mrb[0].mxu0
        %v1093 = vadd.f32 0.0, %v1092
        %v1094 = vpop.f32.mrb[0].mxu0
        %1095 = vdwg.mxu0
        %v1097 = vsel %vm535, %v1093, 0
        %1099 = vmatprep.subr.mxu0 0.0
        %1100 = vmatpush1.msra.mxu0 %v331
        %1101 = vmatprep.subr.mxu0 0.0
        %1102 = vmatpush1.msra.mxu0 %v332
        %1103 = vmatprep.subr.mxu0 0.0
        %1104 = vmatpush1.msra.mxu0 0.0
        %1105 = vmatprep.subr.mxu0 0.0
        %1106 = vmatpush1.msra.mxu0 0.0
        %1107 = vmatprep.subr.mxu0 0.0
        %1108 = vmatpush1.msra.mxu0 0.0
        %1109 = vmatprep.subr.mxu0 0.0
        %1110 = vmatpush1.msra.mxu0 0.0
        %1111 = vmatprep.subr.mxu0 0.0
        %1112 = vmatpush1.msra.mxu0 0.0
        %1113 = vmatprep.subr.mxu0 0.0
        %1114 = vmatpush1.msra.mxu0 0.0
        %1115 = vmatprep.subr.mxu0 0.0
        %1116 = vmatpush1.msra.mxu0 0.0
        %1117 = vmatprep.subr.mxu0 0.0
        %1118 = vmatpush1.msra.mxu0 0.0
        %1119 = vmatprep.subr.mxu0 0.0
        %1120 = vmatpush1.msra.mxu0 0.0
        %1121 = vmatprep.subr.mxu0 0.0
        %1122 = vmatpush1.msra.mxu0 0.0
        %1123 = vmatprep.subr.mxu0 0.0
        %1124 = vmatpush1.msra.mxu0 0.0
        %1125 = vmatprep.subr.mxu0 0.0
        %1126 = vmatpush1.msra.mxu0 0.0
        %1127 = vmatprep.subr.mxu0 0.0
        %1128 = vmatpush1.msra.mxu0 0.0
        %1129 = vmatprep.subr.mxu0 0.0
        %1130 = vmatpush1.msra.mxu0 0.0
        %1131 = vmatprep.subr.mxu0 0.0
        %1132 = vmatpush1.msra.mxu0 0.0
        %1133 = vmatprep.subr.mxu0 0.0
        %1134 = vmatpush1.msra.mxu0 0.0
        %1135 = vmatprep.subr.mxu0 0.0
        %1136 = vmatpush1.msra.mxu0 0.0
        %1137 = vmatprep.subr.mxu0 0.0
        %1138 = vmatpush1.msra.mxu0 0.0
        %1139 = vmatprep.subr.mxu0 0.0
        %1140 = vmatpush1.msra.mxu0 0.0
        %1141 = vmatprep.subr.mxu0 0.0
        %1142 = vmatpush1.msra.mxu0 0.0
        %1143 = vmatprep.subr.mxu0 0.0
        %1144 = vmatpush1.msra.mxu0 0.0
        %1145 = vmatprep.subr.mxu0 0.0
        %1146 = vmatpush1.msra.mxu0 0.0
        %1147 = vmatprep.subr.mxu0 0.0
        %1148 = vmatpush1.msra.mxu0 0.0
        %1149 = vmatprep.subr.mxu0 0.0
        %1150 = vmatpush1.msra.mxu0 0.0
        %1151 = vmatprep.subr.mxu0 0.0
        %1152 = vmatpush1.msra.mxu0 0.0
        %1153 = vmatprep.subr.mxu0 0.0
        %1154 = vmatpush1.msra.mxu0 0.0
        %1155 = vmatprep.subr.mxu0 0.0
        %1156 = vmatpush1.msra.mxu0 0.0
        %1157 = vmatprep.subr.mxu0 0.0
        %1158 = vmatpush1.msra.mxu0 0.0
        %1159 = vmatprep.subr.mxu0 0.0
        %1160 = vmatpush1.msra.mxu0 0.0
        %1161 = vmatprep.subr.mxu0 0.0
        %1162 = vmatpush1.msra.mxu0 0.0
        %1163 = vmatprep.mubr.f32.mxu0 0.0
        %1164 = vmatmul.mubr.f32.gmra.mrb[0].mxu0 %v1097
        %v1165 = vpop.f32.mrb[0].mxu0
        %v1166 = vadd.f32 0.0, %v1165
        %v1167 = vpop.f32.mrb[0].mxu0
        %1168 = vdwg.mxu0
        %v1169 = vadd.f32 %v1025, %v1166
        %vm1170 = vcmask 261120
        %v1172 = vsel %vm1170, %v609, 0
        %v1175 = vsel %vm1170, %v611, 0
        %1177 = vmatprep.subr.mxu0 0.0
        %1178 = vmatpush1.xpose.msra.mxu0 %v1175
        %1179 = vmatprep.subr.mxu0 0.0
        %1180 = vmatpush1.xpose.msra.mxu0 0.0
        %1181 = vmatprep.subr.mxu0 0.0
        %1182 = vmatpush1.xpose.msra.mxu0 0.0
        %1183 = vmatprep.subr.mxu0 0.0
        %1184 = vmatpush1.xpose.msra.mxu0 0.0
        %1185 = vmatprep.subr.mxu0 0.0
        %1186 = vmatpush1.xpose.msra.mxu0 0.0
        %1187 = vmatprep.subr.mxu0 0.0
        %1188 = vmatpush1.xpose.msra.mxu0 0.0
        %1189 = vmatprep.subr.mxu0 0.0
        %1190 = vmatpush1.xpose.msra.mxu0 0.0
        %1191 = vmatprep.subr.mxu0 0.0
        %1192 = vmatpush1.xpose.msra.mxu0 0.0
        %1193 = vmatprep.subr.mxu0 0.0
        %1194 = vmatpush1.xpose.msra.mxu0 0.0
        %1195 = vmatprep.subr.mxu0 0.0
        %1196 = vmatpush1.xpose.msra.mxu0 0.0
        %1197 = vmatprep.subr.mxu0 0.0
        %1198 = vmatpush1.xpose.msra.mxu0 0.0
        %1199 = vmatprep.subr.mxu0 0.0
        %1200 = vmatpush1.xpose.msra.mxu0 0.0
        %1201 = vmatprep.subr.mxu0 0.0
        %1202 = vmatpush1.xpose.msra.mxu0 0.0
        %1203 = vmatprep.subr.mxu0 0.0
        %1204 = vmatpush1.xpose.msra.mxu0 0.0
        %1205 = vmatprep.subr.mxu0 0.0
        %1206 = vmatpush1.xpose.msra.mxu0 0.0
        %1207 = vmatprep.subr.mxu0 0.0
        %1208 = vmatpush1.xpose.msra.mxu0 0.0
        %1209 = vmatprep.subr.mxu0 0.0
        %1210 = vmatpush1.xpose.msra.mxu0 0.0
        %1211 = vmatprep.subr.mxu0 0.0
        %1212 = vmatpush1.xpose.msra.mxu0 0.0
        %1213 = vmatprep.subr.mxu0 0.0
        %1214 = vmatpush1.xpose.msra.mxu0 0.0
        %1215 = vmatprep.subr.mxu0 0.0
        %1216 = vmatpush1.xpose.msra.mxu0 0.0
        %1217 = vmatprep.subr.mxu0 0.0
        %1218 = vmatpush1.xpose.msra.mxu0 0.0
        %1219 = vmatprep.subr.mxu0 0.0
        %1220 = vmatpush1.xpose.msra.mxu0 0.0
        %1221 = vmatprep.subr.mxu0 0.0
        %1222 = vmatpush1.xpose.msra.mxu0 0.0
        %1223 = vmatprep.subr.mxu0 0.0
        %1224 = vmatpush1.xpose.msra.mxu0 0.0
        %1225 = vmatprep.subr.mxu0 0.0
        %1226 = vmatpush1.xpose.msra.mxu0 0.0
        %1227 = vmatprep.subr.mxu0 0.0
        %1228 = vmatpush1.xpose.msra.mxu0 0.0
        %1229 = vmatprep.subr.mxu0 0.0
        %1230 = vmatpush1.xpose.msra.mxu0 0.0
        %1231 = vmatprep.subr.mxu0 0.0
        %1232 = vmatpush1.xpose.msra.mxu0 0.0
        %1233 = vmatprep.subr.mxu0 0.0
        %1234 = vmatpush1.xpose.msra.mxu0 0.0
        %1235 = vmatprep.subr.mxu0 0.0
        %1236 = vmatpush1.xpose.msra.mxu0 0.0
        %1237 = vmatprep.subr.mxu0 0.0
        %1238 = vmatpush1.xpose.msra.mxu0 0.0
        %1239 = vmatprep.subr.mxu0 0.0
        %1240 = vmatpush1.xpose.msra.mxu0 0.0
        %1241 = vmatprep.mubr.f32.mxu0 0.0
        %1242 = vmatmul.mubr.f32.gmra.mrb[0].mxu0 %v1172
        %v1243 = vpop.f32.mrb[0].mxu0
        %v1244 = vadd.f32 0.0, %v1243
        %v1245 = vpop.f32.mrb[0].mxu0
        %1246 = vdwg.mxu0
        %v1247 = vsel %vm867, %v1244, -inf
        %1248 = vmax.xlane.f32.xlu0 %v1247
        %v1249 = vpop.xlane.xlu0 %1248
        %v1250 = vsub.f32 %v1244, %v1249
        %v1251 = vmul.f32 %v1250, 1.442695
        %v1252 = vpow.pop %v1251
        %v1253 = vsel %vm867, %v1252, 0.0
        %1254 = vadd.xlane.f32.xlu0 %v1253
        %v1255 = vpop.xlane.xlu0 %1254
        %v1256 = vrcp.pop %v1255
        %v1257 = vmul.f32 %v1252, %v1256
        %v1259 = vsel %vm867, %v1257, 0
        %1261 = vmatprep.subr.mxu0 0.0
        %1262 = vmatpush1.msra.mxu0 %v688
        %1263 = vmatprep.subr.mxu0 0.0
        %1264 = vmatpush1.msra.mxu0 0.0
        %1265 = vmatprep.subr.mxu0 0.0
        %1266 = vmatpush1.msra.mxu0 0.0
        %1267 = vmatprep.subr.mxu0 0.0
        %1268 = vmatpush1.msra.mxu0 0.0
        %1269 = vmatprep.subr.mxu0 0.0
        %1270 = vmatpush1.msra.mxu0 0.0
        %1271 = vmatprep.subr.mxu0 0.0
        %1272 = vmatpush1.msra.mxu0 0.0
        %1273 = vmatprep.subr.mxu0 0.0
        %1274 = vmatpush1.msra.mxu0 0.0
        %1275 = vmatprep.subr.mxu0 0.0
        %1276 = vmatpush1.msra.mxu0 0.0
        %1277 = vmatprep.subr.mxu0 0.0
        %1278 = vmatpush1.msra.mxu0 0.0
        %1279 = vmatprep.subr.mxu0 0.0
        %1280 = vmatpush1.msra.mxu0 0.0
        %1281 = vmatprep.subr.mxu0 0.0
        %1282 = vmatpush1.msra.mxu0 0.0
        %1283 = vmatprep.subr.mxu0 0.0
        %1284 = vmatpush1.msra.mxu0 0.0
        %1285 = vmatprep.subr.mxu0 0.0
        %1286 = vmatpush1.msra.mxu0 0.0
        %1287 = vmatprep.subr.mxu0 0.0
        %1288 = vmatpush1.msra.mxu0 0.0
        %1289 = vmatprep.subr.mxu0 0.0
        %1290 = vmatpush1.msra.mxu0 0.0
        %1291 = vmatprep.subr.mxu0 0.0
        %1292 = vmatpush1.msra.mxu0 0.0
        %1293 = vmatprep.subr.mxu0 0.0
        %1294 = vmatpush1.msra.mxu0 0.0
        %1295 = vmatprep.subr.mxu0 0.0
        %1296 = vmatpush1.msra.mxu0 0.0
        %1297 = vmatprep.subr.mxu0 0.0
        %1298 = vmatpush1.msra.mxu0 0.0
        %1299 = vmatprep.subr.mxu0 0.0
        %1300 = vmatpush1.msra.mxu0 0.0
        %1301 = vmatprep.subr.mxu0 0.0
        %1302 = vmatpush1.msra.mxu0 0.0
        %1303 = vmatprep.subr.mxu0 0.0
        %1304 = vmatpush1.msra.mxu0 0.0
        %1305 = vmatprep.subr.mxu0 0.0
        %1306 = vmatpush1.msra.mxu0 0.0
        %1307 = vmatprep.subr.mxu0 0.0
        %1308 = vmatpush1.msra.mxu0 0.0
        %1309 = vmatprep.subr.mxu0 0.0
        %1310 = vmatpush1.msra.mxu0 0.0
        %1311 = vmatprep.subr.mxu0 0.0
        %1312 = vmatpush1.msra.mxu0 0.0
        %1313 = vmatprep.subr.mxu0 0.0
        %1314 = vmatpush1.msra.mxu0 0.0
        %1315 = vmatprep.subr.mxu0 0.0
        %1316 = vmatpush1.msra.mxu0 0.0
        %1317 = vmatprep.subr.mxu0 0.0
        %1318 = vmatpush1.msra.mxu0 0.0
        %1319 = vmatprep.subr.mxu0 0.0
        %1320 = vmatpush1.msra.mxu0 0.0
        %1321 = vmatprep.subr.mxu0 0.0
        %1322 = vmatpush1.msra.mxu0 0.0
        %1323 = vmatprep.subr.mxu0 0.0
        %1324 = vmatpush1.msra.mxu0 0.0
        %1325 = vmatprep.mubr.f32.mxu0 0.0
        %1326 = vmatmul.mubr.f32.gmra.mrb[0].mxu0 %v1259
        %v1327 = vpop.f32.mrb[0].mxu0
        %v1328 = vadd.f32 0.0, %v1327
        %v1329 = vpop.f32.mrb[0].mxu0
        %1330 = vdwg.mxu0
        %v1332 = vsel %vm535, %v1328, 0
        %1334 = vmatprep.subr.mxu0 0.0
        %1335 = vmatpush1.msra.mxu0 %v345
        %1336 = vmatprep.subr.mxu0 0.0
        %1337 = vmatpush1.msra.mxu0 %v346
        %1338 = vmatprep.subr.mxu0 0.0
        %1339 = vmatpush1.msra.mxu0 0.0
        %1340 = vmatprep.subr.mxu0 0.0
        %1341 = vmatpush1.msra.mxu0 0.0
        %1342 = vmatprep.subr.mxu0 0.0
        %1343 = vmatpush1.msra.mxu0 0.0
        %1344 = vmatprep.subr.mxu0 0.0
        %1345 = vmatpush1.msra.mxu0 0.0
        %1346 = vmatprep.subr.mxu0 0.0
        %1347 = vmatpush1.msra.mxu0 0.0
        %1348 = vmatprep.subr.mxu0 0.0
        %1349 = vmatpush1.msra.mxu0 0.0
        %1350 = vmatprep.subr.mxu0 0.0
        %1351 = vmatpush1.msra.mxu0 0.0
        %1352 = vmatprep.subr.mxu0 0.0
        %1353 = vmatpush1.msra.mxu0 0.0
        %1354 = vmatprep.subr.mxu0 0.0
        %1355 = vmatpush1.msra.mxu0 0.0
        %1356 = vmatprep.subr.mxu0 0.0
        %1357 = vmatpush1.msra.mxu0 0.0
        %1358 = vmatprep.subr.mxu0 0.0
        %1359 = vmatpush1.msra.mxu0 0.0
        %1360 = vmatprep.subr.mxu0 0.0
        %1361 = vmatpush1.msra.mxu0 0.0
        %1362 = vmatprep.subr.mxu0 0.0
        %1363 = vmatpush1.msra.mxu0 0.0
        %1364 = vmatprep.subr.mxu0 0.0
        %1365 = vmatpush1.msra.mxu0 0.0
        %1366 = vmatprep.subr.mxu0 0.0
        %1367 = vmatpush1.msra.mxu0 0.0
        %1368 = vmatprep.subr.mxu0 0.0
        %1369 = vmatpush1.msra.mxu0 0.0
        %1370 = vmatprep.subr.mxu0 0.0
        %1371 = vmatpush1.msra.mxu0 0.0
        %1372 = vmatprep.subr.mxu0 0.0
        %1373 = vmatpush1.msra.mxu0 0.0
        %1374 = vmatprep.subr.mxu0 0.0
        %1375 = vmatpush1.msra.mxu0 0.0
        %1376 = vmatprep.subr.mxu0 0.0
        %1377 = vmatpush1.msra.mxu0 0.0
        %1378 = vmatprep.subr.mxu0 0.0
        %1379 = vmatpush1.msra.mxu0 0.0
        %1380 = vmatprep.subr.mxu0 0.0
        %1381 = vmatpush1.msra.mxu0 0.0
        %1382 = vmatprep.subr.mxu0 0.0
        %1383 = vmatpush1.msra.mxu0 0.0
        %1384 = vmatprep.subr.mxu0 0.0
        %1385 = vmatpush1.msra.mxu0 0.0
        %1386 = vmatprep.subr.mxu0 0.0
        %1387 = vmatpush1.msra.mxu0 0.0
        %1388 = vmatprep.subr.mxu0 0.0
        %1389 = vmatpush1.msra.mxu0 0.0
        %1390 = vmatprep.subr.mxu0 0.0
        %1391 = vmatpush1.msra.mxu0 0.0
        %1392 = vmatprep.subr.mxu0 0.0
        %1393 = vmatpush1.msra.mxu0 0.0
        %1394 = vmatprep.subr.mxu0 0.0
        %1395 = vmatpush1.msra.mxu0 0.0
        %1396 = vmatprep.subr.mxu0 0.0
        %1397 = vmatpush1.msra.mxu0 0.0
        %1398 = vmatprep.mubr.f32.mxu0 0.0
        %1399 = vmatmul.mubr.f32.gmra.mrb[0].mxu0 %v1332
        %v1400 = vpop.f32.mrb[0].mxu0
        %v1401 = vadd.f32 0.0, %v1400
        %v1402 = vpop.f32.mrb[0].mxu0
        %1403 = vdwg.mxu0
        %v1404 = vadd.f32 %v709, %v1401
        %1405 = vrot.lane.b32.xlu0 %v440, 80
        %v1406 = vpop.permute.xlu0 %1405
        %1407 = vrot.lane.b32.xlu0 %v686, 48
        %v1408 = vpop.permute.xlu0 %1407
        %v1409 = vsel %vm535, %v1406, 0
        %v1411 = vsel %vm535, %v1408, 0
        %1413 = vmatprep.subr.mxu0 0.0
        %1414 = vmatpush1.xpose.msra.mxu0 %v1411
        %1415 = vmatprep.subr.mxu0 0.0
        %1416 = vmatpush1.xpose.msra.mxu0 0.0
        %1417 = vmatprep.subr.mxu0 0.0
        %1418 = vmatpush1.xpose.msra.mxu0 0.0
        %1419 = vmatprep.subr.mxu0 0.0
        %1420 = vmatpush1.xpose.msra.mxu0 0.0
        %1421 = vmatprep.subr.mxu0 0.0
        %1422 = vmatpush1.xpose.msra.mxu0 0.0
        %1423 = vmatprep.subr.mxu0 0.0
        %1424 = vmatpush1.xpose.msra.mxu0 0.0
        %1425 = vmatprep.subr.mxu0 0.0
        %1426 = vmatpush1.xpose.msra.mxu0 0.0
        %1427 = vmatprep.subr.mxu0 0.0
        %1428 = vmatpush1.xpose.msra.mxu0 0.0
        %1429 = vmatprep.subr.mxu0 0.0
        %1430 = vmatpush1.xpose.msra.mxu0 0.0
        %1431 = vmatprep.subr.mxu0 0.0
        %1432 = vmatpush1.xpose.msra.mxu0 0.0
        %1433 = vmatprep.subr.mxu0 0.0
        %1434 = vmatpush1.xpose.msra.mxu0 0.0
        %1435 = vmatprep.subr.mxu0 0.0
        %1436 = vmatpush1.xpose.msra.mxu0 0.0
        %1437 = vmatprep.subr.mxu0 0.0
        %1438 = vmatpush1.xpose.msra.mxu0 0.0
        %1439 = vmatprep.subr.mxu0 0.0
        %1440 = vmatpush1.xpose.msra.mxu0 0.0
        %1441 = vmatprep.subr.mxu0 0.0
        %1442 = vmatpush1.xpose.msra.mxu0 0.0
        %1443 = vmatprep.subr.mxu0 0.0
        %1444 = vmatpush1.xpose.msra.mxu0 0.0
        %1445 = vmatprep.subr.mxu0 0.0
        %1446 = vmatpush1.xpose.msra.mxu0 0.0
        %1447 = vmatprep.subr.mxu0 0.0
        %1448 = vmatpush1.xpose.msra.mxu0 0.0
        %1449 = vmatprep.subr.mxu0 0.0
        %1450 = vmatpush1.xpose.msra.mxu0 0.0
        %1451 = vmatprep.subr.mxu0 0.0
        %1452 = vmatpush1.xpose.msra.mxu0 0.0
        %1453 = vmatprep.subr.mxu0 0.0
        %1454 = vmatpush1.xpose.msra.mxu0 0.0
        %1455 = vmatprep.subr.mxu0 0.0
        %1456 = vmatpush1.xpose.msra.mxu0 0.0
        %1457 = vmatprep.subr.mxu0 0.0
        %1458 = vmatpush1.xpose.msra.mxu0 0.0
        %1459 = vmatprep.subr.mxu0 0.0
        %1460 = vmatpush1.xpose.msra.mxu0 0.0
        %1461 = vmatprep.subr.mxu0 0.0
        %1462 = vmatpush1.xpose.msra.mxu0 0.0
        %1463 = vmatprep.subr.mxu0 0.0
        %1464 = vmatpush1.xpose.msra.mxu0 0.0
        %1465 = vmatprep.subr.mxu0 0.0
        %1466 = vmatpush1.xpose.msra.mxu0 0.0
        %1467 = vmatprep.subr.mxu0 0.0
        %1468 = vmatpush1.xpose.msra.mxu0 0.0
        %1469 = vmatprep.subr.mxu0 0.0
        %1470 = vmatpush1.xpose.msra.mxu0 0.0
        %1471 = vmatprep.subr.mxu0 0.0
        %1472 = vmatpush1.xpose.msra.mxu0 0.0
        %1473 = vmatprep.subr.mxu0 0.0
        %1474 = vmatpush1.xpose.msra.mxu0 0.0
        %1475 = vmatprep.subr.mxu0 0.0
        %1476 = vmatpush1.xpose.msra.mxu0 0.0
        %1477 = vmatprep.mubr.f32.mxu0 0.0
        %1478 = vmatmul.mubr.f32.gmra.mrb[0].mxu0 %v1409
        %v1479 = vpop.f32.mrb[0].mxu0
        %v1480 = vadd.f32 0.0, %v1479
        %v1481 = vpop.f32.mrb[0].mxu0
        %1482 = vdwg.mxu0
        %1483 = vrot.lane.b32.xlu0 %v440, 96
        %v1484 = vpop.permute.xlu0 %1483
        %1485 = vrot.lane.b32.xlu0 %v442, 48
        %v1486 = vpop.permute.xlu0 %1485
        %v1487 = vsel %vm535, %v1484, 0
        %v1489 = vsel %vm535, %v1486, 0
        %1491 = vmatprep.subr.mxu0 0.0
        %1492 = vmatpush1.xpose.msra.mxu0 %v1489
        %1493 = vmatprep.subr.mxu0 0.0
        %1494 = vmatpush1.xpose.msra.mxu0 0.0
        %1495 = vmatprep.subr.mxu0 0.0
        %1496 = vmatpush1.xpose.msra.mxu0 0.0
        %1497 = vmatprep.subr.mxu0 0.0
        %1498 = vmatpush1.xpose.msra.mxu0 0.0
        %1499 = vmatprep.subr.mxu0 0.0
        %1500 = vmatpush1.xpose.msra.mxu0 0.0
        %1501 = vmatprep.subr.mxu0 0.0
        %1502 = vmatpush1.xpose.msra.mxu0 0.0
        %1503 = vmatprep.subr.mxu0 0.0
        %1504 = vmatpush1.xpose.msra.mxu0 0.0
        %1505 = vmatprep.subr.mxu0 0.0
        %1506 = vmatpush1.xpose.msra.mxu0 0.0
        %1507 = vmatprep.subr.mxu0 0.0
        %1508 = vmatpush1.xpose.msra.mxu0 0.0
        %1509 = vmatprep.subr.mxu0 0.0
        %1510 = vmatpush1.xpose.msra.mxu0 0.0
        %1511 = vmatprep.subr.mxu0 0.0
        %1512 = vmatpush1.xpose.msra.mxu0 0.0
        %1513 = vmatprep.subr.mxu0 0.0
        %1514 = vmatpush1.xpose.msra.mxu0 0.0
        %1515 = vmatprep.subr.mxu0 0.0
        %1516 = vmatpush1.xpose.msra.mxu0 0.0
        %1517 = vmatprep.subr.mxu0 0.0
        %1518 = vmatpush1.xpose.msra.mxu0 0.0
        %1519 = vmatprep.subr.mxu0 0.0
        %1520 = vmatpush1.xpose.msra.mxu0 0.0
        %1521 = vmatprep.subr.mxu0 0.0
        %1522 = vmatpush1.xpose.msra.mxu0 0.0
        %1523 = vmatprep.subr.mxu0 0.0
        %1524 = vmatpush1.xpose.msra.mxu0 0.0
        %1525 = vmatprep.subr.mxu0 0.0
        %1526 = vmatpush1.xpose.msra.mxu0 0.0
        %1527 = vmatprep.subr.mxu0 0.0
        %1528 = vmatpush1.xpose.msra.mxu0 0.0
        %1529 = vmatprep.subr.mxu0 0.0
        %1530 = vmatpush1.xpose.msra.mxu0 0.0
        %1531 = vmatprep.subr.mxu0 0.0
        %1532 = vmatpush1.xpose.msra.mxu0 0.0
        %1533 = vmatprep.subr.mxu0 0.0
        %1534 = vmatpush1.xpose.msra.mxu0 0.0
        %1535 = vmatprep.subr.mxu0 0.0
        %1536 = vmatpush1.xpose.msra.mxu0 0.0
        %1537 = vmatprep.subr.mxu0 0.0
        %1538 = vmatpush1.xpose.msra.mxu0 0.0
        %1539 = vmatprep.subr.mxu0 0.0
        %1540 = vmatpush1.xpose.msra.mxu0 0.0
        %1541 = vmatprep.subr.mxu0 0.0
        %1542 = vmatpush1.xpose.msra.mxu0 0.0
        %1543 = vmatprep.subr.mxu0 0.0
        %1544 = vmatpush1.xpose.msra.mxu0 0.0
        %1545 = vmatprep.subr.mxu0 0.0
        %1546 = vmatpush1.xpose.msra.mxu0 0.0
        %1547 = vmatprep.subr.mxu0 0.0
        %1548 = vmatpush1.xpose.msra.mxu0 0.0
        %1549 = vmatprep.subr.mxu0 0.0
        %1550 = vmatpush1.xpose.msra.mxu0 0.0
        %1551 = vmatprep.subr.mxu0 0.0
        %1552 = vmatpush1.xpose.msra.mxu0 0.0
        %1553 = vmatprep.subr.mxu0 0.0
        %1554 = vmatpush1.xpose.msra.mxu0 0.0
        %1555 = vmatprep.mubr.f32.mxu0 0.0
        %1556 = vmatmul.mubr.f32.gmra.mrb[0].mxu0 %v1487
        %v1557 = vpop.f32.mrb[0].mxu0
        %v1558 = vadd.f32 %v1480, %v1557
        %v1559 = vpop.f32.mrb[0].mxu0
        %1560 = vdwg.mxu0
        %v1561 = vsel %vm867, %v1558, -inf
        %1562 = vmax.xlane.f32.xlu0 %v1561
        %v1563 = vpop.xlane.xlu0 %1562
        %v1564 = vsub.f32 %v1558, %v1563
        %v1565 = vmul.f32 %v1564, 1.442695
        %v1566 = vpow.pop %v1565
        %v1567 = vsel %vm867, %v1566, 0.0
        %1568 = vadd.xlane.f32.xlu0 %v1567
        %v1569 = vpop.xlane.xlu0 %1568
        %v1570 = vrcp.pop %v1569
        %v1571 = vmul.f32 %v1566, %v1570
        %1573 = vrot.lane.b32.xlu0 %v517, 112
        %v1574 = vpop.permute.xlu0 %1573
        %v1577 = vsel %vm867, %v1571, 0
        %1579 = vmatprep.subr.mxu0 0.0
        %1580 = vmatpush1.msra.mxu0 %v1574
        %1581 = vmatprep.subr.mxu0 0.0
        %1582 = vmatpush1.msra.mxu0 0.0
        %1583 = vmatprep.subr.mxu0 0.0
        %1584 = vmatpush1.msra.mxu0 0.0
        %1585 = vmatprep.subr.mxu0 0.0
        %1586 = vmatpush1.msra.mxu0 0.0
        %1587 = vmatprep.subr.mxu0 0.0
        %1588 = vmatpush1.msra.mxu0 0.0
        %1589 = vmatprep.subr.mxu0 0.0
        %1590 = vmatpush1.msra.mxu0 0.0
        %1591 = vmatprep.subr.mxu0 0.0
        %1592 = vmatpush1.msra.mxu0 0.0
        %1593 = vmatprep.subr.mxu0 0.0
        %1594 = vmatpush1.msra.mxu0 0.0
        %1595 = vmatprep.subr.mxu0 0.0
        %1596 = vmatpush1.msra.mxu0 0.0
        %1597 = vmatprep.subr.mxu0 0.0
        %1598 = vmatpush1.msra.mxu0 0.0
        %1599 = vmatprep.subr.mxu0 0.0
        %1600 = vmatpush1.msra.mxu0 0.0
        %1601 = vmatprep.subr.mxu0 0.0
        %1602 = vmatpush1.msra.mxu0 0.0
        %1603 = vmatprep.subr.mxu0 0.0
        %1604 = vmatpush1.msra.mxu0 0.0
        %1605 = vmatprep.subr.mxu0 0.0
        %1606 = vmatpush1.msra.mxu0 0.0
        %1607 = vmatprep.subr.mxu0 0.0
        %1608 = vmatpush1.msra.mxu0 0.0
        %1609 = vmatprep.subr.mxu0 0.0
        %1610 = vmatpush1.msra.mxu0 0.0
        %1611 = vmatprep.subr.mxu0 0.0
        %1612 = vmatpush1.msra.mxu0 0.0
        %1613 = vmatprep.subr.mxu0 0.0
        %1614 = vmatpush1.msra.mxu0 0.0
        %1615 = vmatprep.subr.mxu0 0.0
        %1616 = vmatpush1.msra.mxu0 0.0
        %1617 = vmatprep.subr.mxu0 0.0
        %1618 = vmatpush1.msra.mxu0 0.0
        %1619 = vmatprep.subr.mxu0 0.0
        %1620 = vmatpush1.msra.mxu0 0.0
        %1621 = vmatprep.subr.mxu0 0.0
        %1622 = vmatpush1.msra.mxu0 0.0
        %1623 = vmatprep.subr.mxu0 0.0
        %1624 = vmatpush1.msra.mxu0 0.0
        %1625 = vmatprep.subr.mxu0 0.0
        %1626 = vmatpush1.msra.mxu0 0.0
        %1627 = vmatprep.subr.mxu0 0.0
        %1628 = vmatpush1.msra.mxu0 0.0
        %1629 = vmatprep.subr.mxu0 0.0
        %1630 = vmatpush1.msra.mxu0 0.0
        %1631 = vmatprep.subr.mxu0 0.0
        %1632 = vmatpush1.msra.mxu0 0.0
        %1633 = vmatprep.subr.mxu0 0.0
        %1634 = vmatpush1.msra.mxu0 0.0
        %1635 = vmatprep.subr.mxu0 0.0
        %1636 = vmatpush1.msra.mxu0 0.0
        %1637 = vmatprep.subr.mxu0 0.0
        %1638 = vmatpush1.msra.mxu0 0.0
        %1639 = vmatprep.subr.mxu0 0.0
        %1640 = vmatpush1.msra.mxu0 0.0
        %1641 = vmatprep.subr.mxu0 0.0
        %1642 = vmatpush1.msra.mxu0 0.0
        %1643 = vmatprep.mubr.f32.mxu0 0.0
        %1644 = vmatmul.mubr.f32.gmra.mrb[0].mxu0 %v1577
        %v1645 = vpop.f32.mrb[0].mxu0
        %v1646 = vadd.f32 0.0, %v1645
        %v1647 = vpop.f32.mrb[0].mxu0
        %1648 = vdwg.mxu0
        %v1650 = vsel %vm535, %v1646, 0
        %1652 = vmatprep.subr.mxu0 0.0
        %1653 = vmatpush1.msra.mxu0 %v333
        %1654 = vmatprep.subr.mxu0 0.0
        %1655 = vmatpush1.msra.mxu0 %v334
        %1656 = vmatprep.subr.mxu0 0.0
        %1657 = vmatpush1.msra.mxu0 0.0
        %1658 = vmatprep.subr.mxu0 0.0
        %1659 = vmatpush1.msra.mxu0 0.0
        %1660 = vmatprep.subr.mxu0 0.0
        %1661 = vmatpush1.msra.mxu0 0.0
        %1662 = vmatprep.subr.mxu0 0.0
        %1663 = vmatpush1.msra.mxu0 0.0
        %1664 = vmatprep.subr.mxu0 0.0
        %1665 = vmatpush1.msra.mxu0 0.0
        %1666 = vmatprep.subr.mxu0 0.0
        %1667 = vmatpush1.msra.mxu0 0.0
        %1668 = vmatprep.subr.mxu0 0.0
        %1669 = vmatpush1.msra.mxu0 0.0
        %1670 = vmatprep.subr.mxu0 0.0
        %1671 = vmatpush1.msra.mxu0 0.0
        %1672 = vmatprep.subr.mxu0 0.0
        %1673 = vmatpush1.msra.mxu0 0.0
        %1674 = vmatprep.subr.mxu0 0.0
        %1675 = vmatpush1.msra.mxu0 0.0
        %1676 = vmatprep.subr.mxu0 0.0
        %1677 = vmatpush1.msra.mxu0 0.0
        %1678 = vmatprep.subr.mxu0 0.0
        %1679 = vmatpush1.msra.mxu0 0.0
        %1680 = vmatprep.subr.mxu0 0.0
        %1681 = vmatpush1.msra.mxu0 0.0
        %1682 = vmatprep.subr.mxu0 0.0
        %1683 = vmatpush1.msra.mxu0 0.0
        %1684 = vmatprep.subr.mxu0 0.0
        %1685 = vmatpush1.msra.mxu0 0.0
        %1686 = vmatprep.subr.mxu0 0.0
        %1687 = vmatpush1.msra.mxu0 0.0
        %1688 = vmatprep.subr.mxu0 0.0
        %1689 = vmatpush1.msra.mxu0 0.0
        %1690 = vmatprep.subr.mxu0 0.0
        %1691 = vmatpush1.msra.mxu0 0.0
        %1692 = vmatprep.subr.mxu0 0.0
        %1693 = vmatpush1.msra.mxu0 0.0
        %1694 = vmatprep.subr.mxu0 0.0
        %1695 = vmatpush1.msra.mxu0 0.0
        %1696 = vmatprep.subr.mxu0 0.0
        %1697 = vmatpush1.msra.mxu0 0.0
        %1698 = vmatprep.subr.mxu0 0.0
        %1699 = vmatpush1.msra.mxu0 0.0
        %1700 = vmatprep.subr.mxu0 0.0
        %1701 = vmatpush1.msra.mxu0 0.0
        %1702 = vmatprep.subr.mxu0 0.0
        %1703 = vmatpush1.msra.mxu0 0.0
        %1704 = vmatprep.subr.mxu0 0.0
        %1705 = vmatpush1.msra.mxu0 0.0
        %1706 = vmatprep.subr.mxu0 0.0
        %1707 = vmatpush1.msra.mxu0 0.0
        %1708 = vmatprep.subr.mxu0 0.0
        %1709 = vmatpush1.msra.mxu0 0.0
        %1710 = vmatprep.subr.mxu0 0.0
        %1711 = vmatpush1.msra.mxu0 0.0
        %1712 = vmatprep.subr.mxu0 0.0
        %1713 = vmatpush1.msra.mxu0 0.0
        %1714 = vmatprep.subr.mxu0 0.0
        %1715 = vmatpush1.msra.mxu0 0.0
        %1716 = vmatprep.mubr.f32.mxu0 0.0
        %1717 = vmatmul.mubr.f32.gmra.mrb[0].mxu0 %v1650
        %v1718 = vpop.f32.mrb[0].mxu0
        %v1719 = vadd.f32 0.0, %v1718
        %v1720 = vpop.f32.mrb[0].mxu0
        %1721 = vdwg.mxu0
        %v1722 = vadd.f32 %v1169, %v1719
        %1724 = vrot.lane.b32.xlu0 %v688, 112
        %v1725 = vpop.permute.xlu0 %1724
        %1727 = vmatprep.subr.mxu0 0.0
        %1728 = vmatpush1.msra.mxu0 %v1725
        %1729 = vmatprep.subr.mxu0 0.0
        %1730 = vmatpush1.msra.mxu0 0.0
        %1731 = vmatprep.subr.mxu0 0.0
        %1732 = vmatpush1.msra.mxu0 0.0
        %1733 = vmatprep.subr.mxu0 0.0
        %1734 = vmatpush1.msra.mxu0 0.0
        %1735 = vmatprep.subr.mxu0 0.0
        %1736 = vmatpush1.msra.mxu0 0.0
        %1737 = vmatprep.subr.mxu0 0.0
        %1738 = vmatpush1.msra.mxu0 0.0
        %1739 = vmatprep.subr.mxu0 0.0
        %1740 = vmatpush1.msra.mxu0 0.0
        %1741 = vmatprep.subr.mxu0 0.0
        %1742 = vmatpush1.msra.mxu0 0.0
        %1743 = vmatprep.subr.mxu0 0.0
        %1744 = vmatpush1.msra.mxu0 0.0
        %1745 = vmatprep.subr.mxu0 0.0
        %1746 = vmatpush1.msra.mxu0 0.0
        %1747 = vmatprep.subr.mxu0 0.0
        %1748 = vmatpush1.msra.mxu0 0.0
        %1749 = vmatprep.subr.mxu0 0.0
        %1750 = vmatpush1.msra.mxu0 0.0
        %1751 = vmatprep.subr.mxu0 0.0
        %1752 = vmatpush1.msra.mxu0 0.0
        %1753 = vmatprep.subr.mxu0 0.0
        %1754 = vmatpush1.msra.mxu0 0.0
        %1755 = vmatprep.subr.mxu0 0.0
        %1756 = vmatpush1.msra.mxu0 0.0
        %1757 = vmatprep.subr.mxu0 0.0
        %1758 = vmatpush1.msra.mxu0 0.0
        %1759 = vmatprep.subr.mxu0 0.0
        %1760 = vmatpush1.msra.mxu0 0.0
        %1761 = vmatprep.subr.mxu0 0.0
        %1762 = vmatpush1.msra.mxu0 0.0
        %1763 = vmatprep.subr.mxu0 0.0
        %1764 = vmatpush1.msra.mxu0 0.0
        %1765 = vmatprep.subr.mxu0 0.0
        %1766 = vmatpush1.msra.mxu0 0.0
        %1767 = vmatprep.subr.mxu0 0.0
        %1768 = vmatpush1.msra.mxu0 0.0
        %1769 = vmatprep.subr.mxu0 0.0
        %1770 = vmatpush1.msra.mxu0 0.0
        %1771 = vmatprep.subr.mxu0 0.0
        %1772 = vmatpush1.msra.mxu0 0.0
        %1773 = vmatprep.subr.mxu0 0.0
        %1774 = vmatpush1.msra.mxu0 0.0
        %1775 = vmatprep.subr.mxu0 0.0
        %1776 = vmatpush1.msra.mxu0 0.0
        %1777 = vmatprep.subr.mxu0 0.0
        %1778 = vmatpush1.msra.mxu0 0.0
        %1779 = vmatprep.subr.mxu0 0.0
        %1780 = vmatpush1.msra.mxu0 0.0
        %1781 = vmatprep.subr.mxu0 0.0
        %1782 = vmatpush1.msra.mxu0 0.0
        %1783 = vmatprep.subr.mxu0 0.0
        %1784 = vmatpush1.msra.mxu0 0.0
        %1785 = vmatprep.subr.mxu0 0.0
        %1786 = vmatpush1.msra.mxu0 0.0
        %1787 = vmatprep.subr.mxu0 0.0
        %1788 = vmatpush1.msra.mxu0 0.0
        %1789 = vmatprep.subr.mxu0 0.0
        %1790 = vmatpush1.msra.mxu0 0.0
        %1791 = vmatprep.mubr.f32.mxu0 0.0
        %1792 = vmatmul.mubr.f32.gmra.mrb[0].mxu0 %v1577
        %v1793 = vpop.f32.mrb[0].mxu0
        %v1794 = vadd.f32 0.0, %v1793
        %v1795 = vpop.f32.mrb[0].mxu0
        %1796 = vdwg.mxu0
        %v1798 = vsel %vm535, %v1794, 0
        %1800 = vmatprep.subr.mxu0 0.0
        %1801 = vmatpush1.msra.mxu0 %v335
        %1802 = vmatprep.subr.mxu0 0.0
        %1803 = vmatpush1.msra.mxu0 %v336
        %1804 = vmatprep.subr.mxu0 0.0
        %1805 = vmatpush1.msra.mxu0 0.0
        %1806 = vmatprep.subr.mxu0 0.0
        %1807 = vmatpush1.msra.mxu0 0.0
        %1808 = vmatprep.subr.mxu0 0.0
        %1809 = vmatpush1.msra.mxu0 0.0
        %1810 = vmatprep.subr.mxu0 0.0
        %1811 = vmatpush1.msra.mxu0 0.0
        %1812 = vmatprep.subr.mxu0 0.0
        %1813 = vmatpush1.msra.mxu0 0.0
        %1814 = vmatprep.subr.mxu0 0.0
        %1815 = vmatpush1.msra.mxu0 0.0
        %1816 = vmatprep.subr.mxu0 0.0
        %1817 = vmatpush1.msra.mxu0 0.0
        %1818 = vmatprep.subr.mxu0 0.0
        %1819 = vmatpush1.msra.mxu0 0.0
        %1820 = vmatprep.subr.mxu0 0.0
        %1821 = vmatpush1.msra.mxu0 0.0
        %1822 = vmatprep.subr.mxu0 0.0
        %1823 = vmatpush1.msra.mxu0 0.0
        %1824 = vmatprep.subr.mxu0 0.0
        %1825 = vmatpush1.msra.mxu0 0.0
        %1826 = vmatprep.subr.mxu0 0.0
        %1827 = vmatpush1.msra.mxu0 0.0
        %1828 = vmatprep.subr.mxu0 0.0
        %1829 = vmatpush1.msra.mxu0 0.0
        %1830 = vmatprep.subr.mxu0 0.0
        %1831 = vmatpush1.msra.mxu0 0.0
        %1832 = vmatprep.subr.mxu0 0.0
        %1833 = vmatpush1.msra.mxu0 0.0
        %1834 = vmatprep.subr.mxu0 0.0
        %1835 = vmatpush1.msra.mxu0 0.0
        %1836 = vmatprep.subr.mxu0 0.0
        %1837 = vmatpush1.msra.mxu0 0.0
        %1838 = vmatprep.subr.mxu0 0.0
        %1839 = vmatpush1.msra.mxu0 0.0
        %1840 = vmatprep.subr.mxu0 0.0
        %1841 = vmatpush1.msra.mxu0 0.0
        %1842 = vmatprep.subr.mxu0 0.0
        %1843 = vmatpush1.msra.mxu0 0.0
        %1844 = vmatprep.subr.mxu0 0.0
        %1845 = vmatpush1.msra.mxu0 0.0
        %1846 = vmatprep.subr.mxu0 0.0
        %1847 = vmatpush1.msra.mxu0 0.0
        %1848 = vmatprep.subr.mxu0 0.0
        %1849 = vmatpush1.msra.mxu0 0.0
        %1850 = vmatprep.subr.mxu0 0.0
        %1851 = vmatpush1.msra.mxu0 0.0
        %1852 = vmatprep.subr.mxu0 0.0
        %1853 = vmatpush1.msra.mxu0 0.0
        %1854 = vmatprep.subr.mxu0 0.0
        %1855 = vmatpush1.msra.mxu0 0.0
        %1856 = vmatprep.subr.mxu0 0.0
        %1857 = vmatpush1.msra.mxu0 0.0
        %1858 = vmatprep.subr.mxu0 0.0
        %1859 = vmatpush1.msra.mxu0 0.0
        %1860 = vmatprep.subr.mxu0 0.0
        %1861 = vmatpush1.msra.mxu0 0.0
        %1862 = vmatprep.subr.mxu0 0.0
        %1863 = vmatpush1.msra.mxu0 0.0
        %1864 = vmatprep.mubr.f32.mxu0 0.0
        %1865 = vmatmul.mubr.f32.gmra.mrb[0].mxu0 %v1798
        %v1866 = vpop.f32.mrb[0].mxu0
        %v1867 = vadd.f32 0.0, %v1866
        %v1868 = vpop.f32.mrb[0].mxu0
        %1869 = vdwg.mxu0
        %v1870 = vadd.f32 %v1722, %v1867
        %1871 = vrot.lane.b32.xlu0 %v609, 96
        %v1872 = vpop.permute.xlu0 %1871
        %1873 = vrot.lane.b32.xlu0 %v611, 96
        %v1874 = vpop.permute.xlu0 %1873
        %v1875 = vsel %vm1170, %v1872, 0
        %v1877 = vsel %vm1170, %v1874, 0
        %1879 = vmatprep.subr.mxu0 0.0
        %1880 = vmatpush1.xpose.msra.mxu0 %v1877
        %1881 = vmatprep.subr.mxu0 0.0
        %1882 = vmatpush1.xpose.msra.mxu0 0.0
        %1883 = vmatprep.subr.mxu0 0.0
        %1884 = vmatpush1.xpose.msra.mxu0 0.0
        %1885 = vmatprep.subr.mxu0 0.0
        %1886 = vmatpush1.xpose.msra.mxu0 0.0
        %1887 = vmatprep.subr.mxu0 0.0
        %1888 = vmatpush1.xpose.msra.mxu0 0.0
        %1889 = vmatprep.subr.mxu0 0.0
        %1890 = vmatpush1.xpose.msra.mxu0 0.0
        %1891 = vmatprep.subr.mxu0 0.0
        %1892 = vmatpush1.xpose.msra.mxu0 0.0
        %1893 = vmatprep.subr.mxu0 0.0
        %1894 = vmatpush1.xpose.msra.mxu0 0.0
        %1895 = vmatprep.subr.mxu0 0.0
        %1896 = vmatpush1.xpose.msra.mxu0 0.0
        %1897 = vmatprep.subr.mxu0 0.0
        %1898 = vmatpush1.xpose.msra.mxu0 0.0
        %1899 = vmatprep.subr.mxu0 0.0
        %1900 = vmatpush1.xpose.msra.mxu0 0.0
        %1901 = vmatprep.subr.mxu0 0.0
        %1902 = vmatpush1.xpose.msra.mxu0 0.0
        %1903 = vmatprep.subr.mxu0 0.0
        %1904 = vmatpush1.xpose.msra.mxu0 0.0
        %1905 = vmatprep.subr.mxu0 0.0
        %1906 = vmatpush1.xpose.msra.mxu0 0.0
        %1907 = vmatprep.subr.mxu0 0.0
        %1908 = vmatpush1.xpose.msra.mxu0 0.0
        %1909 = vmatprep.subr.mxu0 0.0
        %1910 = vmatpush1.xpose.msra.mxu0 0.0
        %1911 = vmatprep.subr.mxu0 0.0
        %1912 = vmatpush1.xpose.msra.mxu0 0.0
        %1913 = vmatprep.subr.mxu0 0.0
        %1914 = vmatpush1.xpose.msra.mxu0 0.0
        %1915 = vmatprep.subr.mxu0 0.0
        %1916 = vmatpush1.xpose.msra.mxu0 0.0
        %1917 = vmatprep.subr.mxu0 0.0
        %1918 = vmatpush1.xpose.msra.mxu0 0.0
        %1919 = vmatprep.subr.mxu0 0.0
        %1920 = vmatpush1.xpose.msra.mxu0 0.0
        %1921 = vmatprep.subr.mxu0 0.0
        %1922 = vmatpush1.xpose.msra.mxu0 0.0
        %1923 = vmatprep.subr.mxu0 0.0
        %1924 = vmatpush1.xpose.msra.mxu0 0.0
        %1925 = vmatprep.subr.mxu0 0.0
        %1926 = vmatpush1.xpose.msra.mxu0 0.0
        %1927 = vmatprep.subr.mxu0 0.0
        %1928 = vmatpush1.xpose.msra.mxu0 0.0
        %1929 = vmatprep.subr.mxu0 0.0
        %1930 = vmatpush1.xpose.msra.mxu0 0.0
        %1931 = vmatprep.subr.mxu0 0.0
        %1932 = vmatpush1.xpose.msra.mxu0 0.0
        %1933 = vmatprep.subr.mxu0 0.0
        %1934 = vmatpush1.xpose.msra.mxu0 0.0
        %1935 = vmatprep.subr.mxu0 0.0
        %1936 = vmatpush1.xpose.msra.mxu0 0.0
        %1937 = vmatprep.subr.mxu0 0.0
        %1938 = vmatpush1.xpose.msra.mxu0 0.0
        %1939 = vmatprep.subr.mxu0 0.0
        %1940 = vmatpush1.xpose.msra.mxu0 0.0
        %1941 = vmatprep.subr.mxu0 0.0
        %1942 = vmatpush1.xpose.msra.mxu0 0.0
        %1943 = vmatprep.mubr.f32.mxu0 0.0
        %1944 = vmatmul.mubr.f32.gmra.mrb[0].mxu0 %v1875
        %v1945 = vpop.f32.mrb[0].mxu0
        %v1946 = vadd.f32 0.0, %v1945
        %v1947 = vpop.f32.mrb[0].mxu0
        %1948 = vdwg.mxu0
        %v1949 = vsel %vm867, %v1946, -inf
        %1950 = vmax.xlane.f32.xlu0 %v1949
        %v1951 = vpop.xlane.xlu0 %1950
        %v1952 = vsub.f32 %v1946, %v1951
        %v1953 = vmul.f32 %v1952, 1.442695
        %v1954 = vpow.pop %v1953
        %v1955 = vsel %vm867, %v1954, 0.0
        %1956 = vadd.xlane.f32.xlu0 %v1955
        %v1957 = vpop.xlane.xlu0 %1956
        %v1958 = vrcp.pop %v1957
        %v1959 = vmul.f32 %v1954, %v1958
        %v1961 = vsel %vm867, %v1959, 0
        %1963 = vmatprep.subr.mxu0 0.0
        %1964 = vmatpush1.msra.mxu0 %v1725
        %1965 = vmatprep.subr.mxu0 0.0
        %1966 = vmatpush1.msra.mxu0 0.0
        %1967 = vmatprep.subr.mxu0 0.0
        %1968 = vmatpush1.msra.mxu0 0.0
        %1969 = vmatprep.subr.mxu0 0.0
        %1970 = vmatpush1.msra.mxu0 0.0
        %1971 = vmatprep.subr.mxu0 0.0
        %1972 = vmatpush1.msra.mxu0 0.0
        %1973 = vmatprep.subr.mxu0 0.0
        %1974 = vmatpush1.msra.mxu0 0.0
        %1975 = vmatprep.subr.mxu0 0.0
        %1976 = vmatpush1.msra.mxu0 0.0
        %1977 = vmatprep.subr.mxu0 0.0
        %1978 = vmatpush1.msra.mxu0 0.0
        %1979 = vmatprep.subr.mxu0 0.0
        %1980 = vmatpush1.msra.mxu0 0.0
        %1981 = vmatprep.subr.mxu0 0.0
        %1982 = vmatpush1.msra.mxu0 0.0
        %1983 = vmatprep.subr.mxu0 0.0
        %1984 = vmatpush1.msra.mxu0 0.0
        %1985 = vmatprep.subr.mxu0 0.0
        %1986 = vmatpush1.msra.mxu0 0.0
        %1987 = vmatprep.subr.mxu0 0.0
        %1988 = vmatpush1.msra.mxu0 0.0
        %1989 = vmatprep.subr.mxu0 0.0
        %1990 = vmatpush1.msra.mxu0 0.0
        %1991 = vmatprep.subr.mxu0 0.0
        %1992 = vmatpush1.msra.mxu0 0.0
        %1993 = vmatprep.subr.mxu0 0.0
        %1994 = vmatpush1.msra.mxu0 0.0
        %1995 = vmatprep.subr.mxu0 0.0
        %1996 = vmatpush1.msra.mxu0 0.0
        %1997 = vmatprep.subr.mxu0 0.0
        %1998 = vmatpush1.msra.mxu0 0.0
        %1999 = vmatprep.subr.mxu0 0.0
        %2000 = vmatpush1.msra.mxu0 0.0
        %2001 = vmatprep.subr.mxu0 0.0
        %2002 = vmatpush1.msra.mxu0 0.0
        %2003 = vmatprep.subr.mxu0 0.0
        %2004 = vmatpush1.msra.mxu0 0.0
        %2005 = vmatprep.subr.mxu0 0.0
        %2006 = vmatpush1.msra.mxu0 0.0
        %2007 = vmatprep.subr.mxu0 0.0
        %2008 = vmatpush1.msra.mxu0 0.0
        %2009 = vmatprep.subr.mxu0 0.0
        %2010 = vmatpush1.msra.mxu0 0.0
        %2011 = vmatprep.subr.mxu0 0.0
        %2012 = vmatpush1.msra.mxu0 0.0
        %2013 = vmatprep.subr.mxu0 0.0
        %2014 = vmatpush1.msra.mxu0 0.0
        %2015 = vmatprep.subr.mxu0 0.0
        %2016 = vmatpush1.msra.mxu0 0.0
        %2017 = vmatprep.subr.mxu0 0.0
        %2018 = vmatpush1.msra.mxu0 0.0
        %2019 = vmatprep.subr.mxu0 0.0
        %2020 = vmatpush1.msra.mxu0 0.0
        %2021 = vmatprep.subr.mxu0 0.0
        %2022 = vmatpush1.msra.mxu0 0.0
        %2023 = vmatprep.subr.mxu0 0.0
        %2024 = vmatpush1.msra.mxu0 0.0
        %2025 = vmatprep.subr.mxu0 0.0
        %2026 = vmatpush1.msra.mxu0 0.0
        %2027 = vmatprep.mubr.f32.mxu0 0.0
        %2028 = vmatmul.mubr.f32.gmra.mrb[0].mxu0 %v1961
        %v2029 = vpop.f32.mrb[0].mxu0
        %v2030 = vadd.f32 0.0, %v2029
        %v2031 = vpop.f32.mrb[0].mxu0
        %2032 = vdwg.mxu0
        %v2034 = vsel %vm535, %v2030, 0
        %2036 = vmatprep.subr.mxu0 0.0
        %2037 = vmatpush1.msra.mxu0 %v347
        %2038 = vmatprep.subr.mxu0 0.0
        %2039 = vmatpush1.msra.mxu0 %v348
        %2040 = vmatprep.subr.mxu0 0.0
        %2041 = vmatpush1.msra.mxu0 0.0
        %2042 = vmatprep.subr.mxu0 0.0
        %2043 = vmatpush1.msra.mxu0 0.0
        %2044 = vmatprep.subr.mxu0 0.0
        %2045 = vmatpush1.msra.mxu0 0.0
        %2046 = vmatprep.subr.mxu0 0.0
        %2047 = vmatpush1.msra.mxu0 0.0
        %2048 = vmatprep.subr.mxu0 0.0
        %2049 = vmatpush1.msra.mxu0 0.0
        %2050 = vmatprep.subr.mxu0 0.0
        %2051 = vmatpush1.msra.mxu0 0.0
        %2052 = vmatprep.subr.mxu0 0.0
        %2053 = vmatpush1.msra.mxu0 0.0
        %2054 = vmatprep.subr.mxu0 0.0
        %2055 = vmatpush1.msra.mxu0 0.0
        %2056 = vmatprep.subr.mxu0 0.0
        %2057 = vmatpush1.msra.mxu0 0.0
        %2058 = vmatprep.subr.mxu0 0.0
        %2059 = vmatpush1.msra.mxu0 0.0
        %2060 = vmatprep.subr.mxu0 0.0
        %2061 = vmatpush1.msra.mxu0 0.0
        %2062 = vmatprep.subr.mxu0 0.0
        %2063 = vmatpush1.msra.mxu0 0.0
        %2064 = vmatprep.subr.mxu0 0.0
        %2065 = vmatpush1.msra.mxu0 0.0
        %2066 = vmatprep.subr.mxu0 0.0
        %2067 = vmatpush1.msra.mxu0 0.0
        %2068 = vmatprep.subr.mxu0 0.0
        %2069 = vmatpush1.msra.mxu0 0.0
        %2070 = vmatprep.subr.mxu0 0.0
        %2071 = vmatpush1.msra.mxu0 0.0
        %2072 = vmatprep.subr.mxu0 0.0
        %2073 = vmatpush1.msra.mxu0 0.0
        %2074 = vmatprep.subr.mxu0 0.0
        %2075 = vmatpush1.msra.mxu0 0.0
        %2076 = vmatprep.subr.mxu0 0.0
        %2077 = vmatpush1.msra.mxu0 0.0
        %2078 = vmatprep.subr.mxu0 0.0
        %2079 = vmatpush1.msra.mxu0 0.0
        %2080 = vmatprep.subr.mxu0 0.0
        %2081 = vmatpush1.msra.mxu0 0.0
        %2082 = vmatprep.subr.mxu0 0.0
        %2083 = vmatpush1.msra.mxu0 0.0
        %2084 = vmatprep.subr.mxu0 0.0
        %2085 = vmatpush1.msra.mxu0 0.0
        %2086 = vmatprep.subr.mxu0 0.0
        %2087 = vmatpush1.msra.mxu0 0.0
        %2088 = vmatprep.subr.mxu0 0.0
        %2089 = vmatpush1.msra.mxu0 0.0
        %2090 = vmatprep.subr.mxu0 0.0
        %2091 = vmatpush1.msra.mxu0 0.0
        %2092 = vmatprep.subr.mxu0 0.0
        %2093 = vmatpush1.msra.mxu0 0.0
        %2094 = vmatprep.subr.mxu0 0.0
        %2095 = vmatpush1.msra.mxu0 0.0
        %2096 = vmatprep.subr.mxu0 0.0
        %2097 = vmatpush1.msra.mxu0 0.0
        %2098 = vmatprep.subr.mxu0 0.0
        %2099 = vmatpush1.msra.mxu0 0.0
        %2100 = vmatprep.mubr.f32.mxu0 0.0
        %2101 = vmatmul.mubr.f32.gmra.mrb[0].mxu0 %v2034
        %v2102 = vpop.f32.mrb[0].mxu0
        %v2103 = vadd.f32 0.0, %v2102
        %v2104 = vpop.f32.mrb[0].mxu0
        %2105 = vdwg.mxu0
        %v2106 = vadd.f32 %v1404, %v2103
        %2107 = vrot.lane.b32.xlu0 %v440, 48
        %v2108 = vpop.permute.xlu0 %2107
        %2109 = vrot.lane.b32.xlu0 %v686, 32
        %v2110 = vpop.permute.xlu0 %2109
        %v2111 = vsel %vm535, %v2108, 0
        %v2113 = vsel %vm535, %v2110, 0
        %2115 = vmatprep.subr.mxu0 0.0
        %2116 = vmatpush1.xpose.msra.mxu0 %v2113
        %2117 = vmatprep.subr.mxu0 0.0
        %2118 = vmatpush1.xpose.msra.mxu0 0.0
        %2119 = vmatprep.subr.mxu0 0.0
        %2120 = vmatpush1.xpose.msra.mxu0 0.0
        %2121 = vmatprep.subr.mxu0 0.0
        %2122 = vmatpush1.xpose.msra.mxu0 0.0
        %2123 = vmatprep.subr.mxu0 0.0
        %2124 = vmatpush1.xpose.msra.mxu0 0.0
        %2125 = vmatprep.subr.mxu0 0.0
        %2126 = vmatpush1.xpose.msra.mxu0 0.0
        %2127 = vmatprep.subr.mxu0 0.0
        %2128 = vmatpush1.xpose.msra.mxu0 0.0
        %2129 = vmatprep.subr.mxu0 0.0
        %2130 = vmatpush1.xpose.msra.mxu0 0.0
        %2131 = vmatprep.subr.mxu0 0.0
        %2132 = vmatpush1.xpose.msra.mxu0 0.0
        %2133 = vmatprep.subr.mxu0 0.0
        %2134 = vmatpush1.xpose.msra.mxu0 0.0
        %2135 = vmatprep.subr.mxu0 0.0
        %2136 = vmatpush1.xpose.msra.mxu0 0.0
        %2137 = vmatprep.subr.mxu0 0.0
        %2138 = vmatpush1.xpose.msra.mxu0 0.0
        %2139 = vmatprep.subr.mxu0 0.0
        %2140 = vmatpush1.xpose.msra.mxu0 0.0
        %2141 = vmatprep.subr.mxu0 0.0
        %2142 = vmatpush1.xpose.msra.mxu0 0.0
        %2143 = vmatprep.subr.mxu0 0.0
        %2144 = vmatpush1.xpose.msra.mxu0 0.0
        %2145 = vmatprep.subr.mxu0 0.0
        %2146 = vmatpush1.xpose.msra.mxu0 0.0
        %2147 = vmatprep.subr.mxu0 0.0
        %2148 = vmatpush1.xpose.msra.mxu0 0.0
        %2149 = vmatprep.subr.mxu0 0.0
        %2150 = vmatpush1.xpose.msra.mxu0 0.0
        %2151 = vmatprep.subr.mxu0 0.0
        %2152 = vmatpush1.xpose.msra.mxu0 0.0
        %2153 = vmatprep.subr.mxu0 0.0
        %2154 = vmatpush1.xpose.msra.mxu0 0.0
        %2155 = vmatprep.subr.mxu0 0.0
        %2156 = vmatpush1.xpose.msra.mxu0 0.0
        %2157 = vmatprep.subr.mxu0 0.0
        %2158 = vmatpush1.xpose.msra.mxu0 0.0
        %2159 = vmatprep.subr.mxu0 0.0
        %2160 = vmatpush1.xpose.msra.mxu0 0.0
        %2161 = vmatprep.subr.mxu0 0.0
        %2162 = vmatpush1.xpose.msra.mxu0 0.0
        %2163 = vmatprep.subr.mxu0 0.0
        %2164 = vmatpush1.xpose.msra.mxu0 0.0
        %2165 = vmatprep.subr.mxu0 0.0
        %2166 = vmatpush1.xpose.msra.mxu0 0.0
        %2167 = vmatprep.subr.mxu0 0.0
        %2168 = vmatpush1.xpose.msra.mxu0 0.0
        %2169 = vmatprep.subr.mxu0 0.0
        %2170 = vmatpush1.xpose.msra.mxu0 0.0
        %2171 = vmatprep.subr.mxu0 0.0
        %2172 = vmatpush1.xpose.msra.mxu0 0.0
        %2173 = vmatprep.subr.mxu0 0.0
        %2174 = vmatpush1.xpose.msra.mxu0 0.0
        %2175 = vmatprep.subr.mxu0 0.0
        %2176 = vmatpush1.xpose.msra.mxu0 0.0
        %2177 = vmatprep.subr.mxu0 0.0
        %2178 = vmatpush1.xpose.msra.mxu0 0.0
        %2179 = vmatprep.mubr.f32.mxu0 0.0
        %2180 = vmatmul.mubr.f32.gmra.mrb[0].mxu0 %v2111
        %v2181 = vpop.f32.mrb[0].mxu0
        %v2182 = vadd.f32 0.0, %v2181
        %v2183 = vpop.f32.mrb[0].mxu0
        %2184 = vdwg.mxu0
        %2185 = vrot.lane.b32.xlu0 %v440, 64
        %v2186 = vpop.permute.xlu0 %2185
        %2187 = vrot.lane.b32.xlu0 %v442, 32
        %v2188 = vpop.permute.xlu0 %2187
        %v2189 = vsel %vm535, %v2186, 0
        %v2191 = vsel %vm535, %v2188, 0
        %2193 = vmatprep.subr.mxu0 0.0
        %2194 = vmatpush1.xpose.msra.mxu0 %v2191
        %2195 = vmatprep.subr.mxu0 0.0
        %2196 = vmatpush1.xpose.msra.mxu0 0.0
        %2197 = vmatprep.subr.mxu0 0.0
        %2198 = vmatpush1.xpose.msra.mxu0 0.0
        %2199 = vmatprep.subr.mxu0 0.0
        %2200 = vmatpush1.xpose.msra.mxu0 0.0
        %2201 = vmatprep.subr.mxu0 0.0
        %2202 = vmatpush1.xpose.msra.mxu0 0.0
        %2203 = vmatprep.subr.mxu0 0.0
        %2204 = vmatpush1.xpose.msra.mxu0 0.0
        %2205 = vmatprep.subr.mxu0 0.0
        %2206 = vmatpush1.xpose.msra.mxu0 0.0
        %2207 = vmatprep.subr.mxu0 0.0
        %2208 = vmatpush1.xpose.msra.mxu0 0.0
        %2209 = vmatprep.subr.mxu0 0.0
        %2210 = vmatpush1.xpose.msra.mxu0 0.0
        %2211 = vmatprep.subr.mxu0 0.0
        %2212 = vmatpush1.xpose.msra.mxu0 0.0
        %2213 = vmatprep.subr.mxu0 0.0
        %2214 = vmatpush1.xpose.msra.mxu0 0.0
        %2215 = vmatprep.subr.mxu0 0.0
        %2216 = vmatpush1.xpose.msra.mxu0 0.0
        %2217 = vmatprep.subr.mxu0 0.0
        %2218 = vmatpush1.xpose.msra.mxu0 0.0
        %2219 = vmatprep.subr.mxu0 0.0
        %2220 = vmatpush1.xpose.msra.mxu0 0.0
        %2221 = vmatprep.subr.mxu0 0.0
        %2222 = vmatpush1.xpose.msra.mxu0 0.0
        %2223 = vmatprep.subr.mxu0 0.0
        %2224 = vmatpush1.xpose.msra.mxu0 0.0
        %2225 = vmatprep.subr.mxu0 0.0
        %2226 = vmatpush1.xpose.msra.mxu0 0.0
        %2227 = vmatprep.subr.mxu0 0.0
        %2228 = vmatpush1.xpose.msra.mxu0 0.0
        %2229 = vmatprep.subr.mxu0 0.0
        %2230 = vmatpush1.xpose.msra.mxu0 0.0
        %2231 = vmatprep.subr.mxu0 0.0
        %2232 = vmatpush1.xpose.msra.mxu0 0.0
        %2233 = vmatprep.subr.mxu0 0.0
        %2234 = vmatpush1.xpose.msra.mxu0 0.0
        %2235 = vmatprep.subr.mxu0 0.0
        %2236 = vmatpush1.xpose.msra.mxu0 0.0
        %2237 = vmatprep.subr.mxu0 0.0
        %2238 = vmatpush1.xpose.msra.mxu0 0.0
        %2239 = vmatprep.subr.mxu0 0.0
        %2240 = vmatpush1.xpose.msra.mxu0 0.0
        %2241 = vmatprep.subr.mxu0 0.0
        %2242 = vmatpush1.xpose.msra.mxu0 0.0
        %2243 = vmatprep.subr.mxu0 0.0
        %2244 = vmatpush1.xpose.msra.mxu0 0.0
        %2245 = vmatprep.subr.mxu0 0.0
        %2246 = vmatpush1.xpose.msra.mxu0 0.0
        %2247 = vmatprep.subr.mxu0 0.0
        %2248 = vmatpush1.xpose.msra.mxu0 0.0
        %2249 = vmatprep.subr.mxu0 0.0
        %2250 = vmatpush1.xpose.msra.mxu0 0.0
        %2251 = vmatprep.subr.mxu0 0.0
        %2252 = vmatpush1.xpose.msra.mxu0 0.0
        %2253 = vmatprep.subr.mxu0 0.0
        %2254 = vmatpush1.xpose.msra.mxu0 0.0
        %2255 = vmatprep.subr.mxu0 0.0
        %2256 = vmatpush1.xpose.msra.mxu0 0.0
        %2257 = vmatprep.mubr.f32.mxu0 0.0
        %2258 = vmatmul.mubr.f32.gmra.mrb[0].mxu0 %v2189
        %v2259 = vpop.f32.mrb[0].mxu0
        %v2260 = vadd.f32 %v2182, %v2259
        %v2261 = vpop.f32.mrb[0].mxu0
        %2262 = vdwg.mxu0
        %v2263 = vsel %vm867, %v2260, -inf
        %2264 = vmax.xlane.f32.xlu0 %v2263
        %v2265 = vpop.xlane.xlu0 %2264
        %v2266 = vsub.f32 %v2260, %v2265
        %v2267 = vmul.f32 %v2266, 1.442695
        %v2268 = vpow.pop %v2267
        %v2269 = vsel %vm867, %v2268, 0.0
        %2270 = vadd.xlane.f32.xlu0 %v2269
        %v2271 = vpop.xlane.xlu0 %2270
        %v2272 = vrcp.pop %v2271
        %v2273 = vmul.f32 %v2268, %v2272
        %2274 = vrot.lane.b32.xlu0 %v517, 96
        %v2275 = vpop.permute.xlu0 %2274
        %v2278 = vsel %vm867, %v2273, 0
        %2280 = vmatprep.subr.mxu0 0.0
        %2281 = vmatpush1.msra.mxu0 %v2275
        %2282 = vmatprep.subr.mxu0 0.0
        %2283 = vmatpush1.msra.mxu0 0.0
        %2284 = vmatprep.subr.mxu0 0.0
        %2285 = vmatpush1.msra.mxu0 0.0
        %2286 = vmatprep.subr.mxu0 0.0
        %2287 = vmatpush1.msra.mxu0 0.0
        %2288 = vmatprep.subr.mxu0 0.0
        %2289 = vmatpush1.msra.mxu0 0.0
        %2290 = vmatprep.subr.mxu0 0.0
        %2291 = vmatpush1.msra.mxu0 0.0
        %2292 = vmatprep.subr.mxu0 0.0
        %2293 = vmatpush1.msra.mxu0 0.0
        %2294 = vmatprep.subr.mxu0 0.0
        %2295 = vmatpush1.msra.mxu0 0.0
        %2296 = vmatprep.subr.mxu0 0.0
        %2297 = vmatpush1.msra.mxu0 0.0
        %2298 = vmatprep.subr.mxu0 0.0
        %2299 = vmatpush1.msra.mxu0 0.0
        %2300 = vmatprep.subr.mxu0 0.0
        %2301 = vmatpush1.msra.mxu0 0.0
        %2302 = vmatprep.subr.mxu0 0.0
        %2303 = vmatpush1.msra.mxu0 0.0
        %2304 = vmatprep.subr.mxu0 0.0
        %2305 = vmatpush1.msra.mxu0 0.0
        %2306 = vmatprep.subr.mxu0 0.0
        %2307 = vmatpush1.msra.mxu0 0.0
        %2308 = vmatprep.subr.mxu0 0.0
        %2309 = vmatpush1.msra.mxu0 0.0
        %2310 = vmatprep.subr.mxu0 0.0
        %2311 = vmatpush1.msra.mxu0 0.0
        %2312 = vmatprep.subr.mxu0 0.0
        %2313 = vmatpush1.msra.mxu0 0.0
        %2314 = vmatprep.subr.mxu0 0.0
        %2315 = vmatpush1.msra.mxu0 0.0
        %2316 = vmatprep.subr.mxu0 0.0
        %2317 = vmatpush1.msra.mxu0 0.0
        %2318 = vmatprep.subr.mxu0 0.0
        %2319 = vmatpush1.msra.mxu0 0.0
        %2320 = vmatprep.subr.mxu0 0.0
        %2321 = vmatpush1.msra.mxu0 0.0
        %2322 = vmatprep.subr.mxu0 0.0
        %2323 = vmatpush1.msra.mxu0 0.0
        %2324 = vmatprep.subr.mxu0 0.0
        %2325 = vmatpush1.msra.mxu0 0.0
        %2326 = vmatprep.subr.mxu0 0.0
        %2327 = vmatpush1.msra.mxu0 0.0
        %2328 = vmatprep.subr.mxu0 0.0
        %2329 = vmatpush1.msra.mxu0 0.0
        %2330 = vmatprep.subr.mxu0 0.0
        %2331 = vmatpush1.msra.mxu0 0.0
        %2332 = vmatprep.subr.mxu0 0.0
        %2333 = vmatpush1.msra.mxu0 0.0
        %2334 = vmatprep.subr.mxu0 0.0
        %2335 = vmatpush1.msra.mxu0 0.0
        %2336 = vmatprep.subr.mxu0 0.0
        %2337 = vmatpush1.msra.mxu0 0.0
        %2338 = vmatprep.subr.mxu0 0.0
        %2339 = vmatpush1.msra.mxu0 0.0
        %2340 = vmatprep.subr.mxu0 0.0
        %2341 = vmatpush1.msra.mxu0 0.0
        %2342 = vmatprep.subr.mxu0 0.0
        %2343 = vmatpush1.msra.mxu0 0.0
        %2344 = vmatprep.mubr.f32.mxu0 0.0
        %2345 = vmatmul.mubr.f32.gmra.mrb[0].mxu0 %v2278
        %v2346 = vpop.f32.mrb[0].mxu0
        %v2347 = vadd.f32 0.0, %v2346
        %v2348 = vpop.f32.mrb[0].mxu0
        %2349 = vdwg.mxu0
        %v2351 = vsel %vm535, %v2347, 0
        %2353 = vmatprep.subr.mxu0 0.0
        %2354 = vmatpush1.msra.mxu0 %v337
        %2355 = vmatprep.subr.mxu0 0.0
        %2356 = vmatpush1.msra.mxu0 %v338
        %2357 = vmatprep.subr.mxu0 0.0
        %2358 = vmatpush1.msra.mxu0 0.0
        %2359 = vmatprep.subr.mxu0 0.0
        %2360 = vmatpush1.msra.mxu0 0.0
        %2361 = vmatprep.subr.mxu0 0.0
        %2362 = vmatpush1.msra.mxu0 0.0
        %2363 = vmatprep.subr.mxu0 0.0
        %2364 = vmatpush1.msra.mxu0 0.0
        %2365 = vmatprep.subr.mxu0 0.0
        %2366 = vmatpush1.msra.mxu0 0.0
        %2367 = vmatprep.subr.mxu0 0.0
        %2368 = vmatpush1.msra.mxu0 0.0
        %2369 = vmatprep.subr.mxu0 0.0
        %2370 = vmatpush1.msra.mxu0 0.0
        %2371 = vmatprep.subr.mxu0 0.0
        %2372 = vmatpush1.msra.mxu0 0.0
        %2373 = vmatprep.subr.mxu0 0.0
        %2374 = vmatpush1.msra.mxu0 0.0
        %2375 = vmatprep.subr.mxu0 0.0
        %2376 = vmatpush1.msra.mxu0 0.0
        %2377 = vmatprep.subr.mxu0 0.0
        %2378 = vmatpush1.msra.mxu0 0.0
        %2379 = vmatprep.subr.mxu0 0.0
        %2380 = vmatpush1.msra.mxu0 0.0
        %2381 = vmatprep.subr.mxu0 0.0
        %2382 = vmatpush1.msra.mxu0 0.0
        %2383 = vmatprep.subr.mxu0 0.0
        %2384 = vmatpush1.msra.mxu0 0.0
        %2385 = vmatprep.subr.mxu0 0.0
        %2386 = vmatpush1.msra.mxu0 0.0
        %2387 = vmatprep.subr.mxu0 0.0
        %2388 = vmatpush1.msra.mxu0 0.0
        %2389 = vmatprep.subr.mxu0 0.0
        %2390 = vmatpush1.msra.mxu0 0.0
        %2391 = vmatprep.subr.mxu0 0.0
        %2392 = vmatpush1.msra.mxu0 0.0
        %2393 = vmatprep.subr.mxu0 0.0
        %2394 = vmatpush1.msra.mxu0 0.0
        %2395 = vmatprep.subr.mxu0 0.0
        %2396 = vmatpush1.msra.mxu0 0.0
        %2397 = vmatprep.subr.mxu0 0.0
        %2398 = vmatpush1.msra.mxu0 0.0
        %2399 = vmatprep.subr.mxu0 0.0
        %2400 = vmatpush1.msra.mxu0 0.0
        %2401 = vmatprep.subr.mxu0 0.0
        %2402 = vmatpush1.msra.mxu0 0.0
        %2403 = vmatprep.subr.mxu0 0.0
        %2404 = vmatpush1.msra.mxu0 0.0
        %2405 = vmatprep.subr.mxu0 0.0
        %2406 = vmatpush1.msra.mxu0 0.0
        %2407 = vmatprep.subr.mxu0 0.0
        %2408 = vmatpush1.msra.mxu0 0.0
        %2409 = vmatprep.subr.mxu0 0.0
        %2410 = vmatpush1.msra.mxu0 0.0
        %2411 = vmatprep.subr.mxu0 0.0
        %2412 = vmatpush1.msra.mxu0 0.0
        %2413 = vmatprep.subr.mxu0 0.0
        %2414 = vmatpush1.msra.mxu0 0.0
        %2415 = vmatprep.subr.mxu0 0.0
        %2416 = vmatpush1.msra.mxu0 0.0
        %2417 = vmatprep.mubr.f32.mxu0 0.0
        %2418 = vmatmul.mubr.f32.gmra.mrb[0].mxu0 %v2351
        %v2419 = vpop.f32.mrb[0].mxu0
        %v2420 = vadd.f32 0.0, %v2419
        %v2421 = vpop.f32.mrb[0].mxu0
        %2422 = vdwg.mxu0
        %v2423 = vadd.f32 %v1870, %v2420
        %2424 = vrot.lane.b32.xlu0 %v688, 96
        %v2425 = vpop.permute.xlu0 %2424
        %2427 = vmatprep.subr.mxu0 0.0
        %2428 = vmatpush1.msra.mxu0 %v2425
        %2429 = vmatprep.subr.mxu0 0.0
        %2430 = vmatpush1.msra.mxu0 0.0
        %2431 = vmatprep.subr.mxu0 0.0
        %2432 = vmatpush1.msra.mxu0 0.0
        %2433 = vmatprep.subr.mxu0 0.0
        %2434 = vmatpush1.msra.mxu0 0.0
        %2435 = vmatprep.subr.mxu0 0.0
        %2436 = vmatpush1.msra.mxu0 0.0
        %2437 = vmatprep.subr.mxu0 0.0
        %2438 = vmatpush1.msra.mxu0 0.0
        %2439 = vmatprep.subr.mxu0 0.0
        %2440 = vmatpush1.msra.mxu0 0.0
        %2441 = vmatprep.subr.mxu0 0.0
        %2442 = vmatpush1.msra.mxu0 0.0
        %2443 = vmatprep.subr.mxu0 0.0
        %2444 = vmatpush1.msra.mxu0 0.0
        %2445 = vmatprep.subr.mxu0 0.0
        %2446 = vmatpush1.msra.mxu0 0.0
        %2447 = vmatprep.subr.mxu0 0.0
        %2448 = vmatpush1.msra.mxu0 0.0
        %2449 = vmatprep.subr.mxu0 0.0
        %2450 = vmatpush1.msra.mxu0 0.0
        %2451 = vmatprep.subr.mxu0 0.0
        %2452 = vmatpush1.msra.mxu0 0.0
        %2453 = vmatprep.subr.mxu0 0.0
        %2454 = vmatpush1.msra.mxu0 0.0
        %2455 = vmatprep.subr.mxu0 0.0
        %2456 = vmatpush1.msra.mxu0 0.0
        %2457 = vmatprep.subr.mxu0 0.0
        %2458 = vmatpush1.msra.mxu0 0.0
        %2459 = vmatprep.subr.mxu0 0.0
        %2460 = vmatpush1.msra.mxu0 0.0
        %2461 = vmatprep.subr.mxu0 0.0
        %2462 = vmatpush1.msra.mxu0 0.0
        %2463 = vmatprep.subr.mxu0 0.0
        %2464 = vmatpush1.msra.mxu0 0.0
        %2465 = vmatprep.subr.mxu0 0.0
        %2466 = vmatpush1.msra.mxu0 0.0
        %2467 = vmatprep.subr.mxu0 0.0
        %2468 = vmatpush1.msra.mxu0 0.0
        %2469 = vmatprep.subr.mxu0 0.0
        %2470 = vmatpush1.msra.mxu0 0.0
        %2471 = vmatprep.subr.mxu0 0.0
        %2472 = vmatpush1.msra.mxu0 0.0
        %2473 = vmatprep.subr.mxu0 0.0
        %2474 = vmatpush1.msra.mxu0 0.0
        %2475 = vmatprep.subr.mxu0 0.0
        %2476 = vmatpush1.msra.mxu0 0.0
        %2477 = vmatprep.subr.mxu0 0.0
        %2478 = vmatpush1.msra.mxu0 0.0
        %2479 = vmatprep.subr.mxu0 0.0
        %2480 = vmatpush1.msra.mxu0 0.0
        %2481 = vmatprep.subr.mxu0 0.0
        %2482 = vmatpush1.msra.mxu0 0.0
        %2483 = vmatprep.subr.mxu0 0.0
        %2484 = vmatpush1.msra.mxu0 0.0
        %2485 = vmatprep.subr.mxu0 0.0
        %2486 = vmatpush1.msra.mxu0 0.0
        %2487 = vmatprep.subr.mxu0 0.0
        %2488 = vmatpush1.msra.mxu0 0.0
        %2489 = vmatprep.subr.mxu0 0.0
        %2490 = vmatpush1.msra.mxu0 0.0
        %2491 = vmatprep.mubr.f32.mxu0 0.0
        %2492 = vmatmul.mubr.f32.gmra.mrb[0].mxu0 %v2278
        %v2493 = vpop.f32.mrb[0].mxu0
        %v2494 = vadd.f32 0.0, %v2493
        %v2495 = vpop.f32.mrb[0].mxu0
        %2496 = vdwg.mxu0
        %v2498 = vsel %vm535, %v2494, 0
        %2500 = vmatprep.subr.mxu0 0.0
        %2501 = vmatpush1.msra.mxu0 %v339
        %2502 = vmatprep.subr.mxu0 0.0
        %2503 = vmatpush1.msra.mxu0 %v340
        %2504 = vmatprep.subr.mxu0 0.0
        %2505 = vmatpush1.msra.mxu0 0.0
        %2506 = vmatprep.subr.mxu0 0.0
        %2507 = vmatpush1.msra.mxu0 0.0
        %2508 = vmatprep.subr.mxu0 0.0
        %2509 = vmatpush1.msra.mxu0 0.0
        %2510 = vmatprep.subr.mxu0 0.0
        %2511 = vmatpush1.msra.mxu0 0.0
        %2512 = vmatprep.subr.mxu0 0.0
        %2513 = vmatpush1.msra.mxu0 0.0
        %2514 = vmatprep.subr.mxu0 0.0
        %2515 = vmatpush1.msra.mxu0 0.0
        %2516 = vmatprep.subr.mxu0 0.0
        %2517 = vmatpush1.msra.mxu0 0.0
        %2518 = vmatprep.subr.mxu0 0.0
        %2519 = vmatpush1.msra.mxu0 0.0
        %2520 = vmatprep.subr.mxu0 0.0
        %2521 = vmatpush1.msra.mxu0 0.0
        %2522 = vmatprep.subr.mxu0 0.0
        %2523 = vmatpush1.msra.mxu0 0.0
        %2524 = vmatprep.subr.mxu0 0.0
        %2525 = vmatpush1.msra.mxu0 0.0
        %2526 = vmatprep.subr.mxu0 0.0
        %2527 = vmatpush1.msra.mxu0 0.0
        %2528 = vmatprep.subr.mxu0 0.0
        %2529 = vmatpush1.msra.mxu0 0.0
        %2530 = vmatprep.subr.mxu0 0.0
        %2531 = vmatpush1.msra.mxu0 0.0
        %2532 = vmatprep.subr.mxu0 0.0
        %2533 = vmatpush1.msra.mxu0 0.0
        %2534 = vmatprep.subr.mxu0 0.0
        %2535 = vmatpush1.msra.mxu0 0.0
        %2536 = vmatprep.subr.mxu0 0.0
        %2537 = vmatpush1.msra.mxu0 0.0
        %2538 = vmatprep.subr.mxu0 0.0
        %2539 = vmatpush1.msra.mxu0 0.0
        %2540 = vmatprep.subr.mxu0 0.0
        %2541 = vmatpush1.msra.mxu0 0.0
        %2542 = vmatprep.subr.mxu0 0.0
        %2543 = vmatpush1.msra.mxu0 0.0
        %2544 = vmatprep.subr.mxu0 0.0
        %2545 = vmatpush1.msra.mxu0 0.0
        %2546 = vmatprep.subr.mxu0 0.0
        %2547 = vmatpush1.msra.mxu0 0.0
        %2548 = vmatprep.subr.mxu0 0.0
        %2549 = vmatpush1.msra.mxu0 0.0
        %2550 = vmatprep.subr.mxu0 0.0
        %2551 = vmatpush1.msra.mxu0 0.0
        %2552 = vmatprep.subr.mxu0 0.0
        %2553 = vmatpush1.msra.mxu0 0.0
        %2554 = vmatprep.subr.mxu0 0.0
        %2555 = vmatpush1.msra.mxu0 0.0
        %2556 = vmatprep.subr.mxu0 0.0
        %2557 = vmatpush1.msra.mxu0 0.0
        %2558 = vmatprep.subr.mxu0 0.0
        %2559 = vmatpush1.msra.mxu0 0.0
        %2560 = vmatprep.subr.mxu0 0.0
        %2561 = vmatpush1.msra.mxu0 0.0
        %2562 = vmatprep.subr.mxu0 0.0
        %2563 = vmatpush1.msra.mxu0 0.0
        %2564 = vmatprep.mubr.f32.mxu0 0.0
        %2565 = vmatmul.mubr.f32.gmra.mrb[0].mxu0 %v2498
        %v2566 = vpop.f32.mrb[0].mxu0
        %v2567 = vadd.f32 0.0, %v2566
        %v2568 = vpop.f32.mrb[0].mxu0
        %2569 = vdwg.mxu0
        %v2570 = vadd.f32 %v2423, %v2567
        %2571 = vrot.lane.b32.xlu0 %v609, 64
        %v2572 = vpop.permute.xlu0 %2571
        %2573 = vrot.lane.b32.xlu0 %v611, 64
        %v2574 = vpop.permute.xlu0 %2573
        %v2575 = vsel %vm1170, %v2572, 0
        %v2577 = vsel %vm1170, %v2574, 0
        %2579 = vmatprep.subr.mxu0 0.0
        %2580 = vmatpush1.xpose.msra.mxu0 %v2577
        %2581 = vmatprep.subr.mxu0 0.0
        %2582 = vmatpush1.xpose.msra.mxu0 0.0
        %2583 = vmatprep.subr.mxu0 0.0
        %2584 = vmatpush1.xpose.msra.mxu0 0.0
        %2585 = vmatprep.subr.mxu0 0.0
        %2586 = vmatpush1.xpose.msra.mxu0 0.0
        %2587 = vmatprep.subr.mxu0 0.0
        %2588 = vmatpush1.xpose.msra.mxu0 0.0
        %2589 = vmatprep.subr.mxu0 0.0
        %2590 = vmatpush1.xpose.msra.mxu0 0.0
        %2591 = vmatprep.subr.mxu0 0.0
        %2592 = vmatpush1.xpose.msra.mxu0 0.0
        %2593 = vmatprep.subr.mxu0 0.0
        %2594 = vmatpush1.xpose.msra.mxu0 0.0
        %2595 = vmatprep.subr.mxu0 0.0
        %2596 = vmatpush1.xpose.msra.mxu0 0.0
        %2597 = vmatprep.subr.mxu0 0.0
        %2598 = vmatpush1.xpose.msra.mxu0 0.0
        %2599 = vmatprep.subr.mxu0 0.0
        %2600 = vmatpush1.xpose.msra.mxu0 0.0
        %2601 = vmatprep.subr.mxu0 0.0
        %2602 = vmatpush1.xpose.msra.mxu0 0.0
        %2603 = vmatprep.subr.mxu0 0.0
        %2604 = vmatpush1.xpose.msra.mxu0 0.0
        %2605 = vmatprep.subr.mxu0 0.0
        %2606 = vmatpush1.xpose.msra.mxu0 0.0
        %2607 = vmatprep.subr.mxu0 0.0
        %2608 = vmatpush1.xpose.msra.mxu0 0.0
        %2609 = vmatprep.subr.mxu0 0.0
        %2610 = vmatpush1.xpose.msra.mxu0 0.0
        %2611 = vmatprep.subr.mxu0 0.0
        %2612 = vmatpush1.xpose.msra.mxu0 0.0
        %2613 = vmatprep.subr.mxu0 0.0
        %2614 = vmatpush1.xpose.msra.mxu0 0.0
        %2615 = vmatprep.subr.mxu0 0.0
        %2616 = vmatpush1.xpose.msra.mxu0 0.0
        %2617 = vmatprep.subr.mxu0 0.0
        %2618 = vmatpush1.xpose.msra.mxu0 0.0
        %2619 = vmatprep.subr.mxu0 0.0
        %2620 = vmatpush1.xpose.msra.mxu0 0.0
        %2621 = vmatprep.subr.mxu0 0.0
        %2622 = vmatpush1.xpose.msra.mxu0 0.0
        %2623 = vmatprep.subr.mxu0 0.0
        %2624 = vmatpush1.xpose.msra.mxu0 0.0
        %2625 = vmatprep.subr.mxu0 0.0
        %2626 = vmatpush1.xpose.msra.mxu0 0.0
        %2627 = vmatprep.subr.mxu0 0.0
        %2628 = vmatpush1.xpose.msra.mxu0 0.0
        %2629 = vmatprep.subr.mxu0 0.0
        %2630 = vmatpush1.xpose.msra.mxu0 0.0
        %2631 = vmatprep.subr.mxu0 0.0
        %2632 = vmatpush1.xpose.msra.mxu0 0.0
        %2633 = vmatprep.subr.mxu0 0.0
        %2634 = vmatpush1.xpose.msra.mxu0 0.0
        %2635 = vmatprep.subr.mxu0 0.0
        %2636 = vmatpush1.xpose.msra.mxu0 0.0
        %2637 = vmatprep.subr.mxu0 0.0
        %2638 = vmatpush1.xpose.msra.mxu0 0.0
        %2639 = vmatprep.subr.mxu0 0.0
        %2640 = vmatpush1.xpose.msra.mxu0 0.0
        %2641 = vmatprep.subr.mxu0 0.0
        %2642 = vmatpush1.xpose.msra.mxu0 0.0
        %2643 = vmatprep.mubr.f32.mxu0 0.0
        %2644 = vmatmul.mubr.f32.gmra.mrb[0].mxu0 %v2575
        %v2645 = vpop.f32.mrb[0].mxu0
        %v2646 = vadd.f32 0.0, %v2645
        %v2647 = vpop.f32.mrb[0].mxu0
        %2648 = vdwg.mxu0
        %v2649 = vsel %vm867, %v2646, -inf
        %2650 = vmax.xlane.f32.xlu0 %v2649
        %v2651 = vpop.xlane.xlu0 %2650
        %v2652 = vsub.f32 %v2646, %v2651
        %v2653 = vmul.f32 %v2652, 1.442695
        %v2654 = vpow.pop %v2653
        %v2655 = vsel %vm867, %v2654, 0.0
        %2656 = vadd.xlane.f32.xlu0 %v2655
        %v2657 = vpop.xlane.xlu0 %2656
        %v2658 = vrcp.pop %v2657
        %v2659 = vmul.f32 %v2654, %v2658
        %v2661 = vsel %vm867, %v2659, 0
        %2663 = vmatprep.subr.mxu0 0.0
        %2664 = vmatpush1.msra.mxu0 %v2425
        %2665 = vmatprep.subr.mxu0 0.0
        %2666 = vmatpush1.msra.mxu0 0.0
        %2667 = vmatprep.subr.mxu0 0.0
        %2668 = vmatpush1.msra.mxu0 0.0
        %2669 = vmatprep.subr.mxu0 0.0
        %2670 = vmatpush1.msra.mxu0 0.0
        %2671 = vmatprep.subr.mxu0 0.0
        %2672 = vmatpush1.msra.mxu0 0.0
        %2673 = vmatprep.subr.mxu0 0.0
        %2674 = vmatpush1.msra.mxu0 0.0
        %2675 = vmatprep.subr.mxu0 0.0
        %2676 = vmatpush1.msra.mxu0 0.0
        %2677 = vmatprep.subr.mxu0 0.0
        %2678 = vmatpush1.msra.mxu0 0.0
        %2679 = vmatprep.subr.mxu0 0.0
        %2680 = vmatpush1.msra.mxu0 0.0
        %2681 = vmatprep.subr.mxu0 0.0
        %2682 = vmatpush1.msra.mxu0 0.0
        %2683 = vmatprep.subr.mxu0 0.0
        %2684 = vmatpush1.msra.mxu0 0.0
        %2685 = vmatprep.subr.mxu0 0.0
        %2686 = vmatpush1.msra.mxu0 0.0
        %2687 = vmatprep.subr.mxu0 0.0
        %2688 = vmatpush1.msra.mxu0 0.0
        %2689 = vmatprep.subr.mxu0 0.0
        %2690 = vmatpush1.msra.mxu0 0.0
        %2691 = vmatprep.subr.mxu0 0.0
        %2692 = vmatpush1.msra.mxu0 0.0
        %2693 = vmatprep.subr.mxu0 0.0
        %2694 = vmatpush1.msra.mxu0 0.0
        %2695 = vmatprep.subr.mxu0 0.0
        %2696 = vmatpush1.msra.mxu0 0.0
        %2697 = vmatprep.subr.mxu0 0.0
        %2698 = vmatpush1.msra.mxu0 0.0
        %2699 = vmatprep.subr.mxu0 0.0
        %2700 = vmatpush1.msra.mxu0 0.0
        %2701 = vmatprep.subr.mxu0 0.0
        %2702 = vmatpush1.msra.mxu0 0.0
        %2703 = vmatprep.subr.mxu0 0.0
        %2704 = vmatpush1.msra.mxu0 0.0
        %2705 = vmatprep.subr.mxu0 0.0
        %2706 = vmatpush1.msra.mxu0 0.0
        %2707 = vmatprep.subr.mxu0 0.0
        %2708 = vmatpush1.msra.mxu0 0.0
        %2709 = vmatprep.subr.mxu0 0.0
        %2710 = vmatpush1.msra.mxu0 0.0
        %2711 = vmatprep.subr.mxu0 0.0
        %2712 = vmatpush1.msra.mxu0 0.0
        %2713 = vmatprep.subr.mxu0 0.0
        %2714 = vmatpush1.msra.mxu0 0.0
        %2715 = vmatprep.subr.mxu0 0.0
        %2716 = vmatpush1.msra.mxu0 0.0
        %2717 = vmatprep.subr.mxu0 0.0
        %2718 = vmatpush1.msra.mxu0 0.0
        %2719 = vmatprep.subr.mxu0 0.0
        %2720 = vmatpush1.msra.mxu0 0.0
        %2721 = vmatprep.subr.mxu0 0.0
        %2722 = vmatpush1.msra.mxu0 0.0
        %2723 = vmatprep.subr.mxu0 0.0
        %2724 = vmatpush1.msra.mxu0 0.0
        %2725 = vmatprep.subr.mxu0 0.0
        %2726 = vmatpush1.msra.mxu0 0.0
        %2727 = vmatprep.mubr.f32.mxu0 0.0
        %2728 = vmatmul.mubr.f32.gmra.mrb[0].mxu0 %v2661
        %v2729 = vpop.f32.mrb[0].mxu0
        %v2730 = vadd.f32 0.0, %v2729
        %v2731 = vpop.f32.mrb[0].mxu0
        %2732 = vdwg.mxu0
        %v2734 = vsel %vm535, %v2730, 0
        %2736 = vmatprep.subr.mxu0 0.0
        %2737 = vmatpush1.msra.mxu0 %v349
        %2738 = vmatprep.subr.mxu0 0.0
        %2739 = vmatpush1.msra.mxu0 %v350
        %2740 = vmatprep.subr.mxu0 0.0
        %2741 = vmatpush1.msra.mxu0 0.0
        %2742 = vmatprep.subr.mxu0 0.0
        %2743 = vmatpush1.msra.mxu0 0.0
        %2744 = vmatprep.subr.mxu0 0.0
        %2745 = vmatpush1.msra.mxu0 0.0
        %2746 = vmatprep.subr.mxu0 0.0
        %2747 = vmatpush1.msra.mxu0 0.0
        %2748 = vmatprep.subr.mxu0 0.0
        %2749 = vmatpush1.msra.mxu0 0.0
        %2750 = vmatprep.subr.mxu0 0.0
        %2751 = vmatpush1.msra.mxu0 0.0
        %2752 = vmatprep.subr.mxu0 0.0
        %2753 = vmatpush1.msra.mxu0 0.0
        %2754 = vmatprep.subr.mxu0 0.0
        %2755 = vmatpush1.msra.mxu0 0.0
        %2756 = vmatprep.subr.mxu0 0.0
        %2757 = vmatpush1.msra.mxu0 0.0
        %2758 = vmatprep.subr.mxu0 0.0
        %2759 = vmatpush1.msra.mxu0 0.0
        %2760 = vmatprep.subr.mxu0 0.0
        %2761 = vmatpush1.msra.mxu0 0.0
        %2762 = vmatprep.subr.mxu0 0.0
        %2763 = vmatpush1.msra.mxu0 0.0
        %2764 = vmatprep.subr.mxu0 0.0
        %2765 = vmatpush1.msra.mxu0 0.0
        %2766 = vmatprep.subr.mxu0 0.0
        %2767 = vmatpush1.msra.mxu0 0.0
        %2768 = vmatprep.subr.mxu0 0.0
        %2769 = vmatpush1.msra.mxu0 0.0
        %2770 = vmatprep.subr.mxu0 0.0
        %2771 = vmatpush1.msra.mxu0 0.0
        %2772 = vmatprep.subr.mxu0 0.0
        %2773 = vmatpush1.msra.mxu0 0.0
        %2774 = vmatprep.subr.mxu0 0.0
        %2775 = vmatpush1.msra.mxu0 0.0
        %2776 = vmatprep.subr.mxu0 0.0
        %2777 = vmatpush1.msra.mxu0 0.0
        %2778 = vmatprep.subr.mxu0 0.0
        %2779 = vmatpush1.msra.mxu0 0.0
        %2780 = vmatprep.subr.mxu0 0.0
        %2781 = vmatpush1.msra.mxu0 0.0
        %2782 = vmatprep.subr.mxu0 0.0
        %2783 = vmatpush1.msra.mxu0 0.0
        %2784 = vmatprep.subr.mxu0 0.0
        %2785 = vmatpush1.msra.mxu0 0.0
        %2786 = vmatprep.subr.mxu0 0.0
        %2787 = vmatpush1.msra.mxu0 0.0
        %2788 = vmatprep.subr.mxu0 0.0
        %2789 = vmatpush1.msra.mxu0 0.0
        %2790 = vmatprep.subr.mxu0 0.0
        %2791 = vmatpush1.msra.mxu0 0.0
        %2792 = vmatprep.subr.mxu0 0.0
        %2793 = vmatpush1.msra.mxu0 0.0
        %2794 = vmatprep.subr.mxu0 0.0
        %2795 = vmatpush1.msra.mxu0 0.0
        %2796 = vmatprep.subr.mxu0 0.0
        %2797 = vmatpush1.msra.mxu0 0.0
        %2798 = vmatprep.subr.mxu0 0.0
        %2799 = vmatpush1.msra.mxu0 0.0
        %2800 = vmatprep.mubr.f32.mxu0 0.0
        %2801 = vmatmul.mubr.f32.gmra.mrb[0].mxu0 %v2734
        %v2802 = vpop.f32.mrb[0].mxu0
        %v2803 = vadd.f32 0.0, %v2802
        %v2804 = vpop.f32.mrb[0].mxu0
        %2805 = vdwg.mxu0
        %v2806 = vadd.f32 %v2106, %v2803
        %2807 = vrot.lane.b32.xlu0 %v440, 16
        %v2808 = vpop.permute.xlu0 %2807
        %2809 = vrot.lane.b32.xlu0 %v686, 16
        %v2810 = vpop.permute.xlu0 %2809
        %v2811 = vsel %vm535, %v2808, 0
        %v2813 = vsel %vm535, %v2810, 0
        %2815 = vmatprep.subr.mxu0 0.0
        %2816 = vmatpush1.xpose.msra.mxu0 %v2813
        %2817 = vmatprep.subr.mxu0 0.0
        %2818 = vmatpush1.xpose.msra.mxu0 0.0
        %2819 = vmatprep.subr.mxu0 0.0
        %2820 = vmatpush1.xpose.msra.mxu0 0.0
        %2821 = vmatprep.subr.mxu0 0.0
        %2822 = vmatpush1.xpose.msra.mxu0 0.0
        %2823 = vmatprep.subr.mxu0 0.0
        %2824 = vmatpush1.xpose.msra.mxu0 0.0
        %2825 = vmatprep.subr.mxu0 0.0
        %2826 = vmatpush1.xpose.msra.mxu0 0.0
        %2827 = vmatprep.subr.mxu0 0.0
        %2828 = vmatpush1.xpose.msra.mxu0 0.0
        %2829 = vmatprep.subr.mxu0 0.0
        %2830 = vmatpush1.xpose.msra.mxu0 0.0
        %2831 = vmatprep.subr.mxu0 0.0
        %2832 = vmatpush1.xpose.msra.mxu0 0.0
        %2833 = vmatprep.subr.mxu0 0.0
        %2834 = vmatpush1.xpose.msra.mxu0 0.0
        %2835 = vmatprep.subr.mxu0 0.0
        %2836 = vmatpush1.xpose.msra.mxu0 0.0
        %2837 = vmatprep.subr.mxu0 0.0
        %2838 = vmatpush1.xpose.msra.mxu0 0.0
        %2839 = vmatprep.subr.mxu0 0.0
        %2840 = vmatpush1.xpose.msra.mxu0 0.0
        %2841 = vmatprep.subr.mxu0 0.0
        %2842 = vmatpush1.xpose.msra.mxu0 0.0
        %2843 = vmatprep.subr.mxu0 0.0
        %2844 = vmatpush1.xpose.msra.mxu0 0.0
        %2845 = vmatprep.subr.mxu0 0.0
        %2846 = vmatpush1.xpose.msra.mxu0 0.0
        %2847 = vmatprep.subr.mxu0 0.0
        %2848 = vmatpush1.xpose.msra.mxu0 0.0
        %2849 = vmatprep.subr.mxu0 0.0
        %2850 = vmatpush1.xpose.msra.mxu0 0.0
        %2851 = vmatprep.subr.mxu0 0.0
        %2852 = vmatpush1.xpose.msra.mxu0 0.0
        %2853 = vmatprep.subr.mxu0 0.0
        %2854 = vmatpush1.xpose.msra.mxu0 0.0
        %2855 = vmatprep.subr.mxu0 0.0
        %2856 = vmatpush1.xpose.msra.mxu0 0.0
        %2857 = vmatprep.subr.mxu0 0.0
        %2858 = vmatpush1.xpose.msra.mxu0 0.0
        %2859 = vmatprep.subr.mxu0 0.0
        %2860 = vmatpush1.xpose.msra.mxu0 0.0
        %2861 = vmatprep.subr.mxu0 0.0
        %2862 = vmatpush1.xpose.msra.mxu0 0.0
        %2863 = vmatprep.subr.mxu0 0.0
        %2864 = vmatpush1.xpose.msra.mxu0 0.0
        %2865 = vmatprep.subr.mxu0 0.0
        %2866 = vmatpush1.xpose.msra.mxu0 0.0
        %2867 = vmatprep.subr.mxu0 0.0
        %2868 = vmatpush1.xpose.msra.mxu0 0.0
        %2869 = vmatprep.subr.mxu0 0.0
        %2870 = vmatpush1.xpose.msra.mxu0 0.0
        %2871 = vmatprep.subr.mxu0 0.0
        %2872 = vmatpush1.xpose.msra.mxu0 0.0
        %2873 = vmatprep.subr.mxu0 0.0
        %2874 = vmatpush1.xpose.msra.mxu0 0.0
        %2875 = vmatprep.subr.mxu0 0.0
        %2876 = vmatpush1.xpose.msra.mxu0 0.0
        %2877 = vmatprep.subr.mxu0 0.0
        %2878 = vmatpush1.xpose.msra.mxu0 0.0
        %2879 = vmatprep.mubr.f32.mxu0 0.0
        %2880 = vmatmul.mubr.f32.gmra.mrb[0].mxu0 %v2811
        %v2881 = vpop.f32.mrb[0].mxu0
        %v2882 = vadd.f32 0.0, %v2881
        %v2883 = vpop.f32.mrb[0].mxu0
        %2884 = vdwg.mxu0
        %2885 = vrot.lane.b32.xlu0 %v440, 32
        %v2886 = vpop.permute.xlu0 %2885
        %2887 = vrot.lane.b32.xlu0 %v442, 16
        %v2888 = vpop.permute.xlu0 %2887
        %v2889 = vsel %vm535, %v2886, 0
        %v2891 = vsel %vm535, %v2888, 0
        %2893 = vmatprep.subr.mxu0 0.0
        %2894 = vmatpush1.xpose.msra.mxu0 %v2891
        %2895 = vmatprep.subr.mxu0 0.0
        %2896 = vmatpush1.xpose.msra.mxu0 0.0
        %2897 = vmatprep.subr.mxu0 0.0
        %2898 = vmatpush1.xpose.msra.mxu0 0.0
        %2899 = vmatprep.subr.mxu0 0.0
        %2900 = vmatpush1.xpose.msra.mxu0 0.0
        %2901 = vmatprep.subr.mxu0 0.0
        %2902 = vmatpush1.xpose.msra.mxu0 0.0
        %2903 = vmatprep.subr.mxu0 0.0
        %2904 = vmatpush1.xpose.msra.mxu0 0.0
        %2905 = vmatprep.subr.mxu0 0.0
        %2906 = vmatpush1.xpose.msra.mxu0 0.0
        %2907 = vmatprep.subr.mxu0 0.0
        %2908 = vmatpush1.xpose.msra.mxu0 0.0
        %2909 = vmatprep.subr.mxu0 0.0
        %2910 = vmatpush1.xpose.msra.mxu0 0.0
        %2911 = vmatprep.subr.mxu0 0.0
        %2912 = vmatpush1.xpose.msra.mxu0 0.0
        %2913 = vmatprep.subr.mxu0 0.0
        %2914 = vmatpush1.xpose.msra.mxu0 0.0
        %2915 = vmatprep.subr.mxu0 0.0
        %2916 = vmatpush1.xpose.msra.mxu0 0.0
        %2917 = vmatprep.subr.mxu0 0.0
        %2918 = vmatpush1.xpose.msra.mxu0 0.0
        %2919 = vmatprep.subr.mxu0 0.0
        %2920 = vmatpush1.xpose.msra.mxu0 0.0
        %2921 = vmatprep.subr.mxu0 0.0
        %2922 = vmatpush1.xpose.msra.mxu0 0.0
        %2923 = vmatprep.subr.mxu0 0.0
        %2924 = vmatpush1.xpose.msra.mxu0 0.0
        %2925 = vmatprep.subr.mxu0 0.0
        %2926 = vmatpush1.xpose.msra.mxu0 0.0
        %2927 = vmatprep.subr.mxu0 0.0
        %2928 = vmatpush1.xpose.msra.mxu0 0.0
        %2929 = vmatprep.subr.mxu0 0.0
        %2930 = vmatpush1.xpose.msra.mxu0 0.0
        %2931 = vmatprep.subr.mxu0 0.0
        %2932 = vmatpush1.xpose.msra.mxu0 0.0
        %2933 = vmatprep.subr.mxu0 0.0
        %2934 = vmatpush1.xpose.msra.mxu0 0.0
        %2935 = vmatprep.subr.mxu0 0.0
        %2936 = vmatpush1.xpose.msra.mxu0 0.0
        %2937 = vmatprep.subr.mxu0 0.0
        %2938 = vmatpush1.xpose.msra.mxu0 0.0
        %2939 = vmatprep.subr.mxu0 0.0
        %2940 = vmatpush1.xpose.msra.mxu0 0.0
        %2941 = vmatprep.subr.mxu0 0.0
        %2942 = vmatpush1.xpose.msra.mxu0 0.0
        %2943 = vmatprep.subr.mxu0 0.0
        %2944 = vmatpush1.xpose.msra.mxu0 0.0
        %2945 = vmatprep.subr.mxu0 0.0
        %2946 = vmatpush1.xpose.msra.mxu0 0.0
        %2947 = vmatprep.subr.mxu0 0.0
        %2948 = vmatpush1.xpose.msra.mxu0 0.0
        %2949 = vmatprep.subr.mxu0 0.0
        %2950 = vmatpush1.xpose.msra.mxu0 0.0
        %2951 = vmatprep.subr.mxu0 0.0
        %2952 = vmatpush1.xpose.msra.mxu0 0.0
        %2953 = vmatprep.subr.mxu0 0.0
        %2954 = vmatpush1.xpose.msra.mxu0 0.0
        %2955 = vmatprep.subr.mxu0 0.0
        %2956 = vmatpush1.xpose.msra.mxu0 0.0
        %2957 = vmatprep.mubr.f32.mxu0 0.0
        %2958 = vmatmul.mubr.f32.gmra.mrb[0].mxu0 %v2889
        %v2959 = vpop.f32.mrb[0].mxu0
        %v2960 = vadd.f32 %v2882, %v2959
        %v2961 = vpop.f32.mrb[0].mxu0
        %2962 = vdwg.mxu0
        %v2963 = vsel %vm867, %v2960, -inf
        %2964 = vmax.xlane.f32.xlu0 %v2963
        %v2965 = vpop.xlane.xlu0 %2964
        %v2966 = vsub.f32 %v2960, %v2965
        %v2967 = vmul.f32 %v2966, 1.442695
        %v2968 = vpow.pop %v2967
        %v2969 = vsel %vm867, %v2968, 0.0
        %2970 = vadd.xlane.f32.xlu0 %v2969
        %v2971 = vpop.xlane.xlu0 %2970
        %v2972 = vrcp.pop %v2971
        %v2973 = vmul.f32 %v2968, %v2972
        %2974 = vrot.lane.b32.xlu0 %v517, 80
        %v2975 = vpop.permute.xlu0 %2974
        %v2978 = vsel %vm867, %v2973, 0
        %2980 = vmatprep.subr.mxu0 0.0
        %2981 = vmatpush1.msra.mxu0 %v2975
        %2982 = vmatprep.subr.mxu0 0.0
        %2983 = vmatpush1.msra.mxu0 0.0
        %2984 = vmatprep.subr.mxu0 0.0
        %2985 = vmatpush1.msra.mxu0 0.0
        %2986 = vmatprep.subr.mxu0 0.0
        %2987 = vmatpush1.msra.mxu0 0.0
        %2988 = vmatprep.subr.mxu0 0.0
        %2989 = vmatpush1.msra.mxu0 0.0
        %2990 = vmatprep.subr.mxu0 0.0
        %2991 = vmatpush1.msra.mxu0 0.0
        %2992 = vmatprep.subr.mxu0 0.0
        %2993 = vmatpush1.msra.mxu0 0.0
        %2994 = vmatprep.subr.mxu0 0.0
        %2995 = vmatpush1.msra.mxu0 0.0
        %2996 = vmatprep.subr.mxu0 0.0
        %2997 = vmatpush1.msra.mxu0 0.0
        %2998 = vmatprep.subr.mxu0 0.0
        %2999 = vmatpush1.msra.mxu0 0.0
        %3000 = vmatprep.subr.mxu0 0.0
        %3001 = vmatpush1.msra.mxu0 0.0
        %3002 = vmatprep.subr.mxu0 0.0
        %3003 = vmatpush1.msra.mxu0 0.0
        %3004 = vmatprep.subr.mxu0 0.0
        %3005 = vmatpush1.msra.mxu0 0.0
        %3006 = vmatprep.subr.mxu0 0.0
        %3007 = vmatpush1.msra.mxu0 0.0
        %3008 = vmatprep.subr.mxu0 0.0
        %3009 = vmatpush1.msra.mxu0 0.0
        %3010 = vmatprep.subr.mxu0 0.0
        %3011 = vmatpush1.msra.mxu0 0.0
        %3012 = vmatprep.subr.mxu0 0.0
        %3013 = vmatpush1.msra.mxu0 0.0
        %3014 = vmatprep.subr.mxu0 0.0
        %3015 = vmatpush1.msra.mxu0 0.0
        %3016 = vmatprep.subr.mxu0 0.0
        %3017 = vmatpush1.msra.mxu0 0.0
        %3018 = vmatprep.subr.mxu0 0.0
        %3019 = vmatpush1.msra.mxu0 0.0
        %3020 = vmatprep.subr.mxu0 0.0
        %3021 = vmatpush1.msra.mxu0 0.0
        %3022 = vmatprep.subr.mxu0 0.0
        %3023 = vmatpush1.msra.mxu0 0.0
        %3024 = vmatprep.subr.mxu0 0.0
        %3025 = vmatpush1.msra.mxu0 0.0
        %3026 = vmatprep.subr.mxu0 0.0
        %3027 = vmatpush1.msra.mxu0 0.0
        %3028 = vmatprep.subr.mxu0 0.0
        %3029 = vmatpush1.msra.mxu0 0.0
        %3030 = vmatprep.subr.mxu0 0.0
        %3031 = vmatpush1.msra.mxu0 0.0
        %3032 = vmatprep.subr.mxu0 0.0
        %3033 = vmatpush1.msra.mxu0 0.0
        %3034 = vmatprep.subr.mxu0 0.0
        %3035 = vmatpush1.msra.mxu0 0.0
        %3036 = vmatprep.subr.mxu0 0.0
        %3037 = vmatpush1.msra.mxu0 0.0
        %3038 = vmatprep.subr.mxu0 0.0
        %3039 = vmatpush1.msra.mxu0 0.0
        %3040 = vmatprep.subr.mxu0 0.0
        %3041 = vmatpush1.msra.mxu0 0.0
        %3042 = vmatprep.subr.mxu0 0.0
        %3043 = vmatpush1.msra.mxu0 0.0
        %3044 = vmatprep.mubr.f32.mxu0 0.0
        %3045 = vmatmul.mubr.f32.gmra.mrb[0].mxu0 %v2978
        %v3046 = vpop.f32.mrb[0].mxu0
        %v3047 = vadd.f32 0.0, %v3046
        %v3048 = vpop.f32.mrb[0].mxu0
        %3049 = vdwg.mxu0
        %v3051 = vsel %vm535, %v3047, 0
        %3053 = vmatprep.subr.mxu0 0.0
        %3054 = vmatpush1.msra.mxu0 %v341
        %3055 = vmatprep.subr.mxu0 0.0
        %3056 = vmatpush1.msra.mxu0 %v342
        %3057 = vmatprep.subr.mxu0 0.0
        %3058 = vmatpush1.msra.mxu0 0.0
        %3059 = vmatprep.subr.mxu0 0.0
        %3060 = vmatpush1.msra.mxu0 0.0
        %3061 = vmatprep.subr.mxu0 0.0
        %3062 = vmatpush1.msra.mxu0 0.0
        %3063 = vmatprep.subr.mxu0 0.0
        %3064 = vmatpush1.msra.mxu0 0.0
        %3065 = vmatprep.subr.mxu0 0.0
        %3066 = vmatpush1.msra.mxu0 0.0
        %3067 = vmatprep.subr.mxu0 0.0
        %3068 = vmatpush1.msra.mxu0 0.0
        %3069 = vmatprep.subr.mxu0 0.0
        %3070 = vmatpush1.msra.mxu0 0.0
        %3071 = vmatprep.subr.mxu0 0.0
        %3072 = vmatpush1.msra.mxu0 0.0
        %3073 = vmatprep.subr.mxu0 0.0
        %3074 = vmatpush1.msra.mxu0 0.0
        %3075 = vmatprep.subr.mxu0 0.0
        %3076 = vmatpush1.msra.mxu0 0.0
        %3077 = vmatprep.subr.mxu0 0.0
        %3078 = vmatpush1.msra.mxu0 0.0
        %3079 = vmatprep.subr.mxu0 0.0
        %3080 = vmatpush1.msra.mxu0 0.0
        %3081 = vmatprep.subr.mxu0 0.0
        %3082 = vmatpush1.msra.mxu0 0.0
        %3083 = vmatprep.subr.mxu0 0.0
        %3084 = vmatpush1.msra.mxu0 0.0
        %3085 = vmatprep.subr.mxu0 0.0
        %3086 = vmatpush1.msra.mxu0 0.0
        %3087 = vmatprep.subr.mxu0 0.0
        %3088 = vmatpush1.msra.mxu0 0.0
        %3089 = vmatprep.subr.mxu0 0.0
        %3090 = vmatpush1.msra.mxu0 0.0
        %3091 = vmatprep.subr.mxu0 0.0
        %3092 = vmatpush1.msra.mxu0 0.0
        %3093 = vmatprep.subr.mxu0 0.0
        %3094 = vmatpush1.msra.mxu0 0.0
        %3095 = vmatprep.subr.mxu0 0.0
        %3096 = vmatpush1.msra.mxu0 0.0
        %3097 = vmatprep.subr.mxu0 0.0
        %3098 = vmatpush1.msra.mxu0 0.0
        %3099 = vmatprep.subr.mxu0 0.0
        %3100 = vmatpush1.msra.mxu0 0.0
        %3101 = vmatprep.subr.mxu0 0.0
        %3102 = vmatpush1.msra.mxu0 0.0
        %3103 = vmatprep.subr.mxu0 0.0
        %3104 = vmatpush1.msra.mxu0 0.0
        %3105 = vmatprep.subr.mxu0 0.0
        %3106 = vmatpush1.msra.mxu0 0.0
        %3107 = vmatprep.subr.mxu0 0.0
        %3108 = vmatpush1.msra.mxu0 0.0
        %3109 = vmatprep.subr.mxu0 0.0
        %3110 = vmatpush1.msra.mxu0 0.0
        %3111 = vmatprep.subr.mxu0 0.0
        %3112 = vmatpush1.msra.mxu0 0.0
        %3113 = vmatprep.subr.mxu0 0.0
        %3114 = vmatpush1.msra.mxu0 0.0
        %3115 = vmatprep.subr.mxu0 0.0
        %3116 = vmatpush1.msra.mxu0 0.0
        %3117 = vmatprep.mubr.f32.mxu0 0.0
        %3118 = vmatmul.mubr.f32.gmra.mrb[0].mxu0 %v3051
        %v3119 = vpop.f32.mrb[0].mxu0
        %v3120 = vadd.f32 0.0, %v3119
        %v3121 = vpop.f32.mrb[0].mxu0
        %3122 = vdwg.mxu0
        %v3123 = vadd.f32 %v2570, %v3120
        %3124 = vrot.lane.b32.xlu0 %v688, 80
        %v3125 = vpop.permute.xlu0 %3124
        %3127 = vmatprep.subr.mxu0 0.0
        %3128 = vmatpush1.msra.mxu0 %v3125
        %3129 = vmatprep.subr.mxu0 0.0
        %3130 = vmatpush1.msra.mxu0 0.0
        %3131 = vmatprep.subr.mxu0 0.0
        %3132 = vmatpush1.msra.mxu0 0.0
        %3133 = vmatprep.subr.mxu0 0.0
        %3134 = vmatpush1.msra.mxu0 0.0
        %3135 = vmatprep.subr.mxu0 0.0
        %3136 = vmatpush1.msra.mxu0 0.0
        %3137 = vmatprep.subr.mxu0 0.0
        %3138 = vmatpush1.msra.mxu0 0.0
        %3139 = vmatprep.subr.mxu0 0.0
        %3140 = vmatpush1.msra.mxu0 0.0
        %3141 = vmatprep.subr.mxu0 0.0
        %3142 = vmatpush1.msra.mxu0 0.0
        %3143 = vmatprep.subr.mxu0 0.0
        %3144 = vmatpush1.msra.mxu0 0.0
        %3145 = vmatprep.subr.mxu0 0.0
        %3146 = vmatpush1.msra.mxu0 0.0
        %3147 = vmatprep.subr.mxu0 0.0
        %3148 = vmatpush1.msra.mxu0 0.0
        %3149 = vmatprep.subr.mxu0 0.0
        %3150 = vmatpush1.msra.mxu0 0.0
        %3151 = vmatprep.subr.mxu0 0.0
        %3152 = vmatpush1.msra.mxu0 0.0
        %3153 = vmatprep.subr.mxu0 0.0
        %3154 = vmatpush1.msra.mxu0 0.0
        %3155 = vmatprep.subr.mxu0 0.0
        %3156 = vmatpush1.msra.mxu0 0.0
        %3157 = vmatprep.subr.mxu0 0.0
        %3158 = vmatpush1.msra.mxu0 0.0
        %3159 = vmatprep.subr.mxu0 0.0
        %3160 = vmatpush1.msra.mxu0 0.0
        %3161 = vmatprep.subr.mxu0 0.0
        %3162 = vmatpush1.msra.mxu0 0.0
        %3163 = vmatprep.subr.mxu0 0.0
        %3164 = vmatpush1.msra.mxu0 0.0
        %3165 = vmatprep.subr.mxu0 0.0
        %3166 = vmatpush1.msra.mxu0 0.0
        %3167 = vmatprep.subr.mxu0 0.0
        %3168 = vmatpush1.msra.mxu0 0.0
        %3169 = vmatprep.subr.mxu0 0.0
        %3170 = vmatpush1.msra.mxu0 0.0
        %3171 = vmatprep.subr.mxu0 0.0
        %3172 = vmatpush1.msra.mxu0 0.0
        %3173 = vmatprep.subr.mxu0 0.0
        %3174 = vmatpush1.msra.mxu0 0.0
        %3175 = vmatprep.subr.mxu0 0.0
        %3176 = vmatpush1.msra.mxu0 0.0
        %3177 = vmatprep.subr.mxu0 0.0
        %3178 = vmatpush1.msra.mxu0 0.0
        %3179 = vmatprep.subr.mxu0 0.0
        %3180 = vmatpush1.msra.mxu0 0.0
        %3181 = vmatprep.subr.mxu0 0.0
        %3182 = vmatpush1.msra.mxu0 0.0
        %3183 = vmatprep.subr.mxu0 0.0
        %3184 = vmatpush1.msra.mxu0 0.0
        %3185 = vmatprep.subr.mxu0 0.0
        %3186 = vmatpush1.msra.mxu0 0.0
        %3187 = vmatprep.subr.mxu0 0.0
        %3188 = vmatpush1.msra.mxu0 0.0
        %3189 = vmatprep.subr.mxu0 0.0
        %3190 = vmatpush1.msra.mxu0 0.0
        %3191 = vmatprep.mubr.f32.mxu0 0.0
        %3192 = vmatmul.mubr.f32.gmra.mrb[0].mxu0 %v2978
        %v3193 = vpop.f32.mrb[0].mxu0
        %v3194 = vadd.f32 0.0, %v3193
        %v3195 = vpop.f32.mrb[0].mxu0
        %3196 = vdwg.mxu0
        %v3198 = vsel %vm535, %v3194, 0
        %3200 = vmatprep.subr.mxu0 0.0
        %3201 = vmatpush1.msra.mxu0 %v343
        %3202 = vmatprep.subr.mxu0 0.0
        %3203 = vmatpush1.msra.mxu0 %v344
        %3204 = vmatprep.subr.mxu0 0.0
        %3205 = vmatpush1.msra.mxu0 0.0
        %3206 = vmatprep.subr.mxu0 0.0
        %3207 = vmatpush1.msra.mxu0 0.0
        %3208 = vmatprep.subr.mxu0 0.0
        %3209 = vmatpush1.msra.mxu0 0.0
        %3210 = vmatprep.subr.mxu0 0.0
        %3211 = vmatpush1.msra.mxu0 0.0
        %3212 = vmatprep.subr.mxu0 0.0
        %3213 = vmatpush1.msra.mxu0 0.0
        %3214 = vmatprep.subr.mxu0 0.0
        %3215 = vmatpush1.msra.mxu0 0.0
        %3216 = vmatprep.subr.mxu0 0.0
        %3217 = vmatpush1.msra.mxu0 0.0
        %3218 = vmatprep.subr.mxu0 0.0
        %3219 = vmatpush1.msra.mxu0 0.0
        %3220 = vmatprep.subr.mxu0 0.0
        %3221 = vmatpush1.msra.mxu0 0.0
        %3222 = vmatprep.subr.mxu0 0.0
        %3223 = vmatpush1.msra.mxu0 0.0
        %3224 = vmatprep.subr.mxu0 0.0
        %3225 = vmatpush1.msra.mxu0 0.0
        %3226 = vmatprep.subr.mxu0 0.0
        %3227 = vmatpush1.msra.mxu0 0.0
        %3228 = vmatprep.subr.mxu0 0.0
        %3229 = vmatpush1.msra.mxu0 0.0
        %3230 = vmatprep.subr.mxu0 0.0
        %3231 = vmatpush1.msra.mxu0 0.0
        %3232 = vmatprep.subr.mxu0 0.0
        %3233 = vmatpush1.msra.mxu0 0.0
        %3234 = vmatprep.subr.mxu0 0.0
        %3235 = vmatpush1.msra.mxu0 0.0
        %3236 = vmatprep.subr.mxu0 0.0
        %3237 = vmatpush1.msra.mxu0 0.0
        %3238 = vmatprep.subr.mxu0 0.0
        %3239 = vmatpush1.msra.mxu0 0.0
        %3240 = vmatprep.subr.mxu0 0.0
        %3241 = vmatpush1.msra.mxu0 0.0
        %3242 = vmatprep.subr.mxu0 0.0
        %3243 = vmatpush1.msra.mxu0 0.0
        %3244 = vmatprep.subr.mxu0 0.0
        %3245 = vmatpush1.msra.mxu0 0.0
        %3246 = vmatprep.subr.mxu0 0.0
        %3247 = vmatpush1.msra.mxu0 0.0
        %3248 = vmatprep.subr.mxu0 0.0
        %3249 = vmatpush1.msra.mxu0 0.0
        %3250 = vmatprep.subr.mxu0 0.0
        %3251 = vmatpush1.msra.mxu0 0.0
        %3252 = vmatprep.subr.mxu0 0.0
        %3253 = vmatpush1.msra.mxu0 0.0
        %3254 = vmatprep.subr.mxu0 0.0
        %3255 = vmatpush1.msra.mxu0 0.0
        %3256 = vmatprep.subr.mxu0 0.0
        %3257 = vmatpush1.msra.mxu0 0.0
        %3258 = vmatprep.subr.mxu0 0.0
        %3259 = vmatpush1.msra.mxu0 0.0
        %3260 = vmatprep.subr.mxu0 0.0
        %3261 = vmatpush1.msra.mxu0 0.0
        %3262 = vmatprep.subr.mxu0 0.0
        %3263 = vmatpush1.msra.mxu0 0.0
        %3264 = vmatprep.mubr.f32.mxu0 0.0
        %3265 = vmatmul.mubr.f32.gmra.mrb[0].mxu0 %v3198
        %v3266 = vpop.f32.mrb[0].mxu0
        %v3267 = vadd.f32 0.0, %v3266
        %v3268 = vpop.f32.mrb[0].mxu0
        %3269 = vdwg.mxu0
        %v3270 = vadd.f32 %v3123, %v3267
        %3271 = vrot.lane.b32.xlu0 %v609, 32
        %v3272 = vpop.permute.xlu0 %3271
        %3273 = vrot.lane.b32.xlu0 %v611, 32
        %v3274 = vpop.permute.xlu0 %3273
        %v3275 = vsel %vm1170, %v3272, 0
        %v3277 = vsel %vm1170, %v3274, 0
        %3279 = vmatprep.subr.mxu0 0.0
        %3280 = vmatpush1.xpose.msra.mxu0 %v3277
        %3281 = vmatprep.subr.mxu0 0.0
        %3282 = vmatpush1.xpose.msra.mxu0 0.0
        %3283 = vmatprep.subr.mxu0 0.0
        %3284 = vmatpush1.xpose.msra.mxu0 0.0
        %3285 = vmatprep.subr.mxu0 0.0
        %3286 = vmatpush1.xpose.msra.mxu0 0.0
        %3287 = vmatprep.subr.mxu0 0.0
        %3288 = vmatpush1.xpose.msra.mxu0 0.0
        %3289 = vmatprep.subr.mxu0 0.0
        %3290 = vmatpush1.xpose.msra.mxu0 0.0
        %3291 = vmatprep.subr.mxu0 0.0
        %3292 = vmatpush1.xpose.msra.mxu0 0.0
        %3293 = vmatprep.subr.mxu0 0.0
        %3294 = vmatpush1.xpose.msra.mxu0 0.0
        %3295 = vmatprep.subr.mxu0 0.0
        %3296 = vmatpush1.xpose.msra.mxu0 0.0
        %3297 = vmatprep.subr.mxu0 0.0
        %3298 = vmatpush1.xpose.msra.mxu0 0.0
        %3299 = vmatprep.subr.mxu0 0.0
        %3300 = vmatpush1.xpose.msra.mxu0 0.0
        %3301 = vmatprep.subr.mxu0 0.0
        %3302 = vmatpush1.xpose.msra.mxu0 0.0
        %3303 = vmatprep.subr.mxu0 0.0
        %3304 = vmatpush1.xpose.msra.mxu0 0.0
        %3305 = vmatprep.subr.mxu0 0.0
        %3306 = vmatpush1.xpose.msra.mxu0 0.0
        %3307 = vmatprep.subr.mxu0 0.0
        %3308 = vmatpush1.xpose.msra.mxu0 0.0
        %3309 = vmatprep.subr.mxu0 0.0
        %3310 = vmatpush1.xpose.msra.mxu0 0.0
        %3311 = vmatprep.subr.mxu0 0.0
        %3312 = vmatpush1.xpose.msra.mxu0 0.0
        %3313 = vmatprep.subr.mxu0 0.0
        %3314 = vmatpush1.xpose.msra.mxu0 0.0
        %3315 = vmatprep.subr.mxu0 0.0
        %3316 = vmatpush1.xpose.msra.mxu0 0.0
        %3317 = vmatprep.subr.mxu0 0.0
        %3318 = vmatpush1.xpose.msra.mxu0 0.0
        %3319 = vmatprep.subr.mxu0 0.0
        %3320 = vmatpush1.xpose.msra.mxu0 0.0
        %3321 = vmatprep.subr.mxu0 0.0
        %3322 = vmatpush1.xpose.msra.mxu0 0.0
        %3323 = vmatprep.subr.mxu0 0.0
        %3324 = vmatpush1.xpose.msra.mxu0 0.0
        %3325 = vmatprep.subr.mxu0 0.0
        %3326 = vmatpush1.xpose.msra.mxu0 0.0
        %3327 = vmatprep.subr.mxu0 0.0
        %3328 = vmatpush1.xpose.msra.mxu0 0.0
        %3329 = vmatprep.subr.mxu0 0.0
        %3330 = vmatpush1.xpose.msra.mxu0 0.0
        %3331 = vmatprep.subr.mxu0 0.0
        %3332 = vmatpush1.xpose.msra.mxu0 0.0
        %3333 = vmatprep.subr.mxu0 0.0
        %3334 = vmatpush1.xpose.msra.mxu0 0.0
        %3335 = vmatprep.subr.mxu0 0.0
        %3336 = vmatpush1.xpose.msra.mxu0 0.0
        %3337 = vmatprep.subr.mxu0 0.0
        %3338 = vmatpush1.xpose.msra.mxu0 0.0
        %3339 = vmatprep.subr.mxu0 0.0
        %3340 = vmatpush1.xpose.msra.mxu0 0.0
        %3341 = vmatprep.subr.mxu0 0.0
        %3342 = vmatpush1.xpose.msra.mxu0 0.0
        %3343 = vmatprep.mubr.f32.mxu0 0.0
        %3344 = vmatmul.mubr.f32.gmra.mrb[0].mxu0 %v3275
        %v3345 = vpop.f32.mrb[0].mxu0
        %v3346 = vadd.f32 0.0, %v3345
        %v3347 = vpop.f32.mrb[0].mxu0
        %3348 = vdwg.mxu0
        %v3349 = vsel %vm867, %v3346, -inf
        %3350 = vmax.xlane.f32.xlu0 %v3349
        %v3351 = vpop.xlane.xlu0 %3350
        %v3352 = vsub.f32 %v3346, %v3351
        %v3353 = vmul.f32 %v3352, 1.442695
        %v3354 = vpow.pop %v3353
        %v3355 = vsel %vm867, %v3354, 0.0
        %3356 = vadd.xlane.f32.xlu0 %v3355
        %v3357 = vpop.xlane.xlu0 %3356
        %v3358 = vrcp.pop %v3357
        %v3359 = vmul.f32 %v3354, %v3358
        %v3361 = vsel %vm867, %v3359, 0
        %3363 = vmatprep.subr.mxu0 0.0
        %3364 = vmatpush1.msra.mxu0 %v3125
        %3365 = vmatprep.subr.mxu0 0.0
        %3366 = vmatpush1.msra.mxu0 0.0
        %3367 = vmatprep.subr.mxu0 0.0
        %3368 = vmatpush1.msra.mxu0 0.0
        %3369 = vmatprep.subr.mxu0 0.0
        %3370 = vmatpush1.msra.mxu0 0.0
        %3371 = vmatprep.subr.mxu0 0.0
        %3372 = vmatpush1.msra.mxu0 0.0
        %3373 = vmatprep.subr.mxu0 0.0
        %3374 = vmatpush1.msra.mxu0 0.0
        %3375 = vmatprep.subr.mxu0 0.0
        %3376 = vmatpush1.msra.mxu0 0.0
        %3377 = vmatprep.subr.mxu0 0.0
        %3378 = vmatpush1.msra.mxu0 0.0
        %3379 = vmatprep.subr.mxu0 0.0
        %3380 = vmatpush1.msra.mxu0 0.0
        %3381 = vmatprep.subr.mxu0 0.0
        %3382 = vmatpush1.msra.mxu0 0.0
        %3383 = vmatprep.subr.mxu0 0.0
        %3384 = vmatpush1.msra.mxu0 0.0
        %3385 = vmatprep.subr.mxu0 0.0
        %3386 = vmatpush1.msra.mxu0 0.0
        %3387 = vmatprep.subr.mxu0 0.0
        %3388 = vmatpush1.msra.mxu0 0.0
        %3389 = vmatprep.subr.mxu0 0.0
        %3390 = vmatpush1.msra.mxu0 0.0
        %3391 = vmatprep.subr.mxu0 0.0
        %3392 = vmatpush1.msra.mxu0 0.0
        %3393 = vmatprep.subr.mxu0 0.0
        %3394 = vmatpush1.msra.mxu0 0.0
        %3395 = vmatprep.subr.mxu0 0.0
        %3396 = vmatpush1.msra.mxu0 0.0
        %3397 = vmatprep.subr.mxu0 0.0
        %3398 = vmatpush1.msra.mxu0 0.0
        %3399 = vmatprep.subr.mxu0 0.0
        %3400 = vmatpush1.msra.mxu0 0.0
        %3401 = vmatprep.subr.mxu0 0.0
        %3402 = vmatpush1.msra.mxu0 0.0
        %3403 = vmatprep.subr.mxu0 0.0
        %3404 = vmatpush1.msra.mxu0 0.0
        %3405 = vmatprep.subr.mxu0 0.0
        %3406 = vmatpush1.msra.mxu0 0.0
        %3407 = vmatprep.subr.mxu0 0.0
        %3408 = vmatpush1.msra.mxu0 0.0
        %3409 = vmatprep.subr.mxu0 0.0
        %3410 = vmatpush1.msra.mxu0 0.0
        %3411 = vmatprep.subr.mxu0 0.0
        %3412 = vmatpush1.msra.mxu0 0.0
        %3413 = vmatprep.subr.mxu0 0.0
        %3414 = vmatpush1.msra.mxu0 0.0
        %3415 = vmatprep.subr.mxu0 0.0
        %3416 = vmatpush1.msra.mxu0 0.0
        %3417 = vmatprep.subr.mxu0 0.0
        %3418 = vmatpush1.msra.mxu0 0.0
        %3419 = vmatprep.subr.mxu0 0.0
        %3420 = vmatpush1.msra.mxu0 0.0
        %3421 = vmatprep.subr.mxu0 0.0
        %3422 = vmatpush1.msra.mxu0 0.0
        %3423 = vmatprep.subr.mxu0 0.0
        %3424 = vmatpush1.msra.mxu0 0.0
        %3425 = vmatprep.subr.mxu0 0.0
        %3426 = vmatpush1.msra.mxu0 0.0
        %3427 = vmatprep.mubr.f32.mxu0 0.0
        %3428 = vmatmul.mubr.f32.gmra.mrb[0].mxu0 %v3361
        %v3429 = vpop.f32.mrb[0].mxu0
        %v3430 = vadd.f32 0.0, %v3429
        %v3431 = vpop.f32.mrb[0].mxu0
        %3432 = vdwg.mxu0
        %v3434 = vsel %vm535, %v3430, 0
        %3436 = vmatprep.subr.mxu0 0.0
        %3437 = vmatpush1.msra.mxu0 %v351
        %3438 = vmatprep.subr.mxu0 0.0
        %3439 = vmatpush1.msra.mxu0 %v352
        %3440 = vmatprep.subr.mxu0 0.0
        %3441 = vmatpush1.msra.mxu0 0.0
        %3442 = vmatprep.subr.mxu0 0.0
        %3443 = vmatpush1.msra.mxu0 0.0
        %3444 = vmatprep.subr.mxu0 0.0
        %3445 = vmatpush1.msra.mxu0 0.0
        %3446 = vmatprep.subr.mxu0 0.0
        %3447 = vmatpush1.msra.mxu0 0.0
        %3448 = vmatprep.subr.mxu0 0.0
        %3449 = vmatpush1.msra.mxu0 0.0
        %3450 = vmatprep.subr.mxu0 0.0
        %3451 = vmatpush1.msra.mxu0 0.0
        %3452 = vmatprep.subr.mxu0 0.0
        %3453 = vmatpush1.msra.mxu0 0.0
        %3454 = vmatprep.subr.mxu0 0.0
        %3455 = vmatpush1.msra.mxu0 0.0
        %3456 = vmatprep.subr.mxu0 0.0
        %3457 = vmatpush1.msra.mxu0 0.0
        %3458 = vmatprep.subr.mxu0 0.0
        %3459 = vmatpush1.msra.mxu0 0.0
        %3460 = vmatprep.subr.mxu0 0.0
        %3461 = vmatpush1.msra.mxu0 0.0
        %3462 = vmatprep.subr.mxu0 0.0
        %3463 = vmatpush1.msra.mxu0 0.0
        %3464 = vmatprep.subr.mxu0 0.0
        %3465 = vmatpush1.msra.mxu0 0.0
        %3466 = vmatprep.subr.mxu0 0.0
        %3467 = vmatpush1.msra.mxu0 0.0
        %3468 = vmatprep.subr.mxu0 0.0
        %3469 = vmatpush1.msra.mxu0 0.0
        %3470 = vmatprep.subr.mxu0 0.0
        %3471 = vmatpush1.msra.mxu0 0.0
        %3472 = vmatprep.subr.mxu0 0.0
        %3473 = vmatpush1.msra.mxu0 0.0
        %3474 = vmatprep.subr.mxu0 0.0
        %3475 = vmatpush1.msra.mxu0 0.0
        %3476 = vmatprep.subr.mxu0 0.0
        %3477 = vmatpush1.msra.mxu0 0.0
        %3478 = vmatprep.subr.mxu0 0.0
        %3479 = vmatpush1.msra.mxu0 0.0
        %3480 = vmatprep.subr.mxu0 0.0
        %3481 = vmatpush1.msra.mxu0 0.0
        %3482 = vmatprep.subr.mxu0 0.0
        %3483 = vmatpush1.msra.mxu0 0.0
        %3484 = vmatprep.subr.mxu0 0.0
        %3485 = vmatpush1.msra.mxu0 0.0
        %3486 = vmatprep.subr.mxu0 0.0
        %3487 = vmatpush1.msra.mxu0 0.0
        %3488 = vmatprep.subr.mxu0 0.0
        %3489 = vmatpush1.msra.mxu0 0.0
        %3490 = vmatprep.subr.mxu0 0.0
        %3491 = vmatpush1.msra.mxu0 0.0
        %3492 = vmatprep.subr.mxu0 0.0
        %3493 = vmatpush1.msra.mxu0 0.0
        %3494 = vmatprep.subr.mxu0 0.0
        %3495 = vmatpush1.msra.mxu0 0.0
        %3496 = vmatprep.subr.mxu0 0.0
        %3497 = vmatpush1.msra.mxu0 0.0
        %3498 = vmatprep.subr.mxu0 0.0
        %3499 = vmatpush1.msra.mxu0 0.0
        %3500 = vmatprep.mubr.f32.mxu0 0.0
        %3501 = vmatmul.mubr.f32.gmra.mrb[0].mxu0 %v3434
        %v3502 = vpop.f32.mrb[0].mxu0
        %v3503 = vadd.f32 0.0, %v3502
        %v3504 = vpop.f32.mrb[0].mxu0
        %3505 = vdwg.mxu0
        %v3506 = vadd.f32 %v2806, %v3503
        %3508 = vrot.lane.b32.xlu0 %v3506, 64
        %v3509 = vpop.permute.xlu0 %3508
        %vm3511 = vcmask 523264
        %v3512 = vsel %vm3511, %v3270, %v3509
        %v3513 = vadd.f32 %v3512, %v440
        %3514 = vst [vmem:[%s315] sm:$0xff] %v3513
        %v3515 = vadd.f32 %v448, %v700
        %v3516 = vadd.f32 %v692, %v707
        %3518 = vrot.lane.b32.xlu0 %v446, 112
        %v3519 = vpop.permute.xlu0 %3518
        %3521 = vrot.lane.b32.xlu0 %v692, 64
        %v3522 = vpop.permute.xlu0 %3521
        %v3523 = vsel %vm535, %v3519, 0
        %v3525 = vsel %vm535, %v3522, 0
        %3527 = vmatprep.subr.mxu0 0.0
        %3528 = vmatpush1.xpose.msra.mxu0 %v3525
        %3529 = vmatprep.subr.mxu0 0.0
        %3530 = vmatpush1.xpose.msra.mxu0 0.0
        %3531 = vmatprep.subr.mxu0 0.0
        %3532 = vmatpush1.xpose.msra.mxu0 0.0
        %3533 = vmatprep.subr.mxu0 0.0
        %3534 = vmatpush1.xpose.msra.mxu0 0.0
        %3535 = vmatprep.subr.mxu0 0.0
        %3536 = vmatpush1.xpose.msra.mxu0 0.0
        %3537 = vmatprep.subr.mxu0 0.0
        %3538 = vmatpush1.xpose.msra.mxu0 0.0
        %3539 = vmatprep.subr.mxu0 0.0
        %3540 = vmatpush1.xpose.msra.mxu0 0.0
        %3541 = vmatprep.subr.mxu0 0.0
        %3542 = vmatpush1.xpose.msra.mxu0 0.0
        %3543 = vmatprep.subr.mxu0 0.0
        %3544 = vmatpush1.xpose.msra.mxu0 0.0
        %3545 = vmatprep.subr.mxu0 0.0
        %3546 = vmatpush1.xpose.msra.mxu0 0.0
        %3547 = vmatprep.subr.mxu0 0.0
        %3548 = vmatpush1.xpose.msra.mxu0 0.0
        %3549 = vmatprep.subr.mxu0 0.0
        %3550 = vmatpush1.xpose.msra.mxu0 0.0
        %3551 = vmatprep.subr.mxu0 0.0
        %3552 = vmatpush1.xpose.msra.mxu0 0.0
        %3553 = vmatprep.subr.mxu0 0.0
        %3554 = vmatpush1.xpose.msra.mxu0 0.0
        %3555 = vmatprep.subr.mxu0 0.0
        %3556 = vmatpush1.xpose.msra.mxu0 0.0
        %3557 = vmatprep.subr.mxu0 0.0
        %3558 = vmatpush1.xpose.msra.mxu0 0.0
        %3559 = vmatprep.subr.mxu0 0.0
        %3560 = vmatpush1.xpose.msra.mxu0 0.0
        %3561 = vmatprep.subr.mxu0 0.0
        %3562 = vmatpush1.xpose.msra.mxu0 0.0
        %3563 = vmatprep.subr.mxu0 0.0
        %3564 = vmatpush1.xpose.msra.mxu0 0.0
        %3565 = vmatprep.subr.mxu0 0.0
        %3566 = vmatpush1.xpose.msra.mxu0 0.0
        %3567 = vmatprep.subr.mxu0 0.0
        %3568 = vmatpush1.xpose.msra.mxu0 0.0
        %3569 = vmatprep.subr.mxu0 0.0
        %3570 = vmatpush1.xpose.msra.mxu0 0.0
        %3571 = vmatprep.subr.mxu0 0.0
        %3572 = vmatpush1.xpose.msra.mxu0 0.0
        %3573 = vmatprep.subr.mxu0 0.0
        %3574 = vmatpush1.xpose.msra.mxu0 0.0
        %3575 = vmatprep.subr.mxu0 0.0
        %3576 = vmatpush1.xpose.msra.mxu0 0.0
        %3577 = vmatprep.subr.mxu0 0.0
        %3578 = vmatpush1.xpose.msra.mxu0 0.0
        %3579 = vmatprep.subr.mxu0 0.0
        %3580 = vmatpush1.xpose.msra.mxu0 0.0
        %3581 = vmatprep.subr.mxu0 0.0
        %3582 = vmatpush1.xpose.msra.mxu0 0.0
        %3583 = vmatprep.subr.mxu0 0.0
        %3584 = vmatpush1.xpose.msra.mxu0 0.0
        %3585 = vmatprep.subr.mxu0 0.0
        %3586 = vmatpush1.xpose.msra.mxu0 0.0
        %3587 = vmatprep.subr.mxu0 0.0
        %3588 = vmatpush1.xpose.msra.mxu0 0.0
        %3589 = vmatprep.subr.mxu0 0.0
        %3590 = vmatpush1.xpose.msra.mxu0 0.0
        %3591 = vmatprep.mubr.f32.mxu0 0.0
        %3592 = vmatmul.mubr.f32.gmra.mrb[0].mxu0 %v3523
        %v3593 = vpop.f32.mrb[0].mxu0
        %v3594 = vadd.f32 0.0, %v3593
        %v3595 = vpop.f32.mrb[0].mxu0
        %3596 = vdwg.mxu0
        %3598 = vrot.lane.b32.xlu0 %v448, 64
        %v3599 = vpop.permute.xlu0 %3598
        %v3600 = vsel %vm535, %v446, 0
        %v3602 = vsel %vm535, %v3599, 0
        %3604 = vmatprep.subr.mxu0 0.0
        %3605 = vmatpush1.xpose.msra.mxu0 %v3602
        %3606 = vmatprep.subr.mxu0 0.0
        %3607 = vmatpush1.xpose.msra.mxu0 0.0
        %3608 = vmatprep.subr.mxu0 0.0
        %3609 = vmatpush1.xpose.msra.mxu0 0.0
        %3610 = vmatprep.subr.mxu0 0.0
        %3611 = vmatpush1.xpose.msra.mxu0 0.0
        %3612 = vmatprep.subr.mxu0 0.0
        %3613 = vmatpush1.xpose.msra.mxu0 0.0
        %3614 = vmatprep.subr.mxu0 0.0
        %3615 = vmatpush1.xpose.msra.mxu0 0.0
        %3616 = vmatprep.subr.mxu0 0.0
        %3617 = vmatpush1.xpose.msra.mxu0 0.0
        %3618 = vmatprep.subr.mxu0 0.0
        %3619 = vmatpush1.xpose.msra.mxu0 0.0
        %3620 = vmatprep.subr.mxu0 0.0
        %3621 = vmatpush1.xpose.msra.mxu0 0.0
        %3622 = vmatprep.subr.mxu0 0.0
        %3623 = vmatpush1.xpose.msra.mxu0 0.0
        %3624 = vmatprep.subr.mxu0 0.0
        %3625 = vmatpush1.xpose.msra.mxu0 0.0
        %3626 = vmatprep.subr.mxu0 0.0
        %3627 = vmatpush1.xpose.msra.mxu0 0.0
        %3628 = vmatprep.subr.mxu0 0.0
        %3629 = vmatpush1.xpose.msra.mxu0 0.0
        %3630 = vmatprep.subr.mxu0 0.0
        %3631 = vmatpush1.xpose.msra.mxu0 0.0
        %3632 = vmatprep.subr.mxu0 0.0
        %3633 = vmatpush1.xpose.msra.mxu0 0.0
        %3634 = vmatprep.subr.mxu0 0.0
        %3635 = vmatpush1.xpose.msra.mxu0 0.0
        %3636 = vmatprep.subr.mxu0 0.0
        %3637 = vmatpush1.xpose.msra.mxu0 0.0
        %3638 = vmatprep.subr.mxu0 0.0
        %3639 = vmatpush1.xpose.msra.mxu0 0.0
        %3640 = vmatprep.subr.mxu0 0.0
        %3641 = vmatpush1.xpose.msra.mxu0 0.0
        %3642 = vmatprep.subr.mxu0 0.0
        %3643 = vmatpush1.xpose.msra.mxu0 0.0
        %3644 = vmatprep.subr.mxu0 0.0
        %3645 = vmatpush1.xpose.msra.mxu0 0.0
        %3646 = vmatprep.subr.mxu0 0.0
        %3647 = vmatpush1.xpose.msra.mxu0 0.0
        %3648 = vmatprep.subr.mxu0 0.0
        %3649 = vmatpush1.xpose.msra.mxu0 0.0
        %3650 = vmatprep.subr.mxu0 0.0
        %3651 = vmatpush1.xpose.msra.mxu0 0.0
        %3652 = vmatprep.subr.mxu0 0.0
        %3653 = vmatpush1.xpose.msra.mxu0 0.0
        %3654 = vmatprep.subr.mxu0 0.0
        %3655 = vmatpush1.xpose.msra.mxu0 0.0
        %3656 = vmatprep.subr.mxu0 0.0
        %3657 = vmatpush1.xpose.msra.mxu0 0.0
        %3658 = vmatprep.subr.mxu0 0.0
        %3659 = vmatpush1.xpose.msra.mxu0 0.0
        %3660 = vmatprep.subr.mxu0 0.0
        %3661 = vmatpush1.xpose.msra.mxu0 0.0
        %3662 = vmatprep.subr.mxu0 0.0
        %3663 = vmatpush1.xpose.msra.mxu0 0.0
        %3664 = vmatprep.subr.mxu0 0.0
        %3665 = vmatpush1.xpose.msra.mxu0 0.0
        %3666 = vmatprep.subr.mxu0 0.0
        %3667 = vmatpush1.xpose.msra.mxu0 0.0
        %3668 = vmatprep.mubr.f32.mxu0 0.0
        %3669 = vmatmul.mubr.f32.gmra.mrb[0].mxu0 %v3600
        %v3670 = vpop.f32.mrb[0].mxu0
        %v3671 = vadd.f32 %v3594, %v3670
        %v3672 = vpop.f32.mrb[0].mxu0
        %3673 = vdwg.mxu0
        %v3674 = vsel %vm867, %v3671, -inf
        %3675 = vmax.xlane.f32.xlu0 %v3674
        %v3676 = vpop.xlane.xlu0 %3675
        %v3677 = vsub.f32 %v3671, %v3676
        %v3678 = vmul.f32 %v3677, 1.442695
        %v3679 = vpow.pop %v3678
        %v3680 = vsel %vm867, %v3679, 0.0
        %3681 = vadd.xlane.f32.xlu0 %v3680
        %v3682 = vpop.xlane.xlu0 %3681
        %v3683 = vrcp.pop %v3682
        %v3684 = vmul.f32 %v3679, %v3683
        %v3686 = vsel %vm867, %v3684, 0
        %3688 = vmatprep.subr.mxu0 0.0
        %3689 = vmatpush1.msra.mxu0 %v522
        %3690 = vmatprep.subr.mxu0 0.0
        %3691 = vmatpush1.msra.mxu0 0.0
        %3692 = vmatprep.subr.mxu0 0.0
        %3693 = vmatpush1.msra.mxu0 0.0
        %3694 = vmatprep.subr.mxu0 0.0
        %3695 = vmatpush1.msra.mxu0 0.0
        %3696 = vmatprep.subr.mxu0 0.0
        %3697 = vmatpush1.msra.mxu0 0.0
        %3698 = vmatprep.subr.mxu0 0.0
        %3699 = vmatpush1.msra.mxu0 0.0
        %3700 = vmatprep.subr.mxu0 0.0
        %3701 = vmatpush1.msra.mxu0 0.0
        %3702 = vmatprep.subr.mxu0 0.0
        %3703 = vmatpush1.msra.mxu0 0.0
        %3704 = vmatprep.subr.mxu0 0.0
        %3705 = vmatpush1.msra.mxu0 0.0
        %3706 = vmatprep.subr.mxu0 0.0
        %3707 = vmatpush1.msra.mxu0 0.0
        %3708 = vmatprep.subr.mxu0 0.0
        %3709 = vmatpush1.msra.mxu0 0.0
        %3710 = vmatprep.subr.mxu0 0.0
        %3711 = vmatpush1.msra.mxu0 0.0
        %3712 = vmatprep.subr.mxu0 0.0
        %3713 = vmatpush1.msra.mxu0 0.0
        %3714 = vmatprep.subr.mxu0 0.0
        %3715 = vmatpush1.msra.mxu0 0.0
        %3716 = vmatprep.subr.mxu0 0.0
        %3717 = vmatpush1.msra.mxu0 0.0
        %3718 = vmatprep.subr.mxu0 0.0
        %3719 = vmatpush1.msra.mxu0 0.0
        %3720 = vmatprep.subr.mxu0 0.0
        %3721 = vmatpush1.msra.mxu0 0.0
        %3722 = vmatprep.subr.mxu0 0.0
        %3723 = vmatpush1.msra.mxu0 0.0
        %3724 = vmatprep.subr.mxu0 0.0
        %3725 = vmatpush1.msra.mxu0 0.0
        %3726 = vmatprep.subr.mxu0 0.0
        %3727 = vmatpush1.msra.mxu0 0.0
        %3728 = vmatprep.subr.mxu0 0.0
        %3729 = vmatpush1.msra.mxu0 0.0
        %3730 = vmatprep.subr.mxu0 0.0
        %3731 = vmatpush1.msra.mxu0 0.0
        %3732 = vmatprep.subr.mxu0 0.0
        %3733 = vmatpush1.msra.mxu0 0.0
        %3734 = vmatprep.subr.mxu0 0.0
        %3735 = vmatpush1.msra.mxu0 0.0
        %3736 = vmatprep.subr.mxu0 0.0
        %3737 = vmatpush1.msra.mxu0 0.0
        %3738 = vmatprep.subr.mxu0 0.0
        %3739 = vmatpush1.msra.mxu0 0.0
        %3740 = vmatprep.subr.mxu0 0.0
        %3741 = vmatpush1.msra.mxu0 0.0
        %3742 = vmatprep.subr.mxu0 0.0
        %3743 = vmatpush1.msra.mxu0 0.0
        %3744 = vmatprep.subr.mxu0 0.0
        %3745 = vmatpush1.msra.mxu0 0.0
        %3746 = vmatprep.subr.mxu0 0.0
        %3747 = vmatpush1.msra.mxu0 0.0
        %3748 = vmatprep.subr.mxu0 0.0
        %3749 = vmatpush1.msra.mxu0 0.0
        %3750 = vmatprep.subr.mxu0 0.0
        %3751 = vmatpush1.msra.mxu0 0.0
        %3752 = vmatprep.mubr.f32.mxu0 0.0
        %3753 = vmatmul.mubr.f32.gmra.mrb[0].mxu0 %v3686
        %v3754 = vpop.f32.mrb[0].mxu0
        %v3755 = vadd.f32 0.0, %v3754
        %v3756 = vpop.f32.mrb[0].mxu0
        %3757 = vdwg.mxu0
        %v3759 = vsel %vm535, %v3755, 0
        %3761 = vmatprep.subr.mxu0 0.0
        %3762 = vmatpush1.msra.mxu0 %v329
        %3763 = vmatprep.subr.mxu0 0.0
        %3764 = vmatpush1.msra.mxu0 %v330
        %3765 = vmatprep.subr.mxu0 0.0
        %3766 = vmatpush1.msra.mxu0 0.0
        %3767 = vmatprep.subr.mxu0 0.0
        %3768 = vmatpush1.msra.mxu0 0.0
        %3769 = vmatprep.subr.mxu0 0.0
        %3770 = vmatpush1.msra.mxu0 0.0
        %3771 = vmatprep.subr.mxu0 0.0
        %3772 = vmatpush1.msra.mxu0 0.0
        %3773 = vmatprep.subr.mxu0 0.0
        %3774 = vmatpush1.msra.mxu0 0.0
        %3775 = vmatprep.subr.mxu0 0.0
        %3776 = vmatpush1.msra.mxu0 0.0
        %3777 = vmatprep.subr.mxu0 0.0
        %3778 = vmatpush1.msra.mxu0 0.0
        %3779 = vmatprep.subr.mxu0 0.0
        %3780 = vmatpush1.msra.mxu0 0.0
        %3781 = vmatprep.subr.mxu0 0.0
        %3782 = vmatpush1.msra.mxu0 0.0
        %3783 = vmatprep.subr.mxu0 0.0
        %3784 = vmatpush1.msra.mxu0 0.0
        %3785 = vmatprep.subr.mxu0 0.0
        %3786 = vmatpush1.msra.mxu0 0.0
        %3787 = vmatprep.subr.mxu0 0.0
        %3788 = vmatpush1.msra.mxu0 0.0
        %3789 = vmatprep.subr.mxu0 0.0
        %3790 = vmatpush1.msra.mxu0 0.0
        %3791 = vmatprep.subr.mxu0 0.0
        %3792 = vmatpush1.msra.mxu0 0.0
        %3793 = vmatprep.subr.mxu0 0.0
        %3794 = vmatpush1.msra.mxu0 0.0
        %3795 = vmatprep.subr.mxu0 0.0
        %3796 = vmatpush1.msra.mxu0 0.0
        %3797 = vmatprep.subr.mxu0 0.0
        %3798 = vmatpush1.msra.mxu0 0.0
        %3799 = vmatprep.subr.mxu0 0.0
        %3800 = vmatpush1.msra.mxu0 0.0
        %3801 = vmatprep.subr.mxu0 0.0
        %3802 = vmatpush1.msra.mxu0 0.0
        %3803 = vmatprep.subr.mxu0 0.0
        %3804 = vmatpush1.msra.mxu0 0.0
        %3805 = vmatprep.subr.mxu0 0.0
        %3806 = vmatpush1.msra.mxu0 0.0
        %3807 = vmatprep.subr.mxu0 0.0
        %3808 = vmatpush1.msra.mxu0 0.0
        %3809 = vmatprep.subr.mxu0 0.0
        %3810 = vmatpush1.msra.mxu0 0.0
        %3811 = vmatprep.subr.mxu0 0.0
        %3812 = vmatpush1.msra.mxu0 0.0
        %3813 = vmatprep.subr.mxu0 0.0
        %3814 = vmatpush1.msra.mxu0 0.0
        %3815 = vmatprep.subr.mxu0 0.0
        %3816 = vmatpush1.msra.mxu0 0.0
        %3817 = vmatprep.subr.mxu0 0.0
        %3818 = vmatpush1.msra.mxu0 0.0
        %3819 = vmatprep.subr.mxu0 0.0
        %3820 = vmatpush1.msra.mxu0 0.0
        %3821 = vmatprep.subr.mxu0 0.0
        %3822 = vmatpush1.msra.mxu0 0.0
        %3823 = vmatprep.subr.mxu0 0.0
        %3824 = vmatpush1.msra.mxu0 0.0
        %3825 = vmatprep.mubr.f32.mxu0 0.0
        %3826 = vmatmul.mubr.f32.gmra.mrb[0].mxu0 %v3759
        %v3827 = vpop.f32.mrb[0].mxu0
        %v3828 = vadd.f32 0.0, %v3827
        %v3829 = vpop.f32.mrb[0].mxu0
        %3830 = vdwg.mxu0
        %v3831 = vadd.f32 %v3515, %v3828
        %3832 = vmatprep.subr.mxu0 0.0
        %3833 = vmatpush1.msra.mxu0 %v694
        %3834 = vmatprep.subr.mxu0 0.0
        %3835 = vmatpush1.msra.mxu0 0.0
        %3836 = vmatprep.subr.mxu0 0.0
        %3837 = vmatpush1.msra.mxu0 0.0
        %3838 = vmatprep.subr.mxu0 0.0
        %3839 = vmatpush1.msra.mxu0 0.0
        %3840 = vmatprep.subr.mxu0 0.0
        %3841 = vmatpush1.msra.mxu0 0.0
        %3842 = vmatprep.subr.mxu0 0.0
        %3843 = vmatpush1.msra.mxu0 0.0
        %3844 = vmatprep.subr.mxu0 0.0
        %3845 = vmatpush1.msra.mxu0 0.0
        %3846 = vmatprep.subr.mxu0 0.0
        %3847 = vmatpush1.msra.mxu0 0.0
        %3848 = vmatprep.subr.mxu0 0.0
        %3849 = vmatpush1.msra.mxu0 0.0
        %3850 = vmatprep.subr.mxu0 0.0
        %3851 = vmatpush1.msra.mxu0 0.0
        %3852 = vmatprep.subr.mxu0 0.0
        %3853 = vmatpush1.msra.mxu0 0.0
        %3854 = vmatprep.subr.mxu0 0.0
        %3855 = vmatpush1.msra.mxu0 0.0
        %3856 = vmatprep.subr.mxu0 0.0
        %3857 = vmatpush1.msra.mxu0 0.0
        %3858 = vmatprep.subr.mxu0 0.0
        %3859 = vmatpush1.msra.mxu0 0.0
        %3860 = vmatprep.subr.mxu0 0.0
        %3861 = vmatpush1.msra.mxu0 0.0
        %3862 = vmatprep.subr.mxu0 0.0
        %3863 = vmatpush1.msra.mxu0 0.0
        %3864 = vmatprep.subr.mxu0 0.0
        %3865 = vmatpush1.msra.mxu0 0.0
        %3866 = vmatprep.subr.mxu0 0.0
        %3867 = vmatpush1.msra.mxu0 0.0
        %3868 = vmatprep.subr.mxu0 0.0
        %3869 = vmatpush1.msra.mxu0 0.0
        %3870 = vmatprep.subr.mxu0 0.0
        %3871 = vmatpush1.msra.mxu0 0.0
        %3872 = vmatprep.subr.mxu0 0.0
        %3873 = vmatpush1.msra.mxu0 0.0
        %3874 = vmatprep.subr.mxu0 0.0
        %3875 = vmatpush1.msra.mxu0 0.0
        %3876 = vmatprep.subr.mxu0 0.0
        %3877 = vmatpush1.msra.mxu0 0.0
        %3878 = vmatprep.subr.mxu0 0.0
        %3879 = vmatpush1.msra.mxu0 0.0
        %3880 = vmatprep.subr.mxu0 0.0
        %3881 = vmatpush1.msra.mxu0 0.0
        %3882 = vmatprep.subr.mxu0 0.0
        %3883 = vmatpush1.msra.mxu0 0.0
        %3884 = vmatprep.subr.mxu0 0.0
        %3885 = vmatpush1.msra.mxu0 0.0
        %3886 = vmatprep.subr.mxu0 0.0
        %3887 = vmatpush1.msra.mxu0 0.0
        %3888 = vmatprep.subr.mxu0 0.0
        %3889 = vmatpush1.msra.mxu0 0.0
        %3890 = vmatprep.subr.mxu0 0.0
        %3891 = vmatpush1.msra.mxu0 0.0
        %3892 = vmatprep.subr.mxu0 0.0
        %3893 = vmatpush1.msra.mxu0 0.0
        %3894 = vmatprep.subr.mxu0 0.0
        %3895 = vmatpush1.msra.mxu0 0.0
        %3896 = vmatprep.mubr.f32.mxu0 0.0
        %3897 = vmatmul.mubr.f32.gmra.mrb[0].mxu0 %v3686
        %v3898 = vpop.f32.mrb[0].mxu0
        %v3899 = vadd.f32 0.0, %v3898
        %v3900 = vpop.f32.mrb[0].mxu0
        %3901 = vdwg.mxu0
        %v3903 = vsel %vm535, %v3899, 0
        %3905 = vmatprep.subr.mxu0 0.0
        %3906 = vmatpush1.msra.mxu0 %v331
        %3907 = vmatprep.subr.mxu0 0.0
        %3908 = vmatpush1.msra.mxu0 %v332
        %3909 = vmatprep.subr.mxu0 0.0
        %3910 = vmatpush1.msra.mxu0 0.0
        %3911 = vmatprep.subr.mxu0 0.0
        %3912 = vmatpush1.msra.mxu0 0.0
        %3913 = vmatprep.subr.mxu0 0.0
        %3914 = vmatpush1.msra.mxu0 0.0
        %3915 = vmatprep.subr.mxu0 0.0
        %3916 = vmatpush1.msra.mxu0 0.0
        %3917 = vmatprep.subr.mxu0 0.0
        %3918 = vmatpush1.msra.mxu0 0.0
        %3919 = vmatprep.subr.mxu0 0.0
        %3920 = vmatpush1.msra.mxu0 0.0
        %3921 = vmatprep.subr.mxu0 0.0
        %3922 = vmatpush1.msra.mxu0 0.0
        %3923 = vmatprep.subr.mxu0 0.0
        %3924 = vmatpush1.msra.mxu0 0.0
        %3925 = vmatprep.subr.mxu0 0.0
        %3926 = vmatpush1.msra.mxu0 0.0
        %3927 = vmatprep.subr.mxu0 0.0
        %3928 = vmatpush1.msra.mxu0 0.0
        %3929 = vmatprep.subr.mxu0 0.0
        %3930 = vmatpush1.msra.mxu0 0.0
        %3931 = vmatprep.subr.mxu0 0.0
        %3932 = vmatpush1.msra.mxu0 0.0
        %3933 = vmatprep.subr.mxu0 0.0
        %3934 = vmatpush1.msra.mxu0 0.0
        %3935 = vmatprep.subr.mxu0 0.0
        %3936 = vmatpush1.msra.mxu0 0.0
        %3937 = vmatprep.subr.mxu0 0.0
        %3938 = vmatpush1.msra.mxu0 0.0
        %3939 = vmatprep.subr.mxu0 0.0
        %3940 = vmatpush1.msra.mxu0 0.0
        %3941 = vmatprep.subr.mxu0 0.0
        %3942 = vmatpush1.msra.mxu0 0.0
        %3943 = vmatprep.subr.mxu0 0.0
        %3944 = vmatpush1.msra.mxu0 0.0
        %3945 = vmatprep.subr.mxu0 0.0
        %3946 = vmatpush1.msra.mxu0 0.0
        %3947 = vmatprep.subr.mxu0 0.0
        %3948 = vmatpush1.msra.mxu0 0.0
        %3949 = vmatprep.subr.mxu0 0.0
        %3950 = vmatpush1.msra.mxu0 0.0
        %3951 = vmatprep.subr.mxu0 0.0
        %3952 = vmatpush1.msra.mxu0 0.0
        %3953 = vmatprep.subr.mxu0 0.0
        %3954 = vmatpush1.msra.mxu0 0.0
        %3955 = vmatprep.subr.mxu0 0.0
        %3956 = vmatpush1.msra.mxu0 0.0
        %3957 = vmatprep.subr.mxu0 0.0
        %3958 = vmatpush1.msra.mxu0 0.0
        %3959 = vmatprep.subr.mxu0 0.0
        %3960 = vmatpush1.msra.mxu0 0.0
        %3961 = vmatprep.subr.mxu0 0.0
        %3962 = vmatpush1.msra.mxu0 0.0
        %3963 = vmatprep.subr.mxu0 0.0
        %3964 = vmatpush1.msra.mxu0 0.0
        %3965 = vmatprep.subr.mxu0 0.0
        %3966 = vmatpush1.msra.mxu0 0.0
        %3967 = vmatprep.subr.mxu0 0.0
        %3968 = vmatpush1.msra.mxu0 0.0
        %3969 = vmatprep.mubr.f32.mxu0 0.0
        %3970 = vmatmul.mubr.f32.gmra.mrb[0].mxu0 %v3903
        %v3971 = vpop.f32.mrb[0].mxu0
        %v3972 = vadd.f32 0.0, %v3971
        %v3973 = vpop.f32.mrb[0].mxu0
        %3974 = vdwg.mxu0
        %v3975 = vadd.f32 %v3831, %v3972
        %v3977 = vsel %vm1170, %v615, 0
        %v3980 = vsel %vm1170, %v617, 0
        %3982 = vmatprep.subr.mxu0 0.0
        %3983 = vmatpush1.xpose.msra.mxu0 %v3980
        %3984 = vmatprep.subr.mxu0 0.0
        %3985 = vmatpush1.xpose.msra.mxu0 0.0
        %3986 = vmatprep.subr.mxu0 0.0
        %3987 = vmatpush1.xpose.msra.mxu0 0.0
        %3988 = vmatprep.subr.mxu0 0.0
        %3989 = vmatpush1.xpose.msra.mxu0 0.0
        %3990 = vmatprep.subr.mxu0 0.0
        %3991 = vmatpush1.xpose.msra.mxu0 0.0
        %3992 = vmatprep.subr.mxu0 0.0
        %3993 = vmatpush1.xpose.msra.mxu0 0.0
        %3994 = vmatprep.subr.mxu0 0.0
        %3995 = vmatpush1.xpose.msra.mxu0 0.0
        %3996 = vmatprep.subr.mxu0 0.0
        %3997 = vmatpush1.xpose.msra.mxu0 0.0
        %3998 = vmatprep.subr.mxu0 0.0
        %3999 = vmatpush1.xpose.msra.mxu0 0.0
        %4000 = vmatprep.subr.mxu0 0.0
        %4001 = vmatpush1.xpose.msra.mxu0 0.0
        %4002 = vmatprep.subr.mxu0 0.0
        %4003 = vmatpush1.xpose.msra.mxu0 0.0
        %4004 = vmatprep.subr.mxu0 0.0
        %4005 = vmatpush1.xpose.msra.mxu0 0.0
        %4006 = vmatprep.subr.mxu0 0.0
        %4007 = vmatpush1.xpose.msra.mxu0 0.0
        %4008 = vmatprep.subr.mxu0 0.0
        %4009 = vmatpush1.xpose.msra.mxu0 0.0
        %4010 = vmatprep.subr.mxu0 0.0
        %4011 = vmatpush1.xpose.msra.mxu0 0.0
        %4012 = vmatprep.subr.mxu0 0.0
        %4013 = vmatpush1.xpose.msra.mxu0 0.0
        %4014 = vmatprep.subr.mxu0 0.0
        %4015 = vmatpush1.xpose.msra.mxu0 0.0
        %4016 = vmatprep.subr.mxu0 0.0
        %4017 = vmatpush1.xpose.msra.mxu0 0.0
        %4018 = vmatprep.subr.mxu0 0.0
        %4019 = vmatpush1.xpose.msra.mxu0 0.0
        %4020 = vmatprep.subr.mxu0 0.0
        %4021 = vmatpush1.xpose.msra.mxu0 0.0
        %4022 = vmatprep.subr.mxu0 0.0
        %4023 = vmatpush1.xpose.msra.mxu0 0.0
        %4024 = vmatprep.subr.mxu0 0.0
        %4025 = vmatpush1.xpose.msra.mxu0 0.0
        %4026 = vmatprep.subr.mxu0 0.0
        %4027 = vmatpush1.xpose.msra.mxu0 0.0
        %4028 = vmatprep.subr.mxu0 0.0
        %4029 = vmatpush1.xpose.msra.mxu0 0.0
        %4030 = vmatprep.subr.mxu0 0.0
        %4031 = vmatpush1.xpose.msra.mxu0 0.0
        %4032 = vmatprep.subr.mxu0 0.0
        %4033 = vmatpush1.xpose.msra.mxu0 0.0
        %4034 = vmatprep.subr.mxu0 0.0
        %4035 = vmatpush1.xpose.msra.mxu0 0.0
        %4036 = vmatprep.subr.mxu0 0.0
        %4037 = vmatpush1.xpose.msra.mxu0 0.0
        %4038 = vmatprep.subr.mxu0 0.0
        %4039 = vmatpush1.xpose.msra.mxu0 0.0
        %4040 = vmatprep.subr.mxu0 0.0
        %4041 = vmatpush1.xpose.msra.mxu0 0.0
        %4042 = vmatprep.subr.mxu0 0.0
        %4043 = vmatpush1.xpose.msra.mxu0 0.0
        %4044 = vmatprep.subr.mxu0 0.0
        %4045 = vmatpush1.xpose.msra.mxu0 0.0
        %4046 = vmatprep.mubr.f32.mxu0 0.0
        %4047 = vmatmul.mubr.f32.gmra.mrb[0].mxu0 %v3977
        %v4048 = vpop.f32.mrb[0].mxu0
        %v4049 = vadd.f32 0.0, %v4048
        %v4050 = vpop.f32.mrb[0].mxu0
        %4051 = vdwg.mxu0
        %v4052 = vsel %vm867, %v4049, -inf
        %4053 = vmax.xlane.f32.xlu0 %v4052
        %v4054 = vpop.xlane.xlu0 %4053
        %v4055 = vsub.f32 %v4049, %v4054
        %v4056 = vmul.f32 %v4055, 1.442695
        %v4057 = vpow.pop %v4056
        %v4058 = vsel %vm867, %v4057, 0.0
        %4059 = vadd.xlane.f32.xlu0 %v4058
        %v4060 = vpop.xlane.xlu0 %4059
        %v4061 = vrcp.pop %v4060
        %v4062 = vmul.f32 %v4057, %v4061
        %v4064 = vsel %vm867, %v4062, 0
        %4066 = vmatprep.subr.mxu0 0.0
        %4067 = vmatpush1.msra.mxu0 %v694
        %4068 = vmatprep.subr.mxu0 0.0
        %4069 = vmatpush1.msra.mxu0 0.0
        %4070 = vmatprep.subr.mxu0 0.0
        %4071 = vmatpush1.msra.mxu0 0.0
        %4072 = vmatprep.subr.mxu0 0.0
        %4073 = vmatpush1.msra.mxu0 0.0
        %4074 = vmatprep.subr.mxu0 0.0
        %4075 = vmatpush1.msra.mxu0 0.0
        %4076 = vmatprep.subr.mxu0 0.0
        %4077 = vmatpush1.msra.mxu0 0.0
        %4078 = vmatprep.subr.mxu0 0.0
        %4079 = vmatpush1.msra.mxu0 0.0
        %4080 = vmatprep.subr.mxu0 0.0
        %4081 = vmatpush1.msra.mxu0 0.0
        %4082 = vmatprep.subr.mxu0 0.0
        %4083 = vmatpush1.msra.mxu0 0.0
        %4084 = vmatprep.subr.mxu0 0.0
        %4085 = vmatpush1.msra.mxu0 0.0
        %4086 = vmatprep.subr.mxu0 0.0
        %4087 = vmatpush1.msra.mxu0 0.0
        %4088 = vmatprep.subr.mxu0 0.0
        %4089 = vmatpush1.msra.mxu0 0.0
        %4090 = vmatprep.subr.mxu0 0.0
        %4091 = vmatpush1.msra.mxu0 0.0
        %4092 = vmatprep.subr.mxu0 0.0
        %4093 = vmatpush1.msra.mxu0 0.0
        %4094 = vmatprep.subr.mxu0 0.0
        %4095 = vmatpush1.msra.mxu0 0.0
        %4096 = vmatprep.subr.mxu0 0.0
        %4097 = vmatpush1.msra.mxu0 0.0
        %4098 = vmatprep.subr.mxu0 0.0
        %4099 = vmatpush1.msra.mxu0 0.0
        %4100 = vmatprep.subr.mxu0 0.0
        %4101 = vmatpush1.msra.mxu0 0.0
        %4102 = vmatprep.subr.mxu0 0.0
        %4103 = vmatpush1.msra.mxu0 0.0
        %4104 = vmatprep.subr.mxu0 0.0
        %4105 = vmatpush1.msra.mxu0 0.0
        %4106 = vmatprep.subr.mxu0 0.0
        %4107 = vmatpush1.msra.mxu0 0.0
        %4108 = vmatprep.subr.mxu0 0.0
        %4109 = vmatpush1.msra.mxu0 0.0
        %4110 = vmatprep.subr.mxu0 0.0
        %4111 = vmatpush1.msra.mxu0 0.0
        %4112 = vmatprep.subr.mxu0 0.0
        %4113 = vmatpush1.msra.mxu0 0.0
        %4114 = vmatprep.subr.mxu0 0.0
        %4115 = vmatpush1.msra.mxu0 0.0
        %4116 = vmatprep.subr.mxu0 0.0
        %4117 = vmatpush1.msra.mxu0 0.0
        %4118 = vmatprep.subr.mxu0 0.0
        %4119 = vmatpush1.msra.mxu0 0.0
        %4120 = vmatprep.subr.mxu0 0.0
        %4121 = vmatpush1.msra.mxu0 0.0
        %4122 = vmatprep.subr.mxu0 0.0
        %4123 = vmatpush1.msra.mxu0 0.0
        %4124 = vmatprep.subr.mxu0 0.0
        %4125 = vmatpush1.msra.mxu0 0.0
        %4126 = vmatprep.subr.mxu0 0.0
        %4127 = vmatpush1.msra.mxu0 0.0
        %4128 = vmatprep.subr.mxu0 0.0
        %4129 = vmatpush1.msra.mxu0 0.0
        %4130 = vmatprep.mubr.f32.mxu0 0.0
        %4131 = vmatmul.mubr.f32.gmra.mrb[0].mxu0 %v4064
        %v4132 = vpop.f32.mrb[0].mxu0
        %v4133 = vadd.f32 0.0, %v4132
        %v4134 = vpop.f32.mrb[0].mxu0
        %4135 = vdwg.mxu0
        %v4137 = vsel %vm535, %v4133, 0
        %4139 = vmatprep.subr.mxu0 0.0
        %4140 = vmatpush1.msra.mxu0 %v345
        %4141 = vmatprep.subr.mxu0 0.0
        %4142 = vmatpush1.msra.mxu0 %v346
        %4143 = vmatprep.subr.mxu0 0.0
        %4144 = vmatpush1.msra.mxu0 0.0
        %4145 = vmatprep.subr.mxu0 0.0
        %4146 = vmatpush1.msra.mxu0 0.0
        %4147 = vmatprep.subr.mxu0 0.0
        %4148 = vmatpush1.msra.mxu0 0.0
        %4149 = vmatprep.subr.mxu0 0.0
        %4150 = vmatpush1.msra.mxu0 0.0
        %4151 = vmatprep.subr.mxu0 0.0
        %4152 = vmatpush1.msra.mxu0 0.0
        %4153 = vmatprep.subr.mxu0 0.0
        %4154 = vmatpush1.msra.mxu0 0.0
        %4155 = vmatprep.subr.mxu0 0.0
        %4156 = vmatpush1.msra.mxu0 0.0
        %4157 = vmatprep.subr.mxu0 0.0
        %4158 = vmatpush1.msra.mxu0 0.0
        %4159 = vmatprep.subr.mxu0 0.0
        %4160 = vmatpush1.msra.mxu0 0.0
        %4161 = vmatprep.subr.mxu0 0.0
        %4162 = vmatpush1.msra.mxu0 0.0
        %4163 = vmatprep.subr.mxu0 0.0
        %4164 = vmatpush1.msra.mxu0 0.0
        %4165 = vmatprep.subr.mxu0 0.0
        %4166 = vmatpush1.msra.mxu0 0.0
        %4167 = vmatprep.subr.mxu0 0.0
        %4168 = vmatpush1.msra.mxu0 0.0
        %4169 = vmatprep.subr.mxu0 0.0
        %4170 = vmatpush1.msra.mxu0 0.0
        %4171 = vmatprep.subr.mxu0 0.0
        %4172 = vmatpush1.msra.mxu0 0.0
        %4173 = vmatprep.subr.mxu0 0.0
        %4174 = vmatpush1.msra.mxu0 0.0
        %4175 = vmatprep.subr.mxu0 0.0
        %4176 = vmatpush1.msra.mxu0 0.0
        %4177 = vmatprep.subr.mxu0 0.0
        %4178 = vmatpush1.msra.mxu0 0.0
        %4179 = vmatprep.subr.mxu0 0.0
        %4180 = vmatpush1.msra.mxu0 0.0
        %4181 = vmatprep.subr.mxu0 0.0
        %4182 = vmatpush1.msra.mxu0 0.0
        %4183 = vmatprep.subr.mxu0 0.0
        %4184 = vmatpush1.msra.mxu0 0.0
        %4185 = vmatprep.subr.mxu0 0.0
        %4186 = vmatpush1.msra.mxu0 0.0
        %4187 = vmatprep.subr.mxu0 0.0
        %4188 = vmatpush1.msra.mxu0 0.0
        %4189 = vmatprep.subr.mxu0 0.0
        %4190 = vmatpush1.msra.mxu0 0.0
        %4191 = vmatprep.subr.mxu0 0.0
        %4192 = vmatpush1.msra.mxu0 0.0
        %4193 = vmatprep.subr.mxu0 0.0
        %4194 = vmatpush1.msra.mxu0 0.0
        %4195 = vmatprep.subr.mxu0 0.0
        %4196 = vmatpush1.msra.mxu0 0.0
        %4197 = vmatprep.subr.mxu0 0.0
        %4198 = vmatpush1.msra.mxu0 0.0
        %4199 = vmatprep.subr.mxu0 0.0
        %4200 = vmatpush1.msra.mxu0 0.0
        %4201 = vmatprep.subr.mxu0 0.0
        %4202 = vmatpush1.msra.mxu0 0.0
        %4203 = vmatprep.mubr.f32.mxu0 0.0
        %4204 = vmatmul.mubr.f32.gmra.mrb[0].mxu0 %v4137
        %v4205 = vpop.f32.mrb[0].mxu0
        %v4206 = vadd.f32 0.0, %v4205
        %v4207 = vpop.f32.mrb[0].mxu0
        %4208 = vdwg.mxu0
        %v4209 = vadd.f32 %v3516, %v4206
        %4210 = vrot.lane.b32.xlu0 %v446, 80
        %v4211 = vpop.permute.xlu0 %4210
        %4212 = vrot.lane.b32.xlu0 %v692, 48
        %v4213 = vpop.permute.xlu0 %4212
        %v4214 = vsel %vm535, %v4211, 0
        %v4216 = vsel %vm535, %v4213, 0
        %4218 = vmatprep.subr.mxu0 0.0
        %4219 = vmatpush1.xpose.msra.mxu0 %v4216
        %4220 = vmatprep.subr.mxu0 0.0
        %4221 = vmatpush1.xpose.msra.mxu0 0.0
        %4222 = vmatprep.subr.mxu0 0.0
        %4223 = vmatpush1.xpose.msra.mxu0 0.0
        %4224 = vmatprep.subr.mxu0 0.0
        %4225 = vmatpush1.xpose.msra.mxu0 0.0
        %4226 = vmatprep.subr.mxu0 0.0
        %4227 = vmatpush1.xpose.msra.mxu0 0.0
        %4228 = vmatprep.subr.mxu0 0.0
        %4229 = vmatpush1.xpose.msra.mxu0 0.0
        %4230 = vmatprep.subr.mxu0 0.0
        %4231 = vmatpush1.xpose.msra.mxu0 0.0
        %4232 = vmatprep.subr.mxu0 0.0
        %4233 = vmatpush1.xpose.msra.mxu0 0.0
        %4234 = vmatprep.subr.mxu0 0.0
        %4235 = vmatpush1.xpose.msra.mxu0 0.0
        %4236 = vmatprep.subr.mxu0 0.0
        %4237 = vmatpush1.xpose.msra.mxu0 0.0
        %4238 = vmatprep.subr.mxu0 0.0
        %4239 = vmatpush1.xpose.msra.mxu0 0.0
        %4240 = vmatprep.subr.mxu0 0.0
        %4241 = vmatpush1.xpose.msra.mxu0 0.0
        %4242 = vmatprep.subr.mxu0 0.0
        %4243 = vmatpush1.xpose.msra.mxu0 0.0
        %4244 = vmatprep.subr.mxu0 0.0
        %4245 = vmatpush1.xpose.msra.mxu0 0.0
        %4246 = vmatprep.subr.mxu0 0.0
        %4247 = vmatpush1.xpose.msra.mxu0 0.0
        %4248 = vmatprep.subr.mxu0 0.0
        %4249 = vmatpush1.xpose.msra.mxu0 0.0
        %4250 = vmatprep.subr.mxu0 0.0
        %4251 = vmatpush1.xpose.msra.mxu0 0.0
        %4252 = vmatprep.subr.mxu0 0.0
        %4253 = vmatpush1.xpose.msra.mxu0 0.0
        %4254 = vmatprep.subr.mxu0 0.0
        %4255 = vmatpush1.xpose.msra.mxu0 0.0
        %4256 = vmatprep.subr.mxu0 0.0
        %4257 = vmatpush1.xpose.msra.mxu0 0.0
        %4258 = vmatprep.subr.mxu0 0.0
        %4259 = vmatpush1.xpose.msra.mxu0 0.0
        %4260 = vmatprep.subr.mxu0 0.0
        %4261 = vmatpush1.xpose.msra.mxu0 0.0
        %4262 = vmatprep.subr.mxu0 0.0
        %4263 = vmatpush1.xpose.msra.mxu0 0.0
        %4264 = vmatprep.subr.mxu0 0.0
        %4265 = vmatpush1.xpose.msra.mxu0 0.0
        %4266 = vmatprep.subr.mxu0 0.0
        %4267 = vmatpush1.xpose.msra.mxu0 0.0
        %4268 = vmatprep.subr.mxu0 0.0
        %4269 = vmatpush1.xpose.msra.mxu0 0.0
        %4270 = vmatprep.subr.mxu0 0.0
        %4271 = vmatpush1.xpose.msra.mxu0 0.0
        %4272 = vmatprep.subr.mxu0 0.0
        %4273 = vmatpush1.xpose.msra.mxu0 0.0
        %4274 = vmatprep.subr.mxu0 0.0
        %4275 = vmatpush1.xpose.msra.mxu0 0.0
        %4276 = vmatprep.subr.mxu0 0.0
        %4277 = vmatpush1.xpose.msra.mxu0 0.0
        %4278 = vmatprep.subr.mxu0 0.0
        %4279 = vmatpush1.xpose.msra.mxu0 0.0
        %4280 = vmatprep.subr.mxu0 0.0
        %4281 = vmatpush1.xpose.msra.mxu0 0.0
        %4282 = vmatprep.mubr.f32.mxu0 0.0
        %4283 = vmatmul.mubr.f32.gmra.mrb[0].mxu0 %v4214
        %v4284 = vpop.f32.mrb[0].mxu0
        %v4285 = vadd.f32 0.0, %v4284
        %v4286 = vpop.f32.mrb[0].mxu0
        %4287 = vdwg.mxu0
        %4288 = vrot.lane.b32.xlu0 %v446, 96
        %v4289 = vpop.permute.xlu0 %4288
        %4290 = vrot.lane.b32.xlu0 %v448, 48
        %v4291 = vpop.permute.xlu0 %4290
        %v4292 = vsel %vm535, %v4289, 0
        %v4294 = vsel %vm535, %v4291, 0
        %4296 = vmatprep.subr.mxu0 0.0
        %4297 = vmatpush1.xpose.msra.mxu0 %v4294
        %4298 = vmatprep.subr.mxu0 0.0
        %4299 = vmatpush1.xpose.msra.mxu0 0.0
        %4300 = vmatprep.subr.mxu0 0.0
        %4301 = vmatpush1.xpose.msra.mxu0 0.0
        %4302 = vmatprep.subr.mxu0 0.0
        %4303 = vmatpush1.xpose.msra.mxu0 0.0
        %4304 = vmatprep.subr.mxu0 0.0
        %4305 = vmatpush1.xpose.msra.mxu0 0.0
        %4306 = vmatprep.subr.mxu0 0.0
        %4307 = vmatpush1.xpose.msra.mxu0 0.0
        %4308 = vmatprep.subr.mxu0 0.0
        %4309 = vmatpush1.xpose.msra.mxu0 0.0
        %4310 = vmatprep.subr.mxu0 0.0
        %4311 = vmatpush1.xpose.msra.mxu0 0.0
        %4312 = vmatprep.subr.mxu0 0.0
        %4313 = vmatpush1.xpose.msra.mxu0 0.0
        %4314 = vmatprep.subr.mxu0 0.0
        %4315 = vmatpush1.xpose.msra.mxu0 0.0
        %4316 = vmatprep.subr.mxu0 0.0
        %4317 = vmatpush1.xpose.msra.mxu0 0.0
        %4318 = vmatprep.subr.mxu0 0.0
        %4319 = vmatpush1.xpose.msra.mxu0 0.0
        %4320 = vmatprep.subr.mxu0 0.0
        %4321 = vmatpush1.xpose.msra.mxu0 0.0
        %4322 = vmatprep.subr.mxu0 0.0
        %4323 = vmatpush1.xpose.msra.mxu0 0.0
        %4324 = vmatprep.subr.mxu0 0.0
        %4325 = vmatpush1.xpose.msra.mxu0 0.0
        %4326 = vmatprep.subr.mxu0 0.0
        %4327 = vmatpush1.xpose.msra.mxu0 0.0
        %4328 = vmatprep.subr.mxu0 0.0
        %4329 = vmatpush1.xpose.msra.mxu0 0.0
        %4330 = vmatprep.subr.mxu0 0.0
        %4331 = vmatpush1.xpose.msra.mxu0 0.0
        %4332 = vmatprep.subr.mxu0 0.0
        %4333 = vmatpush1.xpose.msra.mxu0 0.0
        %4334 = vmatprep.subr.mxu0 0.0
        %4335 = vmatpush1.xpose.msra.mxu0 0.0
        %4336 = vmatprep.subr.mxu0 0.0
        %4337 = vmatpush1.xpose.msra.mxu0 0.0
        %4338 = vmatprep.subr.mxu0 0.0
        %4339 = vmatpush1.xpose.msra.mxu0 0.0
        %4340 = vmatprep.subr.mxu0 0.0
        %4341 = vmatpush1.xpose.msra.mxu0 0.0
        %4342 = vmatprep.subr.mxu0 0.0
        %4343 = vmatpush1.xpose.msra.mxu0 0.0
        %4344 = vmatprep.subr.mxu0 0.0
        %4345 = vmatpush1.xpose.msra.mxu0 0.0
        %4346 = vmatprep.subr.mxu0 0.0
        %4347 = vmatpush1.xpose.msra.mxu0 0.0
        %4348 = vmatprep.subr.mxu0 0.0
        %4349 = vmatpush1.xpose.msra.mxu0 0.0
        %4350 = vmatprep.subr.mxu0 0.0
        %4351 = vmatpush1.xpose.msra.mxu0 0.0
        %4352 = vmatprep.subr.mxu0 0.0
        %4353 = vmatpush1.xpose.msra.mxu0 0.0
        %4354 = vmatprep.subr.mxu0 0.0
        %4355 = vmatpush1.xpose.msra.mxu0 0.0
        %4356 = vmatprep.subr.mxu0 0.0
        %4357 = vmatpush1.xpose.msra.mxu0 0.0
        %4358 = vmatprep.subr.mxu0 0.0
        %4359 = vmatpush1.xpose.msra.mxu0 0.0
        %4360 = vmatprep.mubr.f32.mxu0 0.0
        %4361 = vmatmul.mubr.f32.gmra.mrb[0].mxu0 %v4292
        %v4362 = vpop.f32.mrb[0].mxu0
        %v4363 = vadd.f32 %v4285, %v4362
        %v4364 = vpop.f32.mrb[0].mxu0
        %4365 = vdwg.mxu0
        %v4366 = vsel %vm867, %v4363, -inf
        %4367 = vmax.xlane.f32.xlu0 %v4366
        %v4368 = vpop.xlane.xlu0 %4367
        %v4369 = vsub.f32 %v4363, %v4368
        %v4370 = vmul.f32 %v4369, 1.442695
        %v4371 = vpow.pop %v4370
        %v4372 = vsel %vm867, %v4371, 0.0
        %4373 = vadd.xlane.f32.xlu0 %v4372
        %v4374 = vpop.xlane.xlu0 %4373
        %v4375 = vrcp.pop %v4374
        %v4376 = vmul.f32 %v4371, %v4375
        %4378 = vrot.lane.b32.xlu0 %v522, 112
        %v4379 = vpop.permute.xlu0 %4378
        %v4382 = vsel %vm867, %v4376, 0
        %4384 = vmatprep.subr.mxu0 0.0
        %4385 = vmatpush1.msra.mxu0 %v4379
        %4386 = vmatprep.subr.mxu0 0.0
        %4387 = vmatpush1.msra.mxu0 0.0
        %4388 = vmatprep.subr.mxu0 0.0
        %4389 = vmatpush1.msra.mxu0 0.0
        %4390 = vmatprep.subr.mxu0 0.0
        %4391 = vmatpush1.msra.mxu0 0.0
        %4392 = vmatprep.subr.mxu0 0.0
        %4393 = vmatpush1.msra.mxu0 0.0
        %4394 = vmatprep.subr.mxu0 0.0
        %4395 = vmatpush1.msra.mxu0 0.0
        %4396 = vmatprep.subr.mxu0 0.0
        %4397 = vmatpush1.msra.mxu0 0.0
        %4398 = vmatprep.subr.mxu0 0.0
        %4399 = vmatpush1.msra.mxu0 0.0
        %4400 = vmatprep.subr.mxu0 0.0
        %4401 = vmatpush1.msra.mxu0 0.0
        %4402 = vmatprep.subr.mxu0 0.0
        %4403 = vmatpush1.msra.mxu0 0.0
        %4404 = vmatprep.subr.mxu0 0.0
        %4405 = vmatpush1.msra.mxu0 0.0
        %4406 = vmatprep.subr.mxu0 0.0
        %4407 = vmatpush1.msra.mxu0 0.0
        %4408 = vmatprep.subr.mxu0 0.0
        %4409 = vmatpush1.msra.mxu0 0.0
        %4410 = vmatprep.subr.mxu0 0.0
        %4411 = vmatpush1.msra.mxu0 0.0
        %4412 = vmatprep.subr.mxu0 0.0
        %4413 = vmatpush1.msra.mxu0 0.0
        %4414 = vmatprep.subr.mxu0 0.0
        %4415 = vmatpush1.msra.mxu0 0.0
        %4416 = vmatprep.subr.mxu0 0.0
        %4417 = vmatpush1.msra.mxu0 0.0
        %4418 = vmatprep.subr.mxu0 0.0
        %4419 = vmatpush1.msra.mxu0 0.0
        %4420 = vmatprep.subr.mxu0 0.0
        %4421 = vmatpush1.msra.mxu0 0.0
        %4422 = vmatprep.subr.mxu0 0.0
        %4423 = vmatpush1.msra.mxu0 0.0
        %4424 = vmatprep.subr.mxu0 0.0
        %4425 = vmatpush1.msra.mxu0 0.0
        %4426 = vmatprep.subr.mxu0 0.0
        %4427 = vmatpush1.msra.mxu0 0.0
        %4428 = vmatprep.subr.mxu0 0.0
        %4429 = vmatpush1.msra.mxu0 0.0
        %4430 = vmatprep.subr.mxu0 0.0
        %4431 = vmatpush1.msra.mxu0 0.0
        %4432 = vmatprep.subr.mxu0 0.0
        %4433 = vmatpush1.msra.mxu0 0.0
        %4434 = vmatprep.subr.mxu0 0.0
        %4435 = vmatpush1.msra.mxu0 0.0
        %4436 = vmatprep.subr.mxu0 0.0
        %4437 = vmatpush1.msra.mxu0 0.0
        %4438 = vmatprep.subr.mxu0 0.0
        %4439 = vmatpush1.msra.mxu0 0.0
        %4440 = vmatprep.subr.mxu0 0.0
        %4441 = vmatpush1.msra.mxu0 0.0
        %4442 = vmatprep.subr.mxu0 0.0
        %4443 = vmatpush1.msra.mxu0 0.0
        %4444 = vmatprep.subr.mxu0 0.0
        %4445 = vmatpush1.msra.mxu0 0.0
        %4446 = vmatprep.subr.mxu0 0.0
        %4447 = vmatpush1.msra.mxu0 0.0
        %4448 = vmatprep.mubr.f32.mxu0 0.0
        %4449 = vmatmul.mubr.f32.gmra.mrb[0].mxu0 %v4382
        %v4450 = vpop.f32.mrb[0].mxu0
        %v4451 = vadd.f32 0.0, %v4450
        %v4452 = vpop.f32.mrb[0].mxu0
        %4453 = vdwg.mxu0
        %v4455 = vsel %vm535, %v4451, 0
        %4457 = vmatprep.subr.mxu0 0.0
        %4458 = vmatpush1.msra.mxu0 %v333
        %4459 = vmatprep.subr.mxu0 0.0
        %4460 = vmatpush1.msra.mxu0 %v334
        %4461 = vmatprep.subr.mxu0 0.0
        %4462 = vmatpush1.msra.mxu0 0.0
        %4463 = vmatprep.subr.mxu0 0.0
        %4464 = vmatpush1.msra.mxu0 0.0
        %4465 = vmatprep.subr.mxu0 0.0
        %4466 = vmatpush1.msra.mxu0 0.0
        %4467 = vmatprep.subr.mxu0 0.0
        %4468 = vmatpush1.msra.mxu0 0.0
        %4469 = vmatprep.subr.mxu0 0.0
        %4470 = vmatpush1.msra.mxu0 0.0
        %4471 = vmatprep.subr.mxu0 0.0
        %4472 = vmatpush1.msra.mxu0 0.0
        %4473 = vmatprep.subr.mxu0 0.0
        %4474 = vmatpush1.msra.mxu0 0.0
        %4475 = vmatprep.subr.mxu0 0.0
        %4476 = vmatpush1.msra.mxu0 0.0
        %4477 = vmatprep.subr.mxu0 0.0
        %4478 = vmatpush1.msra.mxu0 0.0
        %4479 = vmatprep.subr.mxu0 0.0
        %4480 = vmatpush1.msra.mxu0 0.0
        %4481 = vmatprep.subr.mxu0 0.0
        %4482 = vmatpush1.msra.mxu0 0.0
        %4483 = vmatprep.subr.mxu0 0.0
        %4484 = vmatpush1.msra.mxu0 0.0
        %4485 = vmatprep.subr.mxu0 0.0
        %4486 = vmatpush1.msra.mxu0 0.0
        %4487 = vmatprep.subr.mxu0 0.0
        %4488 = vmatpush1.msra.mxu0 0.0
        %4489 = vmatprep.subr.mxu0 0.0
        %4490 = vmatpush1.msra.mxu0 0.0
        %4491 = vmatprep.subr.mxu0 0.0
        %4492 = vmatpush1.msra.mxu0 0.0
        %4493 = vmatprep.subr.mxu0 0.0
        %4494 = vmatpush1.msra.mxu0 0.0
        %4495 = vmatprep.subr.mxu0 0.0
        %4496 = vmatpush1.msra.mxu0 0.0
        %4497 = vmatprep.subr.mxu0 0.0
        %4498 = vmatpush1.msra.mxu0 0.0
        %4499 = vmatprep.subr.mxu0 0.0
        %4500 = vmatpush1.msra.mxu0 0.0
        %4501 = vmatprep.subr.mxu0 0.0
        %4502 = vmatpush1.msra.mxu0 0.0
        %4503 = vmatprep.subr.mxu0 0.0
        %4504 = vmatpush1.msra.mxu0 0.0
        %4505 = vmatprep.subr.mxu0 0.0
        %4506 = vmatpush1.msra.mxu0 0.0
        %4507 = vmatprep.subr.mxu0 0.0
        %4508 = vmatpush1.msra.mxu0 0.0
        %4509 = vmatprep.subr.mxu0 0.0
        %4510 = vmatpush1.msra.mxu0 0.0
        %4511 = vmatprep.subr.mxu0 0.0
        %4512 = vmatpush1.msra.mxu0 0.0
        %4513 = vmatprep.subr.mxu0 0.0
        %4514 = vmatpush1.msra.mxu0 0.0
        %4515 = vmatprep.subr.mxu0 0.0
        %4516 = vmatpush1.msra.mxu0 0.0
        %4517 = vmatprep.subr.mxu0 0.0
        %4518 = vmatpush1.msra.mxu0 0.0
        %4519 = vmatprep.subr.mxu0 0.0
        %4520 = vmatpush1.msra.mxu0 0.0
        %4521 = vmatprep.mubr.f32.mxu0 0.0
        %4522 = vmatmul.mubr.f32.gmra.mrb[0].mxu0 %v4455
        %v4523 = vpop.f32.mrb[0].mxu0
        %v4524 = vadd.f32 0.0, %v4523
        %v4525 = vpop.f32.mrb[0].mxu0
        %4526 = vdwg.mxu0
        %v4527 = vadd.f32 %v3975, %v4524
        %4529 = vrot.lane.b32.xlu0 %v694, 112
        %v4530 = vpop.permute.xlu0 %4529
        %4532 = vmatprep.subr.mxu0 0.0
        %4533 = vmatpush1.msra.mxu0 %v4530
        %4534 = vmatprep.subr.mxu0 0.0
        %4535 = vmatpush1.msra.mxu0 0.0
        %4536 = vmatprep.subr.mxu0 0.0
        %4537 = vmatpush1.msra.mxu0 0.0
        %4538 = vmatprep.subr.mxu0 0.0
        %4539 = vmatpush1.msra.mxu0 0.0
        %4540 = vmatprep.subr.mxu0 0.0
        %4541 = vmatpush1.msra.mxu0 0.0
        %4542 = vmatprep.subr.mxu0 0.0
        %4543 = vmatpush1.msra.mxu0 0.0
        %4544 = vmatprep.subr.mxu0 0.0
        %4545 = vmatpush1.msra.mxu0 0.0
        %4546 = vmatprep.subr.mxu0 0.0
        %4547 = vmatpush1.msra.mxu0 0.0
        %4548 = vmatprep.subr.mxu0 0.0
        %4549 = vmatpush1.msra.mxu0 0.0
        %4550 = vmatprep.subr.mxu0 0.0
        %4551 = vmatpush1.msra.mxu0 0.0
        %4552 = vmatprep.subr.mxu0 0.0
        %4553 = vmatpush1.msra.mxu0 0.0
        %4554 = vmatprep.subr.mxu0 0.0
        %4555 = vmatpush1.msra.mxu0 0.0
        %4556 = vmatprep.subr.mxu0 0.0
        %4557 = vmatpush1.msra.mxu0 0.0
        %4558 = vmatprep.subr.mxu0 0.0
        %4559 = vmatpush1.msra.mxu0 0.0
        %4560 = vmatprep.subr.mxu0 0.0
        %4561 = vmatpush1.msra.mxu0 0.0
        %4562 = vmatprep.subr.mxu0 0.0
        %4563 = vmatpush1.msra.mxu0 0.0
        %4564 = vmatprep.subr.mxu0 0.0
        %4565 = vmatpush1.msra.mxu0 0.0
        %4566 = vmatprep.subr.mxu0 0.0
        %4567 = vmatpush1.msra.mxu0 0.0
        %4568 = vmatprep.subr.mxu0 0.0
        %4569 = vmatpush1.msra.mxu0 0.0
        %4570 = vmatprep.subr.mxu0 0.0
        %4571 = vmatpush1.msra.mxu0 0.0
        %4572 = vmatprep.subr.mxu0 0.0
        %4573 = vmatpush1.msra.mxu0 0.0
        %4574 = vmatprep.subr.mxu0 0.0
        %4575 = vmatpush1.msra.mxu0 0.0
        %4576 = vmatprep.subr.mxu0 0.0
        %4577 = vmatpush1.msra.mxu0 0.0
        %4578 = vmatprep.subr.mxu0 0.0
        %4579 = vmatpush1.msra.mxu0 0.0
        %4580 = vmatprep.subr.mxu0 0.0
        %4581 = vmatpush1.msra.mxu0 0.0
        %4582 = vmatprep.subr.mxu0 0.0
        %4583 = vmatpush1.msra.mxu0 0.0
        %4584 = vmatprep.subr.mxu0 0.0
        %4585 = vmatpush1.msra.mxu0 0.0
        %4586 = vmatprep.subr.mxu0 0.0
        %4587 = vmatpush1.msra.mxu0 0.0
        %4588 = vmatprep.subr.mxu0 0.0
        %4589 = vmatpush1.msra.mxu0 0.0
        %4590 = vmatprep.subr.mxu0 0.0
        %4591 = vmatpush1.msra.mxu0 0.0
        %4592 = vmatprep.subr.mxu0 0.0
        %4593 = vmatpush1.msra.mxu0 0.0
        %4594 = vmatprep.subr.mxu0 0.0
        %4595 = vmatpush1.msra.mxu0 0.0
        %4596 = vmatprep.mubr.f32.mxu0 0.0
        %4597 = vmatmul.mubr.f32.gmra.mrb[0].mxu0 %v4382
        %v4598 = vpop.f32.mrb[0].mxu0
        %v4599 = vadd.f32 0.0, %v4598
        %v4600 = vpop.f32.mrb[0].mxu0
        %4601 = vdwg.mxu0
        %v4603 = vsel %vm535, %v4599, 0
        %4605 = vmatprep.subr.mxu0 0.0
        %4606 = vmatpush1.msra.mxu0 %v335
        %4607 = vmatprep.subr.mxu0 0.0
        %4608 = vmatpush1.msra.mxu0 %v336
        %4609 = vmatprep.subr.mxu0 0.0
        %4610 = vmatpush1.msra.mxu0 0.0
        %4611 = vmatprep.subr.mxu0 0.0
        %4612 = vmatpush1.msra.mxu0 0.0
        %4613 = vmatprep.subr.mxu0 0.0
        %4614 = vmatpush1.msra.mxu0 0.0
        %4615 = vmatprep.subr.mxu0 0.0
        %4616 = vmatpush1.msra.mxu0 0.0
        %4617 = vmatprep.subr.mxu0 0.0
        %4618 = vmatpush1.msra.mxu0 0.0
        %4619 = vmatprep.subr.mxu0 0.0
        %4620 = vmatpush1.msra.mxu0 0.0
        %4621 = vmatprep.subr.mxu0 0.0
        %4622 = vmatpush1.msra.mxu0 0.0
        %4623 = vmatprep.subr.mxu0 0.0
        %4624 = vmatpush1.msra.mxu0 0.0
        %4625 = vmatprep.subr.mxu0 0.0
        %4626 = vmatpush1.msra.mxu0 0.0
        %4627 = vmatprep.subr.mxu0 0.0
        %4628 = vmatpush1.msra.mxu0 0.0
        %4629 = vmatprep.subr.mxu0 0.0
        %4630 = vmatpush1.msra.mxu0 0.0
        %4631 = vmatprep.subr.mxu0 0.0
        %4632 = vmatpush1.msra.mxu0 0.0
        %4633 = vmatprep.subr.mxu0 0.0
        %4634 = vmatpush1.msra.mxu0 0.0
        %4635 = vmatprep.subr.mxu0 0.0
        %4636 = vmatpush1.msra.mxu0 0.0
        %4637 = vmatprep.subr.mxu0 0.0
        %4638 = vmatpush1.msra.mxu0 0.0
        %4639 = vmatprep.subr.mxu0 0.0
        %4640 = vmatpush1.msra.mxu0 0.0
        %4641 = vmatprep.subr.mxu0 0.0
        %4642 = vmatpush1.msra.mxu0 0.0
        %4643 = vmatprep.subr.mxu0 0.0
        %4644 = vmatpush1.msra.mxu0 0.0
        %4645 = vmatprep.subr.mxu0 0.0
        %4646 = vmatpush1.msra.mxu0 0.0
        %4647 = vmatprep.subr.mxu0 0.0
        %4648 = vmatpush1.msra.mxu0 0.0
        %4649 = vmatprep.subr.mxu0 0.0
        %4650 = vmatpush1.msra.mxu0 0.0
        %4651 = vmatprep.subr.mxu0 0.0
        %4652 = vmatpush1.msra.mxu0 0.0
        %4653 = vmatprep.subr.mxu0 0.0
        %4654 = vmatpush1.msra.mxu0 0.0
        %4655 = vmatprep.subr.mxu0 0.0
        %4656 = vmatpush1.msra.mxu0 0.0
        %4657 = vmatprep.subr.mxu0 0.0
        %4658 = vmatpush1.msra.mxu0 0.0
        %4659 = vmatprep.subr.mxu0 0.0
        %4660 = vmatpush1.msra.mxu0 0.0
        %4661 = vmatprep.subr.mxu0 0.0
        %4662 = vmatpush1.msra.mxu0 0.0
        %4663 = vmatprep.subr.mxu0 0.0
        %4664 = vmatpush1.msra.mxu0 0.0
        %4665 = vmatprep.subr.mxu0 0.0
        %4666 = vmatpush1.msra.mxu0 0.0
        %4667 = vmatprep.subr.mxu0 0.0
        %4668 = vmatpush1.msra.mxu0 0.0
        %4669 = vmatprep.mubr.f32.mxu0 0.0
        %4670 = vmatmul.mubr.f32.gmra.mrb[0].mxu0 %v4603
        %v4671 = vpop.f32.mrb[0].mxu0
        %v4672 = vadd.f32 0.0, %v4671
        %v4673 = vpop.f32.mrb[0].mxu0
        %4674 = vdwg.mxu0
        %v4675 = vadd.f32 %v4527, %v4672
        %4676 = vrot.lane.b32.xlu0 %v615, 96
        %v4677 = vpop.permute.xlu0 %4676
        %4678 = vrot.lane.b32.xlu0 %v617, 96
        %v4679 = vpop.permute.xlu0 %4678
        %v4680 = vsel %vm1170, %v4677, 0
        %v4682 = vsel %vm1170, %v4679, 0
        %4684 = vmatprep.subr.mxu0 0.0
        %4685 = vmatpush1.xpose.msra.mxu0 %v4682
        %4686 = vmatprep.subr.mxu0 0.0
        %4687 = vmatpush1.xpose.msra.mxu0 0.0
        %4688 = vmatprep.subr.mxu0 0.0
        %4689 = vmatpush1.xpose.msra.mxu0 0.0
        %4690 = vmatprep.subr.mxu0 0.0
        %4691 = vmatpush1.xpose.msra.mxu0 0.0
        %4692 = vmatprep.subr.mxu0 0.0
        %4693 = vmatpush1.xpose.msra.mxu0 0.0
        %4694 = vmatprep.subr.mxu0 0.0
        %4695 = vmatpush1.xpose.msra.mxu0 0.0
        %4696 = vmatprep.subr.mxu0 0.0
        %4697 = vmatpush1.xpose.msra.mxu0 0.0
        %4698 = vmatprep.subr.mxu0 0.0
        %4699 = vmatpush1.xpose.msra.mxu0 0.0
        %4700 = vmatprep.subr.mxu0 0.0
        %4701 = vmatpush1.xpose.msra.mxu0 0.0
        %4702 = vmatprep.subr.mxu0 0.0
        %4703 = vmatpush1.xpose.msra.mxu0 0.0
        %4704 = vmatprep.subr.mxu0 0.0
        %4705 = vmatpush1.xpose.msra.mxu0 0.0
        %4706 = vmatprep.subr.mxu0 0.0
        %4707 = vmatpush1.xpose.msra.mxu0 0.0
        %4708 = vmatprep.subr.mxu0 0.0
        %4709 = vmatpush1.xpose.msra.mxu0 0.0
        %4710 = vmatprep.subr.mxu0 0.0
        %4711 = vmatpush1.xpose.msra.mxu0 0.0
        %4712 = vmatprep.subr.mxu0 0.0
        %4713 = vmatpush1.xpose.msra.mxu0 0.0
        %4714 = vmatprep.subr.mxu0 0.0
        %4715 = vmatpush1.xpose.msra.mxu0 0.0
        %4716 = vmatprep.subr.mxu0 0.0
        %4717 = vmatpush1.xpose.msra.mxu0 0.0
        %4718 = vmatprep.subr.mxu0 0.0
        %4719 = vmatpush1.xpose.msra.mxu0 0.0
        %4720 = vmatprep.subr.mxu0 0.0
        %4721 = vmatpush1.xpose.msra.mxu0 0.0
        %4722 = vmatprep.subr.mxu0 0.0
        %4723 = vmatpush1.xpose.msra.mxu0 0.0
        %4724 = vmatprep.subr.mxu0 0.0
        %4725 = vmatpush1.xpose.msra.mxu0 0.0
        %4726 = vmatprep.subr.mxu0 0.0
        %4727 = vmatpush1.xpose.msra.mxu0 0.0
        %4728 = vmatprep.subr.mxu0 0.0
        %4729 = vmatpush1.xpose.msra.mxu0 0.0
        %4730 = vmatprep.subr.mxu0 0.0
        %4731 = vmatpush1.xpose.msra.mxu0 0.0
        %4732 = vmatprep.subr.mxu0 0.0
        %4733 = vmatpush1.xpose.msra.mxu0 0.0
        %4734 = vmatprep.subr.mxu0 0.0
        %4735 = vmatpush1.xpose.msra.mxu0 0.0
        %4736 = vmatprep.subr.mxu0 0.0
        %4737 = vmatpush1.xpose.msra.mxu0 0.0
        %4738 = vmatprep.subr.mxu0 0.0
        %4739 = vmatpush1.xpose.msra.mxu0 0.0
        %4740 = vmatprep.subr.mxu0 0.0
        %4741 = vmatpush1.xpose.msra.mxu0 0.0
        %4742 = vmatprep.subr.mxu0 0.0
        %4743 = vmatpush1.xpose.msra.mxu0 0.0
        %4744 = vmatprep.subr.mxu0 0.0
        %4745 = vmatpush1.xpose.msra.mxu0 0.0
        %4746 = vmatprep.subr.mxu0 0.0
        %4747 = vmatpush1.xpose.msra.mxu0 0.0
        %4748 = vmatprep.mubr.f32.mxu0 0.0
        %4749 = vmatmul.mubr.f32.gmra.mrb[0].mxu0 %v4680
        %v4750 = vpop.f32.mrb[0].mxu0
        %v4751 = vadd.f32 0.0, %v4750
        %v4752 = vpop.f32.mrb[0].mxu0
        %4753 = vdwg.mxu0
        %v4754 = vsel %vm867, %v4751, -inf
        %4755 = vmax.xlane.f32.xlu0 %v4754
        %v4756 = vpop.xlane.xlu0 %4755
        %v4757 = vsub.f32 %v4751, %v4756
        %v4758 = vmul.f32 %v4757, 1.442695
        %v4759 = vpow.pop %v4758
        %v4760 = vsel %vm867, %v4759, 0.0
        %4761 = vadd.xlane.f32.xlu0 %v4760
        %v4762 = vpop.xlane.xlu0 %4761
        %v4763 = vrcp.pop %v4762
        %v4764 = vmul.f32 %v4759, %v4763
        %v4766 = vsel %vm867, %v4764, 0
        %4768 = vmatprep.subr.mxu0 0.0
        %4769 = vmatpush1.msra.mxu0 %v4530
        %4770 = vmatprep.subr.mxu0 0.0
        %4771 = vmatpush1.msra.mxu0 0.0
        %4772 = vmatprep.subr.mxu0 0.0
        %4773 = vmatpush1.msra.mxu0 0.0
        %4774 = vmatprep.subr.mxu0 0.0
        %4775 = vmatpush1.msra.mxu0 0.0
        %4776 = vmatprep.subr.mxu0 0.0
        %4777 = vmatpush1.msra.mxu0 0.0
        %4778 = vmatprep.subr.mxu0 0.0
        %4779 = vmatpush1.msra.mxu0 0.0
        %4780 = vmatprep.subr.mxu0 0.0
        %4781 = vmatpush1.msra.mxu0 0.0
        %4782 = vmatprep.subr.mxu0 0.0
        %4783 = vmatpush1.msra.mxu0 0.0
        %4784 = vmatprep.subr.mxu0 0.0
        %4785 = vmatpush1.msra.mxu0 0.0
        %4786 = vmatprep.subr.mxu0 0.0
        %4787 = vmatpush1.msra.mxu0 0.0
        %4788 = vmatprep.subr.mxu0 0.0
        %4789 = vmatpush1.msra.mxu0 0.0
        %4790 = vmatprep.subr.mxu0 0.0
        %4791 = vmatpush1.msra.mxu0 0.0
        %4792 = vmatprep.subr.mxu0 0.0
        %4793 = vmatpush1.msra.mxu0 0.0
        %4794 = vmatprep.subr.mxu0 0.0
        %4795 = vmatpush1.msra.mxu0 0.0
        %4796 = vmatprep.subr.mxu0 0.0
        %4797 = vmatpush1.msra.mxu0 0.0
        %4798 = vmatprep.subr.mxu0 0.0
        %4799 = vmatpush1.msra.mxu0 0.0
        %4800 = vmatprep.subr.mxu0 0.0
        %4801 = vmatpush1.msra.mxu0 0.0
        %4802 = vmatprep.subr.mxu0 0.0
        %4803 = vmatpush1.msra.mxu0 0.0
        %4804 = vmatprep.subr.mxu0 0.0
        %4805 = vmatpush1.msra.mxu0 0.0
        %4806 = vmatprep.subr.mxu0 0.0
        %4807 = vmatpush1.msra.mxu0 0.0
        %4808 = vmatprep.subr.mxu0 0.0
        %4809 = vmatpush1.msra.mxu0 0.0
        %4810 = vmatprep.subr.mxu0 0.0
        %4811 = vmatpush1.msra.mxu0 0.0
        %4812 = vmatprep.subr.mxu0 0.0
        %4813 = vmatpush1.msra.mxu0 0.0
        %4814 = vmatprep.subr.mxu0 0.0
        %4815 = vmatpush1.msra.mxu0 0.0
        %4816 = vmatprep.subr.mxu0 0.0
        %4817 = vmatpush1.msra.mxu0 0.0
        %4818 = vmatprep.subr.mxu0 0.0
        %4819 = vmatpush1.msra.mxu0 0.0
        %4820 = vmatprep.subr.mxu0 0.0
        %4821 = vmatpush1.msra.mxu0 0.0
        %4822 = vmatprep.subr.mxu0 0.0
        %4823 = vmatpush1.msra.mxu0 0.0
        %4824 = vmatprep.subr.mxu0 0.0
        %4825 = vmatpush1.msra.mxu0 0.0
        %4826 = vmatprep.subr.mxu0 0.0
        %4827 = vmatpush1.msra.mxu0 0.0
        %4828 = vmatprep.subr.mxu0 0.0
        %4829 = vmatpush1.msra.mxu0 0.0
        %4830 = vmatprep.subr.mxu0 0.0
        %4831 = vmatpush1.msra.mxu0 0.0
        %4832 = vmatprep.mubr.f32.mxu0 0.0
        %4833 = vmatmul.mubr.f32.gmra.mrb[0].mxu0 %v4766
        %v4834 = vpop.f32.mrb[0].mxu0
        %v4835 = vadd.f32 0.0, %v4834
        %v4836 = vpop.f32.mrb[0].mxu0
        %4837 = vdwg.mxu0
        %v4839 = vsel %vm535, %v4835, 0
        %4841 = vmatprep.subr.mxu0 0.0
        %4842 = vmatpush1.msra.mxu0 %v347
        %4843 = vmatprep.subr.mxu0 0.0
        %4844 = vmatpush1.msra.mxu0 %v348
        %4845 = vmatprep.subr.mxu0 0.0
        %4846 = vmatpush1.msra.mxu0 0.0
        %4847 = vmatprep.subr.mxu0 0.0
        %4848 = vmatpush1.msra.mxu0 0.0
        %4849 = vmatprep.subr.mxu0 0.0
        %4850 = vmatpush1.msra.mxu0 0.0
        %4851 = vmatprep.subr.mxu0 0.0
        %4852 = vmatpush1.msra.mxu0 0.0
        %4853 = vmatprep.subr.mxu0 0.0
        %4854 = vmatpush1.msra.mxu0 0.0
        %4855 = vmatprep.subr.mxu0 0.0
        %4856 = vmatpush1.msra.mxu0 0.0
        %4857 = vmatprep.subr.mxu0 0.0
        %4858 = vmatpush1.msra.mxu0 0.0
        %4859 = vmatprep.subr.mxu0 0.0
        %4860 = vmatpush1.msra.mxu0 0.0
        %4861 = vmatprep.subr.mxu0 0.0
        %4862 = vmatpush1.msra.mxu0 0.0
        %4863 = vmatprep.subr.mxu0 0.0
        %4864 = vmatpush1.msra.mxu0 0.0
        %4865 = vmatprep.subr.mxu0 0.0
        %4866 = vmatpush1.msra.mxu0 0.0
        %4867 = vmatprep.subr.mxu0 0.0
        %4868 = vmatpush1.msra.mxu0 0.0
        %4869 = vmatprep.subr.mxu0 0.0
        %4870 = vmatpush1.msra.mxu0 0.0
        %4871 = vmatprep.subr.mxu0 0.0
        %4872 = vmatpush1.msra.mxu0 0.0
        %4873 = vmatprep.subr.mxu0 0.0
        %4874 = vmatpush1.msra.mxu0 0.0
        %4875 = vmatprep.subr.mxu0 0.0
        %4876 = vmatpush1.msra.mxu0 0.0
        %4877 = vmatprep.subr.mxu0 0.0
        %4878 = vmatpush1.msra.mxu0 0.0
        %4879 = vmatprep.subr.mxu0 0.0
        %4880 = vmatpush1.msra.mxu0 0.0
        %4881 = vmatprep.subr.mxu0 0.0
        %4882 = vmatpush1.msra.mxu0 0.0
        %4883 = vmatprep.subr.mxu0 0.0
        %4884 = vmatpush1.msra.mxu0 0.0
        %4885 = vmatprep.subr.mxu0 0.0
        %4886 = vmatpush1.msra.mxu0 0.0
        %4887 = vmatprep.subr.mxu0 0.0
        %4888 = vmatpush1.msra.mxu0 0.0
        %4889 = vmatprep.subr.mxu0 0.0
        %4890 = vmatpush1.msra.mxu0 0.0
        %4891 = vmatprep.subr.mxu0 0.0
        %4892 = vmatpush1.msra.mxu0 0.0
        %4893 = vmatprep.subr.mxu0 0.0
        %4894 = vmatpush1.msra.mxu0 0.0
        %4895 = vmatprep.subr.mxu0 0.0
        %4896 = vmatpush1.msra.mxu0 0.0
        %4897 = vmatprep.subr.mxu0 0.0
        %4898 = vmatpush1.msra.mxu0 0.0
        %4899 = vmatprep.subr.mxu0 0.0
        %4900 = vmatpush1.msra.mxu0 0.0
        %4901 = vmatprep.subr.mxu0 0.0
        %4902 = vmatpush1.msra.mxu0 0.0
        %4903 = vmatprep.subr.mxu0 0.0
        %4904 = vmatpush1.msra.mxu0 0.0
        %4905 = vmatprep.mubr.f32.mxu0 0.0
        %4906 = vmatmul.mubr.f32.gmra.mrb[0].mxu0 %v4839
        %v4907 = vpop.f32.mrb[0].mxu0
        %v4908 = vadd.f32 0.0, %v4907
        %v4909 = vpop.f32.mrb[0].mxu0
        %4910 = vdwg.mxu0
        %v4911 = vadd.f32 %v4209, %v4908
        %4912 = vrot.lane.b32.xlu0 %v446, 48
        %v4913 = vpop.permute.xlu0 %4912
        %4914 = vrot.lane.b32.xlu0 %v692, 32
        %v4915 = vpop.permute.xlu0 %4914
        %v4916 = vsel %vm535, %v4913, 0
        %v4918 = vsel %vm535, %v4915, 0
        %4920 = vmatprep.subr.mxu0 0.0
        %4921 = vmatpush1.xpose.msra.mxu0 %v4918
        %4922 = vmatprep.subr.mxu0 0.0
        %4923 = vmatpush1.xpose.msra.mxu0 0.0
        %4924 = vmatprep.subr.mxu0 0.0
        %4925 = vmatpush1.xpose.msra.mxu0 0.0
        %4926 = vmatprep.subr.mxu0 0.0
        %4927 = vmatpush1.xpose.msra.mxu0 0.0
        %4928 = vmatprep.subr.mxu0 0.0
        %4929 = vmatpush1.xpose.msra.mxu0 0.0
        %4930 = vmatprep.subr.mxu0 0.0
        %4931 = vmatpush1.xpose.msra.mxu0 0.0
        %4932 = vmatprep.subr.mxu0 0.0
        %4933 = vmatpush1.xpose.msra.mxu0 0.0
        %4934 = vmatprep.subr.mxu0 0.0
        %4935 = vmatpush1.xpose.msra.mxu0 0.0
        %4936 = vmatprep.subr.mxu0 0.0
        %4937 = vmatpush1.xpose.msra.mxu0 0.0
        %4938 = vmatprep.subr.mxu0 0.0
        %4939 = vmatpush1.xpose.msra.mxu0 0.0
        %4940 = vmatprep.subr.mxu0 0.0
        %4941 = vmatpush1.xpose.msra.mxu0 0.0
        %4942 = vmatprep.subr.mxu0 0.0
        %4943 = vmatpush1.xpose.msra.mxu0 0.0
        %4944 = vmatprep.subr.mxu0 0.0
        %4945 = vmatpush1.xpose.msra.mxu0 0.0
        %4946 = vmatprep.subr.mxu0 0.0
        %4947 = vmatpush1.xpose.msra.mxu0 0.0
        %4948 = vmatprep.subr.mxu0 0.0
        %4949 = vmatpush1.xpose.msra.mxu0 0.0
        %4950 = vmatprep.subr.mxu0 0.0
        %4951 = vmatpush1.xpose.msra.mxu0 0.0
        %4952 = vmatprep.subr.mxu0 0.0
        %4953 = vmatpush1.xpose.msra.mxu0 0.0
        %4954 = vmatprep.subr.mxu0 0.0
        %4955 = vmatpush1.xpose.msra.mxu0 0.0
        %4956 = vmatprep.subr.mxu0 0.0
        %4957 = vmatpush1.xpose.msra.mxu0 0.0
        %4958 = vmatprep.subr.mxu0 0.0
        %4959 = vmatpush1.xpose.msra.mxu0 0.0
        %4960 = vmatprep.subr.mxu0 0.0
        %4961 = vmatpush1.xpose.msra.mxu0 0.0
        %4962 = vmatprep.subr.mxu0 0.0
        %4963 = vmatpush1.xpose.msra.mxu0 0.0
        %4964 = vmatprep.subr.mxu0 0.0
        %4965 = vmatpush1.xpose.msra.mxu0 0.0
        %4966 = vmatprep.subr.mxu0 0.0
        %4967 = vmatpush1.xpose.msra.mxu0 0.0
        %4968 = vmatprep.subr.mxu0 0.0
        %4969 = vmatpush1.xpose.msra.mxu0 0.0
        %4970 = vmatprep.subr.mxu0 0.0
        %4971 = vmatpush1.xpose.msra.mxu0 0.0
        %4972 = vmatprep.subr.mxu0 0.0
        %4973 = vmatpush1.xpose.msra.mxu0 0.0
        %4974 = vmatprep.subr.mxu0 0.0
        %4975 = vmatpush1.xpose.msra.mxu0 0.0
        %4976 = vmatprep.subr.mxu0 0.0
        %4977 = vmatpush1.xpose.msra.mxu0 0.0
        %4978 = vmatprep.subr.mxu0 0.0
        %4979 = vmatpush1.xpose.msra.mxu0 0.0
        %4980 = vmatprep.subr.mxu0 0.0
        %4981 = vmatpush1.xpose.msra.mxu0 0.0
        %4982 = vmatprep.subr.mxu0 0.0
        %4983 = vmatpush1.xpose.msra.mxu0 0.0
        %4984 = vmatprep.mubr.f32.mxu0 0.0
        %4985 = vmatmul.mubr.f32.gmra.mrb[0].mxu0 %v4916
        %v4986 = vpop.f32.mrb[0].mxu0
        %v4987 = vadd.f32 0.0, %v4986
        %v4988 = vpop.f32.mrb[0].mxu0
        %4989 = vdwg.mxu0
        %4990 = vrot.lane.b32.xlu0 %v446, 64
        %v4991 = vpop.permute.xlu0 %4990
        %4992 = vrot.lane.b32.xlu0 %v448, 32
        %v4993 = vpop.permute.xlu0 %4992
        %v4994 = vsel %vm535, %v4991, 0
        %v4996 = vsel %vm535, %v4993, 0
        %4998 = vmatprep.subr.mxu0 0.0
        %4999 = vmatpush1.xpose.msra.mxu0 %v4996
        %5000 = vmatprep.subr.mxu0 0.0
        %5001 = vmatpush1.xpose.msra.mxu0 0.0
        %5002 = vmatprep.subr.mxu0 0.0
        %5003 = vmatpush1.xpose.msra.mxu0 0.0
        %5004 = vmatprep.subr.mxu0 0.0
        %5005 = vmatpush1.xpose.msra.mxu0 0.0
        %5006 = vmatprep.subr.mxu0 0.0
        %5007 = vmatpush1.xpose.msra.mxu0 0.0
        %5008 = vmatprep.subr.mxu0 0.0
        %5009 = vmatpush1.xpose.msra.mxu0 0.0
        %5010 = vmatprep.subr.mxu0 0.0
        %5011 = vmatpush1.xpose.msra.mxu0 0.0
        %5012 = vmatprep.subr.mxu0 0.0
        %5013 = vmatpush1.xpose.msra.mxu0 0.0
        %5014 = vmatprep.subr.mxu0 0.0
        %5015 = vmatpush1.xpose.msra.mxu0 0.0
        %5016 = vmatprep.subr.mxu0 0.0
        %5017 = vmatpush1.xpose.msra.mxu0 0.0
        %5018 = vmatprep.subr.mxu0 0.0
        %5019 = vmatpush1.xpose.msra.mxu0 0.0
        %5020 = vmatprep.subr.mxu0 0.0
        %5021 = vmatpush1.xpose.msra.mxu0 0.0
        %5022 = vmatprep.subr.mxu0 0.0
        %5023 = vmatpush1.xpose.msra.mxu0 0.0
        %5024 = vmatprep.subr.mxu0 0.0
        %5025 = vmatpush1.xpose.msra.mxu0 0.0
        %5026 = vmatprep.subr.mxu0 0.0
        %5027 = vmatpush1.xpose.msra.mxu0 0.0
        %5028 = vmatprep.subr.mxu0 0.0
        %5029 = vmatpush1.xpose.msra.mxu0 0.0
        %5030 = vmatprep.subr.mxu0 0.0
        %5031 = vmatpush1.xpose.msra.mxu0 0.0
        %5032 = vmatprep.subr.mxu0 0.0
        %5033 = vmatpush1.xpose.msra.mxu0 0.0
        %5034 = vmatprep.subr.mxu0 0.0
        %5035 = vmatpush1.xpose.msra.mxu0 0.0
        %5036 = vmatprep.subr.mxu0 0.0
        %5037 = vmatpush1.xpose.msra.mxu0 0.0
        %5038 = vmatprep.subr.mxu0 0.0
        %5039 = vmatpush1.xpose.msra.mxu0 0.0
        %5040 = vmatprep.subr.mxu0 0.0
        %5041 = vmatpush1.xpose.msra.mxu0 0.0
        %5042 = vmatprep.subr.mxu0 0.0
        %5043 = vmatpush1.xpose.msra.mxu0 0.0
        %5044 = vmatprep.subr.mxu0 0.0
        %5045 = vmatpush1.xpose.msra.mxu0 0.0
        %5046 = vmatprep.subr.mxu0 0.0
        %5047 = vmatpush1.xpose.msra.mxu0 0.0
        %5048 = vmatprep.subr.mxu0 0.0
        %5049 = vmatpush1.xpose.msra.mxu0 0.0
        %5050 = vmatprep.subr.mxu0 0.0
        %5051 = vmatpush1.xpose.msra.mxu0 0.0
        %5052 = vmatprep.subr.mxu0 0.0
        %5053 = vmatpush1.xpose.msra.mxu0 0.0
        %5054 = vmatprep.subr.mxu0 0.0
        %5055 = vmatpush1.xpose.msra.mxu0 0.0
        %5056 = vmatprep.subr.mxu0 0.0
        %5057 = vmatpush1.xpose.msra.mxu0 0.0
        %5058 = vmatprep.subr.mxu0 0.0
        %5059 = vmatpush1.xpose.msra.mxu0 0.0
        %5060 = vmatprep.subr.mxu0 0.0
        %5061 = vmatpush1.xpose.msra.mxu0 0.0
        %5062 = vmatprep.mubr.f32.mxu0 0.0
        %5063 = vmatmul.mubr.f32.gmra.mrb[0].mxu0 %v4994
        %v5064 = vpop.f32.mrb[0].mxu0
        %v5065 = vadd.f32 %v4987, %v5064
        %v5066 = vpop.f32.mrb[0].mxu0
        %5067 = vdwg.mxu0
        %v5068 = vsel %vm867, %v5065, -inf
        %5069 = vmax.xlane.f32.xlu0 %v5068
        %v5070 = vpop.xlane.xlu0 %5069
        %v5071 = vsub.f32 %v5065, %v5070
        %v5072 = vmul.f32 %v5071, 1.442695
        %v5073 = vpow.pop %v5072
        %v5074 = vsel %vm867, %v5073, 0.0
        %5075 = vadd.xlane.f32.xlu0 %v5074
        %v5076 = vpop.xlane.xlu0 %5075
        %v5077 = vrcp.pop %v5076
        %v5078 = vmul.f32 %v5073, %v5077
        %5079 = vrot.lane.b32.xlu0 %v522, 96
        %v5080 = vpop.permute.xlu0 %5079
        %v5083 = vsel %vm867, %v5078, 0
        %5085 = vmatprep.subr.mxu0 0.0
        %5086 = vmatpush1.msra.mxu0 %v5080
        %5087 = vmatprep.subr.mxu0 0.0
        %5088 = vmatpush1.msra.mxu0 0.0
        %5089 = vmatprep.subr.mxu0 0.0
        %5090 = vmatpush1.msra.mxu0 0.0
        %5091 = vmatprep.subr.mxu0 0.0
        %5092 = vmatpush1.msra.mxu0 0.0
        %5093 = vmatprep.subr.mxu0 0.0
        %5094 = vmatpush1.msra.mxu0 0.0
        %5095 = vmatprep.subr.mxu0 0.0
        %5096 = vmatpush1.msra.mxu0 0.0
        %5097 = vmatprep.subr.mxu0 0.0
        %5098 = vmatpush1.msra.mxu0 0.0
        %5099 = vmatprep.subr.mxu0 0.0
        %5100 = vmatpush1.msra.mxu0 0.0
        %5101 = vmatprep.subr.mxu0 0.0
        %5102 = vmatpush1.msra.mxu0 0.0
        %5103 = vmatprep.subr.mxu0 0.0
        %5104 = vmatpush1.msra.mxu0 0.0
        %5105 = vmatprep.subr.mxu0 0.0
        %5106 = vmatpush1.msra.mxu0 0.0
        %5107 = vmatprep.subr.mxu0 0.0
        %5108 = vmatpush1.msra.mxu0 0.0
        %5109 = vmatprep.subr.mxu0 0.0
        %5110 = vmatpush1.msra.mxu0 0.0
        %5111 = vmatprep.subr.mxu0 0.0
        %5112 = vmatpush1.msra.mxu0 0.0
        %5113 = vmatprep.subr.mxu0 0.0
        %5114 = vmatpush1.msra.mxu0 0.0
        %5115 = vmatprep.subr.mxu0 0.0
        %5116 = vmatpush1.msra.mxu0 0.0
        %5117 = vmatprep.subr.mxu0 0.0
        %5118 = vmatpush1.msra.mxu0 0.0
        %5119 = vmatprep.subr.mxu0 0.0
        %5120 = vmatpush1.msra.mxu0 0.0
        %5121 = vmatprep.subr.mxu0 0.0
        %5122 = vmatpush1.msra.mxu0 0.0
        %5123 = vmatprep.subr.mxu0 0.0
        %5124 = vmatpush1.msra.mxu0 0.0
        %5125 = vmatprep.subr.mxu0 0.0
        %5126 = vmatpush1.msra.mxu0 0.0
        %5127 = vmatprep.subr.mxu0 0.0
        %5128 = vmatpush1.msra.mxu0 0.0
        %5129 = vmatprep.subr.mxu0 0.0
        %5130 = vmatpush1.msra.mxu0 0.0
        %5131 = vmatprep.subr.mxu0 0.0
        %5132 = vmatpush1.msra.mxu0 0.0
        %5133 = vmatprep.subr.mxu0 0.0
        %5134 = vmatpush1.msra.mxu0 0.0
        %5135 = vmatprep.subr.mxu0 0.0
        %5136 = vmatpush1.msra.mxu0 0.0
        %5137 = vmatprep.subr.mxu0 0.0
        %5138 = vmatpush1.msra.mxu0 0.0
        %5139 = vmatprep.subr.mxu0 0.0
        %5140 = vmatpush1.msra.mxu0 0.0
        %5141 = vmatprep.subr.mxu0 0.0
        %5142 = vmatpush1.msra.mxu0 0.0
        %5143 = vmatprep.subr.mxu0 0.0
        %5144 = vmatpush1.msra.mxu0 0.0
        %5145 = vmatprep.subr.mxu0 0.0
        %5146 = vmatpush1.msra.mxu0 0.0
        %5147 = vmatprep.subr.mxu0 0.0
        %5148 = vmatpush1.msra.mxu0 0.0
        %5149 = vmatprep.mubr.f32.mxu0 0.0
        %5150 = vmatmul.mubr.f32.gmra.mrb[0].mxu0 %v5083
        %v5151 = vpop.f32.mrb[0].mxu0
        %v5152 = vadd.f32 0.0, %v5151
        %v5153 = vpop.f32.mrb[0].mxu0
        %5154 = vdwg.mxu0
        %v5156 = vsel %vm535, %v5152, 0
        %5158 = vmatprep.subr.mxu0 0.0
        %5159 = vmatpush1.msra.mxu0 %v337
        %5160 = vmatprep.subr.mxu0 0.0
        %5161 = vmatpush1.msra.mxu0 %v338
        %5162 = vmatprep.subr.mxu0 0.0
        %5163 = vmatpush1.msra.mxu0 0.0
        %5164 = vmatprep.subr.mxu0 0.0
        %5165 = vmatpush1.msra.mxu0 0.0
        %5166 = vmatprep.subr.mxu0 0.0
        %5167 = vmatpush1.msra.mxu0 0.0
        %5168 = vmatprep.subr.mxu0 0.0
        %5169 = vmatpush1.msra.mxu0 0.0
        %5170 = vmatprep.subr.mxu0 0.0
        %5171 = vmatpush1.msra.mxu0 0.0
        %5172 = vmatprep.subr.mxu0 0.0
        %5173 = vmatpush1.msra.mxu0 0.0
        %5174 = vmatprep.subr.mxu0 0.0
        %5175 = vmatpush1.msra.mxu0 0.0
        %5176 = vmatprep.subr.mxu0 0.0
        %5177 = vmatpush1.msra.mxu0 0.0
        %5178 = vmatprep.subr.mxu0 0.0
        %5179 = vmatpush1.msra.mxu0 0.0
        %5180 = vmatprep.subr.mxu0 0.0
        %5181 = vmatpush1.msra.mxu0 0.0
        %5182 = vmatprep.subr.mxu0 0.0
        %5183 = vmatpush1.msra.mxu0 0.0
        %5184 = vmatprep.subr.mxu0 0.0
        %5185 = vmatpush1.msra.mxu0 0.0
        %5186 = vmatprep.subr.mxu0 0.0
        %5187 = vmatpush1.msra.mxu0 0.0
        %5188 = vmatprep.subr.mxu0 0.0
        %5189 = vmatpush1.msra.mxu0 0.0
        %5190 = vmatprep.subr.mxu0 0.0
        %5191 = vmatpush1.msra.mxu0 0.0
        %5192 = vmatprep.subr.mxu0 0.0
        %5193 = vmatpush1.msra.mxu0 0.0
        %5194 = vmatprep.subr.mxu0 0.0
        %5195 = vmatpush1.msra.mxu0 0.0
        %5196 = vmatprep.subr.mxu0 0.0
        %5197 = vmatpush1.msra.mxu0 0.0
        %5198 = vmatprep.subr.mxu0 0.0
        %5199 = vmatpush1.msra.mxu0 0.0
        %5200 = vmatprep.subr.mxu0 0.0
        %5201 = vmatpush1.msra.mxu0 0.0
        %5202 = vmatprep.subr.mxu0 0.0
        %5203 = vmatpush1.msra.mxu0 0.0
        %5204 = vmatprep.subr.mxu0 0.0
        %5205 = vmatpush1.msra.mxu0 0.0
        %5206 = vmatprep.subr.mxu0 0.0
        %5207 = vmatpush1.msra.mxu0 0.0
        %5208 = vmatprep.subr.mxu0 0.0
        %5209 = vmatpush1.msra.mxu0 0.0
        %5210 = vmatprep.subr.mxu0 0.0
        %5211 = vmatpush1.msra.mxu0 0.0
        %5212 = vmatprep.subr.mxu0 0.0
        %5213 = vmatpush1.msra.mxu0 0.0
        %5214 = vmatprep.subr.mxu0 0.0
        %5215 = vmatpush1.msra.mxu0 0.0
        %5216 = vmatprep.subr.mxu0 0.0
        %5217 = vmatpush1.msra.mxu0 0.0
        %5218 = vmatprep.subr.mxu0 0.0
        %5219 = vmatpush1.msra.mxu0 0.0
        %5220 = vmatprep.subr.mxu0 0.0
        %5221 = vmatpush1.msra.mxu0 0.0
        %5222 = vmatprep.mubr.f32.mxu0 0.0
        %5223 = vmatmul.mubr.f32.gmra.mrb[0].mxu0 %v5156
        %v5224 = vpop.f32.mrb[0].mxu0
        %v5225 = vadd.f32 0.0, %v5224
        %v5226 = vpop.f32.mrb[0].mxu0
        %5227 = vdwg.mxu0
        %v5228 = vadd.f32 %v4675, %v5225
        %5229 = vrot.lane.b32.xlu0 %v694, 96
        %v5230 = vpop.permute.xlu0 %5229
        %5232 = vmatprep.subr.mxu0 0.0
        %5233 = vmatpush1.msra.mxu0 %v5230
        %5234 = vmatprep.subr.mxu0 0.0
        %5235 = vmatpush1.msra.mxu0 0.0
        %5236 = vmatprep.subr.mxu0 0.0
        %5237 = vmatpush1.msra.mxu0 0.0
        %5238 = vmatprep.subr.mxu0 0.0
        %5239 = vmatpush1.msra.mxu0 0.0
        %5240 = vmatprep.subr.mxu0 0.0
        %5241 = vmatpush1.msra.mxu0 0.0
        %5242 = vmatprep.subr.mxu0 0.0
        %5243 = vmatpush1.msra.mxu0 0.0
        %5244 = vmatprep.subr.mxu0 0.0
        %5245 = vmatpush1.msra.mxu0 0.0
        %5246 = vmatprep.subr.mxu0 0.0
        %5247 = vmatpush1.msra.mxu0 0.0
        %5248 = vmatprep.subr.mxu0 0.0
        %5249 = vmatpush1.msra.mxu0 0.0
        %5250 = vmatprep.subr.mxu0 0.0
        %5251 = vmatpush1.msra.mxu0 0.0
        %5252 = vmatprep.subr.mxu0 0.0
        %5253 = vmatpush1.msra.mxu0 0.0
        %5254 = vmatprep.subr.mxu0 0.0
        %5255 = vmatpush1.msra.mxu0 0.0
        %5256 = vmatprep.subr.mxu0 0.0
        %5257 = vmatpush1.msra.mxu0 0.0
        %5258 = vmatprep.subr.mxu0 0.0
        %5259 = vmatpush1.msra.mxu0 0.0
        %5260 = vmatprep.subr.mxu0 0.0
        %5261 = vmatpush1.msra.mxu0 0.0
        %5262 = vmatprep.subr.mxu0 0.0
        %5263 = vmatpush1.msra.mxu0 0.0
        %5264 = vmatprep.subr.mxu0 0.0
        %5265 = vmatpush1.msra.mxu0 0.0
        %5266 = vmatprep.subr.mxu0 0.0
        %5267 = vmatpush1.msra.mxu0 0.0
        %5268 = vmatprep.subr.mxu0 0.0
        %5269 = vmatpush1.msra.mxu0 0.0
        %5270 = vmatprep.subr.mxu0 0.0
        %5271 = vmatpush1.msra.mxu0 0.0
        %5272 = vmatprep.subr.mxu0 0.0
        %5273 = vmatpush1.msra.mxu0 0.0
        %5274 = vmatprep.subr.mxu0 0.0
        %5275 = vmatpush1.msra.mxu0 0.0
        %5276 = vmatprep.subr.mxu0 0.0
        %5277 = vmatpush1.msra.mxu0 0.0
        %5278 = vmatprep.subr.mxu0 0.0
        %5279 = vmatpush1.msra.mxu0 0.0
        %5280 = vmatprep.subr.mxu0 0.0
        %5281 = vmatpush1.msra.mxu0 0.0
        %5282 = vmatprep.subr.mxu0 0.0
        %5283 = vmatpush1.msra.mxu0 0.0
        %5284 = vmatprep.subr.mxu0 0.0
        %5285 = vmatpush1.msra.mxu0 0.0
        %5286 = vmatprep.subr.mxu0 0.0
        %5287 = vmatpush1.msra.mxu0 0.0
        %5288 = vmatprep.subr.mxu0 0.0
        %5289 = vmatpush1.msra.mxu0 0.0
        %5290 = vmatprep.subr.mxu0 0.0
        %5291 = vmatpush1.msra.mxu0 0.0
        %5292 = vmatprep.subr.mxu0 0.0
        %5293 = vmatpush1.msra.mxu0 0.0
        %5294 = vmatprep.subr.mxu0 0.0
        %5295 = vmatpush1.msra.mxu0 0.0
        %5296 = vmatprep.mubr.f32.mxu0 0.0
        %5297 = vmatmul.mubr.f32.gmra.mrb[0].mxu0 %v5083
        %v5298 = vpop.f32.mrb[0].mxu0
        %v5299 = vadd.f32 0.0, %v5298
        %v5300 = vpop.f32.mrb[0].mxu0
        %5301 = vdwg.mxu0
        %v5303 = vsel %vm535, %v5299, 0
        %5305 = vmatprep.subr.mxu0 0.0
        %5306 = vmatpush1.msra.mxu0 %v339
        %5307 = vmatprep.subr.mxu0 0.0
        %5308 = vmatpush1.msra.mxu0 %v340
        %5309 = vmatprep.subr.mxu0 0.0
        %5310 = vmatpush1.msra.mxu0 0.0
        %5311 = vmatprep.subr.mxu0 0.0
        %5312 = vmatpush1.msra.mxu0 0.0
        %5313 = vmatprep.subr.mxu0 0.0
        %5314 = vmatpush1.msra.mxu0 0.0
        %5315 = vmatprep.subr.mxu0 0.0
        %5316 = vmatpush1.msra.mxu0 0.0
        %5317 = vmatprep.subr.mxu0 0.0
        %5318 = vmatpush1.msra.mxu0 0.0
        %5319 = vmatprep.subr.mxu0 0.0
        %5320 = vmatpush1.msra.mxu0 0.0
        %5321 = vmatprep.subr.mxu0 0.0
        %5322 = vmatpush1.msra.mxu0 0.0
        %5323 = vmatprep.subr.mxu0 0.0
        %5324 = vmatpush1.msra.mxu0 0.0
        %5325 = vmatprep.subr.mxu0 0.0
        %5326 = vmatpush1.msra.mxu0 0.0
        %5327 = vmatprep.subr.mxu0 0.0
        %5328 = vmatpush1.msra.mxu0 0.0
        %5329 = vmatprep.subr.mxu0 0.0
        %5330 = vmatpush1.msra.mxu0 0.0
        %5331 = vmatprep.subr.mxu0 0.0
        %5332 = vmatpush1.msra.mxu0 0.0
        %5333 = vmatprep.subr.mxu0 0.0
        %5334 = vmatpush1.msra.mxu0 0.0
        %5335 = vmatprep.subr.mxu0 0.0
        %5336 = vmatpush1.msra.mxu0 0.0
        %5337 = vmatprep.subr.mxu0 0.0
        %5338 = vmatpush1.msra.mxu0 0.0
        %5339 = vmatprep.subr.mxu0 0.0
        %5340 = vmatpush1.msra.mxu0 0.0
        %5341 = vmatprep.subr.mxu0 0.0
        %5342 = vmatpush1.msra.mxu0 0.0
        %5343 = vmatprep.subr.mxu0 0.0
        %5344 = vmatpush1.msra.mxu0 0.0
        %5345 = vmatprep.subr.mxu0 0.0
        %5346 = vmatpush1.msra.mxu0 0.0
        %5347 = vmatprep.subr.mxu0 0.0
        %5348 = vmatpush1.msra.mxu0 0.0
        %5349 = vmatprep.subr.mxu0 0.0
        %5350 = vmatpush1.msra.mxu0 0.0
        %5351 = vmatprep.subr.mxu0 0.0
        %5352 = vmatpush1.msra.mxu0 0.0
        %5353 = vmatprep.subr.mxu0 0.0
        %5354 = vmatpush1.msra.mxu0 0.0
        %5355 = vmatprep.subr.mxu0 0.0
        %5356 = vmatpush1.msra.mxu0 0.0
        %5357 = vmatprep.subr.mxu0 0.0
        %5358 = vmatpush1.msra.mxu0 0.0
        %5359 = vmatprep.subr.mxu0 0.0
        %5360 = vmatpush1.msra.mxu0 0.0
        %5361 = vmatprep.subr.mxu0 0.0
        %5362 = vmatpush1.msra.mxu0 0.0
        %5363 = vmatprep.subr.mxu0 0.0
        %5364 = vmatpush1.msra.mxu0 0.0
        %5365 = vmatprep.subr.mxu0 0.0
        %5366 = vmatpush1.msra.mxu0 0.0
        %5367 = vmatprep.subr.mxu0 0.0
        %5368 = vmatpush1.msra.mxu0 0.0
        %5369 = vmatprep.mubr.f32.mxu0 0.0
        %5370 = vmatmul.mubr.f32.gmra.mrb[0].mxu0 %v5303
        %v5371 = vpop.f32.mrb[0].mxu0
        %v5372 = vadd.f32 0.0, %v5371
        %v5373 = vpop.f32.mrb[0].mxu0
        %5374 = vdwg.mxu0
        %v5375 = vadd.f32 %v5228, %v5372
        %5376 = vrot.lane.b32.xlu0 %v615, 64
        %v5377 = vpop.permute.xlu0 %5376
        %5378 = vrot.lane.b32.xlu0 %v617, 64
        %v5379 = vpop.permute.xlu0 %5378
        %v5380 = vsel %vm1170, %v5377, 0
        %v5382 = vsel %vm1170, %v5379, 0
        %5384 = vmatprep.subr.mxu0 0.0
        %5385 = vmatpush1.xpose.msra.mxu0 %v5382
        %5386 = vmatprep.subr.mxu0 0.0
        %5387 = vmatpush1.xpose.msra.mxu0 0.0
        %5388 = vmatprep.subr.mxu0 0.0
        %5389 = vmatpush1.xpose.msra.mxu0 0.0
        %5390 = vmatprep.subr.mxu0 0.0
        %5391 = vmatpush1.xpose.msra.mxu0 0.0
        %5392 = vmatprep.subr.mxu0 0.0
        %5393 = vmatpush1.xpose.msra.mxu0 0.0
        %5394 = vmatprep.subr.mxu0 0.0
        %5395 = vmatpush1.xpose.msra.mxu0 0.0
        %5396 = vmatprep.subr.mxu0 0.0
        %5397 = vmatpush1.xpose.msra.mxu0 0.0
        %5398 = vmatprep.subr.mxu0 0.0
        %5399 = vmatpush1.xpose.msra.mxu0 0.0
        %5400 = vmatprep.subr.mxu0 0.0
        %5401 = vmatpush1.xpose.msra.mxu0 0.0
        %5402 = vmatprep.subr.mxu0 0.0
        %5403 = vmatpush1.xpose.msra.mxu0 0.0
        %5404 = vmatprep.subr.mxu0 0.0
        %5405 = vmatpush1.xpose.msra.mxu0 0.0
        %5406 = vmatprep.subr.mxu0 0.0
        %5407 = vmatpush1.xpose.msra.mxu0 0.0
        %5408 = vmatprep.subr.mxu0 0.0
        %5409 = vmatpush1.xpose.msra.mxu0 0.0
        %5410 = vmatprep.subr.mxu0 0.0
        %5411 = vmatpush1.xpose.msra.mxu0 0.0
        %5412 = vmatprep.subr.mxu0 0.0
        %5413 = vmatpush1.xpose.msra.mxu0 0.0
        %5414 = vmatprep.subr.mxu0 0.0
        %5415 = vmatpush1.xpose.msra.mxu0 0.0
        %5416 = vmatprep.subr.mxu0 0.0
        %5417 = vmatpush1.xpose.msra.mxu0 0.0
        %5418 = vmatprep.subr.mxu0 0.0
        %5419 = vmatpush1.xpose.msra.mxu0 0.0
        %5420 = vmatprep.subr.mxu0 0.0
        %5421 = vmatpush1.xpose.msra.mxu0 0.0
        %5422 = vmatprep.subr.mxu0 0.0
        %5423 = vmatpush1.xpose.msra.mxu0 0.0
        %5424 = vmatprep.subr.mxu0 0.0
        %5425 = vmatpush1.xpose.msra.mxu0 0.0
        %5426 = vmatprep.subr.mxu0 0.0
        %5427 = vmatpush1.xpose.msra.mxu0 0.0
        %5428 = vmatprep.subr.mxu0 0.0
        %5429 = vmatpush1.xpose.msra.mxu0 0.0
        %5430 = vmatprep.subr.mxu0 0.0
        %5431 = vmatpush1.xpose.msra.mxu0 0.0
        %5432 = vmatprep.subr.mxu0 0.0
        %5433 = vmatpush1.xpose.msra.mxu0 0.0
        %5434 = vmatprep.subr.mxu0 0.0
        %5435 = vmatpush1.xpose.msra.mxu0 0.0
        %5436 = vmatprep.subr.mxu0 0.0
        %5437 = vmatpush1.xpose.msra.mxu0 0.0
        %5438 = vmatprep.subr.mxu0 0.0
        %5439 = vmatpush1.xpose.msra.mxu0 0.0
        %5440 = vmatprep.subr.mxu0 0.0
        %5441 = vmatpush1.xpose.msra.mxu0 0.0
        %5442 = vmatprep.subr.mxu0 0.0
        %5443 = vmatpush1.xpose.msra.mxu0 0.0
        %5444 = vmatprep.subr.mxu0 0.0
        %5445 = vmatpush1.xpose.msra.mxu0 0.0
        %5446 = vmatprep.subr.mxu0 0.0
        %5447 = vmatpush1.xpose.msra.mxu0 0.0
        %5448 = vmatprep.mubr.f32.mxu0 0.0
        %5449 = vmatmul.mubr.f32.gmra.mrb[0].mxu0 %v5380
        %v5450 = vpop.f32.mrb[0].mxu0
        %v5451 = vadd.f32 0.0, %v5450
        %v5452 = vpop.f32.mrb[0].mxu0
        %5453 = vdwg.mxu0
        %v5454 = vsel %vm867, %v5451, -inf
        %5455 = vmax.xlane.f32.xlu0 %v5454
        %v5456 = vpop.xlane.xlu0 %5455
        %v5457 = vsub.f32 %v5451, %v5456
        %v5458 = vmul.f32 %v5457, 1.442695
        %v5459 = vpow.pop %v5458
        %v5460 = vsel %vm867, %v5459, 0.0
        %5461 = vadd.xlane.f32.xlu0 %v5460
        %v5462 = vpop.xlane.xlu0 %5461
        %v5463 = vrcp.pop %v5462
        %v5464 = vmul.f32 %v5459, %v5463
        %v5466 = vsel %vm867, %v5464, 0
        %5468 = vmatprep.subr.mxu0 0.0
        %5469 = vmatpush1.msra.mxu0 %v5230
        %5470 = vmatprep.subr.mxu0 0.0
        %5471 = vmatpush1.msra.mxu0 0.0
        %5472 = vmatprep.subr.mxu0 0.0
        %5473 = vmatpush1.msra.mxu0 0.0
        %5474 = vmatprep.subr.mxu0 0.0
        %5475 = vmatpush1.msra.mxu0 0.0
        %5476 = vmatprep.subr.mxu0 0.0
        %5477 = vmatpush1.msra.mxu0 0.0
        %5478 = vmatprep.subr.mxu0 0.0
        %5479 = vmatpush1.msra.mxu0 0.0
        %5480 = vmatprep.subr.mxu0 0.0
        %5481 = vmatpush1.msra.mxu0 0.0
        %5482 = vmatprep.subr.mxu0 0.0
        %5483 = vmatpush1.msra.mxu0 0.0
        %5484 = vmatprep.subr.mxu0 0.0
        %5485 = vmatpush1.msra.mxu0 0.0
        %5486 = vmatprep.subr.mxu0 0.0
        %5487 = vmatpush1.msra.mxu0 0.0
        %5488 = vmatprep.subr.mxu0 0.0
        %5489 = vmatpush1.msra.mxu0 0.0
        %5490 = vmatprep.subr.mxu0 0.0
        %5491 = vmatpush1.msra.mxu0 0.0
        %5492 = vmatprep.subr.mxu0 0.0
        %5493 = vmatpush1.msra.mxu0 0.0
        %5494 = vmatprep.subr.mxu0 0.0
        %5495 = vmatpush1.msra.mxu0 0.0
        %5496 = vmatprep.subr.mxu0 0.0
        %5497 = vmatpush1.msra.mxu0 0.0
        %5498 = vmatprep.subr.mxu0 0.0
        %5499 = vmatpush1.msra.mxu0 0.0
        %5500 = vmatprep.subr.mxu0 0.0
        %5501 = vmatpush1.msra.mxu0 0.0
        %5502 = vmatprep.subr.mxu0 0.0
        %5503 = vmatpush1.msra.mxu0 0.0
        %5504 = vmatprep.subr.mxu0 0.0
        %5505 = vmatpush1.msra.mxu0 0.0
        %5506 = vmatprep.subr.mxu0 0.0
        %5507 = vmatpush1.msra.mxu0 0.0
        %5508 = vmatprep.subr.mxu0 0.0
        %5509 = vmatpush1.msra.mxu0 0.0
        %5510 = vmatprep.subr.mxu0 0.0
        %5511 = vmatpush1.msra.mxu0 0.0
        %5512 = vmatprep.subr.mxu0 0.0
        %5513 = vmatpush1.msra.mxu0 0.0
        %5514 = vmatprep.subr.mxu0 0.0
        %5515 = vmatpush1.msra.mxu0 0.0
        %5516 = vmatprep.subr.mxu0 0.0
        %5517 = vmatpush1.msra.mxu0 0.0
        %5518 = vmatprep.subr.mxu0 0.0
        %5519 = vmatpush1.msra.mxu0 0.0
        %5520 = vmatprep.subr.mxu0 0.0
        %5521 = vmatpush1.msra.mxu0 0.0
        %5522 = vmatprep.subr.mxu0 0.0
        %5523 = vmatpush1.msra.mxu0 0.0
        %5524 = vmatprep.subr.mxu0 0.0
        %5525 = vmatpush1.msra.mxu0 0.0
        %5526 = vmatprep.subr.mxu0 0.0
        %5527 = vmatpush1.msra.mxu0 0.0
        %5528 = vmatprep.subr.mxu0 0.0
        %5529 = vmatpush1.msra.mxu0 0.0
        %5530 = vmatprep.subr.mxu0 0.0
        %5531 = vmatpush1.msra.mxu0 0.0
        %5532 = vmatprep.mubr.f32.mxu0 0.0
        %5533 = vmatmul.mubr.f32.gmra.mrb[0].mxu0 %v5466
        %v5534 = vpop.f32.mrb[0].mxu0
        %v5535 = vadd.f32 0.0, %v5534
        %v5536 = vpop.f32.mrb[0].mxu0
        %5537 = vdwg.mxu0
        %v5539 = vsel %vm535, %v5535, 0
        %5541 = vmatprep.subr.mxu0 0.0
        %5542 = vmatpush1.msra.mxu0 %v349
        %5543 = vmatprep.subr.mxu0 0.0
        %5544 = vmatpush1.msra.mxu0 %v350
        %5545 = vmatprep.subr.mxu0 0.0
        %5546 = vmatpush1.msra.mxu0 0.0
        %5547 = vmatprep.subr.mxu0 0.0
        %5548 = vmatpush1.msra.mxu0 0.0
        %5549 = vmatprep.subr.mxu0 0.0
        %5550 = vmatpush1.msra.mxu0 0.0
        %5551 = vmatprep.subr.mxu0 0.0
        %5552 = vmatpush1.msra.mxu0 0.0
        %5553 = vmatprep.subr.mxu0 0.0
        %5554 = vmatpush1.msra.mxu0 0.0
        %5555 = vmatprep.subr.mxu0 0.0
        %5556 = vmatpush1.msra.mxu0 0.0
        %5557 = vmatprep.subr.mxu0 0.0
        %5558 = vmatpush1.msra.mxu0 0.0
        %5559 = vmatprep.subr.mxu0 0.0
        %5560 = vmatpush1.msra.mxu0 0.0
        %5561 = vmatprep.subr.mxu0 0.0
        %5562 = vmatpush1.msra.mxu0 0.0
        %5563 = vmatprep.subr.mxu0 0.0
        %5564 = vmatpush1.msra.mxu0 0.0
        %5565 = vmatprep.subr.mxu0 0.0
        %5566 = vmatpush1.msra.mxu0 0.0
        %5567 = vmatprep.subr.mxu0 0.0
        %5568 = vmatpush1.msra.mxu0 0.0
        %5569 = vmatprep.subr.mxu0 0.0
        %5570 = vmatpush1.msra.mxu0 0.0
        %5571 = vmatprep.subr.mxu0 0.0
        %5572 = vmatpush1.msra.mxu0 0.0
        %5573 = vmatprep.subr.mxu0 0.0
        %5574 = vmatpush1.msra.mxu0 0.0
        %5575 = vmatprep.subr.mxu0 0.0
        %5576 = vmatpush1.msra.mxu0 0.0
        %5577 = vmatprep.subr.mxu0 0.0
        %5578 = vmatpush1.msra.mxu0 0.0
        %5579 = vmatprep.subr.mxu0 0.0
        %5580 = vmatpush1.msra.mxu0 0.0
        %5581 = vmatprep.subr.mxu0 0.0
        %5582 = vmatpush1.msra.mxu0 0.0
        %5583 = vmatprep.subr.mxu0 0.0
        %5584 = vmatpush1.msra.mxu0 0.0
        %5585 = vmatprep.subr.mxu0 0.0
        %5586 = vmatpush1.msra.mxu0 0.0
        %5587 = vmatprep.subr.mxu0 0.0
        %5588 = vmatpush1.msra.mxu0 0.0
        %5589 = vmatprep.subr.mxu0 0.0
        %5590 = vmatpush1.msra.mxu0 0.0
        %5591 = vmatprep.subr.mxu0 0.0
        %5592 = vmatpush1.msra.mxu0 0.0
        %5593 = vmatprep.subr.mxu0 0.0
        %5594 = vmatpush1.msra.mxu0 0.0
        %5595 = vmatprep.subr.mxu0 0.0
        %5596 = vmatpush1.msra.mxu0 0.0
        %5597 = vmatprep.subr.mxu0 0.0
        %5598 = vmatpush1.msra.mxu0 0.0
        %5599 = vmatprep.subr.mxu0 0.0
        %5600 = vmatpush1.msra.mxu0 0.0
        %5601 = vmatprep.subr.mxu0 0.0
        %5602 = vmatpush1.msra.mxu0 0.0
        %5603 = vmatprep.subr.mxu0 0.0
        %5604 = vmatpush1.msra.mxu0 0.0
        %5605 = vmatprep.mubr.f32.mxu0 0.0
        %5606 = vmatmul.mubr.f32.gmra.mrb[0].mxu0 %v5539
        %v5607 = vpop.f32.mrb[0].mxu0
        %v5608 = vadd.f32 0.0, %v5607
        %v5609 = vpop.f32.mrb[0].mxu0
        %5610 = vdwg.mxu0
        %v5611 = vadd.f32 %v4911, %v5608
        %5612 = vrot.lane.b32.xlu0 %v446, 16
        %v5613 = vpop.permute.xlu0 %5612
        %5614 = vrot.lane.b32.xlu0 %v692, 16
        %v5615 = vpop.permute.xlu0 %5614
        %v5616 = vsel %vm535, %v5613, 0
        %v5618 = vsel %vm535, %v5615, 0
        %5620 = vmatprep.subr.mxu0 0.0
        %5621 = vmatpush1.xpose.msra.mxu0 %v5618
        %5622 = vmatprep.subr.mxu0 0.0
        %5623 = vmatpush1.xpose.msra.mxu0 0.0
        %5624 = vmatprep.subr.mxu0 0.0
        %5625 = vmatpush1.xpose.msra.mxu0 0.0
        %5626 = vmatprep.subr.mxu0 0.0
        %5627 = vmatpush1.xpose.msra.mxu0 0.0
        %5628 = vmatprep.subr.mxu0 0.0
        %5629 = vmatpush1.xpose.msra.mxu0 0.0
        %5630 = vmatprep.subr.mxu0 0.0
        %5631 = vmatpush1.xpose.msra.mxu0 0.0
        %5632 = vmatprep.subr.mxu0 0.0
        %5633 = vmatpush1.xpose.msra.mxu0 0.0
        %5634 = vmatprep.subr.mxu0 0.0
        %5635 = vmatpush1.xpose.msra.mxu0 0.0
        %5636 = vmatprep.subr.mxu0 0.0
        %5637 = vmatpush1.xpose.msra.mxu0 0.0
        %5638 = vmatprep.subr.mxu0 0.0
        %5639 = vmatpush1.xpose.msra.mxu0 0.0
        %5640 = vmatprep.subr.mxu0 0.0
        %5641 = vmatpush1.xpose.msra.mxu0 0.0
        %5642 = vmatprep.subr.mxu0 0.0
        %5643 = vmatpush1.xpose.msra.mxu0 0.0
        %5644 = vmatprep.subr.mxu0 0.0
        %5645 = vmatpush1.xpose.msra.mxu0 0.0
        %5646 = vmatprep.subr.mxu0 0.0
        %5647 = vmatpush1.xpose.msra.mxu0 0.0
        %5648 = vmatprep.subr.mxu0 0.0
        %5649 = vmatpush1.xpose.msra.mxu0 0.0
        %5650 = vmatprep.subr.mxu0 0.0
        %5651 = vmatpush1.xpose.msra.mxu0 0.0
        %5652 = vmatprep.subr.mxu0 0.0
        %5653 = vmatpush1.xpose.msra.mxu0 0.0
        %5654 = vmatprep.subr.mxu0 0.0
        %5655 = vmatpush1.xpose.msra.mxu0 0.0
        %5656 = vmatprep.subr.mxu0 0.0
        %5657 = vmatpush1.xpose.msra.mxu0 0.0
        %5658 = vmatprep.subr.mxu0 0.0
        %5659 = vmatpush1.xpose.msra.mxu0 0.0
        %5660 = vmatprep.subr.mxu0 0.0
        %5661 = vmatpush1.xpose.msra.mxu0 0.0
        %5662 = vmatprep.subr.mxu0 0.0
        %5663 = vmatpush1.xpose.msra.mxu0 0.0
        %5664 = vmatprep.subr.mxu0 0.0
        %5665 = vmatpush1.xpose.msra.mxu0 0.0
        %5666 = vmatprep.subr.mxu0 0.0
        %5667 = vmatpush1.xpose.msra.mxu0 0.0
        %5668 = vmatprep.subr.mxu0 0.0
        %5669 = vmatpush1.xpose.msra.mxu0 0.0
        %5670 = vmatprep.subr.mxu0 0.0
        %5671 = vmatpush1.xpose.msra.mxu0 0.0
        %5672 = vmatprep.subr.mxu0 0.0
        %5673 = vmatpush1.xpose.msra.mxu0 0.0
        %5674 = vmatprep.subr.mxu0 0.0
        %5675 = vmatpush1.xpose.msra.mxu0 0.0
        %5676 = vmatprep.subr.mxu0 0.0
        %5677 = vmatpush1.xpose.msra.mxu0 0.0
        %5678 = vmatprep.subr.mxu0 0.0
        %5679 = vmatpush1.xpose.msra.mxu0 0.0
        %5680 = vmatprep.subr.mxu0 0.0
        %5681 = vmatpush1.xpose.msra.mxu0 0.0
        %5682 = vmatprep.subr.mxu0 0.0
        %5683 = vmatpush1.xpose.msra.mxu0 0.0
        %5684 = vmatprep.mubr.f32.mxu0 0.0
        %5685 = vmatmul.mubr.f32.gmra.mrb[0].mxu0 %v5616
        %v5686 = vpop.f32.mrb[0].mxu0
        %v5687 = vadd.f32 0.0, %v5686
        %v5688 = vpop.f32.mrb[0].mxu0
        %5689 = vdwg.mxu0
        %5690 = vrot.lane.b32.xlu0 %v446, 32
        %v5691 = vpop.permute.xlu0 %5690
        %5692 = vrot.lane.b32.xlu0 %v448, 16
        %v5693 = vpop.permute.xlu0 %5692
        %v5694 = vsel %vm535, %v5691, 0
        %v5696 = vsel %vm535, %v5693, 0
        %5698 = vmatprep.subr.mxu0 0.0
        %5699 = vmatpush1.xpose.msra.mxu0 %v5696
        %5700 = vmatprep.subr.mxu0 0.0
        %5701 = vmatpush1.xpose.msra.mxu0 0.0
        %5702 = vmatprep.subr.mxu0 0.0
        %5703 = vmatpush1.xpose.msra.mxu0 0.0
        %5704 = vmatprep.subr.mxu0 0.0
        %5705 = vmatpush1.xpose.msra.mxu0 0.0
        %5706 = vmatprep.subr.mxu0 0.0
        %5707 = vmatpush1.xpose.msra.mxu0 0.0
        %5708 = vmatprep.subr.mxu0 0.0
        %5709 = vmatpush1.xpose.msra.mxu0 0.0
        %5710 = vmatprep.subr.mxu0 0.0
        %5711 = vmatpush1.xpose.msra.mxu0 0.0
        %5712 = vmatprep.subr.mxu0 0.0
        %5713 = vmatpush1.xpose.msra.mxu0 0.0
        %5714 = vmatprep.subr.mxu0 0.0
        %5715 = vmatpush1.xpose.msra.mxu0 0.0
        %5716 = vmatprep.subr.mxu0 0.0
        %5717 = vmatpush1.xpose.msra.mxu0 0.0
        %5718 = vmatprep.subr.mxu0 0.0
        %5719 = vmatpush1.xpose.msra.mxu0 0.0
        %5720 = vmatprep.subr.mxu0 0.0
        %5721 = vmatpush1.xpose.msra.mxu0 0.0
        %5722 = vmatprep.subr.mxu0 0.0
        %5723 = vmatpush1.xpose.msra.mxu0 0.0
        %5724 = vmatprep.subr.mxu0 0.0
        %5725 = vmatpush1.xpose.msra.mxu0 0.0
        %5726 = vmatprep.subr.mxu0 0.0
        %5727 = vmatpush1.xpose.msra.mxu0 0.0
        %5728 = vmatprep.subr.mxu0 0.0
        %5729 = vmatpush1.xpose.msra.mxu0 0.0
        %5730 = vmatprep.subr.mxu0 0.0
        %5731 = vmatpush1.xpose.msra.mxu0 0.0
        %5732 = vmatprep.subr.mxu0 0.0
        %5733 = vmatpush1.xpose.msra.mxu0 0.0
        %5734 = vmatprep.subr.mxu0 0.0
        %5735 = vmatpush1.xpose.msra.mxu0 0.0
        %5736 = vmatprep.subr.mxu0 0.0
        %5737 = vmatpush1.xpose.msra.mxu0 0.0
        %5738 = vmatprep.subr.mxu0 0.0
        %5739 = vmatpush1.xpose.msra.mxu0 0.0
        %5740 = vmatprep.subr.mxu0 0.0
        %5741 = vmatpush1.xpose.msra.mxu0 0.0
        %5742 = vmatprep.subr.mxu0 0.0
        %5743 = vmatpush1.xpose.msra.mxu0 0.0
        %5744 = vmatprep.subr.mxu0 0.0
        %5745 = vmatpush1.xpose.msra.mxu0 0.0
        %5746 = vmatprep.subr.mxu0 0.0
        %5747 = vmatpush1.xpose.msra.mxu0 0.0
        %5748 = vmatprep.subr.mxu0 0.0
        %5749 = vmatpush1.xpose.msra.mxu0 0.0
        %5750 = vmatprep.subr.mxu0 0.0
        %5751 = vmatpush1.xpose.msra.mxu0 0.0
        %5752 = vmatprep.subr.mxu0 0.0
        %5753 = vmatpush1.xpose.msra.mxu0 0.0
        %5754 = vmatprep.subr.mxu0 0.0
        %5755 = vmatpush1.xpose.msra.mxu0 0.0
        %5756 = vmatprep.subr.mxu0 0.0
        %5757 = vmatpush1.xpose.msra.mxu0 0.0
        %5758 = vmatprep.subr.mxu0 0.0
        %5759 = vmatpush1.xpose.msra.mxu0 0.0
        %5760 = vmatprep.subr.mxu0 0.0
        %5761 = vmatpush1.xpose.msra.mxu0 0.0
        %5762 = vmatprep.mubr.f32.mxu0 0.0
        %5763 = vmatmul.mubr.f32.gmra.mrb[0].mxu0 %v5694
        %v5764 = vpop.f32.mrb[0].mxu0
        %v5765 = vadd.f32 %v5687, %v5764
        %v5766 = vpop.f32.mrb[0].mxu0
        %5767 = vdwg.mxu0
        %v5768 = vsel %vm867, %v5765, -inf
        %5769 = vmax.xlane.f32.xlu0 %v5768
        %v5770 = vpop.xlane.xlu0 %5769
        %v5771 = vsub.f32 %v5765, %v5770
        %v5772 = vmul.f32 %v5771, 1.442695
        %v5773 = vpow.pop %v5772
        %v5774 = vsel %vm867, %v5773, 0.0
        %5775 = vadd.xlane.f32.xlu0 %v5774
        %v5776 = vpop.xlane.xlu0 %5775
        %v5777 = vrcp.pop %v5776
        %v5778 = vmul.f32 %v5773, %v5777
        %5779 = vrot.lane.b32.xlu0 %v522, 80
        %v5780 = vpop.permute.xlu0 %5779
        %v5783 = vsel %vm867, %v5778, 0
        %5785 = vmatprep.subr.mxu0 0.0
        %5786 = vmatpush1.msra.mxu0 %v5780
        %5787 = vmatprep.subr.mxu0 0.0
        %5788 = vmatpush1.msra.mxu0 0.0
        %5789 = vmatprep.subr.mxu0 0.0
        %5790 = vmatpush1.msra.mxu0 0.0
        %5791 = vmatprep.subr.mxu0 0.0
        %5792 = vmatpush1.msra.mxu0 0.0
        %5793 = vmatprep.subr.mxu0 0.0
        %5794 = vmatpush1.msra.mxu0 0.0
        %5795 = vmatprep.subr.mxu0 0.0
        %5796 = vmatpush1.msra.mxu0 0.0
        %5797 = vmatprep.subr.mxu0 0.0
        %5798 = vmatpush1.msra.mxu0 0.0
        %5799 = vmatprep.subr.mxu0 0.0
        %5800 = vmatpush1.msra.mxu0 0.0
        %5801 = vmatprep.subr.mxu0 0.0
        %5802 = vmatpush1.msra.mxu0 0.0
        %5803 = vmatprep.subr.mxu0 0.0
        %5804 = vmatpush1.msra.mxu0 0.0
        %5805 = vmatprep.subr.mxu0 0.0
        %5806 = vmatpush1.msra.mxu0 0.0
        %5807 = vmatprep.subr.mxu0 0.0
        %5808 = vmatpush1.msra.mxu0 0.0
        %5809 = vmatprep.subr.mxu0 0.0
        %5810 = vmatpush1.msra.mxu0 0.0
        %5811 = vmatprep.subr.mxu0 0.0
        %5812 = vmatpush1.msra.mxu0 0.0
        %5813 = vmatprep.subr.mxu0 0.0
        %5814 = vmatpush1.msra.mxu0 0.0
        %5815 = vmatprep.subr.mxu0 0.0
        %5816 = vmatpush1.msra.mxu0 0.0
        %5817 = vmatprep.subr.mxu0 0.0
        %5818 = vmatpush1.msra.mxu0 0.0
        %5819 = vmatprep.subr.mxu0 0.0
        %5820 = vmatpush1.msra.mxu0 0.0
        %5821 = vmatprep.subr.mxu0 0.0
        %5822 = vmatpush1.msra.mxu0 0.0
        %5823 = vmatprep.subr.mxu0 0.0
        %5824 = vmatpush1.msra.mxu0 0.0
        %5825 = vmatprep.subr.mxu0 0.0
        %5826 = vmatpush1.msra.mxu0 0.0
        %5827 = vmatprep.subr.mxu0 0.0
        %5828 = vmatpush1.msra.mxu0 0.0
        %5829 = vmatprep.subr.mxu0 0.0
        %5830 = vmatpush1.msra.mxu0 0.0
        %5831 = vmatprep.subr.mxu0 0.0
        %5832 = vmatpush1.msra.mxu0 0.0
        %5833 = vmatprep.subr.mxu0 0.0
        %5834 = vmatpush1.msra.mxu0 0.0
        %5835 = vmatprep.subr.mxu0 0.0
        %5836 = vmatpush1.msra.mxu0 0.0
        %5837 = vmatprep.subr.mxu0 0.0
        %5838 = vmatpush1.msra.mxu0 0.0
        %5839 = vmatprep.subr.mxu0 0.0
        %5840 = vmatpush1.msra.mxu0 0.0
        %5841 = vmatprep.subr.mxu0 0.0
        %5842 = vmatpush1.msra.mxu0 0.0
        %5843 = vmatprep.subr.mxu0 0.0
        %5844 = vmatpush1.msra.mxu0 0.0
        %5845 = vmatprep.subr.mxu0 0.0
        %5846 = vmatpush1.msra.mxu0 0.0
        %5847 = vmatprep.subr.mxu0 0.0
        %5848 = vmatpush1.msra.mxu0 0.0
        %5849 = vmatprep.mubr.f32.mxu0 0.0
        %5850 = vmatmul.mubr.f32.gmra.mrb[0].mxu0 %v5783
        %v5851 = vpop.f32.mrb[0].mxu0
        %v5852 = vadd.f32 0.0, %v5851
        %v5853 = vpop.f32.mrb[0].mxu0
        %5854 = vdwg.mxu0
        %v5856 = vsel %vm535, %v5852, 0
        %5858 = vmatprep.subr.mxu0 0.0
        %5859 = vmatpush1.msra.mxu0 %v341
        %5860 = vmatprep.subr.mxu0 0.0
        %5861 = vmatpush1.msra.mxu0 %v342
        %5862 = vmatprep.subr.mxu0 0.0
        %5863 = vmatpush1.msra.mxu0 0.0
        %5864 = vmatprep.subr.mxu0 0.0
        %5865 = vmatpush1.msra.mxu0 0.0
        %5866 = vmatprep.subr.mxu0 0.0
        %5867 = vmatpush1.msra.mxu0 0.0
        %5868 = vmatprep.subr.mxu0 0.0
        %5869 = vmatpush1.msra.mxu0 0.0
        %5870 = vmatprep.subr.mxu0 0.0
        %5871 = vmatpush1.msra.mxu0 0.0
        %5872 = vmatprep.subr.mxu0 0.0
        %5873 = vmatpush1.msra.mxu0 0.0
        %5874 = vmatprep.subr.mxu0 0.0
        %5875 = vmatpush1.msra.mxu0 0.0
        %5876 = vmatprep.subr.mxu0 0.0
        %5877 = vmatpush1.msra.mxu0 0.0
        %5878 = vmatprep.subr.mxu0 0.0
        %5879 = vmatpush1.msra.mxu0 0.0
        %5880 = vmatprep.subr.mxu0 0.0
        %5881 = vmatpush1.msra.mxu0 0.0
        %5882 = vmatprep.subr.mxu0 0.0
        %5883 = vmatpush1.msra.mxu0 0.0
        %5884 = vmatprep.subr.mxu0 0.0
        %5885 = vmatpush1.msra.mxu0 0.0
        %5886 = vmatprep.subr.mxu0 0.0
        %5887 = vmatpush1.msra.mxu0 0.0
        %5888 = vmatprep.subr.mxu0 0.0
        %5889 = vmatpush1.msra.mxu0 0.0
        %5890 = vmatprep.subr.mxu0 0.0
        %5891 = vmatpush1.msra.mxu0 0.0
        %5892 = vmatprep.subr.mxu0 0.0
        %5893 = vmatpush1.msra.mxu0 0.0
        %5894 = vmatprep.subr.mxu0 0.0
        %5895 = vmatpush1.msra.mxu0 0.0
        %5896 = vmatprep.subr.mxu0 0.0
        %5897 = vmatpush1.msra.mxu0 0.0
        %5898 = vmatprep.subr.mxu0 0.0
        %5899 = vmatpush1.msra.mxu0 0.0
        %5900 = vmatprep.subr.mxu0 0.0
        %5901 = vmatpush1.msra.mxu0 0.0
        %5902 = vmatprep.subr.mxu0 0.0
        %5903 = vmatpush1.msra.mxu0 0.0
        %5904 = vmatprep.subr.mxu0 0.0
        %5905 = vmatpush1.msra.mxu0 0.0
        %5906 = vmatprep.subr.mxu0 0.0
        %5907 = vmatpush1.msra.mxu0 0.0
        %5908 = vmatprep.subr.mxu0 0.0
        %5909 = vmatpush1.msra.mxu0 0.0
        %5910 = vmatprep.subr.mxu0 0.0
        %5911 = vmatpush1.msra.mxu0 0.0
        %5912 = vmatprep.subr.mxu0 0.0
        %5913 = vmatpush1.msra.mxu0 0.0
        %5914 = vmatprep.subr.mxu0 0.0
        %5915 = vmatpush1.msra.mxu0 0.0
        %5916 = vmatprep.subr.mxu0 0.0
        %5917 = vmatpush1.msra.mxu0 0.0
        %5918 = vmatprep.subr.mxu0 0.0
        %5919 = vmatpush1.msra.mxu0 0.0
        %5920 = vmatprep.subr.mxu0 0.0
        %5921 = vmatpush1.msra.mxu0 0.0
        %5922 = vmatprep.mubr.f32.mxu0 0.0
        %5923 = vmatmul.mubr.f32.gmra.mrb[0].mxu0 %v5856
        %v5924 = vpop.f32.mrb[0].mxu0
        %v5925 = vadd.f32 0.0, %v5924
        %v5926 = vpop.f32.mrb[0].mxu0
        %5927 = vdwg.mxu0
        %v5928 = vadd.f32 %v5375, %v5925
        %5929 = vrot.lane.b32.xlu0 %v694, 80
        %v5930 = vpop.permute.xlu0 %5929
        %5932 = vmatprep.subr.mxu0 0.0
        %5933 = vmatpush1.msra.mxu0 %v5930
        %5934 = vmatprep.subr.mxu0 0.0
        %5935 = vmatpush1.msra.mxu0 0.0
        %5936 = vmatprep.subr.mxu0 0.0
        %5937 = vmatpush1.msra.mxu0 0.0
        %5938 = vmatprep.subr.mxu0 0.0
        %5939 = vmatpush1.msra.mxu0 0.0
        %5940 = vmatprep.subr.mxu0 0.0
        %5941 = vmatpush1.msra.mxu0 0.0
        %5942 = vmatprep.subr.mxu0 0.0
        %5943 = vmatpush1.msra.mxu0 0.0
        %5944 = vmatprep.subr.mxu0 0.0
        %5945 = vmatpush1.msra.mxu0 0.0
        %5946 = vmatprep.subr.mxu0 0.0
        %5947 = vmatpush1.msra.mxu0 0.0
        %5948 = vmatprep.subr.mxu0 0.0
        %5949 = vmatpush1.msra.mxu0 0.0
        %5950 = vmatprep.subr.mxu0 0.0
        %5951 = vmatpush1.msra.mxu0 0.0
        %5952 = vmatprep.subr.mxu0 0.0
        %5953 = vmatpush1.msra.mxu0 0.0
        %5954 = vmatprep.subr.mxu0 0.0
        %5955 = vmatpush1.msra.mxu0 0.0
        %5956 = vmatprep.subr.mxu0 0.0
        %5957 = vmatpush1.msra.mxu0 0.0
        %5958 = vmatprep.subr.mxu0 0.0
        %5959 = vmatpush1.msra.mxu0 0.0
        %5960 = vmatprep.subr.mxu0 0.0
        %5961 = vmatpush1.msra.mxu0 0.0
        %5962 = vmatprep.subr.mxu0 0.0
        %5963 = vmatpush1.msra.mxu0 0.0
        %5964 = vmatprep.subr.mxu0 0.0
        %5965 = vmatpush1.msra.mxu0 0.0
        %5966 = vmatprep.subr.mxu0 0.0
        %5967 = vmatpush1.msra.mxu0 0.0
        %5968 = vmatprep.subr.mxu0 0.0
        %5969 = vmatpush1.msra.mxu0 0.0
        %5970 = vmatprep.subr.mxu0 0.0
        %5971 = vmatpush1.msra.mxu0 0.0
        %5972 = vmatprep.subr.mxu0 0.0
        %5973 = vmatpush1.msra.mxu0 0.0
        %5974 = vmatprep.subr.mxu0 0.0
        %5975 = vmatpush1.msra.mxu0 0.0
        %5976 = vmatprep.subr.mxu0 0.0
        %5977 = vmatpush1.msra.mxu0 0.0
        %5978 = vmatprep.subr.mxu0 0.0
        %5979 = vmatpush1.msra.mxu0 0.0
        %5980 = vmatprep.subr.mxu0 0.0
        %5981 = vmatpush1.msra.mxu0 0.0
        %5982 = vmatprep.subr.mxu0 0.0
        %5983 = vmatpush1.msra.mxu0 0.0
        %5984 = vmatprep.subr.mxu0 0.0
        %5985 = vmatpush1.msra.mxu0 0.0
        %5986 = vmatprep.subr.mxu0 0.0
        %5987 = vmatpush1.msra.mxu0 0.0
        %5988 = vmatprep.subr.mxu0 0.0
        %5989 = vmatpush1.msra.mxu0 0.0
        %5990 = vmatprep.subr.mxu0 0.0
        %5991 = vmatpush1.msra.mxu0 0.0
        %5992 = vmatprep.subr.mxu0 0.0
        %5993 = vmatpush1.msra.mxu0 0.0
        %5994 = vmatprep.subr.mxu0 0.0
        %5995 = vmatpush1.msra.mxu0 0.0
        %5996 = vmatprep.mubr.f32.mxu0 0.0
        %5997 = vmatmul.mubr.f32.gmra.mrb[0].mxu0 %v5783
        %v5998 = vpop.f32.mrb[0].mxu0
        %v5999 = vadd.f32 0.0, %v5998
        %v6000 = vpop.f32.mrb[0].mxu0
        %6001 = vdwg.mxu0
        %v6003 = vsel %vm535, %v5999, 0
        %6005 = vmatprep.subr.mxu0 0.0
        %6006 = vmatpush1.msra.mxu0 %v343
        %6007 = vmatprep.subr.mxu0 0.0
        %6008 = vmatpush1.msra.mxu0 %v344
        %6009 = vmatprep.subr.mxu0 0.0
        %6010 = vmatpush1.msra.mxu0 0.0
        %6011 = vmatprep.subr.mxu0 0.0
        %6012 = vmatpush1.msra.mxu0 0.0
        %6013 = vmatprep.subr.mxu0 0.0
        %6014 = vmatpush1.msra.mxu0 0.0
        %6015 = vmatprep.subr.mxu0 0.0
        %6016 = vmatpush1.msra.mxu0 0.0
        %6017 = vmatprep.subr.mxu0 0.0
        %6018 = vmatpush1.msra.mxu0 0.0
        %6019 = vmatprep.subr.mxu0 0.0
        %6020 = vmatpush1.msra.mxu0 0.0
        %6021 = vmatprep.subr.mxu0 0.0
        %6022 = vmatpush1.msra.mxu0 0.0
        %6023 = vmatprep.subr.mxu0 0.0
        %6024 = vmatpush1.msra.mxu0 0.0
        %6025 = vmatprep.subr.mxu0 0.0
        %6026 = vmatpush1.msra.mxu0 0.0
        %6027 = vmatprep.subr.mxu0 0.0
        %6028 = vmatpush1.msra.mxu0 0.0
        %6029 = vmatprep.subr.mxu0 0.0
        %6030 = vmatpush1.msra.mxu0 0.0
        %6031 = vmatprep.subr.mxu0 0.0
        %6032 = vmatpush1.msra.mxu0 0.0
        %6033 = vmatprep.subr.mxu0 0.0
        %6034 = vmatpush1.msra.mxu0 0.0
        %6035 = vmatprep.subr.mxu0 0.0
        %6036 = vmatpush1.msra.mxu0 0.0
        %6037 = vmatprep.subr.mxu0 0.0
        %6038 = vmatpush1.msra.mxu0 0.0
        %6039 = vmatprep.subr.mxu0 0.0
        %6040 = vmatpush1.msra.mxu0 0.0
        %6041 = vmatprep.subr.mxu0 0.0
        %6042 = vmatpush1.msra.mxu0 0.0
        %6043 = vmatprep.subr.mxu0 0.0
        %6044 = vmatpush1.msra.mxu0 0.0
        %6045 = vmatprep.subr.mxu0 0.0
        %6046 = vmatpush1.msra.mxu0 0.0
        %6047 = vmatprep.subr.mxu0 0.0
        %6048 = vmatpush1.msra.mxu0 0.0
        %6049 = vmatprep.subr.mxu0 0.0
        %6050 = vmatpush1.msra.mxu0 0.0
        %6051 = vmatprep.subr.mxu0 0.0
        %6052 = vmatpush1.msra.mxu0 0.0
        %6053 = vmatprep.subr.mxu0 0.0
        %6054 = vmatpush1.msra.mxu0 0.0
        %6055 = vmatprep.subr.mxu0 0.0
        %6056 = vmatpush1.msra.mxu0 0.0
        %6057 = vmatprep.subr.mxu0 0.0
        %6058 = vmatpush1.msra.mxu0 0.0
        %6059 = vmatprep.subr.mxu0 0.0
        %6060 = vmatpush1.msra.mxu0 0.0
        %6061 = vmatprep.subr.mxu0 0.0
        %6062 = vmatpush1.msra.mxu0 0.0
        %6063 = vmatprep.subr.mxu0 0.0
        %6064 = vmatpush1.msra.mxu0 0.0
        %6065 = vmatprep.subr.mxu0 0.0
        %6066 = vmatpush1.msra.mxu0 0.0
        %6067 = vmatprep.subr.mxu0 0.0
        %6068 = vmatpush1.msra.mxu0 0.0
        %6069 = vmatprep.mubr.f32.mxu0 0.0
        %6070 = vmatmul.mubr.f32.gmra.mrb[0].mxu0 %v6003
        %v6071 = vpop.f32.mrb[0].mxu0
        %v6072 = vadd.f32 0.0, %v6071
        %v6073 = vpop.f32.mrb[0].mxu0
        %6074 = vdwg.mxu0
        %v6075 = vadd.f32 %v5928, %v6072
        %6076 = vrot.lane.b32.xlu0 %v615, 32
        %v6077 = vpop.permute.xlu0 %6076
        %6078 = vrot.lane.b32.xlu0 %v617, 32
        %v6079 = vpop.permute.xlu0 %6078
        %v6080 = vsel %vm1170, %v6077, 0
        %v6082 = vsel %vm1170, %v6079, 0
        %6084 = vmatprep.subr.mxu0 0.0
        %6085 = vmatpush1.xpose.msra.mxu0 %v6082
        %6086 = vmatprep.subr.mxu0 0.0
        %6087 = vmatpush1.xpose.msra.mxu0 0.0
        %6088 = vmatprep.subr.mxu0 0.0
        %6089 = vmatpush1.xpose.msra.mxu0 0.0
        %6090 = vmatprep.subr.mxu0 0.0
        %6091 = vmatpush1.xpose.msra.mxu0 0.0
        %6092 = vmatprep.subr.mxu0 0.0
        %6093 = vmatpush1.xpose.msra.mxu0 0.0
        %6094 = vmatprep.subr.mxu0 0.0
        %6095 = vmatpush1.xpose.msra.mxu0 0.0
        %6096 = vmatprep.subr.mxu0 0.0
        %6097 = vmatpush1.xpose.msra.mxu0 0.0
        %6098 = vmatprep.subr.mxu0 0.0
        %6099 = vmatpush1.xpose.msra.mxu0 0.0
        %6100 = vmatprep.subr.mxu0 0.0
        %6101 = vmatpush1.xpose.msra.mxu0 0.0
        %6102 = vmatprep.subr.mxu0 0.0
        %6103 = vmatpush1.xpose.msra.mxu0 0.0
        %6104 = vmatprep.subr.mxu0 0.0
        %6105 = vmatpush1.xpose.msra.mxu0 0.0
        %6106 = vmatprep.subr.mxu0 0.0
        %6107 = vmatpush1.xpose.msra.mxu0 0.0
        %6108 = vmatprep.subr.mxu0 0.0
        %6109 = vmatpush1.xpose.msra.mxu0 0.0
        %6110 = vmatprep.subr.mxu0 0.0
        %6111 = vmatpush1.xpose.msra.mxu0 0.0
        %6112 = vmatprep.subr.mxu0 0.0
        %6113 = vmatpush1.xpose.msra.mxu0 0.0
        %6114 = vmatprep.subr.mxu0 0.0
        %6115 = vmatpush1.xpose.msra.mxu0 0.0
        %6116 = vmatprep.subr.mxu0 0.0
        %6117 = vmatpush1.xpose.msra.mxu0 0.0
        %6118 = vmatprep.subr.mxu0 0.0
        %6119 = vmatpush1.xpose.msra.mxu0 0.0
        %6120 = vmatprep.subr.mxu0 0.0
        %6121 = vmatpush1.xpose.msra.mxu0 0.0
        %6122 = vmatprep.subr.mxu0 0.0
        %6123 = vmatpush1.xpose.msra.mxu0 0.0
        %6124 = vmatprep.subr.mxu0 0.0
        %6125 = vmatpush1.xpose.msra.mxu0 0.0
        %6126 = vmatprep.subr.mxu0 0.0
        %6127 = vmatpush1.xpose.msra.mxu0 0.0
        %6128 = vmatprep.subr.mxu0 0.0
        %6129 = vmatpush1.xpose.msra.mxu0 0.0
        %6130 = vmatprep.subr.mxu0 0.0
        %6131 = vmatpush1.xpose.msra.mxu0 0.0
        %6132 = vmatprep.subr.mxu0 0.0
        %6133 = vmatpush1.xpose.msra.mxu0 0.0
        %6134 = vmatprep.subr.mxu0 0.0
        %6135 = vmatpush1.xpose.msra.mxu0 0.0
        %6136 = vmatprep.subr.mxu0 0.0
        %6137 = vmatpush1.xpose.msra.mxu0 0.0
        %6138 = vmatprep.subr.mxu0 0.0
        %6139 = vmatpush1.xpose.msra.mxu0 0.0
        %6140 = vmatprep.subr.mxu0 0.0
        %6141 = vmatpush1.xpose.msra.mxu0 0.0
        %6142 = vmatprep.subr.mxu0 0.0
        %6143 = vmatpush1.xpose.msra.mxu0 0.0
        %6144 = vmatprep.subr.mxu0 0.0
        %6145 = vmatpush1.xpose.msra.mxu0 0.0
        %6146 = vmatprep.subr.mxu0 0.0
        %6147 = vmatpush1.xpose.msra.mxu0 0.0
        %6148 = vmatprep.mubr.f32.mxu0 0.0
        %6149 = vmatmul.mubr.f32.gmra.mrb[0].mxu0 %v6080
        %v6150 = vpop.f32.mrb[0].mxu0
        %v6151 = vadd.f32 0.0, %v6150
        %v6152 = vpop.f32.mrb[0].mxu0
        %6153 = vdwg.mxu0
        %v6154 = vsel %vm867, %v6151, -inf
        %6155 = vmax.xlane.f32.xlu0 %v6154
        %v6156 = vpop.xlane.xlu0 %6155
        %v6157 = vsub.f32 %v6151, %v6156
        %v6158 = vmul.f32 %v6157, 1.442695
        %v6159 = vpow.pop %v6158
        %v6160 = vsel %vm867, %v6159, 0.0
        %6161 = vadd.xlane.f32.xlu0 %v6160
        %v6162 = vpop.xlane.xlu0 %6161
        %v6163 = vrcp.pop %v6162
        %v6164 = vmul.f32 %v6159, %v6163
        %v6166 = vsel %vm867, %v6164, 0
        %6168 = vmatprep.subr.mxu0 0.0
        %6169 = vmatpush1.msra.mxu0 %v5930
        %6170 = vmatprep.subr.mxu0 0.0
        %6171 = vmatpush1.msra.mxu0 0.0
        %6172 = vmatprep.subr.mxu0 0.0
        %6173 = vmatpush1.msra.mxu0 0.0
        %6174 = vmatprep.subr.mxu0 0.0
        %6175 = vmatpush1.msra.mxu0 0.0
        %6176 = vmatprep.subr.mxu0 0.0
        %6177 = vmatpush1.msra.mxu0 0.0
        %6178 = vmatprep.subr.mxu0 0.0
        %6179 = vmatpush1.msra.mxu0 0.0
        %6180 = vmatprep.subr.mxu0 0.0
        %6181 = vmatpush1.msra.mxu0 0.0
        %6182 = vmatprep.subr.mxu0 0.0
        %6183 = vmatpush1.msra.mxu0 0.0
        %6184 = vmatprep.subr.mxu0 0.0
        %6185 = vmatpush1.msra.mxu0 0.0
        %6186 = vmatprep.subr.mxu0 0.0
        %6187 = vmatpush1.msra.mxu0 0.0
        %6188 = vmatprep.subr.mxu0 0.0
        %6189 = vmatpush1.msra.mxu0 0.0
        %6190 = vmatprep.subr.mxu0 0.0
        %6191 = vmatpush1.msra.mxu0 0.0
        %6192 = vmatprep.subr.mxu0 0.0
        %6193 = vmatpush1.msra.mxu0 0.0
        %6194 = vmatprep.subr.mxu0 0.0
        %6195 = vmatpush1.msra.mxu0 0.0
        %6196 = vmatprep.subr.mxu0 0.0
        %6197 = vmatpush1.msra.mxu0 0.0
        %6198 = vmatprep.subr.mxu0 0.0
        %6199 = vmatpush1.msra.mxu0 0.0
        %6200 = vmatprep.subr.mxu0 0.0
        %6201 = vmatpush1.msra.mxu0 0.0
        %6202 = vmatprep.subr.mxu0 0.0
        %6203 = vmatpush1.msra.mxu0 0.0
        %6204 = vmatprep.subr.mxu0 0.0
        %6205 = vmatpush1.msra.mxu0 0.0
        %6206 = vmatprep.subr.mxu0 0.0
        %6207 = vmatpush1.msra.mxu0 0.0
        %6208 = vmatprep.subr.mxu0 0.0
        %6209 = vmatpush1.msra.mxu0 0.0
        %6210 = vmatprep.subr.mxu0 0.0
        %6211 = vmatpush1.msra.mxu0 0.0
        %6212 = vmatprep.subr.mxu0 0.0
        %6213 = vmatpush1.msra.mxu0 0.0
        %6214 = vmatprep.subr.mxu0 0.0
        %6215 = vmatpush1.msra.mxu0 0.0
        %6216 = vmatprep.subr.mxu0 0.0
        %6217 = vmatpush1.msra.mxu0 0.0
        %6218 = vmatprep.subr.mxu0 0.0
        %6219 = vmatpush1.msra.mxu0 0.0
        %6220 = vmatprep.subr.mxu0 0.0
        %6221 = vmatpush1.msra.mxu0 0.0
        %6222 = vmatprep.subr.mxu0 0.0
        %6223 = vmatpush1.msra.mxu0 0.0
        %6224 = vmatprep.subr.mxu0 0.0
        %6225 = vmatpush1.msra.mxu0 0.0
        %6226 = vmatprep.subr.mxu0 0.0
        %6227 = vmatpush1.msra.mxu0 0.0
        %6228 = vmatprep.subr.mxu0 0.0
        %6229 = vmatpush1.msra.mxu0 0.0
        %6230 = vmatprep.subr.mxu0 0.0
        %6231 = vmatpush1.msra.mxu0 0.0
        %6232 = vmatprep.mubr.f32.mxu0 0.0
        %6233 = vmatmul.mubr.f32.gmra.mrb[0].mxu0 %v6166
        %v6234 = vpop.f32.mrb[0].mxu0
        %v6235 = vadd.f32 0.0, %v6234
        %v6236 = vpop.f32.mrb[0].mxu0
        %6237 = vdwg.mxu0
        %v6239 = vsel %vm535, %v6235, 0
        %6241 = vmatprep.subr.mxu0 0.0
        %6242 = vmatpush1.msra.mxu0 %v351
        %6243 = vmatprep.subr.mxu0 0.0
        %6244 = vmatpush1.msra.mxu0 %v352
        %6245 = vmatprep.subr.mxu0 0.0
        %6246 = vmatpush1.msra.mxu0 0.0
        %6247 = vmatprep.subr.mxu0 0.0
        %6248 = vmatpush1.msra.mxu0 0.0
        %6249 = vmatprep.subr.mxu0 0.0
        %6250 = vmatpush1.msra.mxu0 0.0
        %6251 = vmatprep.subr.mxu0 0.0
        %6252 = vmatpush1.msra.mxu0 0.0
        %6253 = vmatprep.subr.mxu0 0.0
        %6254 = vmatpush1.msra.mxu0 0.0
        %6255 = vmatprep.subr.mxu0 0.0
        %6256 = vmatpush1.msra.mxu0 0.0
        %6257 = vmatprep.subr.mxu0 0.0
        %6258 = vmatpush1.msra.mxu0 0.0
        %6259 = vmatprep.subr.mxu0 0.0
        %6260 = vmatpush1.msra.mxu0 0.0
        %6261 = vmatprep.subr.mxu0 0.0
        %6262 = vmatpush1.msra.mxu0 0.0
        %6263 = vmatprep.subr.mxu0 0.0
        %6264 = vmatpush1.msra.mxu0 0.0
        %6265 = vmatprep.subr.mxu0 0.0
        %6266 = vmatpush1.msra.mxu0 0.0
        %6267 = vmatprep.subr.mxu0 0.0
        %6268 = vmatpush1.msra.mxu0 0.0
        %6269 = vmatprep.subr.mxu0 0.0
        %6270 = vmatpush1.msra.mxu0 0.0
        %6271 = vmatprep.subr.mxu0 0.0
        %6272 = vmatpush1.msra.mxu0 0.0
        %6273 = vmatprep.subr.mxu0 0.0
        %6274 = vmatpush1.msra.mxu0 0.0
        %6275 = vmatprep.subr.mxu0 0.0
        %6276 = vmatpush1.msra.mxu0 0.0
        %6277 = vmatprep.subr.mxu0 0.0
        %6278 = vmatpush1.msra.mxu0 0.0
        %6279 = vmatprep.subr.mxu0 0.0
        %6280 = vmatpush1.msra.mxu0 0.0
        %6281 = vmatprep.subr.mxu0 0.0
        %6282 = vmatpush1.msra.mxu0 0.0
        %6283 = vmatprep.subr.mxu0 0.0
        %6284 = vmatpush1.msra.mxu0 0.0
        %6285 = vmatprep.subr.mxu0 0.0
        %6286 = vmatpush1.msra.mxu0 0.0
        %6287 = vmatprep.subr.mxu0 0.0
        %6288 = vmatpush1.msra.mxu0 0.0
        %6289 = vmatprep.subr.mxu0 0.0
        %6290 = vmatpush1.msra.mxu0 0.0
        %6291 = vmatprep.subr.mxu0 0.0
        %6292 = vmatpush1.msra.mxu0 0.0
        %6293 = vmatprep.subr.mxu0 0.0
        %6294 = vmatpush1.msra.mxu0 0.0
        %6295 = vmatprep.subr.mxu0 0.0
        %6296 = vmatpush1.msra.mxu0 0.0
        %6297 = vmatprep.subr.mxu0 0.0
        %6298 = vmatpush1.msra.mxu0 0.0
        %6299 = vmatprep.subr.mxu0 0.0
        %6300 = vmatpush1.msra.mxu0 0.0
        %6301 = vmatprep.subr.mxu0 0.0
        %6302 = vmatpush1.msra.mxu0 0.0
        %6303 = vmatprep.subr.mxu0 0.0
        %6304 = vmatpush1.msra.mxu0 0.0
        %6305 = vmatprep.mubr.f32.mxu0 0.0
        %6306 = vmatmul.mubr.f32.gmra.mrb[0].mxu0 %v6239
        %v6307 = vpop.f32.mrb[0].mxu0
        %v6308 = vadd.f32 0.0, %v6307
        %v6309 = vpop.f32.mrb[0].mxu0
        %6310 = vdwg.mxu0
        %v6311 = vadd.f32 %v5611, %v6308
        %6313 = vrot.lane.b32.xlu0 %v6311, 64
        %v6314 = vpop.permute.xlu0 %6313
        %v6316 = vsel %vm3511, %v6075, %v6314
        %v6317 = vadd.f32 %v6316, %v446
        %6318 = vst [vmem:[%s315 + $0x8] sm:$0xff] %v6317
        %s6319 = sand.u32 %s208, 1
        %s6320 = scalar_lea.sflag [#allocation3], %s6319
        %s6321 = sand.u32 %s208, 1
        %s6322 = smul.addr %s6321, 16
        %s6323 = scalar_lea.vmem [#allocation2], %s6322
        // Predicated region
        $region53: #{tpu_custom_call.1} parent=51 // pred_check
          %p6324 = pneg %p218
        $region54: #{tpu_custom_call.1} parent=51 // pred_check_branch
          %6326 = sbr.rel (%p6324) target = $region56
        $region55: #{tpu_custom_call.1} parent=51 // pred_region
          %s6327 = smul.u32 2, %s22
          %s6329 = ssub.s32 256, 256
          %6330 = vsyncadd %s6320, %s6329
          %s6331 = smul.addr %s6327, 128
          %s6332 = scalar_lea.hbm %s8, %s6331
          %s6333 = sshll.u32 %s6323, 4
          %s6334 = int_to_ptr.vmem [resolvable:$true] %s6333
          %6339 = dma.vmem_to_hbm [thread:$0]  %s6334, 256, %s6332, %s6320, 128, 128, 8
        $region56: #{tpu_custom_call.1} parent=51 // pred_fallthru
          _
      $region52: #{tpu_custom_call.1} parent=5 // pred_fallthru
        _
      %p6340 = scmp.le.s32.totalorder 2, %s17
      // Predicated region
      $region57: #{tpu_custom_call.1} parent=5 // pred_check
        %p6341 = pneg %p6340
      $region58: #{tpu_custom_call.1} parent=5 // pred_check_branch
        %6343 = sbr.rel (%p6341) target = $region60
      $region59: #{tpu_custom_call.1} parent=5 // pred_region
        %s6344 = ssub.s32 %s17, 2
        // Predicated region
        $region61: #{tpu_custom_call.1} parent=59 // pred_check
          %p6345 = pneg %p224
        $region62: #{tpu_custom_call.1} parent=59 // pred_check_branch
          %6347 = sbr.rel (%p6345) target = $region64
        $region63: #{tpu_custom_call.1} parent=59 // pred_region
          %s6348 = sand.u32 %s209, 1
          %s6349 = scalar_lea.sflag [#allocation3], %s6348
          %s6350 = sand.u32 %s209, 1
          %s6351 = smul.addr %s6350, 16
          %s6352 = scalar_lea.vmem [#allocation2], %s6351
          %6353 = dma.done %s6349, 256
        $region64: #{tpu_custom_call.1} parent=59 // pred_fallthru
          _
      $region60: #{tpu_custom_call.1} parent=5 // pred_fallthru
        _
    $region6: #{tpu_custom_call.1} parent=1 // loop_footer
      %s21 = sadd.s32 1, %s17
    $region7: #{tpu_custom_call.1} parent=1 // loop_footer_branch
      %16 = sbr.rel target = $region3
    $region8: #{tpu_custom_call.1} parent=1 // loop_exit
      _
    %6354 = vsyncpa [#allocation3], 1
    %s6355 = scalar_lea.sflag [#allocation3], 1
    %6356 = vsyncpa %s6355, 1

</llo_original>
